<compile_context>
chip_gen: v5e
topology: v5e:2x2
jax: 0.10.0
libtpu: 0.0.40
codegen_flags: <defaults>
</compile_context>

<pallas_src>
import functools
import math

import jax
import jax.numpy as jnp
from jax.experimental import pallas as pl
from jax.experimental.pallas import tpu as pltpu


# Safe on all generations: well above the ~7 MiB peak of these kernels, below v7x's
# 64 MiB physical VMEM, above v5e's 16 MiB default scoped limit.
_VMEM_LIMIT = 40 * 1024 * 1024


def _round_up(x, m):
    return (x + m - 1) // m * m


def _pick_tn(N, target=640):
    """Largest multiple-of-128 divisor of N that is <= target (else the full width)."""
    best = N
    for cand in range(128, min(N, target) + 1, 128):
        if N % cand == 0:
            best = cand
    return best


# ---------- Pallas kernel 1: fused (x * matrix_representation) @ W (layer 1) ----------
def _mul_matmul_kernel(x_ref, mat_ref, w_ref, o_ref):
    # x_ref: (1,1,Cp) f32, mat_ref: (HW,Cp) f32 (resident), w_ref: (Cp,tn) bf16 (streamed),
    # o_ref: (HW,tn) bf16.  Multiply stays in f32 (v5e has no bf16 VALU), dot is bf16 MXU
    # with f32 accumulation.
    a = (mat_ref[...] * x_ref[0]).astype(jnp.bfloat16)
    o_ref[...] = jnp.dot(a, w_ref[...],
                         preferred_element_type=jnp.float32).astype(o_ref.dtype)


def mul_matmul(x3, mat_flat, w_bf16):
    B = x3.shape[0]
    HW, Cp = mat_flat.shape
    N = w_bf16.shape[1]
    tn = _pick_tn(N)
    assert N % tn == 0
    # TODO(synk): pipeline_mode=pl.Buffered(1) on the resident mat/weight specs would
    # shave duplicate double-buffer VMEM, but VMEM is nowhere near binding here, so it
    # is skipped for cross-version compile safety.
    return pl.pallas_call(
        _mul_matmul_kernel,
        out_shape=jax.ShapeDtypeStruct((B * HW, N), jnp.bfloat16),
        # N outermost: each streamed weight chunk is fetched exactly once across the
        # B inner steps; the next chunk's DMA overlaps the current chunk's MXU work.
        grid=(N // tn, B),
        in_specs=[pl.BlockSpec((1, 1, Cp), lambda j, b: (b, 0, 0)),
                  pl.BlockSpec((HW, Cp), lambda j, b: (0, 0)),    # constant -> resident
                  pl.BlockSpec((Cp, tn), lambda j, b: (0, j))],   # streamed weight chunk
        out_specs=pl.BlockSpec((HW, tn), lambda j, b: (b, j)),
        compiler_params=pltpu.CompilerParams(
            dimension_semantics=("parallel", "parallel"),
            vmem_limit_bytes=_VMEM_LIMIT),
    )(x3, mat_flat, w_bf16)


# ---------- Pallas kernel 2: A @ W (bf16 MXU, f32 accumulate, resident weight) ----------
def _matmul_kernel(a_ref, w_ref, o_ref):
    # A arrives pre-cast to bf16 (previous layer emits bf16); accumulate in f32.
    o_ref[...] = jnp.dot(a_ref[...], w_ref[...],
                         preferred_element_type=jnp.float32).astype(o_ref.dtype)


def matmul(a, w_bf16):
    M, K = a.shape
    N = w_bf16.shape[1]
    # >= 2 near-equal M tiles (megacore), few grid steps, no M padding (partial last block).
    tm = min(2048, max(8, _round_up(pl.cdiv(M, 2), 8)))
    return pl.pallas_call(
        _matmul_kernel,
        out_shape=jax.ShapeDtypeStruct((M, N), jnp.bfloat16),
        grid=(pl.cdiv(M, tm),),
        in_specs=[pl.BlockSpec((tm, K), lambda i: (i, 0)),
                  pl.BlockSpec((K, N), lambda i: (0, 0))],   # constant -> DMA'd once
        out_specs=pl.BlockSpec((tm, N), lambda i: (i, 0)),
        compiler_params=pltpu.CompilerParams(
            dimension_semantics=("parallel",),
            vmem_limit_bytes=_VMEM_LIMIT),
    )(a, w_bf16)


# ---------------- col2im overlap-add + bias + ReLU (XLA glue) ----------------
def _col2im_bias_relu(y, B, H, W, KH, KW, Cp, Cout, stride, bias, out_dtype):
    # TODO(synk): strided overlap-add (col2im) + bias/ReLU epilogue stays in XLA; the
    # strided scatter-add has no clean rectangular Pallas tiling.
    # y: (B*H*W, KH*KW*Cp) with Cp >= Cout channel padding; accumulate in f32.
    s = stride
    assert KH % s == 0 and KW % s == 0
    khs, kws = KH // s, KW // s
    Hq, Wq = H + khs - 1, W + kws - 1            # = OH // s, OW // s
    y8 = y.astype(jnp.float32).reshape(B, H, W, khs, s, kws, s, Cp)
    acc = None
    for dh in range(khs):
        for dw in range(kws):
            p = y8[:, :, :, dh, :, dw, :, :]     # (B, H, W, s, s, Cp)
            p = jnp.pad(p, ((0, 0), (dh, khs - 1 - dh), (dw, kws - 1 - dw),
                            (0, 0), (0, 0), (0, 0)))
            acc = p if acc is None else acc + p
    out = jnp.transpose(acc, (0, 1, 3, 2, 4, 5)).reshape(B, Hq * s, Wq * s, Cp)
    out = out[..., :Cout] + bias.reshape(1, 1, 1, Cout)
    return jnp.maximum(out, 0.0).astype(out_dtype)


# --------------------- one-time (init) parameter packing ---------------------
def pack_params(mat_nchw, weights, strides, num_pallas_layers=2):
    """Hoisted out of the jitted forward: weight transpose/pad/bf16 cast + mat flatten."""
    C = mat_nchw.shape[1]
    Cp = _round_up(C, 128)                                    # 898 -> 1024
    mat_flat = jnp.pad(jnp.transpose(mat_nchw[0], (1, 2, 0)).reshape(-1, C),
                       ((0, 0), (0, Cp - C)))                 # (H*W, Cp) f32

    packed_ws, cfg = [], []
    for li, (w, s) in enumerate(zip(weights, strides)):
        Cin, Cout, KH, KW = w.shape
        w_khwc = jnp.transpose(w, (0, 2, 3, 1))               # (Cin, KH, KW, Cout)
        use_pallas = li < num_pallas_layers
        if li == 0:
            # pad K (=Cin) to the lane-aligned Cp used by mat_flat; N=3200 already %128==0
            wf = jnp.pad(w_khwc.reshape(Cin, KH * KW * Cout),
                         ((0, Cp - Cin), (0, 0))).astype(jnp.bfloat16)
            Cop = Cout
        elif use_pallas:
            # pad Cout so N = KH*KW*Cop is a multiple of 128 (lane-dense output stores)
            Cop = _round_up(Cout, 128 // math.gcd(KH * KW, 128))
            wf = jnp.pad(w_khwc, ((0, 0), (0, 0), (0, 0), (0, Cop - Cout))
                         ).reshape(Cin, KH * KW * Cop).astype(jnp.bfloat16)
        else:
            # tiny tail layers (K<=50, N<=160) stay in fused XLA -> keep f32
            Cop = Cout
            wf = w_khwc.reshape(Cin, KH * KW * Cout).astype(jnp.float32)
        packed_ws.append(wf)
        cfg.append((KH, KW, Cout, Cop, int(s), bool(use_pallas)))
    return mat_flat, tuple(packed_ws), tuple(cfg)


# ----------------------------- model forward --------------------------------
@functools.partial(jax.jit, static_argnames=("cfg", "hw"))
def forward_pallas(x, mat_flat, packed_ws, biases, cfg, hw):
    """x: (B, 898). mat_flat: (H*W, Cp) f32. Returns NCHW f32 (B, 3, H_out, W_out)."""
    B, C = x.shape
    H, W = hw
    HW, Cp = mat_flat.shape

    # ---- layer 1: fused (x * mat) @ W1 on the MXU, streamed weight chunks ----
    KH, KW, Cout, Cop, stride, _ = cfg[0]
    x3 = jnp.pad(x, ((0, 0), (0, Cp - C))).reshape(B, 1, Cp)
    y = mul_matmul(x3, mat_flat, packed_ws[0])                  # (B*HW, 3200) bf16
    h = _col2im_bias_relu(y, B, H, W, KH, KW, Cop, Cout, stride,
                          biases[0], jnp.bfloat16)

    # ---- remaining ConvTranspose2d(+ReLU) layers ----
    n_layers = len(cfg)
    for li in range(1, n_layers):
        KH, KW, Cout, Cop, stride, use_pallas = cfg[li]
        _, H, W, Cin = h.shape
        a = h.reshape(B * H * W, Cin)                           # bf16 A operand
        if use_pallas:
            y = matmul(a, packed_ws[li])                        # bf16 MXU, f32 acc
        else:
            # tiny tail layers: plain XLA dot fused with the epilogue
            y = jnp.dot(a.astype(jnp.float32), packed_ws[li],
                        precision=jax.lax.Precision.HIGHEST,
                        preferred_element_type=jnp.float32)
        out_dtype = jnp.float32 if li == n_layers - 1 else jnp.bfloat16
        h = _col2im_bias_relu(y, B, H, W, KH, KW, Cop, Cout, stride,
                              biases[li], out_dtype)
    return jnp.transpose(h, (0, 3, 1, 2))                       # NHWC -> NCHW


def forward_reference(x, mat_nchw, weights, biases, strides):
    B = x.shape[0]
    h = x.reshape(B, -1, 1, 1) * mat_nchw
    for w, b, s in zip(weights, biases, strides):
        h = jax.lax.conv_transpose(
            h, w, strides=(s, s), padding='VALID',
            dimension_numbers=('NCHW', 'OIHW', 'NCHW'),
            transpose_kernel=True, precision=jax.lax.Precision.HIGHEST)
        h = jnp.maximum(h + b.reshape(1, -1, 1, 1), 0.0)
    return h


if __name__ == "__main__":
    key = jax.random.PRNGKey(0)
    keys = jax.random.split(key, 12)

    B, C, Hs, Ws = 2, 898, 16, 16
    x = jax.random.normal(keys[0], (B, C), dtype=jnp.float32)
    mat = jax.random.normal(keys[1], (1, C, Hs, Ws), dtype=jnp.float32)

    # ConvTranspose2d stack: (in, out, stride) with 4x4 kernels (matches the nn.Module)
    layer_cfg = [(898, 200, 1), (200, 50, 2), (50, 10, 1), (10, 3, 2)]
    weights, biases, strides = [], [], []
    for li, (cin, cout, s) in enumerate(layer_cfg):
        wk, bk = keys[2 + 2 * li], keys[3 + 2 * li]
        scale = 1.0 / jnp.sqrt(jnp.float32(cin * 4 * 4))
        weights.append(jax.random.normal(wk, (cin, cout, 4, 4), dtype=jnp.float32) * scale)
        biases.append(jax.random.normal(bk, (cout,), dtype=jnp.float32) * 0.01)
        strides.append(s)

    # One-time packing, hoisted out of the jitted forward (perf review item 1).
    mat_flat, packed_ws, cfg = pack_params(mat, weights, tuple(strides))
    mat_flat = jax.block_until_ready(mat_flat)

    out = forward_pallas(x, mat_flat, packed_ws, tuple(biases), cfg=cfg, hw=(Hs, Ws))
    out = jax.block_until_ready(out)

    ref = forward_reference(x, mat, weights, biases, strides)
    ref = jax.block_until_ready(ref)

    assert out.shape == (2, 3, 88, 88), out.shape
    rel_err = float(jnp.max(jnp.abs(out - ref)) / (jnp.max(jnp.abs(ref)) + 1e-6))
    assert rel_err < 5e-2, rel_err

    print("KERNEL_OK")
</pallas_src>

<mosaic_0001>
module attributes {stable_mosaic.version = 11 : i64} {
  func.func @_mul_matmul_kernel(%arg0: i32, %arg1: i32, %arg2: memref<1x1x1024xf32, #tpu.memory_space<vmem>>, %arg3: memref<256x1024xf32, #tpu.memory_space<vmem>>, %arg4: memref<1024x640xbf16, #tpu.memory_space<vmem>>, %arg5: memref<256x640xbf16, #tpu.memory_space<vmem>>) attributes {dimension_semantics = [#tpu.dimension_semantics<parallel>, #tpu.dimension_semantics<parallel>], iteration_bounds = array<i64: 5, 2>, scalar_prefetch = 0 : i64, scratch_operands = 0 : i64, tpu.core_type = #tpu.core_type<tc>, window_params = [{transform_indices = @transform_0, window_bounds = array<i64: 1, 1, 1024>}, {pipeline_mode = #tpu.pipeline_mode<synchronous>, transform_indices = @transform_1, window_bounds = array<i64: 256, 1024>}, {transform_indices = @transform_2, window_bounds = array<i64: 1024, 640>}, {transform_indices = @transform_3, window_bounds = array<i64: 256, 640>}]} {
    %c0 = arith.constant 0 : index
    %c0_0 = arith.constant 0 : index
    %0 = vector.load %arg3[%c0, %c0_0] : memref<256x1024xf32, #tpu.memory_space<vmem>>, vector<256x1024xf32>
    %c0_1 = arith.constant 0 : index
    %c0_2 = arith.constant 0 : index
    %c0_3 = arith.constant 0 : index
    %1 = vector.load %arg2[%c0_1, %c0_2, %c0_3] : memref<1x1x1024xf32, #tpu.memory_space<vmem>>, vector<1x1x1024xf32>
    %2 = vector.shape_cast %1 : vector<1x1x1024xf32> to vector<1x1024xf32>
    %3 = vector.broadcast %2 : vector<1x1024xf32> to vector<256x1024xf32>
    %4 = arith.mulf %0, %3 : vector<256x1024xf32>
    %5 = arith.truncf %4 : vector<256x1024xf32> to vector<256x1024xbf16>
    %c0_4 = arith.constant 0 : index
    %c0_5 = arith.constant 0 : index
    %6 = vector.load %arg4[%c0_4, %c0_5] : memref<1024x640xbf16, #tpu.memory_space<vmem>>, vector<1024x640xbf16>
    %cst = arith.constant dense<0.000000e+00> : vector<256x640xf32>
    %7 = tpu.matmul %5, %6, %cst {dimension_numbers = #tpu.dot_dimension_numbers<[1], [0], [0], [1], [0, 0, 1, 1], [], []>} : vector<256x1024xbf16>, vector<1024x640xbf16>, vector<256x640xf32> -> vector<256x640xf32>
    %8 = arith.truncf %7 : vector<256x640xf32> to vector<256x640xbf16>
    %c0_6 = arith.constant 0 : index
    %c0_7 = arith.constant 0 : index
    %9 = vector.load %arg5[%c0_6, %c0_7] : memref<256x640xbf16, #tpu.memory_space<vmem>>, vector<256x640xbf16>
    tpu.vector_store %arg5[%c0_6, %c0_7], %8 {strides = array<i32>} : memref<256x640xbf16, #tpu.memory_space<vmem>>, vector<256x640xbf16>,
    return
  }
  func.func @transform_0(%arg0: i32, %arg1: i32) -> (i32, i32, i32) {
    %c0_i32 = arith.constant 0 : i32
    %c0_i32_0 = arith.constant 0 : i32
    %c0_i32_1 = arith.constant 0 : i32
    return %arg1, %c0_i32, %c0_i32_0 : i32, i32, i32
  }
  func.func @transform_1(%arg0: i32, %arg1: i32) -> (i32, i32) {
    %c0_i32 = arith.constant 0 : i32
    %c0_i32_0 = arith.constant 0 : i32
    %c0_i32_1 = arith.constant 0 : i32
    return %c0_i32, %c0_i32_0 : i32, i32
  }
  func.func @transform_2(%arg0: i32, %arg1: i32) -> (i32, i32) {
    %c0_i32 = arith.constant 0 : i32
    %c0_i32_0 = arith.constant 0 : i32
    return %c0_i32, %arg0 : i32, i32
  }
  func.func @transform_3(%arg0: i32, %arg1: i32) -> (i32, i32) {
    %c0_i32 = arith.constant 0 : i32
    return %arg1, %arg0 : i32, i32
  }
}

module attributes {stable_mosaic.version = 11 : i64} {
  func.func @_matmul_kernel(%arg0: i32, %arg1: memref<368x200xbf16, #tpu.memory_space<vmem>>, %arg2: memref<200x896xbf16, #tpu.memory_space<vmem>>, %arg3: memref<368x896xbf16, #tpu.memory_space<vmem>>) attributes {dimension_semantics = [#tpu.dimension_semantics<parallel>], iteration_bounds = array<i64: 2>, scalar_prefetch = 0 : i64, scratch_operands = 0 : i64, tpu.core_type = #tpu.core_type<tc>, window_params = [{transform_indices = @transform_0, window_bounds = array<i64: 368, 200>}, {pipeline_mode = #tpu.pipeline_mode<synchronous>, transform_indices = @transform_1, window_bounds = array<i64: 200, 896>}, {transform_indices = @transform_2, window_bounds = array<i64: 368, 896>}]} {
    %c0 = arith.constant 0 : index
    %c0_0 = arith.constant 0 : index
    %0 = vector.load %arg1[%c0, %c0_0] : memref<368x200xbf16, #tpu.memory_space<vmem>>, vector<368x200xbf16>
    %c0_1 = arith.constant 0 : index
    %c0_2 = arith.constant 0 : index
    %1 = vector.load %arg2[%c0_1, %c0_2] : memref<200x896xbf16, #tpu.memory_space<vmem>>, vector<200x896xbf16>
    %cst = arith.constant dense<0.000000e+00> : vector<368x896xf32>
    %2 = tpu.matmul %0, %1, %cst {dimension_numbers = #tpu.dot_dimension_numbers<[1], [0], [0], [1], [0, 0, 1, 1], [], []>} : vector<368x200xbf16>, vector<200x896xbf16>, vector<368x896xf32> -> vector<368x896xf32>
    %3 = arith.truncf %2 : vector<368x896xf32> to vector<368x896xbf16>
    %c0_3 = arith.constant 0 : index
    %c0_4 = arith.constant 0 : index
    %4 = vector.load %arg3[%c0_3, %c0_4] : memref<368x896xbf16, #tpu.memory_space<vmem>>, vector<368x896xbf16>
    tpu.vector_store %arg3[%c0_3, %c0_4], %3 {strides = array<i32>} : memref<368x896xbf16, #tpu.memory_space<vmem>>, vector<368x896xbf16>,
    return
  }
  func.func @transform_0(%arg0: i32) -> (i32, i32) {
    %c0_i32 = arith.constant 0 : i32
    %c0_i32_0 = arith.constant 0 : i32
    return %arg0, %c0_i32 : i32, i32
  }
  func.func @transform_1(%arg0: i32) -> (i32, i32) {
    %c0_i32 = arith.constant 0 : i32
    %c0_i32_0 = arith.constant 0 : i32
    %c0_i32_1 = arith.constant 0 : i32
    return %c0_i32, %c0_i32_0 : i32, i32
  }
  func.func @transform_2(%arg0: i32) -> (i32, i32) {
    %c0_i32 = arith.constant 0 : i32
    %c0_i32_0 = arith.constant 0 : i32
    return %arg0, %c0_i32 : i32, i32
  }
}

</mosaic_0001>

<llo_original>
// kernel: forward_pallas.2
$region0: #{forward_pallas.2}
  #allocation0 [shape = 'u32[]', space=smem, size = 0x4, offset = 0x4, fixed_abs, tag = 'smem constant byte address 0x4 - core index']
  #allocation1 [shape = 'u32[72,128]{1,0:T(1,128)}', space=vmem, size = 0x9000, scoped, tag = 'internal scratch']
  %s0 = inlined_call_operand.vmem [shape: f32[2,1,1024], index: 0, kind: input, shape index: {}]
  %s1 = inlined_call_operand.hbm [shape: f32[256,1024], index: 1, kind: input, shape index: {}]
  %s2 = inlined_call_operand.hbm [shape: bf16[1024,3200], index: 2, kind: input, shape index: {}]
  %s3 = inlined_call_operand.vmem [shape: bf16[512,3200], index: 3, kind: output, shape index: {}]
  %s4 = sld [smem:[#allocation0]]
  $region75: #{forward_pallas.2} parent=0
    _
  %s6 = ssub.s32 1, %s4
  %s7 = scalar_select 0, %s6, %s4
  $region1: #{forward_pallas.2} parent=0
    #allocation2 [shape = 'u8[1048576]{0}', space=vmem, size = 0x100000, scoped, tag = 'input window, operand 1, single buffered']
    #allocation3 [shape = 's32[2]{0}', space=sflag, size = 0x8, scoped, tag = 'scoped memory for forward_pallas.2']
    #allocation4 [shape = 'u8[2621440]{0}', space=vmem, size = 0x280000, scoped, tag = 'input window, operand 2']
    #allocation5 [shape = 's32[2]{0}', space=sflag, size = 0x8, scoped, tag = 'scoped memory for forward_pallas.2']
    #allocation6 [shape = 'u8[655360]{0}', space=vmem, size = 0xa0000, scoped, tag = 'output window, operand 0']
    %8 = vsyncpa [#allocation3], 0
    %9 = vsyncpa [#allocation5], 0
    %s10 = scalar_lea.sflag [#allocation5], 1
    %11 = vsyncpa %s10, 0
    loop: start=0, step=1, limit=12
    $region2: #{forward_pallas.2} parent=1 // loop_pre_header
      _
    $region3: #{forward_pallas.2} parent=1 // loop_header
      %s13 = sphi 0, %s17
      %p14 = scmp.ge.s32.totalorder %s13, 12
      %s20 = sphi 0, %s32
      %s21 = sphi 0, %s28
      %s22 = sphi 0, %s20
      %s23 = sphi 0, %s21
      %s24 = sphi 0, %s22
      %s25 = sphi 0, %s23
      %s35 = sphi 0, %s37
      %s38 = sphi 0, %s35
      %s39 = sphi 0, %s38
      %s55 = sphi 0, %s39
      %s59 = sphi 0, %s59
      %s61 = sphi 0, %s59
      %s62 = sphi 0, %s61
      %s76 = sphi 0, %s62
      %s82 = sphi 0, %s84
      %s85 = sphi 0, %s82
      %s86 = sphi 0, %s85
      %s102 = sphi 0, %s86
      %s110 = sphi 0, %s112
      %s113 = sphi 0, %s110
      %s114 = sphi 0, %s113
      %s130 = sphi 0, %s114
    $region4: #{forward_pallas.2} parent=1 // loop_header_branch
      %16 = sbr.rel (%p14) target = $region8
    $region5: #{forward_pallas.2} parent=1 // loop_body
      %s18 = ssub.s32 %s13, 1
      %s19 = ssub.s32 %s13, 2
      %s26 = sadd.s32 1, %s21
      %p27 = scmp.ge.s32.totalorder %s26, 2
      %s28 = scalar_select %p27, 0, %s26
      %s29 = sadd.s32 1, %s20
      %s30 = scalar_select %p27, %s29, %s20
      %p31 = scmp.ge.s32.totalorder %s30, 5
      %s32 = scalar_select %p31, 0, %s30
      %s33 = ssub.s32 %s21, %s28
      %p34 = scmp.eq.s32.totalorder %s33, 0
      %s36 = sadd.s32 %s35, 1
      %s37 = scalar_select %p34, %s35, %s36
      %p40 = pneg %p34
      %p41 = scmp.eq.s32.totalorder %s13, 9
      %p42 = por %p40, %p41
      %p43 = scmp.ne.s32.totalorder %s35, %s38
      %p44 = scmp.eq.s32.totalorder %s13, 0
      %p45 = por %p43, %p44
      %p46 = scmp.ne.s32.totalorder %s35, %s38
      %p47 = scmp.eq.s32.totalorder %s18, 9
      %p48 = por %p46, %p47
      %p49 = scmp.ne.s32.totalorder %s38, %s39
      %p50 = scmp.eq.s32.totalorder %s18, 0
      %p51 = por %p49, %p50
      %p52 = scmp.ne.s32.totalorder %s38, %s39
      %p53 = scmp.eq.s32.totalorder %s19, 9
      %p54 = por %p52, %p53
      %p56 = scmp.ne.s32.totalorder %s39, %s55
      %p57 = scmp.eq.s32.totalorder %s19, 0
      %p58 = por %p56, %p57
      %s60 = sadd.s32 %s59, 1
      %p63 = scmp.eq.s32.totalorder %s13, 9
      %p64 = scmp.ne.s32.totalorder %s59, %s61
      %p65 = scmp.eq.s32.totalorder %s13, 0
      %p66 = por %p64, %p65
      %p67 = scmp.ne.s32.totalorder %s59, %s61
      %p68 = scmp.eq.s32.totalorder %s18, 9
      %p69 = por %p67, %p68
      %p70 = scmp.ne.s32.totalorder %s61, %s62
      %p71 = scmp.eq.s32.totalorder %s18, 0
      %p72 = por %p70, %p71
      %p73 = scmp.ne.s32.totalorder %s61, %s62
      %p74 = scmp.eq.s32.totalorder %s19, 9
      %p75 = por %p73, %p74
      %p77 = scmp.ne.s32.totalorder %s62, %s76
      %p78 = scmp.eq.s32.totalorder %s19, 0
      %p79 = por %p77, %p78
      %s80 = ssub.s32 %s20, %s32
      %p81 = scmp.eq.s32.totalorder %s80, 0
      %s83 = sadd.s32 %s82, 1
      %s84 = scalar_select %p81, %s82, %s83
      %p87 = pneg %p81
      %p88 = scmp.eq.s32.totalorder %s13, 9
      %p89 = por %p87, %p88
      %p90 = scmp.ne.s32.totalorder %s82, %s85
      %p91 = scmp.eq.s32.totalorder %s13, 0
      %p92 = por %p90, %p91
      %p93 = scmp.ne.s32.totalorder %s82, %s85
      %p94 = scmp.eq.s32.totalorder %s18, 9
      %p95 = por %p93, %p94
      %p96 = scmp.ne.s32.totalorder %s85, %s86
      %p97 = scmp.eq.s32.totalorder %s18, 0
      %p98 = por %p96, %p97
      %p99 = scmp.ne.s32.totalorder %s85, %s86
      %p100 = scmp.eq.s32.totalorder %s19, 9
      %p101 = por %p99, %p100
      %p103 = scmp.ne.s32.totalorder %s86, %s102
      %p104 = scmp.eq.s32.totalorder %s19, 0
      %p105 = por %p103, %p104
      %s106 = ssub.s32 %s21, %s28
      %s107 = ssub.s32 %s20, %s32
      %s108 = sor.u32 %s106, %s107
      %p109 = scmp.eq.s32.totalorder %s108, 0
      %s111 = sadd.s32 %s110, 1
      %s112 = scalar_select %p109, %s110, %s111
      %p115 = pneg %p109
      %p116 = scmp.eq.s32.totalorder %s13, 9
      %p117 = por %p115, %p116
      %p118 = scmp.ne.s32.totalorder %s110, %s113
      %p119 = scmp.eq.s32.totalorder %s13, 0
      %p120 = por %p118, %p119
      %p121 = scmp.ne.s32.totalorder %s110, %s113
      %p122 = scmp.eq.s32.totalorder %s18, 9
      %p123 = por %p121, %p122
      %p124 = scmp.ne.s32.totalorder %s113, %s114
      %p125 = scmp.eq.s32.totalorder %s18, 0
      %p126 = por %p124, %p125
      %p127 = scmp.ne.s32.totalorder %s113, %s114
      %p128 = scmp.eq.s32.totalorder %s19, 9
      %p129 = por %p127, %p128
      %p131 = scmp.ne.s32.totalorder %s114, %s130
      %p132 = scmp.eq.s32.totalorder %s19, 0
      %p133 = por %p131, %p132
      %p134 = scmp.le.s32.totalorder 1, %s13
      %p135 = scmp.lt.s32.totalorder %s13, 11
      %p136 = pnand %p134, %p135
      %p137 = pneg %p136
      // Predicated region
      $region9: #{forward_pallas.2} parent=5 // pred_check
        _
      $region10: #{forward_pallas.2} parent=5 // pred_check_branch
        %139 = sbr.rel (%p136) target = $region12
      $region11: #{forward_pallas.2} parent=5 // pred_region
        %s140 = ssub.s32 %s13, 1
        // Predicated region
        $region13: #{forward_pallas.2} parent=11 // pred_check
          %p141 = pneg %p72
        $region14: #{forward_pallas.2} parent=11 // pred_check_branch
          %143 = sbr.rel (%p141) target = $region16
        $region15: #{forward_pallas.2} parent=11 // pred_region
          %145 = vsyncadd [#allocation3], 0
          %s146 = sshll.u32 %s1, 4
          %s147 = int_to_ptr.hbm [resolvable:$true] %s146
          %s148 = sshll.u32 [#allocation2], 4
          %s149 = int_to_ptr.vmem [resolvable:$true] %s148
          %154 = dma.hbm_to_vmem [thread:$0]  %s147, 32768, %s149, [#allocation3], 1024, 1024, 64
        $region16: #{forward_pallas.2} parent=11 // pred_fallthru
          _
      $region12: #{forward_pallas.2} parent=5 // pred_fallthru
        _
      %p155 = scmp.lt.s32.totalorder %s13, 10
      // Predicated region
      $region17: #{forward_pallas.2} parent=5 // pred_check
        %p156 = pneg %p155
      $region18: #{forward_pallas.2} parent=5 // pred_check_branch
        %158 = sbr.rel (%p156) target = $region20
      $region19: #{forward_pallas.2} parent=5 // pred_region
        // Predicated region
        $region21: #{forward_pallas.2} parent=19 // pred_check
          %p159 = pneg %p45
        $region22: #{forward_pallas.2} parent=19 // pred_check_branch
          %161 = sbr.rel (%p159) target = $region24
        $region23: #{forward_pallas.2} parent=19 // pred_region
          %p162 = scmp.lt.s32.totalorder %s21, 1
          %s163 = scalar_select %p162, %s21, 1
          %s164 = smul.addr %s163, 8
          %s165 = scalar_lea.vmem %s0, %s164
        $region24: #{forward_pallas.2} parent=19 // pred_fallthru
          _
        // Predicated region
        $region25: #{forward_pallas.2} parent=19 // pred_check
          %p166 = pneg %p92
        $region26: #{forward_pallas.2} parent=19 // pred_check_branch
          %168 = sbr.rel (%p166) target = $region28
        $region27: #{forward_pallas.2} parent=19 // pred_region
          %s169 = sand.u32 %s82, 1
          %s170 = scalar_lea.sflag [#allocation5], %s169
          %s171 = sand.u32 %s82, 1
          %s172 = smul.addr %s171, 2560
          %s173 = scalar_lea.vmem [#allocation4], %s172
          %s174 = smul.u32 5, %s20
          %176 = vsyncadd %s170, 0
          %s177 = smul.addr %s174, 4
          %s178 = scalar_lea.hbm %s2, %s177
          %s179 = sshll.u32 %s178, 4
          %s180 = int_to_ptr.hbm [resolvable:$true] %s179
          %s181 = sshll.u32 %s173, 4
          %s182 = int_to_ptr.vmem [resolvable:$true] %s181
          %187 = dma.hbm_to_vmem [thread:$0]  %s180, 40960, %s182, %s170, 1600, 320, 20
        $region28: #{forward_pallas.2} parent=19 // pred_fallthru
          _
      $region20: #{forward_pallas.2} parent=5 // pred_fallthru
        _
      %p188 = scmp.le.s32.totalorder 1, %s13
      %p189 = scmp.lt.s32.totalorder %s13, 11
      %p190 = pnand %p188, %p189
      %p191 = pneg %p190
      // Predicated region
      $region29: #{forward_pallas.2} parent=5 // pred_check
        _
      $region30: #{forward_pallas.2} parent=5 // pred_check_branch
        %193 = sbr.rel (%p190) target = $region32
      $region31: #{forward_pallas.2} parent=5 // pred_region
        %s194 = ssub.s32 %s13, 1
        // Predicated region
        $region33: #{forward_pallas.2} parent=31 // pred_check
          %p195 = pneg %p72
        $region34: #{forward_pallas.2} parent=31 // pred_check_branch
          %197 = sbr.rel (%p195) target = $region36
        $region35: #{forward_pallas.2} parent=31 // pred_region
          %199 = dma.done [#allocation3], 32768
        $region36: #{forward_pallas.2} parent=31 // pred_fallthru
          _
        %s200 = sand.u32 %s85, 1
        %s201 = scalar_lea.sflag [#allocation5], %s200
        %s202 = sand.u32 %s85, 1
        %s203 = smul.addr %s202, 2560
        %s204 = scalar_lea.vmem [#allocation4], %s203
        // Predicated region
        $region37: #{forward_pallas.2} parent=31 // pred_check
          %p205 = pneg %p98
        $region38: #{forward_pallas.2} parent=31 // pred_check_branch
          %207 = sbr.rel (%p205) target = $region40
        $region39: #{forward_pallas.2} parent=31 // pred_region
          %209 = dma.done %s201, 40960
        $region40: #{forward_pallas.2} parent=31 // pred_fallthru
          _
        %p210 = scmp.lt.s32.totalorder %s23, 1
        %s211 = scalar_select %p210, %s23, 1
        %s212 = smul.addr %s211, 8
        %s213 = scalar_lea.vmem %s0, %s212
        %p214 = pneg %p51
        %p215 = pneg %p48
        %p216 = pneg %p72
        %p217 = pneg %p69
        %s218 = sand.u32 %s85, 1
        %s219 = scalar_lea.sflag [#allocation5], %s218
        %s220 = sand.u32 %s85, 1
        %s221 = smul.addr %s220, 2560
        %s222 = scalar_lea.vmem [#allocation4], %s221
        %p223 = pneg %p98
        %p224 = pneg %p95
        %p225 = pneg %p126
        %p226 = pneg %p123
        %s227 = sand.u32 %s113, 1
        %s228 = sand.u32 %s113, 1
        %s229 = smul.addr %s228, 640
        %s230 = scalar_lea.vmem [#allocation6], %s229
        %p231 = scmp.lt.s32.totalorder %s23, 1
        %s232 = scalar_select %p231, %s23, 1
        %s233 = smul.addr %s232, 8
        %s234 = scalar_lea.vmem %s0, %s233
        %s235 = smul.u32 5, %s22
        %s236 = smul.u32 32, %s23
        %s237 = smul.u32 5, %s22
        %v238 = vld [vmem:[#allocation2] sm:$0xff]
        %v239 = vld [vmem:[#allocation2 + $0x8] sm:$0xff]
        %v240 = vld [vmem:[#allocation2 + $0x10] sm:$0xff]
        %v241 = vld [vmem:[#allocation2 + $0x18] sm:$0xff]
        %v242 = vld [vmem:[#allocation2 + $0x20] sm:$0xff]
        %v243 = vld [vmem:[#allocation2 + $0x28] sm:$0xff]
        %v244 = vld [vmem:[#allocation2 + $0x30] sm:$0xff]
        %v245 = vld [vmem:[#allocation2 + $0x38] sm:$0xff]
        %v246 = vld [vmem:[#allocation2 + $0x40] sm:$0xff]
        %v247 = vld [vmem:[#allocation2 + $0x48] sm:$0xff]
        %v248 = vld [vmem:[#allocation2 + $0x50] sm:$0xff]
        %v249 = vld [vmem:[#allocation2 + $0x58] sm:$0xff]
        %v250 = vld [vmem:[#allocation2 + $0x60] sm:$0xff]
        %v251 = vld [vmem:[#allocation2 + $0x68] sm:$0xff]
        %v252 = vld [vmem:[#allocation2 + $0x70] sm:$0xff]
        %v253 = vld [vmem:[#allocation2 + $0x78] sm:$0xff]
        %v254 = vld [vmem:[#allocation2 + $0x80] sm:$0xff]
        %v255 = vld [vmem:[#allocation2 + $0x88] sm:$0xff]
        %v256 = vld [vmem:[#allocation2 + $0x90] sm:$0xff]
        %v257 = vld [vmem:[#allocation2 + $0x98] sm:$0xff]
        %v258 = vld [vmem:[#allocation2 + $0xa0] sm:$0xff]
        %v259 = vld [vmem:[#allocation2 + $0xa8] sm:$0xff]
        %v260 = vld [vmem:[#allocation2 + $0xb0] sm:$0xff]
        %v261 = vld [vmem:[#allocation2 + $0xb8] sm:$0xff]
        %v262 = vld [vmem:[#allocation2 + $0xc0] sm:$0xff]
        %v263 = vld [vmem:[#allocation2 + $0xc8] sm:$0xff]
        %v264 = vld [vmem:[#allocation2 + $0xd0] sm:$0xff]
        %v265 = vld [vmem:[#allocation2 + $0xd8] sm:$0xff]
        %v266 = vld [vmem:[#allocation2 + $0xe0] sm:$0xff]
        %v267 = vld [vmem:[#allocation2 + $0xe8] sm:$0xff]
        %v268 = vld [vmem:[#allocation2 + $0xf0] sm:$0xff]
        %v269 = vld [vmem:[#allocation2 + $0xf8] sm:$0xff]
        %v270 = vld [vmem:[#allocation2 + $0x100] sm:$0xff]
        %v271 = vld [vmem:[#allocation2 + $0x108] sm:$0xff]
        %v272 = vld [vmem:[#allocation2 + $0x110] sm:$0xff]
        %v273 = vld [vmem:[#allocation2 + $0x118] sm:$0xff]
        %v274 = vld [vmem:[#allocation2 + $0x120] sm:$0xff]
        %v275 = vld [vmem:[#allocation2 + $0x128] sm:$0xff]
        %v276 = vld [vmem:[#allocation2 + $0x130] sm:$0xff]
        %v277 = vld [vmem:[#allocation2 + $0x138] sm:$0xff]
        %v278 = vld [vmem:[#allocation2 + $0x140] sm:$0xff]
        %v279 = vld [vmem:[#allocation2 + $0x148] sm:$0xff]
        %v280 = vld [vmem:[#allocation2 + $0x150] sm:$0xff]
        %v281 = vld [vmem:[#allocation2 + $0x158] sm:$0xff]
        %v282 = vld [vmem:[#allocation2 + $0x160] sm:$0xff]
        %v283 = vld [vmem:[#allocation2 + $0x168] sm:$0xff]
        %v284 = vld [vmem:[#allocation2 + $0x170] sm:$0xff]
        %v285 = vld [vmem:[#allocation2 + $0x178] sm:$0xff]
        %v286 = vld [vmem:[#allocation2 + $0x180] sm:$0xff]
        %v287 = vld [vmem:[#allocation2 + $0x188] sm:$0xff]
        %v288 = vld [vmem:[#allocation2 + $0x190] sm:$0xff]
        %v289 = vld [vmem:[#allocation2 + $0x198] sm:$0xff]
        %v290 = vld [vmem:[#allocation2 + $0x1a0] sm:$0xff]
        %v291 = vld [vmem:[#allocation2 + $0x1a8] sm:$0xff]
        %v292 = vld [vmem:[#allocation2 + $0x1b0] sm:$0xff]
        %v293 = vld [vmem:[#allocation2 + $0x1b8] sm:$0xff]
        %v294 = vld [vmem:[#allocation2 + $0x1c0] sm:$0xff]
        %v295 = vld [vmem:[#allocation2 + $0x1c8] sm:$0xff]
        %v296 = vld [vmem:[#allocation2 + $0x1d0] sm:$0xff]
        %v297 = vld [vmem:[#allocation2 + $0x1d8] sm:$0xff]
        %v298 = vld [vmem:[#allocation2 + $0x1e0] sm:$0xff]
        %v299 = vld [vmem:[#allocation2 + $0x1e8] sm:$0xff]
        %v300 = vld [vmem:[#allocation2 + $0x1f0] sm:$0xff]
        %v301 = vld [vmem:[#allocation2 + $0x1f8] sm:$0xff]
        %v302 = vld [vmem:[#allocation2 + $0x200] sm:$0xff]
        %v303 = vld [vmem:[#allocation2 + $0x208] sm:$0xff]
        %v304 = vld [vmem:[#allocation2 + $0x210] sm:$0xff]
        %v305 = vld [vmem:[#allocation2 + $0x218] sm:$0xff]
        %v306 = vld [vmem:[#allocation2 + $0x220] sm:$0xff]
        %v307 = vld [vmem:[#allocation2 + $0x228] sm:$0xff]
        %v308 = vld [vmem:[#allocation2 + $0x230] sm:$0xff]
        %v309 = vld [vmem:[#allocation2 + $0x238] sm:$0xff]
        %v310 = vld [vmem:[#allocation2 + $0x240] sm:$0xff]
        %v311 = vld [vmem:[#allocation2 + $0x248] sm:$0xff]
        %v312 = vld [vmem:[#allocation2 + $0x250] sm:$0xff]
        %v313 = vld [vmem:[#allocation2 + $0x258] sm:$0xff]
        %v314 = vld [vmem:[#allocation2 + $0x260] sm:$0xff]
        %v315 = vld [vmem:[#allocation2 + $0x268] sm:$0xff]
        %v316 = vld [vmem:[#allocation2 + $0x270] sm:$0xff]
        %v317 = vld [vmem:[#allocation2 + $0x278] sm:$0xff]
        %v318 = vld [vmem:[#allocation2 + $0x280] sm:$0xff]
        %v319 = vld [vmem:[#allocation2 + $0x288] sm:$0xff]
        %v320 = vld [vmem:[#allocation2 + $0x290] sm:$0xff]
        %v321 = vld [vmem:[#allocation2 + $0x298] sm:$0xff]
        %v322 = vld [vmem:[#allocation2 + $0x2a0] sm:$0xff]
        %v323 = vld [vmem:[#allocation2 + $0x2a8] sm:$0xff]
        %v324 = vld [vmem:[#allocation2 + $0x2b0] sm:$0xff]
        %v325 = vld [vmem:[#allocation2 + $0x2b8] sm:$0xff]
        %v326 = vld [vmem:[#allocation2 + $0x2c0] sm:$0xff]
        %v327 = vld [vmem:[#allocation2 + $0x2c8] sm:$0xff]
        %v328 = vld [vmem:[#allocation2 + $0x2d0] sm:$0xff]
        %v329 = vld [vmem:[#allocation2 + $0x2d8] sm:$0xff]
        %v330 = vld [vmem:[#allocation2 + $0x2e0] sm:$0xff]
        %v331 = vld [vmem:[#allocation2 + $0x2e8] sm:$0xff]
        %v332 = vld [vmem:[#allocation2 + $0x2f0] sm:$0xff]
        %v333 = vld [vmem:[#allocation2 + $0x2f8] sm:$0xff]
        %v334 = vld [vmem:[#allocation2 + $0x300] sm:$0xff]
        %v335 = vld [vmem:[#allocation2 + $0x308] sm:$0xff]
        %v336 = vld [vmem:[#allocation2 + $0x310] sm:$0xff]
        %v337 = vld [vmem:[#allocation2 + $0x318] sm:$0xff]
        %v338 = vld [vmem:[#allocation2 + $0x320] sm:$0xff]
        %v339 = vld [vmem:[#allocation2 + $0x328] sm:$0xff]
        %v340 = vld [vmem:[#allocation2 + $0x330] sm:$0xff]
        %v341 = vld [vmem:[#allocation2 + $0x338] sm:$0xff]
        %v342 = vld [vmem:[#allocation2 + $0x340] sm:$0xff]
        %v343 = vld [vmem:[#allocation2 + $0x348] sm:$0xff]
        %v344 = vld [vmem:[#allocation2 + $0x350] sm:$0xff]
        %v345 = vld [vmem:[#allocation2 + $0x358] sm:$0xff]
        %v346 = vld [vmem:[#allocation2 + $0x360] sm:$0xff]
        %v347 = vld [vmem:[#allocation2 + $0x368] sm:$0xff]
        %v348 = vld [vmem:[#allocation2 + $0x370] sm:$0xff]
        %v349 = vld [vmem:[#allocation2 + $0x378] sm:$0xff]
        %v350 = vld [vmem:[#allocation2 + $0x380] sm:$0xff]
        %v351 = vld [vmem:[#allocation2 + $0x388] sm:$0xff]
        %v352 = vld [vmem:[#allocation2 + $0x390] sm:$0xff]
        %v353 = vld [vmem:[#allocation2 + $0x398] sm:$0xff]
        %v354 = vld [vmem:[#allocation2 + $0x3a0] sm:$0xff]
        %v355 = vld [vmem:[#allocation2 + $0x3a8] sm:$0xff]
        %v356 = vld [vmem:[#allocation2 + $0x3b0] sm:$0xff]
        %v357 = vld [vmem:[#allocation2 + $0x3b8] sm:$0xff]
        %v358 = vld [vmem:[#allocation2 + $0x3c0] sm:$0xff]
        %v359 = vld [vmem:[#allocation2 + $0x3c8] sm:$0xff]
        %v360 = vld [vmem:[#allocation2 + $0x3d0] sm:$0xff]
        %v361 = vld [vmem:[#allocation2 + $0x3d8] sm:$0xff]
        %v362 = vld [vmem:[#allocation2 + $0x3e0] sm:$0xff]
        %v363 = vld [vmem:[#allocation2 + $0x3e8] sm:$0xff]
        %v364 = vld [vmem:[#allocation2 + $0x3f0] sm:$0xff]
        %v365 = vld [vmem:[#allocation2 + $0x3f8] sm:$0xff]
        %v366 = vld [vmem:[#allocation2 + $0x400] sm:$0xff]
        %v367 = vld [vmem:[#allocation2 + $0x408] sm:$0xff]
        %v368 = vld [vmem:[#allocation2 + $0x410] sm:$0xff]
        %v369 = vld [vmem:[#allocation2 + $0x418] sm:$0xff]
        %v370 = vld [vmem:[#allocation2 + $0x420] sm:$0xff]
        %v371 = vld [vmem:[#allocation2 + $0x428] sm:$0xff]
        %v372 = vld [vmem:[#allocation2 + $0x430] sm:$0xff]
        %v373 = vld [vmem:[#allocation2 + $0x438] sm:$0xff]
        %v374 = vld [vmem:[#allocation2 + $0x440] sm:$0xff]
        %v375 = vld [vmem:[#allocation2 + $0x448] sm:$0xff]
        %v376 = vld [vmem:[#allocation2 + $0x450] sm:$0xff]
        %v377 = vld [vmem:[#allocation2 + $0x458] sm:$0xff]
        %v378 = vld [vmem:[#allocation2 + $0x460] sm:$0xff]
        %v379 = vld [vmem:[#allocation2 + $0x468] sm:$0xff]
        %v380 = vld [vmem:[#allocation2 + $0x470] sm:$0xff]
        %v381 = vld [vmem:[#allocation2 + $0x478] sm:$0xff]
        %v382 = vld [vmem:[#allocation2 + $0x480] sm:$0xff]
        %v383 = vld [vmem:[#allocation2 + $0x488] sm:$0xff]
        %v384 = vld [vmem:[#allocation2 + $0x490] sm:$0xff]
        %v385 = vld [vmem:[#allocation2 + $0x498] sm:$0xff]
        %v386 = vld [vmem:[#allocation2 + $0x4a0] sm:$0xff]
        %v387 = vld [vmem:[#allocation2 + $0x4a8] sm:$0xff]
        %v388 = vld [vmem:[#allocation2 + $0x4b0] sm:$0xff]
        %v389 = vld [vmem:[#allocation2 + $0x4b8] sm:$0xff]
        %v390 = vld [vmem:[#allocation2 + $0x4c0] sm:$0xff]
        %v391 = vld [vmem:[#allocation2 + $0x4c8] sm:$0xff]
        %v392 = vld [vmem:[#allocation2 + $0x4d0] sm:$0xff]
        %v393 = vld [vmem:[#allocation2 + $0x4d8] sm:$0xff]
        %v394 = vld [vmem:[#allocation2 + $0x4e0] sm:$0xff]
        %v395 = vld [vmem:[#allocation2 + $0x4e8] sm:$0xff]
        %v396 = vld [vmem:[#allocation2 + $0x4f0] sm:$0xff]
        %v397 = vld [vmem:[#allocation2 + $0x4f8] sm:$0xff]
        %v398 = vld [vmem:[#allocation2 + $0x500] sm:$0xff]
        %v399 = vld [vmem:[#allocation2 + $0x508] sm:$0xff]
        %v400 = vld [vmem:[#allocation2 + $0x510] sm:$0xff]
        %v401 = vld [vmem:[#allocation2 + $0x518] sm:$0xff]
        %v402 = vld [vmem:[#allocation2 + $0x520] sm:$0xff]
        %v403 = vld [vmem:[#allocation2 + $0x528] sm:$0xff]
        %v404 = vld [vmem:[#allocation2 + $0x530] sm:$0xff]
        %v405 = vld [vmem:[#allocation2 + $0x538] sm:$0xff]
        %v406 = vld [vmem:[#allocation2 + $0x540] sm:$0xff]
        %v407 = vld [vmem:[#allocation2 + $0x548] sm:$0xff]
        %v408 = vld [vmem:[#allocation2 + $0x550] sm:$0xff]
        %v409 = vld [vmem:[#allocation2 + $0x558] sm:$0xff]
        %v410 = vld [vmem:[#allocation2 + $0x560] sm:$0xff]
        %v411 = vld [vmem:[#allocation2 + $0x568] sm:$0xff]
        %v412 = vld [vmem:[#allocation2 + $0x570] sm:$0xff]
        %v413 = vld [vmem:[#allocation2 + $0x578] sm:$0xff]
        %v414 = vld [vmem:[#allocation2 + $0x580] sm:$0xff]
        %v415 = vld [vmem:[#allocation2 + $0x588] sm:$0xff]
        %v416 = vld [vmem:[#allocation2 + $0x590] sm:$0xff]
        %v417 = vld [vmem:[#allocation2 + $0x598] sm:$0xff]
        %v418 = vld [vmem:[#allocation2 + $0x5a0] sm:$0xff]
        %v419 = vld [vmem:[#allocation2 + $0x5a8] sm:$0xff]
        %v420 = vld [vmem:[#allocation2 + $0x5b0] sm:$0xff]
        %v421 = vld [vmem:[#allocation2 + $0x5b8] sm:$0xff]
        %v422 = vld [vmem:[#allocation2 + $0x5c0] sm:$0xff]
        %v423 = vld [vmem:[#allocation2 + $0x5c8] sm:$0xff]
        %v424 = vld [vmem:[#allocation2 + $0x5d0] sm:$0xff]
        %v425 = vld [vmem:[#allocation2 + $0x5d8] sm:$0xff]
        %v426 = vld [vmem:[#allocation2 + $0x5e0] sm:$0xff]
        %v427 = vld [vmem:[#allocation2 + $0x5e8] sm:$0xff]
        %v428 = vld [vmem:[#allocation2 + $0x5f0] sm:$0xff]
        %v429 = vld [vmem:[#allocation2 + $0x5f8] sm:$0xff]
        %v430 = vld [vmem:[#allocation2 + $0x600] sm:$0xff]
        %v431 = vld [vmem:[#allocation2 + $0x608] sm:$0xff]
        %v432 = vld [vmem:[#allocation2 + $0x610] sm:$0xff]
        %v433 = vld [vmem:[#allocation2 + $0x618] sm:$0xff]
        %v434 = vld [vmem:[#allocation2 + $0x620] sm:$0xff]
        %v435 = vld [vmem:[#allocation2 + $0x628] sm:$0xff]
        %v436 = vld [vmem:[#allocation2 + $0x630] sm:$0xff]
        %v437 = vld [vmem:[#allocation2 + $0x638] sm:$0xff]
        %v438 = vld [vmem:[#allocation2 + $0x640] sm:$0xff]
        %v439 = vld [vmem:[#allocation2 + $0x648] sm:$0xff]
        %v440 = vld [vmem:[#allocation2 + $0x650] sm:$0xff]
        %v441 = vld [vmem:[#allocation2 + $0x658] sm:$0xff]
        %v442 = vld [vmem:[#allocation2 + $0x660] sm:$0xff]
        %v443 = vld [vmem:[#allocation2 + $0x668] sm:$0xff]
        %v444 = vld [vmem:[#allocation2 + $0x670] sm:$0xff]
        %v445 = vld [vmem:[#allocation2 + $0x678] sm:$0xff]
        %v446 = vld [vmem:[#allocation2 + $0x680] sm:$0xff]
        %v447 = vld [vmem:[#allocation2 + $0x688] sm:$0xff]
        %v448 = vld [vmem:[#allocation2 + $0x690] sm:$0xff]
        %v449 = vld [vmem:[#allocation2 + $0x698] sm:$0xff]
        %v450 = vld [vmem:[#allocation2 + $0x6a0] sm:$0xff]
        %v451 = vld [vmem:[#allocation2 + $0x6a8] sm:$0xff]
        %v452 = vld [vmem:[#allocation2 + $0x6b0] sm:$0xff]
        %v453 = vld [vmem:[#allocation2 + $0x6b8] sm:$0xff]
        %v454 = vld [vmem:[#allocation2 + $0x6c0] sm:$0xff]
        %v455 = vld [vmem:[#allocation2 + $0x6c8] sm:$0xff]
        %v456 = vld [vmem:[#allocation2 + $0x6d0] sm:$0xff]
        %v457 = vld [vmem:[#allocation2 + $0x6d8] sm:$0xff]
        %v458 = vld [vmem:[#allocation2 + $0x6e0] sm:$0xff]
        %v459 = vld [vmem:[#allocation2 + $0x6e8] sm:$0xff]
        %v460 = vld [vmem:[#allocation2 + $0x6f0] sm:$0xff]
        %v461 = vld [vmem:[#allocation2 + $0x6f8] sm:$0xff]
        %v462 = vld [vmem:[#allocation2 + $0x700] sm:$0xff]
        %v463 = vld [vmem:[#allocation2 + $0x708] sm:$0xff]
        %v464 = vld [vmem:[#allocation2 + $0x710] sm:$0xff]
        %v465 = vld [vmem:[#allocation2 + $0x718] sm:$0xff]
        %v466 = vld [vmem:[#allocation2 + $0x720] sm:$0xff]
        %v467 = vld [vmem:[#allocation2 + $0x728] sm:$0xff]
        %v468 = vld [vmem:[#allocation2 + $0x730] sm:$0xff]
        %v469 = vld [vmem:[#allocation2 + $0x738] sm:$0xff]
        %v470 = vld [vmem:[#allocation2 + $0x740] sm:$0xff]
        %v471 = vld [vmem:[#allocation2 + $0x748] sm:$0xff]
        %v472 = vld [vmem:[#allocation2 + $0x750] sm:$0xff]
        %v473 = vld [vmem:[#allocation2 + $0x758] sm:$0xff]
        %v474 = vld [vmem:[#allocation2 + $0x760] sm:$0xff]
        %v475 = vld [vmem:[#allocation2 + $0x768] sm:$0xff]
        %v476 = vld [vmem:[#allocation2 + $0x770] sm:$0xff]
        %v477 = vld [vmem:[#allocation2 + $0x778] sm:$0xff]
        %v478 = vld [vmem:[#allocation2 + $0x780] sm:$0xff]
        %v479 = vld [vmem:[#allocation2 + $0x788] sm:$0xff]
        %v480 = vld [vmem:[#allocation2 + $0x790] sm:$0xff]
        %v481 = vld [vmem:[#allocation2 + $0x798] sm:$0xff]
        %v482 = vld [vmem:[#allocation2 + $0x7a0] sm:$0xff]
        %v483 = vld [vmem:[#allocation2 + $0x7a8] sm:$0xff]
        %v484 = vld [vmem:[#allocation2 + $0x7b0] sm:$0xff]
        %v485 = vld [vmem:[#allocation2 + $0x7b8] sm:$0xff]
        %v486 = vld [vmem:[#allocation2 + $0x7c0] sm:$0xff]
        %v487 = vld [vmem:[#allocation2 + $0x7c8] sm:$0xff]
        %v488 = vld [vmem:[#allocation2 + $0x7d0] sm:$0xff]
        %v489 = vld [vmem:[#allocation2 + $0x7d8] sm:$0xff]
        %v490 = vld [vmem:[#allocation2 + $0x7e0] sm:$0xff]
        %v491 = vld [vmem:[#allocation2 + $0x7e8] sm:$0xff]
        %v492 = vld [vmem:[#allocation2 + $0x7f0] sm:$0xff]
        %v493 = vld [vmem:[#allocation2 + $0x7f8] sm:$0xff]
        %v494 = vld [vmem:[%s234] sm:$0xff]
        %v496 = vperm.slane %v494, 0
        %v497 = vperm.slane %v494, 1
        %v498 = vperm.slane %v494, 2
        %v499 = vperm.slane %v494, 3
        %v500 = vperm.slane %v494, 4
        %v501 = vperm.slane %v494, 5
        %v502 = vperm.slane %v494, 6
        %v503 = vperm.slane %v494, 7
        %v512 = vmul.f32 %v238, %v496
        %v513 = vmul.f32 %v239, %v497
        %v514 = vmul.f32 %v240, %v498
        %v515 = vmul.f32 %v241, %v499
        %v516 = vmul.f32 %v242, %v500
        %v517 = vmul.f32 %v243, %v501
        %v518 = vmul.f32 %v244, %v502
        %v519 = vmul.f32 %v245, %v503
        %v520 = vmul.f32 %v246, %v496
        %v521 = vmul.f32 %v247, %v497
        %v522 = vmul.f32 %v248, %v498
        %v523 = vmul.f32 %v249, %v499
        %v524 = vmul.f32 %v250, %v500
        %v525 = vmul.f32 %v251, %v501
        %v526 = vmul.f32 %v252, %v502
        %v527 = vmul.f32 %v253, %v503
        %v528 = vmul.f32 %v254, %v496
        %v529 = vmul.f32 %v255, %v497
        %v530 = vmul.f32 %v256, %v498
        %v531 = vmul.f32 %v257, %v499
        %v532 = vmul.f32 %v258, %v500
        %v533 = vmul.f32 %v259, %v501
        %v534 = vmul.f32 %v260, %v502
        %v535 = vmul.f32 %v261, %v503
        %v536 = vmul.f32 %v262, %v496
        %v537 = vmul.f32 %v263, %v497
        %v538 = vmul.f32 %v264, %v498
        %v539 = vmul.f32 %v265, %v499
        %v540 = vmul.f32 %v266, %v500
        %v541 = vmul.f32 %v267, %v501
        %v542 = vmul.f32 %v268, %v502
        %v543 = vmul.f32 %v269, %v503
        %v544 = vmul.f32 %v270, %v496
        %v545 = vmul.f32 %v271, %v497
        %v546 = vmul.f32 %v272, %v498
        %v547 = vmul.f32 %v273, %v499
        %v548 = vmul.f32 %v274, %v500
        %v549 = vmul.f32 %v275, %v501
        %v550 = vmul.f32 %v276, %v502
        %v551 = vmul.f32 %v277, %v503
        %v552 = vmul.f32 %v278, %v496
        %v553 = vmul.f32 %v279, %v497
        %v554 = vmul.f32 %v280, %v498
        %v555 = vmul.f32 %v281, %v499
        %v556 = vmul.f32 %v282, %v500
        %v557 = vmul.f32 %v283, %v501
        %v558 = vmul.f32 %v284, %v502
        %v559 = vmul.f32 %v285, %v503
        %v560 = vmul.f32 %v286, %v496
        %v561 = vmul.f32 %v287, %v497
        %v562 = vmul.f32 %v288, %v498
        %v563 = vmul.f32 %v289, %v499
        %v564 = vmul.f32 %v290, %v500
        %v565 = vmul.f32 %v291, %v501
        %v566 = vmul.f32 %v292, %v502
        %v567 = vmul.f32 %v293, %v503
        %v568 = vmul.f32 %v294, %v496
        %v569 = vmul.f32 %v295, %v497
        %v570 = vmul.f32 %v296, %v498
        %v571 = vmul.f32 %v297, %v499
        %v572 = vmul.f32 %v298, %v500
        %v573 = vmul.f32 %v299, %v501
        %v574 = vmul.f32 %v300, %v502
        %v575 = vmul.f32 %v301, %v503
        %v576 = vmul.f32 %v302, %v496
        %v577 = vmul.f32 %v303, %v497
        %v578 = vmul.f32 %v304, %v498
        %v579 = vmul.f32 %v305, %v499
        %v580 = vmul.f32 %v306, %v500
        %v581 = vmul.f32 %v307, %v501
        %v582 = vmul.f32 %v308, %v502
        %v583 = vmul.f32 %v309, %v503
        %v584 = vmul.f32 %v310, %v496
        %v585 = vmul.f32 %v311, %v497
        %v586 = vmul.f32 %v312, %v498
        %v587 = vmul.f32 %v313, %v499
        %v588 = vmul.f32 %v314, %v500
        %v589 = vmul.f32 %v315, %v501
        %v590 = vmul.f32 %v316, %v502
        %v591 = vmul.f32 %v317, %v503
        %v592 = vmul.f32 %v318, %v496
        %v593 = vmul.f32 %v319, %v497
        %v594 = vmul.f32 %v320, %v498
        %v595 = vmul.f32 %v321, %v499
        %v596 = vmul.f32 %v322, %v500
        %v597 = vmul.f32 %v323, %v501
        %v598 = vmul.f32 %v324, %v502
        %v599 = vmul.f32 %v325, %v503
        %v600 = vmul.f32 %v326, %v496
        %v601 = vmul.f32 %v327, %v497
        %v602 = vmul.f32 %v328, %v498
        %v603 = vmul.f32 %v329, %v499
        %v604 = vmul.f32 %v330, %v500
        %v605 = vmul.f32 %v331, %v501
        %v606 = vmul.f32 %v332, %v502
        %v607 = vmul.f32 %v333, %v503
        %v608 = vmul.f32 %v334, %v496
        %v609 = vmul.f32 %v335, %v497
        %v610 = vmul.f32 %v336, %v498
        %v611 = vmul.f32 %v337, %v499
        %v612 = vmul.f32 %v338, %v500
        %v613 = vmul.f32 %v339, %v501
        %v614 = vmul.f32 %v340, %v502
        %v615 = vmul.f32 %v341, %v503
        %v616 = vmul.f32 %v342, %v496
        %v617 = vmul.f32 %v343, %v497
        %v618 = vmul.f32 %v344, %v498
        %v619 = vmul.f32 %v345, %v499
        %v620 = vmul.f32 %v346, %v500
        %v621 = vmul.f32 %v347, %v501
        %v622 = vmul.f32 %v348, %v502
        %v623 = vmul.f32 %v349, %v503
        %v624 = vmul.f32 %v350, %v496
        %v625 = vmul.f32 %v351, %v497
        %v626 = vmul.f32 %v352, %v498
        %v627 = vmul.f32 %v353, %v499
        %v628 = vmul.f32 %v354, %v500
        %v629 = vmul.f32 %v355, %v501
        %v630 = vmul.f32 %v356, %v502
        %v631 = vmul.f32 %v357, %v503
        %v632 = vmul.f32 %v358, %v496
        %v633 = vmul.f32 %v359, %v497
        %v634 = vmul.f32 %v360, %v498
        %v635 = vmul.f32 %v361, %v499
        %v636 = vmul.f32 %v362, %v500
        %v637 = vmul.f32 %v363, %v501
        %v638 = vmul.f32 %v364, %v502
        %v639 = vmul.f32 %v365, %v503
        %v640 = vmul.f32 %v366, %v496
        %v641 = vmul.f32 %v367, %v497
        %v642 = vmul.f32 %v368, %v498
        %v643 = vmul.f32 %v369, %v499
        %v644 = vmul.f32 %v370, %v500
        %v645 = vmul.f32 %v371, %v501
        %v646 = vmul.f32 %v372, %v502
        %v647 = vmul.f32 %v373, %v503
        %v648 = vmul.f32 %v374, %v496
        %v649 = vmul.f32 %v375, %v497
        %v650 = vmul.f32 %v376, %v498
        %v651 = vmul.f32 %v377, %v499
        %v652 = vmul.f32 %v378, %v500
        %v653 = vmul.f32 %v379, %v501
        %v654 = vmul.f32 %v380, %v502
        %v655 = vmul.f32 %v381, %v503
        %v656 = vmul.f32 %v382, %v496
        %v657 = vmul.f32 %v383, %v497
        %v658 = vmul.f32 %v384, %v498
        %v659 = vmul.f32 %v385, %v499
        %v660 = vmul.f32 %v386, %v500
        %v661 = vmul.f32 %v387, %v501
        %v662 = vmul.f32 %v388, %v502
        %v663 = vmul.f32 %v389, %v503
        %v664 = vmul.f32 %v390, %v496
        %v665 = vmul.f32 %v391, %v497
        %v666 = vmul.f32 %v392, %v498
        %v667 = vmul.f32 %v393, %v499
        %v668 = vmul.f32 %v394, %v500
        %v669 = vmul.f32 %v395, %v501
        %v670 = vmul.f32 %v396, %v502
        %v671 = vmul.f32 %v397, %v503
        %v672 = vmul.f32 %v398, %v496
        %v673 = vmul.f32 %v399, %v497
        %v674 = vmul.f32 %v400, %v498
        %v675 = vmul.f32 %v401, %v499
        %v676 = vmul.f32 %v402, %v500
        %v677 = vmul.f32 %v403, %v501
        %v678 = vmul.f32 %v404, %v502
        %v679 = vmul.f32 %v405, %v503
        %v680 = vmul.f32 %v406, %v496
        %v681 = vmul.f32 %v407, %v497
        %v682 = vmul.f32 %v408, %v498
        %v683 = vmul.f32 %v409, %v499
        %v684 = vmul.f32 %v410, %v500
        %v685 = vmul.f32 %v411, %v501
        %v686 = vmul.f32 %v412, %v502
        %v687 = vmul.f32 %v413, %v503
        %v688 = vmul.f32 %v414, %v496
        %v689 = vmul.f32 %v415, %v497
        %v690 = vmul.f32 %v416, %v498
        %v691 = vmul.f32 %v417, %v499
        %v692 = vmul.f32 %v418, %v500
        %v693 = vmul.f32 %v419, %v501
        %v694 = vmul.f32 %v420, %v502
        %v695 = vmul.f32 %v421, %v503
        %v696 = vmul.f32 %v422, %v496
        %v697 = vmul.f32 %v423, %v497
        %v698 = vmul.f32 %v424, %v498
        %v699 = vmul.f32 %v425, %v499
        %v700 = vmul.f32 %v426, %v500
        %v701 = vmul.f32 %v427, %v501
        %v702 = vmul.f32 %v428, %v502
        %v703 = vmul.f32 %v429, %v503
        %v704 = vmul.f32 %v430, %v496
        %v705 = vmul.f32 %v431, %v497
        %v706 = vmul.f32 %v432, %v498
        %v707 = vmul.f32 %v433, %v499
        %v708 = vmul.f32 %v434, %v500
        %v709 = vmul.f32 %v435, %v501
        %v710 = vmul.f32 %v436, %v502
        %v711 = vmul.f32 %v437, %v503
        %v712 = vmul.f32 %v438, %v496
        %v713 = vmul.f32 %v439, %v497
        %v714 = vmul.f32 %v440, %v498
        %v715 = vmul.f32 %v441, %v499
        %v716 = vmul.f32 %v442, %v500
        %v717 = vmul.f32 %v443, %v501
        %v718 = vmul.f32 %v444, %v502
        %v719 = vmul.f32 %v445, %v503
        %v720 = vmul.f32 %v446, %v496
        %v721 = vmul.f32 %v447, %v497
        %v722 = vmul.f32 %v448, %v498
        %v723 = vmul.f32 %v449, %v499
        %v724 = vmul.f32 %v450, %v500
        %v725 = vmul.f32 %v451, %v501
        %v726 = vmul.f32 %v452, %v502
        %v727 = vmul.f32 %v453, %v503
        %v728 = vmul.f32 %v454, %v496
        %v729 = vmul.f32 %v455, %v497
        %v730 = vmul.f32 %v456, %v498
        %v731 = vmul.f32 %v457, %v499
        %v732 = vmul.f32 %v458, %v500
        %v733 = vmul.f32 %v459, %v501
        %v734 = vmul.f32 %v460, %v502
        %v735 = vmul.f32 %v461, %v503
        %v736 = vmul.f32 %v462, %v496
        %v737 = vmul.f32 %v463, %v497
        %v738 = vmul.f32 %v464, %v498
        %v739 = vmul.f32 %v465, %v499
        %v740 = vmul.f32 %v466, %v500
        %v741 = vmul.f32 %v467, %v501
        %v742 = vmul.f32 %v468, %v502
        %v743 = vmul.f32 %v469, %v503
        %v744 = vmul.f32 %v470, %v496
        %v745 = vmul.f32 %v471, %v497
        %v746 = vmul.f32 %v472, %v498
        %v747 = vmul.f32 %v473, %v499
        %v748 = vmul.f32 %v474, %v500
        %v749 = vmul.f32 %v475, %v501
        %v750 = vmul.f32 %v476, %v502
        %v751 = vmul.f32 %v477, %v503
        %v752 = vmul.f32 %v478, %v496
        %v753 = vmul.f32 %v479, %v497
        %v754 = vmul.f32 %v480, %v498
        %v755 = vmul.f32 %v481, %v499
        %v756 = vmul.f32 %v482, %v500
        %v757 = vmul.f32 %v483, %v501
        %v758 = vmul.f32 %v484, %v502
        %v759 = vmul.f32 %v485, %v503
        %v760 = vmul.f32 %v486, %v496
        %v761 = vmul.f32 %v487, %v497
        %v762 = vmul.f32 %v488, %v498
        %v763 = vmul.f32 %v489, %v499
        %v764 = vmul.f32 %v490, %v500
        %v765 = vmul.f32 %v491, %v501
        %v766 = vmul.f32 %v492, %v502
        %v767 = vmul.f32 %v493, %v503
        %v768 = vpack.c.bf16 %v520, %v512
        %v769 = vpack.c.bf16 %v521, %v513
        %v770 = vpack.c.bf16 %v522, %v514
        %v771 = vpack.c.bf16 %v523, %v515
        %v772 = vpack.c.bf16 %v524, %v516
        %v773 = vpack.c.bf16 %v525, %v517
        %v774 = vpack.c.bf16 %v526, %v518
        %v775 = vpack.c.bf16 %v527, %v519
        %v776 = vpack.c.bf16 %v536, %v528
        %v777 = vpack.c.bf16 %v537, %v529
        %v778 = vpack.c.bf16 %v538, %v530
        %v779 = vpack.c.bf16 %v539, %v531
        %v780 = vpack.c.bf16 %v540, %v532
        %v781 = vpack.c.bf16 %v541, %v533
        %v782 = vpack.c.bf16 %v542, %v534
        %v783 = vpack.c.bf16 %v543, %v535
        %v784 = vpack.c.bf16 %v552, %v544
        %v785 = vpack.c.bf16 %v553, %v545
        %v786 = vpack.c.bf16 %v554, %v546
        %v787 = vpack.c.bf16 %v555, %v547
        %v788 = vpack.c.bf16 %v556, %v548
        %v789 = vpack.c.bf16 %v557, %v549
        %v790 = vpack.c.bf16 %v558, %v550
        %v791 = vpack.c.bf16 %v559, %v551
        %v792 = vpack.c.bf16 %v568, %v560
        %v793 = vpack.c.bf16 %v569, %v561
        %v794 = vpack.c.bf16 %v570, %v562
        %v795 = vpack.c.bf16 %v571, %v563
        %v796 = vpack.c.bf16 %v572, %v564
        %v797 = vpack.c.bf16 %v573, %v565
        %v798 = vpack.c.bf16 %v574, %v566
        %v799 = vpack.c.bf16 %v575, %v567
        %v800 = vpack.c.bf16 %v584, %v576
        %v801 = vpack.c.bf16 %v585, %v577
        %v802 = vpack.c.bf16 %v586, %v578
        %v803 = vpack.c.bf16 %v587, %v579
        %v804 = vpack.c.bf16 %v588, %v580
        %v805 = vpack.c.bf16 %v589, %v581
        %v806 = vpack.c.bf16 %v590, %v582
        %v807 = vpack.c.bf16 %v591, %v583
        %v808 = vpack.c.bf16 %v600, %v592
        %v809 = vpack.c.bf16 %v601, %v593
        %v810 = vpack.c.bf16 %v602, %v594
        %v811 = vpack.c.bf16 %v603, %v595
        %v812 = vpack.c.bf16 %v604, %v596
        %v813 = vpack.c.bf16 %v605, %v597
        %v814 = vpack.c.bf16 %v606, %v598
        %v815 = vpack.c.bf16 %v607, %v599
        %v816 = vpack.c.bf16 %v616, %v608
        %v817 = vpack.c.bf16 %v617, %v609
        %v818 = vpack.c.bf16 %v618, %v610
        %v819 = vpack.c.bf16 %v619, %v611
        %v820 = vpack.c.bf16 %v620, %v612
        %v821 = vpack.c.bf16 %v621, %v613
        %v822 = vpack.c.bf16 %v622, %v614
        %v823 = vpack.c.bf16 %v623, %v615
        %v824 = vpack.c.bf16 %v632, %v624
        %v825 = vpack.c.bf16 %v633, %v625
        %v826 = vpack.c.bf16 %v634, %v626
        %v827 = vpack.c.bf16 %v635, %v627
        %v828 = vpack.c.bf16 %v636, %v628
        %v829 = vpack.c.bf16 %v637, %v629
        %v830 = vpack.c.bf16 %v638, %v630
        %v831 = vpack.c.bf16 %v639, %v631
        %v832 = vpack.c.bf16 %v648, %v640
        %v833 = vpack.c.bf16 %v649, %v641
        %v834 = vpack.c.bf16 %v650, %v642
        %v835 = vpack.c.bf16 %v651, %v643
        %v836 = vpack.c.bf16 %v652, %v644
        %v837 = vpack.c.bf16 %v653, %v645
        %v838 = vpack.c.bf16 %v654, %v646
        %v839 = vpack.c.bf16 %v655, %v647
        %v840 = vpack.c.bf16 %v664, %v656
        %v841 = vpack.c.bf16 %v665, %v657
        %v842 = vpack.c.bf16 %v666, %v658
        %v843 = vpack.c.bf16 %v667, %v659
        %v844 = vpack.c.bf16 %v668, %v660
        %v845 = vpack.c.bf16 %v669, %v661
        %v846 = vpack.c.bf16 %v670, %v662
        %v847 = vpack.c.bf16 %v671, %v663
        %v848 = vpack.c.bf16 %v680, %v672
        %v849 = vpack.c.bf16 %v681, %v673
        %v850 = vpack.c.bf16 %v682, %v674
        %v851 = vpack.c.bf16 %v683, %v675
        %v852 = vpack.c.bf16 %v684, %v676
        %v853 = vpack.c.bf16 %v685, %v677
        %v854 = vpack.c.bf16 %v686, %v678
        %v855 = vpack.c.bf16 %v687, %v679
        %v856 = vpack.c.bf16 %v696, %v688
        %v857 = vpack.c.bf16 %v697, %v689
        %v858 = vpack.c.bf16 %v698, %v690
        %v859 = vpack.c.bf16 %v699, %v691
        %v860 = vpack.c.bf16 %v700, %v692
        %v861 = vpack.c.bf16 %v701, %v693
        %v862 = vpack.c.bf16 %v702, %v694
        %v863 = vpack.c.bf16 %v703, %v695
        %v864 = vpack.c.bf16 %v712, %v704
        %v865 = vpack.c.bf16 %v713, %v705
        %v866 = vpack.c.bf16 %v714, %v706
        %v867 = vpack.c.bf16 %v715, %v707
        %v868 = vpack.c.bf16 %v716, %v708
        %v869 = vpack.c.bf16 %v717, %v709
        %v870 = vpack.c.bf16 %v718, %v710
        %v871 = vpack.c.bf16 %v719, %v711
        %v872 = vpack.c.bf16 %v728, %v720
        %v873 = vpack.c.bf16 %v729, %v721
        %v874 = vpack.c.bf16 %v730, %v722
        %v875 = vpack.c.bf16 %v731, %v723
        %v876 = vpack.c.bf16 %v732, %v724
        %v877 = vpack.c.bf16 %v733, %v725
        %v878 = vpack.c.bf16 %v734, %v726
        %v879 = vpack.c.bf16 %v735, %v727
        %v880 = vpack.c.bf16 %v744, %v736
        %v881 = vpack.c.bf16 %v745, %v737
        %v882 = vpack.c.bf16 %v746, %v738
        %v883 = vpack.c.bf16 %v747, %v739
        %v884 = vpack.c.bf16 %v748, %v740
        %v885 = vpack.c.bf16 %v749, %v741
        %v886 = vpack.c.bf16 %v750, %v742
        %v887 = vpack.c.bf16 %v751, %v743
        %v888 = vpack.c.bf16 %v760, %v752
        %v889 = vpack.c.bf16 %v761, %v753
        %v890 = vpack.c.bf16 %v762, %v754
        %v891 = vpack.c.bf16 %v763, %v755
        %v892 = vpack.c.bf16 %v764, %v756
        %v893 = vpack.c.bf16 %v765, %v757
        %v894 = vpack.c.bf16 %v766, %v758
        %v895 = vpack.c.bf16 %v767, %v759
        %v896 = vld [vmem:[%s204] sm:$0xff]
        %v897 = vld [vmem:[%s204 + $0x8] sm:$0xff]
        %v898 = vld [vmem:[%s204 + $0x10] sm:$0xf]
        %v899 = vld [vmem:[%s204 + $0x14] sm:$0xff]
        %v900 = vld [vmem:[%s204 + $0x1c] sm:$0xff]
        %v901 = vld [vmem:[%s204 + $0x24] sm:$0xf]
        %v902 = vld [vmem:[%s204 + $0x28] sm:$0xff]
        %v903 = vld [vmem:[%s204 + $0x30] sm:$0xff]
        %v904 = vld [vmem:[%s204 + $0x38] sm:$0xf]
        %v905 = vld [vmem:[%s204 + $0x3c] sm:$0xff]
        %v906 = vld [vmem:[%s204 + $0x44] sm:$0xff]
        %v907 = vld [vmem:[%s204 + $0x4c] sm:$0xf]
        %v908 = vld [vmem:[%s204 + $0x50] sm:$0xff]
        %v909 = vld [vmem:[%s204 + $0x58] sm:$0xff]
        %v910 = vld [vmem:[%s204 + $0x60] sm:$0xf]
        %v911 = vld [vmem:[%s204 + $0x64] sm:$0xff]
        %v912 = vld [vmem:[%s204 + $0x6c] sm:$0xff]
        %v913 = vld [vmem:[%s204 + $0x74] sm:$0xf]
        %v914 = vld [vmem:[%s204 + $0x78] sm:$0xff]
        %v915 = vld [vmem:[%s204 + $0x80] sm:$0xff]
        %v916 = vld [vmem:[%s204 + $0x88] sm:$0xf]
        %v917 = vld [vmem:[%s204 + $0x8c] sm:$0xff]
        %v918 = vld [vmem:[%s204 + $0x94] sm:$0xff]
        %v919 = vld [vmem:[%s204 + $0x9c] sm:$0xf]
        %v920 = vld [vmem:[%s204 + $0xa0] sm:$0xff]
        %v921 = vld [vmem:[%s204 + $0xa8] sm:$0xff]
        %v922 = vld [vmem:[%s204 + $0xb0] sm:$0xf]
        %v923 = vld [vmem:[%s204 + $0xb4] sm:$0xff]
        %v924 = vld [vmem:[%s204 + $0xbc] sm:$0xff]
        %v925 = vld [vmem:[%s204 + $0xc4] sm:$0xf]
        %v926 = vld [vmem:[%s204 + $0xc8] sm:$0xff]
        %v927 = vld [vmem:[%s204 + $0xd0] sm:$0xff]
        %v928 = vld [vmem:[%s204 + $0xd8] sm:$0xf]
        %v929 = vld [vmem:[%s204 + $0xdc] sm:$0xff]
        %v930 = vld [vmem:[%s204 + $0xe4] sm:$0xff]
        %v931 = vld [vmem:[%s204 + $0xec] sm:$0xf]
        %v932 = vld [vmem:[%s204 + $0xf0] sm:$0xff]
        %v933 = vld [vmem:[%s204 + $0xf8] sm:$0xff]
        %v934 = vld [vmem:[%s204 + $0x100] sm:$0xf]
        %v935 = vld [vmem:[%s204 + $0x104] sm:$0xff]
        %v936 = vld [vmem:[%s204 + $0x10c] sm:$0xff]
        %v937 = vld [vmem:[%s204 + $0x114] sm:$0xf]
        %v938 = vld [vmem:[%s204 + $0x118] sm:$0xff]
        %v939 = vld [vmem:[%s204 + $0x120] sm:$0xff]
        %v940 = vld [vmem:[%s204 + $0x128] sm:$0xf]
        %v941 = vld [vmem:[%s204 + $0x12c] sm:$0xff]
        %v942 = vld [vmem:[%s204 + $0x134] sm:$0xff]
        %v943 = vld [vmem:[%s204 + $0x13c] sm:$0xf]
        %v944 = vld [vmem:[%s204 + $0x140] sm:$0xff]
        %v945 = vld [vmem:[%s204 + $0x148] sm:$0xff]
        %v946 = vld [vmem:[%s204 + $0x150] sm:$0xf]
        %v947 = vld [vmem:[%s204 + $0x154] sm:$0xff]
        %v948 = vld [vmem:[%s204 + $0x15c] sm:$0xff]
        %v949 = vld [vmem:[%s204 + $0x164] sm:$0xf]
        %v950 = vld [vmem:[%s204 + $0x168] sm:$0xff]
        %v951 = vld [vmem:[%s204 + $0x170] sm:$0xff]
        %v952 = vld [vmem:[%s204 + $0x178] sm:$0xf]
        %v953 = vld [vmem:[%s204 + $0x17c] sm:$0xff]
        %v954 = vld [vmem:[%s204 + $0x184] sm:$0xff]
        %v955 = vld [vmem:[%s204 + $0x18c] sm:$0xf]
        %v956 = vld [vmem:[%s204 + $0x190] sm:$0xff]
        %v957 = vld [vmem:[%s204 + $0x198] sm:$0xff]
        %v958 = vld [vmem:[%s204 + $0x1a0] sm:$0xf]
        %v959 = vld [vmem:[%s204 + $0x1a4] sm:$0xff]
        %v960 = vld [vmem:[%s204 + $0x1ac] sm:$0xff]
        %v961 = vld [vmem:[%s204 + $0x1b4] sm:$0xf]
        %v962 = vld [vmem:[%s204 + $0x1b8] sm:$0xff]
        %v963 = vld [vmem:[%s204 + $0x1c0] sm:$0xff]
        %v964 = vld [vmem:[%s204 + $0x1c8] sm:$0xf]
        %v965 = vld [vmem:[%s204 + $0x1cc] sm:$0xff]
        %v966 = vld [vmem:[%s204 + $0x1d4] sm:$0xff]
        %v967 = vld [vmem:[%s204 + $0x1dc] sm:$0xf]
        %v968 = vld [vmem:[%s204 + $0x1e0] sm:$0xff]
        %v969 = vld [vmem:[%s204 + $0x1e8] sm:$0xff]
        %v970 = vld [vmem:[%s204 + $0x1f0] sm:$0xf]
        %v971 = vld [vmem:[%s204 + $0x1f4] sm:$0xff]
        %v972 = vld [vmem:[%s204 + $0x1fc] sm:$0xff]
        %v973 = vld [vmem:[%s204 + $0x204] sm:$0xf]
        %v974 = vld [vmem:[%s204 + $0x208] sm:$0xff]
        %v975 = vld [vmem:[%s204 + $0x210] sm:$0xff]
        %v976 = vld [vmem:[%s204 + $0x218] sm:$0xf]
        %v977 = vld [vmem:[%s204 + $0x21c] sm:$0xff]
        %v978 = vld [vmem:[%s204 + $0x224] sm:$0xff]
        %v979 = vld [vmem:[%s204 + $0x22c] sm:$0xf]
        %v980 = vld [vmem:[%s204 + $0x230] sm:$0xff]
        %v981 = vld [vmem:[%s204 + $0x238] sm:$0xff]
        %v982 = vld [vmem:[%s204 + $0x240] sm:$0xf]
        %v983 = vld [vmem:[%s204 + $0x244] sm:$0xff]
        %v984 = vld [vmem:[%s204 + $0x24c] sm:$0xff]
        %v985 = vld [vmem:[%s204 + $0x254] sm:$0xf]
        %v986 = vld [vmem:[%s204 + $0x258] sm:$0xff]
        %v987 = vld [vmem:[%s204 + $0x260] sm:$0xff]
        %v988 = vld [vmem:[%s204 + $0x268] sm:$0xf]
        %v989 = vld [vmem:[%s204 + $0x26c] sm:$0xff]
        %v990 = vld [vmem:[%s204 + $0x274] sm:$0xff]
        %v991 = vld [vmem:[%s204 + $0x27c] sm:$0xf]
        %v992 = vld [vmem:[%s204 + $0x280] sm:$0xff]
        %v993 = vld [vmem:[%s204 + $0x288] sm:$0xff]
        %v994 = vld [vmem:[%s204 + $0x290] sm:$0xf]
        %v995 = vld [vmem:[%s204 + $0x294] sm:$0xff]
        %v996 = vld [vmem:[%s204 + $0x29c] sm:$0xff]
        %v997 = vld [vmem:[%s204 + $0x2a4] sm:$0xf]
        %v998 = vld [vmem:[%s204 + $0x2a8] sm:$0xff]
        %v999 = vld [vmem:[%s204 + $0x2b0] sm:$0xff]
        %v1000 = vld [vmem:[%s204 + $0x2b8] sm:$0xf]
        %v1001 = vld [vmem:[%s204 + $0x2bc] sm:$0xff]
        %v1002 = vld [vmem:[%s204 + $0x2c4] sm:$0xff]
        %v1003 = vld [vmem:[%s204 + $0x2cc] sm:$0xf]
        %v1004 = vld [vmem:[%s204 + $0x2d0] sm:$0xff]
        %v1005 = vld [vmem:[%s204 + $0x2d8] sm:$0xff]
        %v1006 = vld [vmem:[%s204 + $0x2e0] sm:$0xf]
        %v1007 = vld [vmem:[%s204 + $0x2e4] sm:$0xff]
        %v1008 = vld [vmem:[%s204 + $0x2ec] sm:$0xff]
        %v1009 = vld [vmem:[%s204 + $0x2f4] sm:$0xf]
        %v1010 = vld [vmem:[%s204 + $0x2f8] sm:$0xff]
        %v1011 = vld [vmem:[%s204 + $0x300] sm:$0xff]
        %v1012 = vld [vmem:[%s204 + $0x308] sm:$0xf]
        %v1013 = vld [vmem:[%s204 + $0x30c] sm:$0xff]
        %v1014 = vld [vmem:[%s204 + $0x314] sm:$0xff]
        %v1015 = vld [vmem:[%s204 + $0x31c] sm:$0xf]
        %v1016 = vld [vmem:[%s204 + $0x320] sm:$0xff]
        %v1017 = vld [vmem:[%s204 + $0x328] sm:$0xff]
        %v1018 = vld [vmem:[%s204 + $0x330] sm:$0xf]
        %v1019 = vld [vmem:[%s204 + $0x334] sm:$0xff]
        %v1020 = vld [vmem:[%s204 + $0x33c] sm:$0xff]
        %v1021 = vld [vmem:[%s204 + $0x344] sm:$0xf]
        %v1022 = vld [vmem:[%s204 + $0x348] sm:$0xff]
        %v1023 = vld [vmem:[%s204 + $0x350] sm:$0xff]
        %v1024 = vld [vmem:[%s204 + $0x358] sm:$0xf]
        %v1025 = vld [vmem:[%s204 + $0x35c] sm:$0xff]
        %v1026 = vld [vmem:[%s204 + $0x364] sm:$0xff]
        %v1027 = vld [vmem:[%s204 + $0x36c] sm:$0xf]
        %v1028 = vld [vmem:[%s204 + $0x370] sm:$0xff]
        %v1029 = vld [vmem:[%s204 + $0x378] sm:$0xff]
        %v1030 = vld [vmem:[%s204 + $0x380] sm:$0xf]
        %v1031 = vld [vmem:[%s204 + $0x384] sm:$0xff]
        %v1032 = vld [vmem:[%s204 + $0x38c] sm:$0xff]
        %v1033 = vld [vmem:[%s204 + $0x394] sm:$0xf]
        %v1034 = vld [vmem:[%s204 + $0x398] sm:$0xff]
        %v1035 = vld [vmem:[%s204 + $0x3a0] sm:$0xff]
        %v1036 = vld [vmem:[%s204 + $0x3a8] sm:$0xf]
        %v1037 = vld [vmem:[%s204 + $0x3ac] sm:$0xff]
        %v1038 = vld [vmem:[%s204 + $0x3b4] sm:$0xff]
        %v1039 = vld [vmem:[%s204 + $0x3bc] sm:$0xf]
        %v1040 = vld [vmem:[%s204 + $0x3c0] sm:$0xff]
        %v1041 = vld [vmem:[%s204 + $0x3c8] sm:$0xff]
        %v1042 = vld [vmem:[%s204 + $0x3d0] sm:$0xf]
        %v1043 = vld [vmem:[%s204 + $0x3d4] sm:$0xff]
        %v1044 = vld [vmem:[%s204 + $0x3dc] sm:$0xff]
        %v1045 = vld [vmem:[%s204 + $0x3e4] sm:$0xf]
        %v1046 = vld [vmem:[%s204 + $0x3e8] sm:$0xff]
        %v1047 = vld [vmem:[%s204 + $0x3f0] sm:$0xff]
        %v1048 = vld [vmem:[%s204 + $0x3f8] sm:$0xf]
        %v1049 = vld [vmem:[%s204 + $0x3fc] sm:$0xff]
        %v1050 = vld [vmem:[%s204 + $0x404] sm:$0xff]
        %v1051 = vld [vmem:[%s204 + $0x40c] sm:$0xf]
        %v1052 = vld [vmem:[%s204 + $0x410] sm:$0xff]
        %v1053 = vld [vmem:[%s204 + $0x418] sm:$0xff]
        %v1054 = vld [vmem:[%s204 + $0x420] sm:$0xf]
        %v1055 = vld [vmem:[%s204 + $0x424] sm:$0xff]
        %v1056 = vld [vmem:[%s204 + $0x42c] sm:$0xff]
        %v1057 = vld [vmem:[%s204 + $0x434] sm:$0xf]
        %v1058 = vld [vmem:[%s204 + $0x438] sm:$0xff]
        %v1059 = vld [vmem:[%s204 + $0x440] sm:$0xff]
        %v1060 = vld [vmem:[%s204 + $0x448] sm:$0xf]
        %v1061 = vld [vmem:[%s204 + $0x44c] sm:$0xff]
        %v1062 = vld [vmem:[%s204 + $0x454] sm:$0xff]
        %v1063 = vld [vmem:[%s204 + $0x45c] sm:$0xf]
        %v1064 = vld [vmem:[%s204 + $0x460] sm:$0xff]
        %v1065 = vld [vmem:[%s204 + $0x468] sm:$0xff]
        %v1066 = vld [vmem:[%s204 + $0x470] sm:$0xf]
        %v1067 = vld [vmem:[%s204 + $0x474] sm:$0xff]
        %v1068 = vld [vmem:[%s204 + $0x47c] sm:$0xff]
        %v1069 = vld [vmem:[%s204 + $0x484] sm:$0xf]
        %v1070 = vld [vmem:[%s204 + $0x488] sm:$0xff]
        %v1071 = vld [vmem:[%s204 + $0x490] sm:$0xff]
        %v1072 = vld [vmem:[%s204 + $0x498] sm:$0xf]
        %v1073 = vld [vmem:[%s204 + $0x49c] sm:$0xff]
        %v1074 = vld [vmem:[%s204 + $0x4a4] sm:$0xff]
        %v1075 = vld [vmem:[%s204 + $0x4ac] sm:$0xf]
        %v1076 = vld [vmem:[%s204 + $0x4b0] sm:$0xff]
        %v1077 = vld [vmem:[%s204 + $0x4b8] sm:$0xff]
        %v1078 = vld [vmem:[%s204 + $0x4c0] sm:$0xf]
        %v1079 = vld [vmem:[%s204 + $0x4c4] sm:$0xff]
        %v1080 = vld [vmem:[%s204 + $0x4cc] sm:$0xff]
        %v1081 = vld [vmem:[%s204 + $0x4d4] sm:$0xf]
        %v1082 = vld [vmem:[%s204 + $0x4d8] sm:$0xff]
        %v1083 = vld [vmem:[%s204 + $0x4e0] sm:$0xff]
        %v1084 = vld [vmem:[%s204 + $0x4e8] sm:$0xf]
        %v1085 = vld [vmem:[%s204 + $0x4ec] sm:$0xff]
        %v1086 = vld [vmem:[%s204 + $0x4f4] sm:$0xff]
        %v1087 = vld [vmem:[%s204 + $0x4fc] sm:$0xf]
        %v1088 = vld [vmem:[%s204 + $0x500] sm:$0xff]
        %v1089 = vld [vmem:[%s204 + $0x508] sm:$0xff]
        %v1090 = vld [vmem:[%s204 + $0x510] sm:$0xf]
        %v1091 = vld [vmem:[%s204 + $0x514] sm:$0xff]
        %v1092 = vld [vmem:[%s204 + $0x51c] sm:$0xff]
        %v1093 = vld [vmem:[%s204 + $0x524] sm:$0xf]
        %v1094 = vld [vmem:[%s204 + $0x528] sm:$0xff]
        %v1095 = vld [vmem:[%s204 + $0x530] sm:$0xff]
        %v1096 = vld [vmem:[%s204 + $0x538] sm:$0xf]
        %v1097 = vld [vmem:[%s204 + $0x53c] sm:$0xff]
        %v1098 = vld [vmem:[%s204 + $0x544] sm:$0xff]
        %v1099 = vld [vmem:[%s204 + $0x54c] sm:$0xf]
        %v1100 = vld [vmem:[%s204 + $0x550] sm:$0xff]
        %v1101 = vld [vmem:[%s204 + $0x558] sm:$0xff]
        %v1102 = vld [vmem:[%s204 + $0x560] sm:$0xf]
        %v1103 = vld [vmem:[%s204 + $0x564] sm:$0xff]
        %v1104 = vld [vmem:[%s204 + $0x56c] sm:$0xff]
        %v1105 = vld [vmem:[%s204 + $0x574] sm:$0xf]
        %v1106 = vld [vmem:[%s204 + $0x578] sm:$0xff]
        %v1107 = vld [vmem:[%s204 + $0x580] sm:$0xff]
        %v1108 = vld [vmem:[%s204 + $0x588] sm:$0xf]
        %v1109 = vld [vmem:[%s204 + $0x58c] sm:$0xff]
        %v1110 = vld [vmem:[%s204 + $0x594] sm:$0xff]
        %v1111 = vld [vmem:[%s204 + $0x59c] sm:$0xf]
        %v1112 = vld [vmem:[%s204 + $0x5a0] sm:$0xff]
        %v1113 = vld [vmem:[%s204 + $0x5a8] sm:$0xff]
        %v1114 = vld [vmem:[%s204 + $0x5b0] sm:$0xf]
        %v1115 = vld [vmem:[%s204 + $0x5b4] sm:$0xff]
        %v1116 = vld [vmem:[%s204 + $0x5bc] sm:$0xff]
        %v1117 = vld [vmem:[%s204 + $0x5c4] sm:$0xf]
        %v1118 = vld [vmem:[%s204 + $0x5c8] sm:$0xff]
        %v1119 = vld [vmem:[%s204 + $0x5d0] sm:$0xff]
        %v1120 = vld [vmem:[%s204 + $0x5d8] sm:$0xf]
        %v1121 = vld [vmem:[%s204 + $0x5dc] sm:$0xff]
        %v1122 = vld [vmem:[%s204 + $0x5e4] sm:$0xff]
        %v1123 = vld [vmem:[%s204 + $0x5ec] sm:$0xf]
        %v1124 = vld [vmem:[%s204 + $0x5f0] sm:$0xff]
        %v1125 = vld [vmem:[%s204 + $0x5f8] sm:$0xff]
        %v1126 = vld [vmem:[%s204 + $0x600] sm:$0xf]
        %v1127 = vld [vmem:[%s204 + $0x604] sm:$0xff]
        %v1128 = vld [vmem:[%s204 + $0x60c] sm:$0xff]
        %v1129 = vld [vmem:[%s204 + $0x614] sm:$0xf]
        %v1130 = vld [vmem:[%s204 + $0x618] sm:$0xff]
        %v1131 = vld [vmem:[%s204 + $0x620] sm:$0xff]
        %v1132 = vld [vmem:[%s204 + $0x628] sm:$0xf]
        %v1133 = vld [vmem:[%s204 + $0x62c] sm:$0xff]
        %v1134 = vld [vmem:[%s204 + $0x634] sm:$0xff]
        %v1135 = vld [vmem:[%s204 + $0x63c] sm:$0xf]
        %v1136 = vld [vmem:[%s204 + $0x640] sm:$0xff]
        %v1137 = vld [vmem:[%s204 + $0x648] sm:$0xff]
        %v1138 = vld [vmem:[%s204 + $0x650] sm:$0xf]
        %v1139 = vld [vmem:[%s204 + $0x654] sm:$0xff]
        %v1140 = vld [vmem:[%s204 + $0x65c] sm:$0xff]
        %v1141 = vld [vmem:[%s204 + $0x664] sm:$0xf]
        %v1142 = vld [vmem:[%s204 + $0x668] sm:$0xff]
        %v1143 = vld [vmem:[%s204 + $0x670] sm:$0xff]
        %v1144 = vld [vmem:[%s204 + $0x678] sm:$0xf]
        %v1145 = vld [vmem:[%s204 + $0x67c] sm:$0xff]
        %v1146 = vld [vmem:[%s204 + $0x684] sm:$0xff]
        %v1147 = vld [vmem:[%s204 + $0x68c] sm:$0xf]
        %v1148 = vld [vmem:[%s204 + $0x690] sm:$0xff]
        %v1149 = vld [vmem:[%s204 + $0x698] sm:$0xff]
        %v1150 = vld [vmem:[%s204 + $0x6a0] sm:$0xf]
        %v1151 = vld [vmem:[%s204 + $0x6a4] sm:$0xff]
        %v1152 = vld [vmem:[%s204 + $0x6ac] sm:$0xff]
        %v1153 = vld [vmem:[%s204 + $0x6b4] sm:$0xf]
        %v1154 = vld [vmem:[%s204 + $0x6b8] sm:$0xff]
        %v1155 = vld [vmem:[%s204 + $0x6c0] sm:$0xff]
        %v1156 = vld [vmem:[%s204 + $0x6c8] sm:$0xf]
        %v1157 = vld [vmem:[%s204 + $0x6cc] sm:$0xff]
        %v1158 = vld [vmem:[%s204 + $0x6d4] sm:$0xff]
        %v1159 = vld [vmem:[%s204 + $0x6dc] sm:$0xf]
        %v1160 = vld [vmem:[%s204 + $0x6e0] sm:$0xff]
        %v1161 = vld [vmem:[%s204 + $0x6e8] sm:$0xff]
        %v1162 = vld [vmem:[%s204 + $0x6f0] sm:$0xf]
        %v1163 = vld [vmem:[%s204 + $0x6f4] sm:$0xff]
        %v1164 = vld [vmem:[%s204 + $0x6fc] sm:$0xff]
        %v1165 = vld [vmem:[%s204 + $0x704] sm:$0xf]
        %v1166 = vld [vmem:[%s204 + $0x708] sm:$0xff]
        %v1167 = vld [vmem:[%s204 + $0x710] sm:$0xff]
        %v1168 = vld [vmem:[%s204 + $0x718] sm:$0xf]
        %v1169 = vld [vmem:[%s204 + $0x71c] sm:$0xff]
        %v1170 = vld [vmem:[%s204 + $0x724] sm:$0xff]
        %v1171 = vld [vmem:[%s204 + $0x72c] sm:$0xf]
        %v1172 = vld [vmem:[%s204 + $0x730] sm:$0xff]
        %v1173 = vld [vmem:[%s204 + $0x738] sm:$0xff]
        %v1174 = vld [vmem:[%s204 + $0x740] sm:$0xf]
        %v1175 = vld [vmem:[%s204 + $0x744] sm:$0xff]
        %v1176 = vld [vmem:[%s204 + $0x74c] sm:$0xff]
        %v1177 = vld [vmem:[%s204 + $0x754] sm:$0xf]
        %v1178 = vld [vmem:[%s204 + $0x758] sm:$0xff]
        %v1179 = vld [vmem:[%s204 + $0x760] sm:$0xff]
        %v1180 = vld [vmem:[%s204 + $0x768] sm:$0xf]
        %v1181 = vld [vmem:[%s204 + $0x76c] sm:$0xff]
        %v1182 = vld [vmem:[%s204 + $0x774] sm:$0xff]
        %v1183 = vld [vmem:[%s204 + $0x77c] sm:$0xf]
        %v1184 = vld [vmem:[%s204 + $0x780] sm:$0xff]
        %v1185 = vld [vmem:[%s204 + $0x788] sm:$0xff]
        %v1186 = vld [vmem:[%s204 + $0x790] sm:$0xf]
        %v1187 = vld [vmem:[%s204 + $0x794] sm:$0xff]
        %v1188 = vld [vmem:[%s204 + $0x79c] sm:$0xff]
        %v1189 = vld [vmem:[%s204 + $0x7a4] sm:$0xf]
        %v1190 = vld [vmem:[%s204 + $0x7a8] sm:$0xff]
        %v1191 = vld [vmem:[%s204 + $0x7b0] sm:$0xff]
        %v1192 = vld [vmem:[%s204 + $0x7b8] sm:$0xf]
        %v1193 = vld [vmem:[%s204 + $0x7bc] sm:$0xff]
        %v1194 = vld [vmem:[%s204 + $0x7c4] sm:$0xff]
        %v1195 = vld [vmem:[%s204 + $0x7cc] sm:$0xf]
        %v1196 = vld [vmem:[%s204 + $0x7d0] sm:$0xff]
        %v1197 = vld [vmem:[%s204 + $0x7d8] sm:$0xff]
        %v1198 = vld [vmem:[%s204 + $0x7e0] sm:$0xf]
        %v1199 = vld [vmem:[%s204 + $0x7e4] sm:$0xff]
        %v1200 = vld [vmem:[%s204 + $0x7ec] sm:$0xff]
        %v1201 = vld [vmem:[%s204 + $0x7f4] sm:$0xf]
        %v1202 = vld [vmem:[%s204 + $0x7f8] sm:$0xff]
        %v1203 = vld [vmem:[%s204 + $0x800] sm:$0xff]
        %v1204 = vld [vmem:[%s204 + $0x808] sm:$0xf]
        %v1205 = vld [vmem:[%s204 + $0x80c] sm:$0xff]
        %v1206 = vld [vmem:[%s204 + $0x814] sm:$0xff]
        %v1207 = vld [vmem:[%s204 + $0x81c] sm:$0xf]
        %v1208 = vld [vmem:[%s204 + $0x820] sm:$0xff]
        %v1209 = vld [vmem:[%s204 + $0x828] sm:$0xff]
        %v1210 = vld [vmem:[%s204 + $0x830] sm:$0xf]
        %v1211 = vld [vmem:[%s204 + $0x834] sm:$0xff]
        %v1212 = vld [vmem:[%s204 + $0x83c] sm:$0xff]
        %v1213 = vld [vmem:[%s204 + $0x844] sm:$0xf]
        %v1214 = vld [vmem:[%s204 + $0x848] sm:$0xff]
        %v1215 = vld [vmem:[%s204 + $0x850] sm:$0xff]
        %v1216 = vld [vmem:[%s204 + $0x858] sm:$0xf]
        %v1217 = vld [vmem:[%s204 + $0x85c] sm:$0xff]
        %v1218 = vld [vmem:[%s204 + $0x864] sm:$0xff]
        %v1219 = vld [vmem:[%s204 + $0x86c] sm:$0xf]
        %v1220 = vld [vmem:[%s204 + $0x870] sm:$0xff]
        %v1221 = vld [vmem:[%s204 + $0x878] sm:$0xff]
        %v1222 = vld [vmem:[%s204 + $0x880] sm:$0xf]
        %v1223 = vld [vmem:[%s204 + $0x884] sm:$0xff]
        %v1224 = vld [vmem:[%s204 + $0x88c] sm:$0xff]
        %v1225 = vld [vmem:[%s204 + $0x894] sm:$0xf]
        %v1226 = vld [vmem:[%s204 + $0x898] sm:$0xff]
        %v1227 = vld [vmem:[%s204 + $0x8a0] sm:$0xff]
        %v1228 = vld [vmem:[%s204 + $0x8a8] sm:$0xf]
        %v1229 = vld [vmem:[%s204 + $0x8ac] sm:$0xff]
        %v1230 = vld [vmem:[%s204 + $0x8b4] sm:$0xff]
        %v1231 = vld [vmem:[%s204 + $0x8bc] sm:$0xf]
        %v1232 = vld [vmem:[%s204 + $0x8c0] sm:$0xff]
        %v1233 = vld [vmem:[%s204 + $0x8c8] sm:$0xff]
        %v1234 = vld [vmem:[%s204 + $0x8d0] sm:$0xf]
        %v1235 = vld [vmem:[%s204 + $0x8d4] sm:$0xff]
        %v1236 = vld [vmem:[%s204 + $0x8dc] sm:$0xff]
        %v1237 = vld [vmem:[%s204 + $0x8e4] sm:$0xf]
        %v1238 = vld [vmem:[%s204 + $0x8e8] sm:$0xff]
        %v1239 = vld [vmem:[%s204 + $0x8f0] sm:$0xff]
        %v1240 = vld [vmem:[%s204 + $0x8f8] sm:$0xf]
        %v1241 = vld [vmem:[%s204 + $0x8fc] sm:$0xff]
        %v1242 = vld [vmem:[%s204 + $0x904] sm:$0xff]
        %v1243 = vld [vmem:[%s204 + $0x90c] sm:$0xf]
        %v1244 = vld [vmem:[%s204 + $0x910] sm:$0xff]
        %v1245 = vld [vmem:[%s204 + $0x918] sm:$0xff]
        %v1246 = vld [vmem:[%s204 + $0x920] sm:$0xf]
        %v1247 = vld [vmem:[%s204 + $0x924] sm:$0xff]
        %v1248 = vld [vmem:[%s204 + $0x92c] sm:$0xff]
        %v1249 = vld [vmem:[%s204 + $0x934] sm:$0xf]
        %v1250 = vld [vmem:[%s204 + $0x938] sm:$0xff]
        %v1251 = vld [vmem:[%s204 + $0x940] sm:$0xff]
        %v1252 = vld [vmem:[%s204 + $0x948] sm:$0xf]
        %v1253 = vld [vmem:[%s204 + $0x94c] sm:$0xff]
        %v1254 = vld [vmem:[%s204 + $0x954] sm:$0xff]
        %v1255 = vld [vmem:[%s204 + $0x95c] sm:$0xf]
        %v1256 = vld [vmem:[%s204 + $0x960] sm:$0xff]
        %v1257 = vld [vmem:[%s204 + $0x968] sm:$0xff]
        %v1258 = vld [vmem:[%s204 + $0x970] sm:$0xf]
        %v1259 = vld [vmem:[%s204 + $0x974] sm:$0xff]
        %v1260 = vld [vmem:[%s204 + $0x97c] sm:$0xff]
        %v1261 = vld [vmem:[%s204 + $0x984] sm:$0xf]
        %v1262 = vld [vmem:[%s204 + $0x988] sm:$0xff]
        %v1263 = vld [vmem:[%s204 + $0x990] sm:$0xff]
        %v1264 = vld [vmem:[%s204 + $0x998] sm:$0xf]
        %v1265 = vld [vmem:[%s204 + $0x99c] sm:$0xff]
        %v1266 = vld [vmem:[%s204 + $0x9a4] sm:$0xff]
        %v1267 = vld [vmem:[%s204 + $0x9ac] sm:$0xf]
        %v1268 = vld [vmem:[%s204 + $0x9b0] sm:$0xff]
        %v1269 = vld [vmem:[%s204 + $0x9b8] sm:$0xff]
        %v1270 = vld [vmem:[%s204 + $0x9c0] sm:$0xf]
        %v1271 = vld [vmem:[%s204 + $0x9c4] sm:$0xff]
        %v1272 = vld [vmem:[%s204 + $0x9cc] sm:$0xff]
        %v1273 = vld [vmem:[%s204 + $0x9d4] sm:$0xf]
        %v1274 = vld [vmem:[%s204 + $0x9d8] sm:$0xff]
        %v1275 = vld [vmem:[%s204 + $0x9e0] sm:$0xff]
        %v1276 = vld [vmem:[%s204 + $0x9e8] sm:$0xf]
        %v1277 = vld [vmem:[%s204 + $0x9ec] sm:$0xff]
        %v1278 = vld [vmem:[%s204 + $0x9f4] sm:$0xff]
        %v1279 = vld [vmem:[%s204 + $0x9fc] sm:$0xf]
        %v1664 = vunpack.c.l.b16 %v896
        %v1665 = vunpack.c.h.b16 %v896
        %v1666 = vunpack.c.l.b16 %v897
        %v1667 = vunpack.c.h.b16 %v897
        %v1668 = vunpack.c.l.b16 %v898
        %v1669 = vunpack.c.l.b16 %v899
        %v1670 = vunpack.c.h.b16 %v899
        %v1671 = vunpack.c.l.b16 %v900
        %v1672 = vunpack.c.h.b16 %v900
        %v1673 = vunpack.c.l.b16 %v901
        %v1674 = vunpack.c.l.b16 %v902
        %v1675 = vunpack.c.h.b16 %v902
        %v1676 = vunpack.c.l.b16 %v903
        %v1677 = vunpack.c.h.b16 %v903
        %v1678 = vunpack.c.l.b16 %v904
        %v1679 = vunpack.c.l.b16 %v905
        %v1680 = vunpack.c.h.b16 %v905
        %v1681 = vunpack.c.l.b16 %v906
        %v1682 = vunpack.c.h.b16 %v906
        %v1683 = vunpack.c.l.b16 %v907
        %v1684 = vunpack.c.l.b16 %v908
        %v1685 = vunpack.c.h.b16 %v908
        %v1686 = vunpack.c.l.b16 %v909
        %v1687 = vunpack.c.h.b16 %v909
        %v1688 = vunpack.c.l.b16 %v910
        %v1689 = vunpack.c.l.b16 %v911
        %v1690 = vunpack.c.h.b16 %v911
        %v1691 = vunpack.c.l.b16 %v912
        %v1692 = vunpack.c.h.b16 %v912
        %v1693 = vunpack.c.l.b16 %v913
        %v1694 = vunpack.c.l.b16 %v914
        %v1695 = vunpack.c.h.b16 %v914
        %v1696 = vunpack.c.l.b16 %v915
        %v1697 = vunpack.c.h.b16 %v915
        %v1698 = vunpack.c.l.b16 %v916
        %v1699 = vunpack.c.l.b16 %v917
        %v1700 = vunpack.c.h.b16 %v917
        %v1701 = vunpack.c.l.b16 %v918
        %v1702 = vunpack.c.h.b16 %v918
        %v1703 = vunpack.c.l.b16 %v919
        %v1704 = vunpack.c.l.b16 %v920
        %v1705 = vunpack.c.h.b16 %v920
        %v1706 = vunpack.c.l.b16 %v921
        %v1707 = vunpack.c.h.b16 %v921
        %v1708 = vunpack.c.l.b16 %v922
        %v1709 = vunpack.c.l.b16 %v923
        %v1710 = vunpack.c.h.b16 %v923
        %v1711 = vunpack.c.l.b16 %v924
        %v1712 = vunpack.c.h.b16 %v924
        %v1713 = vunpack.c.l.b16 %v925
        %v1714 = vunpack.c.l.b16 %v926
        %v1715 = vunpack.c.h.b16 %v926
        %v1716 = vunpack.c.l.b16 %v927
        %v1717 = vunpack.c.h.b16 %v927
        %v1718 = vunpack.c.l.b16 %v928
        %v1719 = vunpack.c.l.b16 %v929
        %v1720 = vunpack.c.h.b16 %v929
        %v1721 = vunpack.c.l.b16 %v930
        %v1722 = vunpack.c.h.b16 %v930
        %v1723 = vunpack.c.l.b16 %v931
        %v1724 = vunpack.c.l.b16 %v932
        %v1725 = vunpack.c.h.b16 %v932
        %v1726 = vunpack.c.l.b16 %v933
        %v1727 = vunpack.c.h.b16 %v933
        %v1728 = vunpack.c.l.b16 %v934
        %v1729 = vunpack.c.l.b16 %v935
        %v1730 = vunpack.c.h.b16 %v935
        %v1731 = vunpack.c.l.b16 %v936
        %v1732 = vunpack.c.h.b16 %v936
        %v1733 = vunpack.c.l.b16 %v937
        %v1734 = vunpack.c.l.b16 %v938
        %v1735 = vunpack.c.h.b16 %v938
        %v1736 = vunpack.c.l.b16 %v939
        %v1737 = vunpack.c.h.b16 %v939
        %v1738 = vunpack.c.l.b16 %v940
        %v1739 = vunpack.c.l.b16 %v941
        %v1740 = vunpack.c.h.b16 %v941
        %v1741 = vunpack.c.l.b16 %v942
        %v1742 = vunpack.c.h.b16 %v942
        %v1743 = vunpack.c.l.b16 %v943
        %v1744 = vunpack.c.l.b16 %v944
        %v1745 = vunpack.c.h.b16 %v944
        %v1746 = vunpack.c.l.b16 %v945
        %v1747 = vunpack.c.h.b16 %v945
        %v1748 = vunpack.c.l.b16 %v946
        %v1749 = vunpack.c.l.b16 %v947
        %v1750 = vunpack.c.h.b16 %v947
        %v1751 = vunpack.c.l.b16 %v948
        %v1752 = vunpack.c.h.b16 %v948
        %v1753 = vunpack.c.l.b16 %v949
        %v1754 = vunpack.c.l.b16 %v950
        %v1755 = vunpack.c.h.b16 %v950
        %v1756 = vunpack.c.l.b16 %v951
        %v1757 = vunpack.c.h.b16 %v951
        %v1758 = vunpack.c.l.b16 %v952
        %v1759 = vunpack.c.l.b16 %v953
        %v1760 = vunpack.c.h.b16 %v953
        %v1761 = vunpack.c.l.b16 %v954
        %v1762 = vunpack.c.h.b16 %v954
        %v1763 = vunpack.c.l.b16 %v955
        %v1764 = vunpack.c.l.b16 %v956
        %v1765 = vunpack.c.h.b16 %v956
        %v1766 = vunpack.c.l.b16 %v957
        %v1767 = vunpack.c.h.b16 %v957
        %v1768 = vunpack.c.l.b16 %v958
        %v1769 = vunpack.c.l.b16 %v959
        %v1770 = vunpack.c.h.b16 %v959
        %v1771 = vunpack.c.l.b16 %v960
        %v1772 = vunpack.c.h.b16 %v960
        %v1773 = vunpack.c.l.b16 %v961
        %v1774 = vunpack.c.l.b16 %v962
        %v1775 = vunpack.c.h.b16 %v962
        %v1776 = vunpack.c.l.b16 %v963
        %v1777 = vunpack.c.h.b16 %v963
        %v1778 = vunpack.c.l.b16 %v964
        %v1779 = vunpack.c.l.b16 %v965
        %v1780 = vunpack.c.h.b16 %v965
        %v1781 = vunpack.c.l.b16 %v966
        %v1782 = vunpack.c.h.b16 %v966
        %v1783 = vunpack.c.l.b16 %v967
        %v1784 = vunpack.c.l.b16 %v968
        %v1785 = vunpack.c.h.b16 %v968
        %v1786 = vunpack.c.l.b16 %v969
        %v1787 = vunpack.c.h.b16 %v969
        %v1788 = vunpack.c.l.b16 %v970
        %v1789 = vunpack.c.l.b16 %v971
        %v1790 = vunpack.c.h.b16 %v971
        %v1791 = vunpack.c.l.b16 %v972
        %v1792 = vunpack.c.h.b16 %v972
        %v1793 = vunpack.c.l.b16 %v973
        %v1794 = vunpack.c.l.b16 %v974
        %v1795 = vunpack.c.h.b16 %v974
        %v1796 = vunpack.c.l.b16 %v975
        %v1797 = vunpack.c.h.b16 %v975
        %v1798 = vunpack.c.l.b16 %v976
        %v1799 = vunpack.c.l.b16 %v977
        %v1800 = vunpack.c.h.b16 %v977
        %v1801 = vunpack.c.l.b16 %v978
        %v1802 = vunpack.c.h.b16 %v978
        %v1803 = vunpack.c.l.b16 %v979
        %v1804 = vunpack.c.l.b16 %v980
        %v1805 = vunpack.c.h.b16 %v980
        %v1806 = vunpack.c.l.b16 %v981
        %v1807 = vunpack.c.h.b16 %v981
        %v1808 = vunpack.c.l.b16 %v982
        %v1809 = vunpack.c.l.b16 %v983
        %v1810 = vunpack.c.h.b16 %v983
        %v1811 = vunpack.c.l.b16 %v984
        %v1812 = vunpack.c.h.b16 %v984
        %v1813 = vunpack.c.l.b16 %v985
        %v1814 = vunpack.c.l.b16 %v986
        %v1815 = vunpack.c.h.b16 %v986
        %v1816 = vunpack.c.l.b16 %v987
        %v1817 = vunpack.c.h.b16 %v987
        %v1818 = vunpack.c.l.b16 %v988
        %v1819 = vunpack.c.l.b16 %v989
        %v1820 = vunpack.c.h.b16 %v989
        %v1821 = vunpack.c.l.b16 %v990
        %v1822 = vunpack.c.h.b16 %v990
        %v1823 = vunpack.c.l.b16 %v991
        %v1824 = vunpack.c.l.b16 %v992
        %v1825 = vunpack.c.h.b16 %v992
        %v1826 = vunpack.c.l.b16 %v993
        %v1827 = vunpack.c.h.b16 %v993
        %v1828 = vunpack.c.l.b16 %v994
        %v1829 = vunpack.c.l.b16 %v995
        %v1830 = vunpack.c.h.b16 %v995
        %v1831 = vunpack.c.l.b16 %v996
        %v1832 = vunpack.c.h.b16 %v996
        %v1833 = vunpack.c.l.b16 %v997
        %v1834 = vunpack.c.l.b16 %v998
        %v1835 = vunpack.c.h.b16 %v998
        %v1836 = vunpack.c.l.b16 %v999
        %v1837 = vunpack.c.h.b16 %v999
        %v1838 = vunpack.c.l.b16 %v1000
        %v1839 = vunpack.c.l.b16 %v1001
        %v1840 = vunpack.c.h.b16 %v1001
        %v1841 = vunpack.c.l.b16 %v1002
        %v1842 = vunpack.c.h.b16 %v1002
        %v1843 = vunpack.c.l.b16 %v1003
        %v1844 = vunpack.c.l.b16 %v1004
        %v1845 = vunpack.c.h.b16 %v1004
        %v1846 = vunpack.c.l.b16 %v1005
        %v1847 = vunpack.c.h.b16 %v1005
        %v1848 = vunpack.c.l.b16 %v1006
        %v1849 = vunpack.c.l.b16 %v1007
        %v1850 = vunpack.c.h.b16 %v1007
        %v1851 = vunpack.c.l.b16 %v1008
        %v1852 = vunpack.c.h.b16 %v1008
        %v1853 = vunpack.c.l.b16 %v1009
        %v1854 = vunpack.c.l.b16 %v1010
        %v1855 = vunpack.c.h.b16 %v1010
        %v1856 = vunpack.c.l.b16 %v1011
        %v1857 = vunpack.c.h.b16 %v1011
        %v1858 = vunpack.c.l.b16 %v1012
        %v1859 = vunpack.c.l.b16 %v1013
        %v1860 = vunpack.c.h.b16 %v1013
        %v1861 = vunpack.c.l.b16 %v1014
        %v1862 = vunpack.c.h.b16 %v1014
        %v1863 = vunpack.c.l.b16 %v1015
        %v1864 = vunpack.c.l.b16 %v1016
        %v1865 = vunpack.c.h.b16 %v1016
        %v1866 = vunpack.c.l.b16 %v1017
        %v1867 = vunpack.c.h.b16 %v1017
        %v1868 = vunpack.c.l.b16 %v1018
        %v1869 = vunpack.c.l.b16 %v1019
        %v1870 = vunpack.c.h.b16 %v1019
        %v1871 = vunpack.c.l.b16 %v1020
        %v1872 = vunpack.c.h.b16 %v1020
        %v1873 = vunpack.c.l.b16 %v1021
        %v1874 = vunpack.c.l.b16 %v1022
        %v1875 = vunpack.c.h.b16 %v1022
        %v1876 = vunpack.c.l.b16 %v1023
        %v1877 = vunpack.c.h.b16 %v1023
        %v1878 = vunpack.c.l.b16 %v1024
        %v1879 = vunpack.c.l.b16 %v1025
        %v1880 = vunpack.c.h.b16 %v1025
        %v1881 = vunpack.c.l.b16 %v1026
        %v1882 = vunpack.c.h.b16 %v1026
        %v1883 = vunpack.c.l.b16 %v1027
        %v1884 = vunpack.c.l.b16 %v1028
        %v1885 = vunpack.c.h.b16 %v1028
        %v1886 = vunpack.c.l.b16 %v1029
        %v1887 = vunpack.c.h.b16 %v1029
        %v1888 = vunpack.c.l.b16 %v1030
        %v1889 = vunpack.c.l.b16 %v1031
        %v1890 = vunpack.c.h.b16 %v1031
        %v1891 = vunpack.c.l.b16 %v1032
        %v1892 = vunpack.c.h.b16 %v1032
        %v1893 = vunpack.c.l.b16 %v1033
        %v1894 = vunpack.c.l.b16 %v1034
        %v1895 = vunpack.c.h.b16 %v1034
        %v1896 = vunpack.c.l.b16 %v1035
        %v1897 = vunpack.c.h.b16 %v1035
        %v1898 = vunpack.c.l.b16 %v1036
        %v1899 = vunpack.c.l.b16 %v1037
        %v1900 = vunpack.c.h.b16 %v1037
        %v1901 = vunpack.c.l.b16 %v1038
        %v1902 = vunpack.c.h.b16 %v1038
        %v1903 = vunpack.c.l.b16 %v1039
        %v1904 = vunpack.c.l.b16 %v1040
        %v1905 = vunpack.c.h.b16 %v1040
        %v1906 = vunpack.c.l.b16 %v1041
        %v1907 = vunpack.c.h.b16 %v1041
        %v1908 = vunpack.c.l.b16 %v1042
        %v1909 = vunpack.c.l.b16 %v1043
        %v1910 = vunpack.c.h.b16 %v1043
        %v1911 = vunpack.c.l.b16 %v1044
        %v1912 = vunpack.c.h.b16 %v1044
        %v1913 = vunpack.c.l.b16 %v1045
        %v1914 = vunpack.c.l.b16 %v1046
        %v1915 = vunpack.c.h.b16 %v1046
        %v1916 = vunpack.c.l.b16 %v1047
        %v1917 = vunpack.c.h.b16 %v1047
        %v1918 = vunpack.c.l.b16 %v1048
        %v1919 = vunpack.c.l.b16 %v1049
        %v1920 = vunpack.c.h.b16 %v1049
        %v1921 = vunpack.c.l.b16 %v1050
        %v1922 = vunpack.c.h.b16 %v1050
        %v1923 = vunpack.c.l.b16 %v1051
        %v1924 = vunpack.c.l.b16 %v1052
        %v1925 = vunpack.c.h.b16 %v1052
        %v1926 = vunpack.c.l.b16 %v1053
        %v1927 = vunpack.c.h.b16 %v1053
        %v1928 = vunpack.c.l.b16 %v1054
        %v1929 = vunpack.c.l.b16 %v1055
        %v1930 = vunpack.c.h.b16 %v1055
        %v1931 = vunpack.c.l.b16 %v1056
        %v1932 = vunpack.c.h.b16 %v1056
        %v1933 = vunpack.c.l.b16 %v1057
        %v1934 = vunpack.c.l.b16 %v1058
        %v1935 = vunpack.c.h.b16 %v1058
        %v1936 = vunpack.c.l.b16 %v1059
        %v1937 = vunpack.c.h.b16 %v1059
        %v1938 = vunpack.c.l.b16 %v1060
        %v1939 = vunpack.c.l.b16 %v1061
        %v1940 = vunpack.c.h.b16 %v1061
        %v1941 = vunpack.c.l.b16 %v1062
        %v1942 = vunpack.c.h.b16 %v1062
        %v1943 = vunpack.c.l.b16 %v1063
        %v1944 = vunpack.c.l.b16 %v1064
        %v1945 = vunpack.c.h.b16 %v1064
        %v1946 = vunpack.c.l.b16 %v1065
        %v1947 = vunpack.c.h.b16 %v1065
        %v1948 = vunpack.c.l.b16 %v1066
        %v1949 = vunpack.c.l.b16 %v1067
        %v1950 = vunpack.c.h.b16 %v1067
        %v1951 = vunpack.c.l.b16 %v1068
        %v1952 = vunpack.c.h.b16 %v1068
        %v1953 = vunpack.c.l.b16 %v1069
        %v1954 = vunpack.c.l.b16 %v1070
        %v1955 = vunpack.c.h.b16 %v1070
        %v1956 = vunpack.c.l.b16 %v1071
        %v1957 = vunpack.c.h.b16 %v1071
        %v1958 = vunpack.c.l.b16 %v1072
        %v1959 = vunpack.c.l.b16 %v1073
        %v1960 = vunpack.c.h.b16 %v1073
        %v1961 = vunpack.c.l.b16 %v1074
        %v1962 = vunpack.c.h.b16 %v1074
        %v1963 = vunpack.c.l.b16 %v1075
        %v1964 = vunpack.c.l.b16 %v1076
        %v1965 = vunpack.c.h.b16 %v1076
        %v1966 = vunpack.c.l.b16 %v1077
        %v1967 = vunpack.c.h.b16 %v1077
        %v1968 = vunpack.c.l.b16 %v1078
        %v1969 = vunpack.c.l.b16 %v1079
        %v1970 = vunpack.c.h.b16 %v1079
        %v1971 = vunpack.c.l.b16 %v1080
        %v1972 = vunpack.c.h.b16 %v1080
        %v1973 = vunpack.c.l.b16 %v1081
        %v1974 = vunpack.c.l.b16 %v1082
        %v1975 = vunpack.c.h.b16 %v1082
        %v1976 = vunpack.c.l.b16 %v1083
        %v1977 = vunpack.c.h.b16 %v1083
        %v1978 = vunpack.c.l.b16 %v1084
        %v1979 = vunpack.c.l.b16 %v1085
        %v1980 = vunpack.c.h.b16 %v1085
        %v1981 = vunpack.c.l.b16 %v1086
        %v1982 = vunpack.c.h.b16 %v1086
        %v1983 = vunpack.c.l.b16 %v1087
        %v1984 = vunpack.c.l.b16 %v1088
        %v1985 = vunpack.c.h.b16 %v1088
        %v1986 = vunpack.c.l.b16 %v1089
        %v1987 = vunpack.c.h.b16 %v1089
        %v1988 = vunpack.c.l.b16 %v1090
        %v1989 = vunpack.c.l.b16 %v1091
        %v1990 = vunpack.c.h.b16 %v1091
        %v1991 = vunpack.c.l.b16 %v1092
        %v1992 = vunpack.c.h.b16 %v1092
        %v1993 = vunpack.c.l.b16 %v1093
        %v1994 = vunpack.c.l.b16 %v1094
        %v1995 = vunpack.c.h.b16 %v1094
        %v1996 = vunpack.c.l.b16 %v1095
        %v1997 = vunpack.c.h.b16 %v1095
        %v1998 = vunpack.c.l.b16 %v1096
        %v1999 = vunpack.c.l.b16 %v1097
        %v2000 = vunpack.c.h.b16 %v1097
        %v2001 = vunpack.c.l.b16 %v1098
        %v2002 = vunpack.c.h.b16 %v1098
        %v2003 = vunpack.c.l.b16 %v1099
        %v2004 = vunpack.c.l.b16 %v1100
        %v2005 = vunpack.c.h.b16 %v1100
        %v2006 = vunpack.c.l.b16 %v1101
        %v2007 = vunpack.c.h.b16 %v1101
        %v2008 = vunpack.c.l.b16 %v1102
        %v2009 = vunpack.c.l.b16 %v1103
        %v2010 = vunpack.c.h.b16 %v1103
        %v2011 = vunpack.c.l.b16 %v1104
        %v2012 = vunpack.c.h.b16 %v1104
        %v2013 = vunpack.c.l.b16 %v1105
        %v2014 = vunpack.c.l.b16 %v1106
        %v2015 = vunpack.c.h.b16 %v1106
        %v2016 = vunpack.c.l.b16 %v1107
        %v2017 = vunpack.c.h.b16 %v1107
        %v2018 = vunpack.c.l.b16 %v1108
        %v2019 = vunpack.c.l.b16 %v1109
        %v2020 = vunpack.c.h.b16 %v1109
        %v2021 = vunpack.c.l.b16 %v1110
        %v2022 = vunpack.c.h.b16 %v1110
        %v2023 = vunpack.c.l.b16 %v1111
        %v2024 = vunpack.c.l.b16 %v1112
        %v2025 = vunpack.c.h.b16 %v1112
        %v2026 = vunpack.c.l.b16 %v1113
        %v2027 = vunpack.c.h.b16 %v1113
        %v2028 = vunpack.c.l.b16 %v1114
        %v2029 = vunpack.c.l.b16 %v1115
        %v2030 = vunpack.c.h.b16 %v1115
        %v2031 = vunpack.c.l.b16 %v1116
        %v2032 = vunpack.c.h.b16 %v1116
        %v2033 = vunpack.c.l.b16 %v1117
        %v2034 = vunpack.c.l.b16 %v1118
        %v2035 = vunpack.c.h.b16 %v1118
        %v2036 = vunpack.c.l.b16 %v1119
        %v2037 = vunpack.c.h.b16 %v1119
        %v2038 = vunpack.c.l.b16 %v1120
        %v2039 = vunpack.c.l.b16 %v1121
        %v2040 = vunpack.c.h.b16 %v1121
        %v2041 = vunpack.c.l.b16 %v1122
        %v2042 = vunpack.c.h.b16 %v1122
        %v2043 = vunpack.c.l.b16 %v1123
        %v2044 = vunpack.c.l.b16 %v1124
        %v2045 = vunpack.c.h.b16 %v1124
        %v2046 = vunpack.c.l.b16 %v1125
        %v2047 = vunpack.c.h.b16 %v1125
        %v2048 = vunpack.c.l.b16 %v1126
        %v2049 = vunpack.c.l.b16 %v1127
        %v2050 = vunpack.c.h.b16 %v1127
        %v2051 = vunpack.c.l.b16 %v1128
        %v2052 = vunpack.c.h.b16 %v1128
        %v2053 = vunpack.c.l.b16 %v1129
        %v2054 = vunpack.c.l.b16 %v1130
        %v2055 = vunpack.c.h.b16 %v1130
        %v2056 = vunpack.c.l.b16 %v1131
        %v2057 = vunpack.c.h.b16 %v1131
        %v2058 = vunpack.c.l.b16 %v1132
        %v2059 = vunpack.c.l.b16 %v1133
        %v2060 = vunpack.c.h.b16 %v1133
        %v2061 = vunpack.c.l.b16 %v1134
        %v2062 = vunpack.c.h.b16 %v1134
        %v2063 = vunpack.c.l.b16 %v1135
        %v2064 = vunpack.c.l.b16 %v1136
        %v2065 = vunpack.c.h.b16 %v1136
        %v2066 = vunpack.c.l.b16 %v1137
        %v2067 = vunpack.c.h.b16 %v1137
        %v2068 = vunpack.c.l.b16 %v1138
        %v2069 = vunpack.c.l.b16 %v1139
        %v2070 = vunpack.c.h.b16 %v1139
        %v2071 = vunpack.c.l.b16 %v1140
        %v2072 = vunpack.c.h.b16 %v1140
        %v2073 = vunpack.c.l.b16 %v1141
        %v2074 = vunpack.c.l.b16 %v1142
        %v2075 = vunpack.c.h.b16 %v1142
        %v2076 = vunpack.c.l.b16 %v1143
        %v2077 = vunpack.c.h.b16 %v1143
        %v2078 = vunpack.c.l.b16 %v1144
        %v2079 = vunpack.c.l.b16 %v1145
        %v2080 = vunpack.c.h.b16 %v1145
        %v2081 = vunpack.c.l.b16 %v1146
        %v2082 = vunpack.c.h.b16 %v1146
        %v2083 = vunpack.c.l.b16 %v1147
        %v2084 = vunpack.c.l.b16 %v1148
        %v2085 = vunpack.c.h.b16 %v1148
        %v2086 = vunpack.c.l.b16 %v1149
        %v2087 = vunpack.c.h.b16 %v1149
        %v2088 = vunpack.c.l.b16 %v1150
        %v2089 = vunpack.c.l.b16 %v1151
        %v2090 = vunpack.c.h.b16 %v1151
        %v2091 = vunpack.c.l.b16 %v1152
        %v2092 = vunpack.c.h.b16 %v1152
        %v2093 = vunpack.c.l.b16 %v1153
        %v2094 = vunpack.c.l.b16 %v1154
        %v2095 = vunpack.c.h.b16 %v1154
        %v2096 = vunpack.c.l.b16 %v1155
        %v2097 = vunpack.c.h.b16 %v1155
        %v2098 = vunpack.c.l.b16 %v1156
        %v2099 = vunpack.c.l.b16 %v1157
        %v2100 = vunpack.c.h.b16 %v1157
        %v2101 = vunpack.c.l.b16 %v1158
        %v2102 = vunpack.c.h.b16 %v1158
        %v2103 = vunpack.c.l.b16 %v1159
        %v2104 = vunpack.c.l.b16 %v1160
        %v2105 = vunpack.c.h.b16 %v1160
        %v2106 = vunpack.c.l.b16 %v1161
        %v2107 = vunpack.c.h.b16 %v1161
        %v2108 = vunpack.c.l.b16 %v1162
        %v2109 = vunpack.c.l.b16 %v1163
        %v2110 = vunpack.c.h.b16 %v1163
        %v2111 = vunpack.c.l.b16 %v1164
        %v2112 = vunpack.c.h.b16 %v1164
        %v2113 = vunpack.c.l.b16 %v1165
        %v2114 = vunpack.c.l.b16 %v1166
        %v2115 = vunpack.c.h.b16 %v1166
        %v2116 = vunpack.c.l.b16 %v1167
        %v2117 = vunpack.c.h.b16 %v1167
        %v2118 = vunpack.c.l.b16 %v1168
        %v2119 = vunpack.c.l.b16 %v1169
        %v2120 = vunpack.c.h.b16 %v1169
        %v2121 = vunpack.c.l.b16 %v1170
        %v2122 = vunpack.c.h.b16 %v1170
        %v2123 = vunpack.c.l.b16 %v1171
        %v2124 = vunpack.c.l.b16 %v1172
        %v2125 = vunpack.c.h.b16 %v1172
        %v2126 = vunpack.c.l.b16 %v1173
        %v2127 = vunpack.c.h.b16 %v1173
        %v2128 = vunpack.c.l.b16 %v1174
        %v2129 = vunpack.c.l.b16 %v1175
        %v2130 = vunpack.c.h.b16 %v1175
        %v2131 = vunpack.c.l.b16 %v1176
        %v2132 = vunpack.c.h.b16 %v1176
        %v2133 = vunpack.c.l.b16 %v1177
        %v2134 = vunpack.c.l.b16 %v1178
        %v2135 = vunpack.c.h.b16 %v1178
        %v2136 = vunpack.c.l.b16 %v1179
        %v2137 = vunpack.c.h.b16 %v1179
        %v2138 = vunpack.c.l.b16 %v1180
        %v2139 = vunpack.c.l.b16 %v1181
        %v2140 = vunpack.c.h.b16 %v1181
        %v2141 = vunpack.c.l.b16 %v1182
        %v2142 = vunpack.c.h.b16 %v1182
        %v2143 = vunpack.c.l.b16 %v1183
        %v2144 = vunpack.c.l.b16 %v1184
        %v2145 = vunpack.c.h.b16 %v1184
        %v2146 = vunpack.c.l.b16 %v1185
        %v2147 = vunpack.c.h.b16 %v1185
        %v2148 = vunpack.c.l.b16 %v1186
        %v2149 = vunpack.c.l.b16 %v1187
        %v2150 = vunpack.c.h.b16 %v1187
        %v2151 = vunpack.c.l.b16 %v1188
        %v2152 = vunpack.c.h.b16 %v1188
        %v2153 = vunpack.c.l.b16 %v1189
        %v2154 = vunpack.c.l.b16 %v1190
        %v2155 = vunpack.c.h.b16 %v1190
        %v2156 = vunpack.c.l.b16 %v1191
        %v2157 = vunpack.c.h.b16 %v1191
        %v2158 = vunpack.c.l.b16 %v1192
        %v2159 = vunpack.c.l.b16 %v1193
        %v2160 = vunpack.c.h.b16 %v1193
        %v2161 = vunpack.c.l.b16 %v1194
        %v2162 = vunpack.c.h.b16 %v1194
        %v2163 = vunpack.c.l.b16 %v1195
        %v2164 = vunpack.c.l.b16 %v1196
        %v2165 = vunpack.c.h.b16 %v1196
        %v2166 = vunpack.c.l.b16 %v1197
        %v2167 = vunpack.c.h.b16 %v1197
        %v2168 = vunpack.c.l.b16 %v1198
        %v2169 = vunpack.c.l.b16 %v1199
        %v2170 = vunpack.c.h.b16 %v1199
        %v2171 = vunpack.c.l.b16 %v1200
        %v2172 = vunpack.c.h.b16 %v1200
        %v2173 = vunpack.c.l.b16 %v1201
        %v2174 = vunpack.c.l.b16 %v1202
        %v2175 = vunpack.c.h.b16 %v1202
        %v2176 = vunpack.c.l.b16 %v1203
        %v2177 = vunpack.c.h.b16 %v1203
        %v2178 = vunpack.c.l.b16 %v1204
        %v2179 = vunpack.c.l.b16 %v1205
        %v2180 = vunpack.c.h.b16 %v1205
        %v2181 = vunpack.c.l.b16 %v1206
        %v2182 = vunpack.c.h.b16 %v1206
        %v2183 = vunpack.c.l.b16 %v1207
        %v2184 = vunpack.c.l.b16 %v1208
        %v2185 = vunpack.c.h.b16 %v1208
        %v2186 = vunpack.c.l.b16 %v1209
        %v2187 = vunpack.c.h.b16 %v1209
        %v2188 = vunpack.c.l.b16 %v1210
        %v2189 = vunpack.c.l.b16 %v1211
        %v2190 = vunpack.c.h.b16 %v1211
        %v2191 = vunpack.c.l.b16 %v1212
        %v2192 = vunpack.c.h.b16 %v1212
        %v2193 = vunpack.c.l.b16 %v1213
        %v2194 = vunpack.c.l.b16 %v1214
        %v2195 = vunpack.c.h.b16 %v1214
        %v2196 = vunpack.c.l.b16 %v1215
        %v2197 = vunpack.c.h.b16 %v1215
        %v2198 = vunpack.c.l.b16 %v1216
        %v2199 = vunpack.c.l.b16 %v1217
        %v2200 = vunpack.c.h.b16 %v1217
        %v2201 = vunpack.c.l.b16 %v1218
        %v2202 = vunpack.c.h.b16 %v1218
        %v2203 = vunpack.c.l.b16 %v1219
        %v2204 = vunpack.c.l.b16 %v1220
        %v2205 = vunpack.c.h.b16 %v1220
        %v2206 = vunpack.c.l.b16 %v1221
        %v2207 = vunpack.c.h.b16 %v1221
        %v2208 = vunpack.c.l.b16 %v1222
        %v2209 = vunpack.c.l.b16 %v1223
        %v2210 = vunpack.c.h.b16 %v1223
        %v2211 = vunpack.c.l.b16 %v1224
        %v2212 = vunpack.c.h.b16 %v1224
        %v2213 = vunpack.c.l.b16 %v1225
        %v2214 = vunpack.c.l.b16 %v1226
        %v2215 = vunpack.c.h.b16 %v1226
        %v2216 = vunpack.c.l.b16 %v1227
        %v2217 = vunpack.c.h.b16 %v1227
        %v2218 = vunpack.c.l.b16 %v1228
        %v2219 = vunpack.c.l.b16 %v1229
        %v2220 = vunpack.c.h.b16 %v1229
        %v2221 = vunpack.c.l.b16 %v1230
        %v2222 = vunpack.c.h.b16 %v1230
        %v2223 = vunpack.c.l.b16 %v1231
        %v2224 = vunpack.c.l.b16 %v1232
        %v2225 = vunpack.c.h.b16 %v1232
        %v2226 = vunpack.c.l.b16 %v1233
        %v2227 = vunpack.c.h.b16 %v1233
        %v2228 = vunpack.c.l.b16 %v1234
        %v2229 = vunpack.c.l.b16 %v1235
        %v2230 = vunpack.c.h.b16 %v1235
        %v2231 = vunpack.c.l.b16 %v1236
        %v2232 = vunpack.c.h.b16 %v1236
        %v2233 = vunpack.c.l.b16 %v1237
        %v2234 = vunpack.c.l.b16 %v1238
        %v2235 = vunpack.c.h.b16 %v1238
        %v2236 = vunpack.c.l.b16 %v1239
        %v2237 = vunpack.c.h.b16 %v1239
        %v2238 = vunpack.c.l.b16 %v1240
        %v2239 = vunpack.c.l.b16 %v1241
        %v2240 = vunpack.c.h.b16 %v1241
        %v2241 = vunpack.c.l.b16 %v1242
        %v2242 = vunpack.c.h.b16 %v1242
        %v2243 = vunpack.c.l.b16 %v1243
        %v2244 = vunpack.c.l.b16 %v1244
        %v2245 = vunpack.c.h.b16 %v1244
        %v2246 = vunpack.c.l.b16 %v1245
        %v2247 = vunpack.c.h.b16 %v1245
        %v2248 = vunpack.c.l.b16 %v1246
        %v2249 = vunpack.c.l.b16 %v1247
        %v2250 = vunpack.c.h.b16 %v1247
        %v2251 = vunpack.c.l.b16 %v1248
        %v2252 = vunpack.c.h.b16 %v1248
        %v2253 = vunpack.c.l.b16 %v1249
        %v2254 = vunpack.c.l.b16 %v1250
        %v2255 = vunpack.c.h.b16 %v1250
        %v2256 = vunpack.c.l.b16 %v1251
        %v2257 = vunpack.c.h.b16 %v1251
        %v2258 = vunpack.c.l.b16 %v1252
        %v2259 = vunpack.c.l.b16 %v1253
        %v2260 = vunpack.c.h.b16 %v1253
        %v2261 = vunpack.c.l.b16 %v1254
        %v2262 = vunpack.c.h.b16 %v1254
        %v2263 = vunpack.c.l.b16 %v1255
        %v2264 = vunpack.c.l.b16 %v1256
        %v2265 = vunpack.c.h.b16 %v1256
        %v2266 = vunpack.c.l.b16 %v1257
        %v2267 = vunpack.c.h.b16 %v1257
        %v2268 = vunpack.c.l.b16 %v1258
        %v2269 = vunpack.c.l.b16 %v1259
        %v2270 = vunpack.c.h.b16 %v1259
        %v2271 = vunpack.c.l.b16 %v1260
        %v2272 = vunpack.c.h.b16 %v1260
        %v2273 = vunpack.c.l.b16 %v1261
        %v2274 = vunpack.c.l.b16 %v1262
        %v2275 = vunpack.c.h.b16 %v1262
        %v2276 = vunpack.c.l.b16 %v1263
        %v2277 = vunpack.c.h.b16 %v1263
        %v2278 = vunpack.c.l.b16 %v1264
        %v2279 = vunpack.c.l.b16 %v1265
        %v2280 = vunpack.c.h.b16 %v1265
        %v2281 = vunpack.c.l.b16 %v1266
        %v2282 = vunpack.c.h.b16 %v1266
        %v2283 = vunpack.c.l.b16 %v1267
        %v2284 = vunpack.c.l.b16 %v1268
        %v2285 = vunpack.c.h.b16 %v1268
        %v2286 = vunpack.c.l.b16 %v1269
        %v2287 = vunpack.c.h.b16 %v1269
        %v2288 = vunpack.c.l.b16 %v1270
        %v2289 = vunpack.c.l.b16 %v1271
        %v2290 = vunpack.c.h.b16 %v1271
        %v2291 = vunpack.c.l.b16 %v1272
        %v2292 = vunpack.c.h.b16 %v1272
        %v2293 = vunpack.c.l.b16 %v1273
        %v2294 = vunpack.c.l.b16 %v1274
        %v2295 = vunpack.c.h.b16 %v1274
        %v2296 = vunpack.c.l.b16 %v1275
        %v2297 = vunpack.c.h.b16 %v1275
        %v2298 = vunpack.c.l.b16 %v1276
        %v2299 = vunpack.c.l.b16 %v1277
        %v2300 = vunpack.c.h.b16 %v1277
        %v2301 = vunpack.c.l.b16 %v1278
        %v2302 = vunpack.c.h.b16 %v1278
        %v2303 = vunpack.c.l.b16 %v1279
        %v2304 = vpack.c.b16 %v1669, %v1664
        %v2305 = vpack.c.b16 %v1670, %v1665
        %v2306 = vpack.c.b16 %v1671, %v1666
        %v2307 = vpack.c.b16 %v1672, %v1667
        %v2308 = vpack.c.b16 %v1673, %v1668
        %v2309 = vpack.c.b16 %v1679, %v1674
        %v2310 = vpack.c.b16 %v1680, %v1675
        %v2311 = vpack.c.b16 %v1681, %v1676
        %v2312 = vpack.c.b16 %v1682, %v1677
        %v2313 = vpack.c.b16 %v1683, %v1678
        %v2314 = vpack.c.b16 %v1689, %v1684
        %v2315 = vpack.c.b16 %v1690, %v1685
        %v2316 = vpack.c.b16 %v1691, %v1686
        %v2317 = vpack.c.b16 %v1692, %v1687
        %v2318 = vpack.c.b16 %v1693, %v1688
        %v2319 = vpack.c.b16 %v1699, %v1694
        %v2320 = vpack.c.b16 %v1700, %v1695
        %v2321 = vpack.c.b16 %v1701, %v1696
        %v2322 = vpack.c.b16 %v1702, %v1697
        %v2323 = vpack.c.b16 %v1703, %v1698
        %v2324 = vpack.c.b16 %v1709, %v1704
        %v2325 = vpack.c.b16 %v1710, %v1705
        %v2326 = vpack.c.b16 %v1711, %v1706
        %v2327 = vpack.c.b16 %v1712, %v1707
        %v2328 = vpack.c.b16 %v1713, %v1708
        %v2329 = vpack.c.b16 %v1719, %v1714
        %v2330 = vpack.c.b16 %v1720, %v1715
        %v2331 = vpack.c.b16 %v1721, %v1716
        %v2332 = vpack.c.b16 %v1722, %v1717
        %v2333 = vpack.c.b16 %v1723, %v1718
        %v2334 = vpack.c.b16 %v1729, %v1724
        %v2335 = vpack.c.b16 %v1730, %v1725
        %v2336 = vpack.c.b16 %v1731, %v1726
        %v2337 = vpack.c.b16 %v1732, %v1727
        %v2338 = vpack.c.b16 %v1733, %v1728
        %v2339 = vpack.c.b16 %v1739, %v1734
        %v2340 = vpack.c.b16 %v1740, %v1735
        %v2341 = vpack.c.b16 %v1741, %v1736
        %v2342 = vpack.c.b16 %v1742, %v1737
        %v2343 = vpack.c.b16 %v1743, %v1738
        %v2344 = vpack.c.b16 %v1749, %v1744
        %v2345 = vpack.c.b16 %v1750, %v1745
        %v2346 = vpack.c.b16 %v1751, %v1746
        %v2347 = vpack.c.b16 %v1752, %v1747
        %v2348 = vpack.c.b16 %v1753, %v1748
        %v2349 = vpack.c.b16 %v1759, %v1754
        %v2350 = vpack.c.b16 %v1760, %v1755
        %v2351 = vpack.c.b16 %v1761, %v1756
        %v2352 = vpack.c.b16 %v1762, %v1757
        %v2353 = vpack.c.b16 %v1763, %v1758
        %v2354 = vpack.c.b16 %v1769, %v1764
        %v2355 = vpack.c.b16 %v1770, %v1765
        %v2356 = vpack.c.b16 %v1771, %v1766
        %v2357 = vpack.c.b16 %v1772, %v1767
        %v2358 = vpack.c.b16 %v1773, %v1768
        %v2359 = vpack.c.b16 %v1779, %v1774
        %v2360 = vpack.c.b16 %v1780, %v1775
        %v2361 = vpack.c.b16 %v1781, %v1776
        %v2362 = vpack.c.b16 %v1782, %v1777
        %v2363 = vpack.c.b16 %v1783, %v1778
        %v2364 = vpack.c.b16 %v1789, %v1784
        %v2365 = vpack.c.b16 %v1790, %v1785
        %v2366 = vpack.c.b16 %v1791, %v1786
        %v2367 = vpack.c.b16 %v1792, %v1787
        %v2368 = vpack.c.b16 %v1793, %v1788
        %v2369 = vpack.c.b16 %v1799, %v1794
        %v2370 = vpack.c.b16 %v1800, %v1795
        %v2371 = vpack.c.b16 %v1801, %v1796
        %v2372 = vpack.c.b16 %v1802, %v1797
        %v2373 = vpack.c.b16 %v1803, %v1798
        %v2374 = vpack.c.b16 %v1809, %v1804
        %v2375 = vpack.c.b16 %v1810, %v1805
        %v2376 = vpack.c.b16 %v1811, %v1806
        %v2377 = vpack.c.b16 %v1812, %v1807
        %v2378 = vpack.c.b16 %v1813, %v1808
        %v2379 = vpack.c.b16 %v1819, %v1814
        %v2380 = vpack.c.b16 %v1820, %v1815
        %v2381 = vpack.c.b16 %v1821, %v1816
        %v2382 = vpack.c.b16 %v1822, %v1817
        %v2383 = vpack.c.b16 %v1823, %v1818
        %v2384 = vpack.c.b16 %v1829, %v1824
        %v2385 = vpack.c.b16 %v1830, %v1825
        %v2386 = vpack.c.b16 %v1831, %v1826
        %v2387 = vpack.c.b16 %v1832, %v1827
        %v2388 = vpack.c.b16 %v1833, %v1828
        %v2389 = vpack.c.b16 %v1839, %v1834
        %v2390 = vpack.c.b16 %v1840, %v1835
        %v2391 = vpack.c.b16 %v1841, %v1836
        %v2392 = vpack.c.b16 %v1842, %v1837
        %v2393 = vpack.c.b16 %v1843, %v1838
        %v2394 = vpack.c.b16 %v1849, %v1844
        %v2395 = vpack.c.b16 %v1850, %v1845
        %v2396 = vpack.c.b16 %v1851, %v1846
        %v2397 = vpack.c.b16 %v1852, %v1847
        %v2398 = vpack.c.b16 %v1853, %v1848
        %v2399 = vpack.c.b16 %v1859, %v1854
        %v2400 = vpack.c.b16 %v1860, %v1855
        %v2401 = vpack.c.b16 %v1861, %v1856
        %v2402 = vpack.c.b16 %v1862, %v1857
        %v2403 = vpack.c.b16 %v1863, %v1858
        %v2404 = vpack.c.b16 %v1869, %v1864
        %v2405 = vpack.c.b16 %v1870, %v1865
        %v2406 = vpack.c.b16 %v1871, %v1866
        %v2407 = vpack.c.b16 %v1872, %v1867
        %v2408 = vpack.c.b16 %v1873, %v1868
        %v2409 = vpack.c.b16 %v1879, %v1874
        %v2410 = vpack.c.b16 %v1880, %v1875
        %v2411 = vpack.c.b16 %v1881, %v1876
        %v2412 = vpack.c.b16 %v1882, %v1877
        %v2413 = vpack.c.b16 %v1883, %v1878
        %v2414 = vpack.c.b16 %v1889, %v1884
        %v2415 = vpack.c.b16 %v1890, %v1885
        %v2416 = vpack.c.b16 %v1891, %v1886
        %v2417 = vpack.c.b16 %v1892, %v1887
        %v2418 = vpack.c.b16 %v1893, %v1888
        %v2419 = vpack.c.b16 %v1899, %v1894
        %v2420 = vpack.c.b16 %v1900, %v1895
        %v2421 = vpack.c.b16 %v1901, %v1896
        %v2422 = vpack.c.b16 %v1902, %v1897
        %v2423 = vpack.c.b16 %v1903, %v1898
        %v2424 = vpack.c.b16 %v1909, %v1904
        %v2425 = vpack.c.b16 %v1910, %v1905
        %v2426 = vpack.c.b16 %v1911, %v1906
        %v2427 = vpack.c.b16 %v1912, %v1907
        %v2428 = vpack.c.b16 %v1913, %v1908
        %v2429 = vpack.c.b16 %v1919, %v1914
        %v2430 = vpack.c.b16 %v1920, %v1915
        %v2431 = vpack.c.b16 %v1921, %v1916
        %v2432 = vpack.c.b16 %v1922, %v1917
        %v2433 = vpack.c.b16 %v1923, %v1918
        %v2434 = vpack.c.b16 %v1929, %v1924
        %v2435 = vpack.c.b16 %v1930, %v1925
        %v2436 = vpack.c.b16 %v1931, %v1926
        %v2437 = vpack.c.b16 %v1932, %v1927
        %v2438 = vpack.c.b16 %v1933, %v1928
        %v2439 = vpack.c.b16 %v1939, %v1934
        %v2440 = vpack.c.b16 %v1940, %v1935
        %v2441 = vpack.c.b16 %v1941, %v1936
        %v2442 = vpack.c.b16 %v1942, %v1937
        %v2443 = vpack.c.b16 %v1943, %v1938
        %v2444 = vpack.c.b16 %v1949, %v1944
        %v2445 = vpack.c.b16 %v1950, %v1945
        %v2446 = vpack.c.b16 %v1951, %v1946
        %v2447 = vpack.c.b16 %v1952, %v1947
        %v2448 = vpack.c.b16 %v1953, %v1948
        %v2449 = vpack.c.b16 %v1959, %v1954
        %v2450 = vpack.c.b16 %v1960, %v1955
        %v2451 = vpack.c.b16 %v1961, %v1956
        %v2452 = vpack.c.b16 %v1962, %v1957
        %v2453 = vpack.c.b16 %v1963, %v1958
        %v2454 = vpack.c.b16 %v1969, %v1964
        %v2455 = vpack.c.b16 %v1970, %v1965
        %v2456 = vpack.c.b16 %v1971, %v1966
        %v2457 = vpack.c.b16 %v1972, %v1967
        %v2458 = vpack.c.b16 %v1973, %v1968
        %v2459 = vpack.c.b16 %v1979, %v1974
        %v2460 = vpack.c.b16 %v1980, %v1975
        %v2461 = vpack.c.b16 %v1981, %v1976
        %v2462 = vpack.c.b16 %v1982, %v1977
        %v2463 = vpack.c.b16 %v1983, %v1978
        %v2464 = vpack.c.b16 %v1989, %v1984
        %v2465 = vpack.c.b16 %v1990, %v1985
        %v2466 = vpack.c.b16 %v1991, %v1986
        %v2467 = vpack.c.b16 %v1992, %v1987
        %v2468 = vpack.c.b16 %v1993, %v1988
        %v2469 = vpack.c.b16 %v1999, %v1994
        %v2470 = vpack.c.b16 %v2000, %v1995
        %v2471 = vpack.c.b16 %v2001, %v1996
        %v2472 = vpack.c.b16 %v2002, %v1997
        %v2473 = vpack.c.b16 %v2003, %v1998
        %v2474 = vpack.c.b16 %v2009, %v2004
        %v2475 = vpack.c.b16 %v2010, %v2005
        %v2476 = vpack.c.b16 %v2011, %v2006
        %v2477 = vpack.c.b16 %v2012, %v2007
        %v2478 = vpack.c.b16 %v2013, %v2008
        %v2479 = vpack.c.b16 %v2019, %v2014
        %v2480 = vpack.c.b16 %v2020, %v2015
        %v2481 = vpack.c.b16 %v2021, %v2016
        %v2482 = vpack.c.b16 %v2022, %v2017
        %v2483 = vpack.c.b16 %v2023, %v2018
        %v2484 = vpack.c.b16 %v2029, %v2024
        %v2485 = vpack.c.b16 %v2030, %v2025
        %v2486 = vpack.c.b16 %v2031, %v2026
        %v2487 = vpack.c.b16 %v2032, %v2027
        %v2488 = vpack.c.b16 %v2033, %v2028
        %v2489 = vpack.c.b16 %v2039, %v2034
        %v2490 = vpack.c.b16 %v2040, %v2035
        %v2491 = vpack.c.b16 %v2041, %v2036
        %v2492 = vpack.c.b16 %v2042, %v2037
        %v2493 = vpack.c.b16 %v2043, %v2038
        %v2494 = vpack.c.b16 %v2049, %v2044
        %v2495 = vpack.c.b16 %v2050, %v2045
        %v2496 = vpack.c.b16 %v2051, %v2046
        %v2497 = vpack.c.b16 %v2052, %v2047
        %v2498 = vpack.c.b16 %v2053, %v2048
        %v2499 = vpack.c.b16 %v2059, %v2054
        %v2500 = vpack.c.b16 %v2060, %v2055
        %v2501 = vpack.c.b16 %v2061, %v2056
        %v2502 = vpack.c.b16 %v2062, %v2057
        %v2503 = vpack.c.b16 %v2063, %v2058
        %v2504 = vpack.c.b16 %v2069, %v2064
        %v2505 = vpack.c.b16 %v2070, %v2065
        %v2506 = vpack.c.b16 %v2071, %v2066
        %v2507 = vpack.c.b16 %v2072, %v2067
        %v2508 = vpack.c.b16 %v2073, %v2068
        %v2509 = vpack.c.b16 %v2079, %v2074
        %v2510 = vpack.c.b16 %v2080, %v2075
        %v2511 = vpack.c.b16 %v2081, %v2076
        %v2512 = vpack.c.b16 %v2082, %v2077
        %v2513 = vpack.c.b16 %v2083, %v2078
        %v2514 = vpack.c.b16 %v2089, %v2084
        %v2515 = vpack.c.b16 %v2090, %v2085
        %v2516 = vpack.c.b16 %v2091, %v2086
        %v2517 = vpack.c.b16 %v2092, %v2087
        %v2518 = vpack.c.b16 %v2093, %v2088
        %v2519 = vpack.c.b16 %v2099, %v2094
        %v2520 = vpack.c.b16 %v2100, %v2095
        %v2521 = vpack.c.b16 %v2101, %v2096
        %v2522 = vpack.c.b16 %v2102, %v2097
        %v2523 = vpack.c.b16 %v2103, %v2098
        %v2524 = vpack.c.b16 %v2109, %v2104
        %v2525 = vpack.c.b16 %v2110, %v2105
        %v2526 = vpack.c.b16 %v2111, %v2106
        %v2527 = vpack.c.b16 %v2112, %v2107
        %v2528 = vpack.c.b16 %v2113, %v2108
        %v2529 = vpack.c.b16 %v2119, %v2114
        %v2530 = vpack.c.b16 %v2120, %v2115
        %v2531 = vpack.c.b16 %v2121, %v2116
        %v2532 = vpack.c.b16 %v2122, %v2117
        %v2533 = vpack.c.b16 %v2123, %v2118
        %v2534 = vpack.c.b16 %v2129, %v2124
        %v2535 = vpack.c.b16 %v2130, %v2125
        %v2536 = vpack.c.b16 %v2131, %v2126
        %v2537 = vpack.c.b16 %v2132, %v2127
        %v2538 = vpack.c.b16 %v2133, %v2128
        %v2539 = vpack.c.b16 %v2139, %v2134
        %v2540 = vpack.c.b16 %v2140, %v2135
        %v2541 = vpack.c.b16 %v2141, %v2136
        %v2542 = vpack.c.b16 %v2142, %v2137
        %v2543 = vpack.c.b16 %v2143, %v2138
        %v2544 = vpack.c.b16 %v2149, %v2144
        %v2545 = vpack.c.b16 %v2150, %v2145
        %v2546 = vpack.c.b16 %v2151, %v2146
        %v2547 = vpack.c.b16 %v2152, %v2147
        %v2548 = vpack.c.b16 %v2153, %v2148
        %v2549 = vpack.c.b16 %v2159, %v2154
        %v2550 = vpack.c.b16 %v2160, %v2155
        %v2551 = vpack.c.b16 %v2161, %v2156
        %v2552 = vpack.c.b16 %v2162, %v2157
        %v2553 = vpack.c.b16 %v2163, %v2158
        %v2554 = vpack.c.b16 %v2169, %v2164
        %v2555 = vpack.c.b16 %v2170, %v2165
        %v2556 = vpack.c.b16 %v2171, %v2166
        %v2557 = vpack.c.b16 %v2172, %v2167
        %v2558 = vpack.c.b16 %v2173, %v2168
        %v2559 = vpack.c.b16 %v2179, %v2174
        %v2560 = vpack.c.b16 %v2180, %v2175
        %v2561 = vpack.c.b16 %v2181, %v2176
        %v2562 = vpack.c.b16 %v2182, %v2177
        %v2563 = vpack.c.b16 %v2183, %v2178
        %v2564 = vpack.c.b16 %v2189, %v2184
        %v2565 = vpack.c.b16 %v2190, %v2185
        %v2566 = vpack.c.b16 %v2191, %v2186
        %v2567 = vpack.c.b16 %v2192, %v2187
        %v2568 = vpack.c.b16 %v2193, %v2188
        %v2569 = vpack.c.b16 %v2199, %v2194
        %v2570 = vpack.c.b16 %v2200, %v2195
        %v2571 = vpack.c.b16 %v2201, %v2196
        %v2572 = vpack.c.b16 %v2202, %v2197
        %v2573 = vpack.c.b16 %v2203, %v2198
        %v2574 = vpack.c.b16 %v2209, %v2204
        %v2575 = vpack.c.b16 %v2210, %v2205
        %v2576 = vpack.c.b16 %v2211, %v2206
        %v2577 = vpack.c.b16 %v2212, %v2207
        %v2578 = vpack.c.b16 %v2213, %v2208
        %v2579 = vpack.c.b16 %v2219, %v2214
        %v2580 = vpack.c.b16 %v2220, %v2215
        %v2581 = vpack.c.b16 %v2221, %v2216
        %v2582 = vpack.c.b16 %v2222, %v2217
        %v2583 = vpack.c.b16 %v2223, %v2218
        %v2584 = vpack.c.b16 %v2229, %v2224
        %v2585 = vpack.c.b16 %v2230, %v2225
        %v2586 = vpack.c.b16 %v2231, %v2226
        %v2587 = vpack.c.b16 %v2232, %v2227
        %v2588 = vpack.c.b16 %v2233, %v2228
        %v2589 = vpack.c.b16 %v2239, %v2234
        %v2590 = vpack.c.b16 %v2240, %v2235
        %v2591 = vpack.c.b16 %v2241, %v2236
        %v2592 = vpack.c.b16 %v2242, %v2237
        %v2593 = vpack.c.b16 %v2243, %v2238
        %v2594 = vpack.c.b16 %v2249, %v2244
        %v2595 = vpack.c.b16 %v2250, %v2245
        %v2596 = vpack.c.b16 %v2251, %v2246
        %v2597 = vpack.c.b16 %v2252, %v2247
        %v2598 = vpack.c.b16 %v2253, %v2248
        %v2599 = vpack.c.b16 %v2259, %v2254
        %v2600 = vpack.c.b16 %v2260, %v2255
        %v2601 = vpack.c.b16 %v2261, %v2256
        %v2602 = vpack.c.b16 %v2262, %v2257
        %v2603 = vpack.c.b16 %v2263, %v2258
        %v2604 = vpack.c.b16 %v2269, %v2264
        %v2605 = vpack.c.b16 %v2270, %v2265
        %v2606 = vpack.c.b16 %v2271, %v2266
        %v2607 = vpack.c.b16 %v2272, %v2267
        %v2608 = vpack.c.b16 %v2273, %v2268
        %v2609 = vpack.c.b16 %v2279, %v2274
        %v2610 = vpack.c.b16 %v2280, %v2275
        %v2611 = vpack.c.b16 %v2281, %v2276
        %v2612 = vpack.c.b16 %v2282, %v2277
        %v2613 = vpack.c.b16 %v2283, %v2278
        %v2614 = vpack.c.b16 %v2289, %v2284
        %v2615 = vpack.c.b16 %v2290, %v2285
        %v2616 = vpack.c.b16 %v2291, %v2286
        %v2617 = vpack.c.b16 %v2292, %v2287
        %v2618 = vpack.c.b16 %v2293, %v2288
        %v2619 = vpack.c.b16 %v2299, %v2294
        %v2620 = vpack.c.b16 %v2300, %v2295
        %v2621 = vpack.c.b16 %v2301, %v2296
        %v2622 = vpack.c.b16 %v2302, %v2297
        %v2623 = vpack.c.b16 %v2303, %v2298
        %2944 = vmatpush.bf16.msra.mxu0 %v2339
        %2945 = vmatpush.bf16.msra.mxu0 %v2334
        %2946 = vmatpush.bf16.msra.mxu0 %v2329
        %2947 = vmatpush.bf16.msra.mxu0 %v2324
        %2948 = vmatpush.bf16.msra.mxu0 %v2319
        %2949 = vmatpush.bf16.msra.mxu0 %v2314
        %2950 = vmatpush.bf16.msra.mxu0 %v2309
        %2951 = vmatpush.bf16.msra.mxu0 %v2304
        %2952 = vmatmul.bf16.gmra.mxu0 %v768
        %v2953 = vpop.f32.mrf.mxu0
        %v2954 = vadd.f32 0.0, %v2953
        %v2955 = vpop.f32.mrf.mxu0
        %v2956 = vadd.f32 0.0, %v2955
        %2957 = vmatmul.bf16.gmra.mxu0 %v776
        %v2958 = vpop.f32.mrf.mxu0
        %v2959 = vadd.f32 0.0, %v2958
        %v2960 = vpop.f32.mrf.mxu0
        %v2961 = vadd.f32 0.0, %v2960
        %2962 = vmatmul.bf16.gmra.mxu0 %v784
        %v2963 = vpop.f32.mrf.mxu0
        %v2964 = vadd.f32 0.0, %v2963
        %v2965 = vpop.f32.mrf.mxu0
        %v2966 = vadd.f32 0.0, %v2965
        %2967 = vmatmul.bf16.gmra.mxu0 %v792
        %v2968 = vpop.f32.mrf.mxu0
        %v2969 = vadd.f32 0.0, %v2968
        %v2970 = vpop.f32.mrf.mxu0
        %v2971 = vadd.f32 0.0, %v2970
        %2972 = vmatmul.bf16.gmra.mxu0 %v800
        %v2973 = vpop.f32.mrf.mxu0
        %v2974 = vadd.f32 0.0, %v2973
        %v2975 = vpop.f32.mrf.mxu0
        %v2976 = vadd.f32 0.0, %v2975
        %2977 = vmatmul.bf16.gmra.mxu0 %v808
        %v2978 = vpop.f32.mrf.mxu0
        %v2979 = vadd.f32 0.0, %v2978
        %v2980 = vpop.f32.mrf.mxu0
        %v2981 = vadd.f32 0.0, %v2980
        %2982 = vmatmul.bf16.gmra.mxu0 %v816
        %v2983 = vpop.f32.mrf.mxu0
        %v2984 = vadd.f32 0.0, %v2983
        %v2985 = vpop.f32.mrf.mxu0
        %v2986 = vadd.f32 0.0, %v2985
        %2987 = vmatmul.bf16.gmra.mxu0 %v824
        %v2988 = vpop.f32.mrf.mxu0
        %v2989 = vadd.f32 0.0, %v2988
        %v2990 = vpop.f32.mrf.mxu0
        %v2991 = vadd.f32 0.0, %v2990
        %2992 = vmatmul.bf16.gmra.mxu0 %v832
        %v2993 = vpop.f32.mrf.mxu0
        %v2994 = vadd.f32 0.0, %v2993
        %v2995 = vpop.f32.mrf.mxu0
        %v2996 = vadd.f32 0.0, %v2995
        %2997 = vmatmul.bf16.gmra.mxu0 %v840
        %v2998 = vpop.f32.mrf.mxu0
        %v2999 = vadd.f32 0.0, %v2998
        %v3000 = vpop.f32.mrf.mxu0
        %v3001 = vadd.f32 0.0, %v3000
        %3002 = vmatmul.bf16.gmra.mxu0 %v848
        %v3003 = vpop.f32.mrf.mxu0
        %v3004 = vadd.f32 0.0, %v3003
        %v3005 = vpop.f32.mrf.mxu0
        %v3006 = vadd.f32 0.0, %v3005
        %3007 = vmatmul.bf16.gmra.mxu0 %v856
        %v3008 = vpop.f32.mrf.mxu0
        %v3009 = vadd.f32 0.0, %v3008
        %v3010 = vpop.f32.mrf.mxu0
        %v3011 = vadd.f32 0.0, %v3010
        %3012 = vmatmul.bf16.gmra.mxu0 %v864
        %v3013 = vpop.f32.mrf.mxu0
        %v3014 = vadd.f32 0.0, %v3013
        %v3015 = vpop.f32.mrf.mxu0
        %v3016 = vadd.f32 0.0, %v3015
        %3017 = vmatmul.bf16.gmra.mxu0 %v872
        %v3018 = vpop.f32.mrf.mxu0
        %v3019 = vadd.f32 0.0, %v3018
        %v3020 = vpop.f32.mrf.mxu0
        %v3021 = vadd.f32 0.0, %v3020
        %3022 = vmatmul.bf16.gmra.mxu0 %v880
        %v3023 = vpop.f32.mrf.mxu0
        %v3024 = vadd.f32 0.0, %v3023
        %v3025 = vpop.f32.mrf.mxu0
        %v3026 = vadd.f32 0.0, %v3025
        %3027 = vmatmul.bf16.gmra.mxu0 %v888
        %v3028 = vpop.f32.mrf.mxu0
        %v3029 = vadd.f32 0.0, %v3028
        %v3030 = vpop.f32.mrf.mxu0
        %v3031 = vadd.f32 0.0, %v3030
        %3032 = vdwg.mxu0
        %3033 = vmatpush.bf16.msra.mxu0 %v2379
        %3034 = vmatpush.bf16.msra.mxu0 %v2374
        %3035 = vmatpush.bf16.msra.mxu0 %v2369
        %3036 = vmatpush.bf16.msra.mxu0 %v2364
        %3037 = vmatpush.bf16.msra.mxu0 %v2359
        %3038 = vmatpush.bf16.msra.mxu0 %v2354
        %3039 = vmatpush.bf16.msra.mxu0 %v2349
        %3040 = vmatpush.bf16.msra.mxu0 %v2344
        %3041 = vmatmul.bf16.gmra.mxu0 %v769
        %v3042 = vpop.f32.mrf.mxu0
        %v3043 = vadd.f32 %v2954, %v3042
        %v3044 = vpop.f32.mrf.mxu0
        %v3045 = vadd.f32 %v2956, %v3044
        %3046 = vmatmul.bf16.gmra.mxu0 %v777
        %v3047 = vpop.f32.mrf.mxu0
        %v3048 = vadd.f32 %v2959, %v3047
        %v3049 = vpop.f32.mrf.mxu0
        %v3050 = vadd.f32 %v2961, %v3049
        %3051 = vmatmul.bf16.gmra.mxu0 %v785
        %v3052 = vpop.f32.mrf.mxu0
        %v3053 = vadd.f32 %v2964, %v3052
        %v3054 = vpop.f32.mrf.mxu0
        %v3055 = vadd.f32 %v2966, %v3054
        %3056 = vmatmul.bf16.gmra.mxu0 %v793
        %v3057 = vpop.f32.mrf.mxu0
        %v3058 = vadd.f32 %v2969, %v3057
        %v3059 = vpop.f32.mrf.mxu0
        %v3060 = vadd.f32 %v2971, %v3059
        %3061 = vmatmul.bf16.gmra.mxu0 %v801
        %v3062 = vpop.f32.mrf.mxu0
        %v3063 = vadd.f32 %v2974, %v3062
        %v3064 = vpop.f32.mrf.mxu0
        %v3065 = vadd.f32 %v2976, %v3064
        %3066 = vmatmul.bf16.gmra.mxu0 %v809
        %v3067 = vpop.f32.mrf.mxu0
        %v3068 = vadd.f32 %v2979, %v3067
        %v3069 = vpop.f32.mrf.mxu0
        %v3070 = vadd.f32 %v2981, %v3069
        %3071 = vmatmul.bf16.gmra.mxu0 %v817
        %v3072 = vpop.f32.mrf.mxu0
        %v3073 = vadd.f32 %v2984, %v3072
        %v3074 = vpop.f32.mrf.mxu0
        %v3075 = vadd.f32 %v2986, %v3074
        %3076 = vmatmul.bf16.gmra.mxu0 %v825
        %v3077 = vpop.f32.mrf.mxu0
        %v3078 = vadd.f32 %v2989, %v3077
        %v3079 = vpop.f32.mrf.mxu0
        %v3080 = vadd.f32 %v2991, %v3079
        %3081 = vmatmul.bf16.gmra.mxu0 %v833
        %v3082 = vpop.f32.mrf.mxu0
        %v3083 = vadd.f32 %v2994, %v3082
        %v3084 = vpop.f32.mrf.mxu0
        %v3085 = vadd.f32 %v2996, %v3084
        %3086 = vmatmul.bf16.gmra.mxu0 %v841
        %v3087 = vpop.f32.mrf.mxu0
        %v3088 = vadd.f32 %v2999, %v3087
        %v3089 = vpop.f32.mrf.mxu0
        %v3090 = vadd.f32 %v3001, %v3089
        %3091 = vmatmul.bf16.gmra.mxu0 %v849
        %v3092 = vpop.f32.mrf.mxu0
        %v3093 = vadd.f32 %v3004, %v3092
        %v3094 = vpop.f32.mrf.mxu0
        %v3095 = vadd.f32 %v3006, %v3094
        %3096 = vmatmul.bf16.gmra.mxu0 %v857
        %v3097 = vpop.f32.mrf.mxu0
        %v3098 = vadd.f32 %v3009, %v3097
        %v3099 = vpop.f32.mrf.mxu0
        %v3100 = vadd.f32 %v3011, %v3099
        %3101 = vmatmul.bf16.gmra.mxu0 %v865
        %v3102 = vpop.f32.mrf.mxu0
        %v3103 = vadd.f32 %v3014, %v3102
        %v3104 = vpop.f32.mrf.mxu0
        %v3105 = vadd.f32 %v3016, %v3104
        %3106 = vmatmul.bf16.gmra.mxu0 %v873
        %v3107 = vpop.f32.mrf.mxu0
        %v3108 = vadd.f32 %v3019, %v3107
        %v3109 = vpop.f32.mrf.mxu0
        %v3110 = vadd.f32 %v3021, %v3109
        %3111 = vmatmul.bf16.gmra.mxu0 %v881
        %v3112 = vpop.f32.mrf.mxu0
        %v3113 = vadd.f32 %v3024, %v3112
        %v3114 = vpop.f32.mrf.mxu0
        %v3115 = vadd.f32 %v3026, %v3114
        %3116 = vmatmul.bf16.gmra.mxu0 %v889
        %v3117 = vpop.f32.mrf.mxu0
        %v3118 = vadd.f32 %v3029, %v3117
        %v3119 = vpop.f32.mrf.mxu0
        %v3120 = vadd.f32 %v3031, %v3119
        %3121 = vdwg.mxu0
        %3122 = vmatpush.bf16.msra.mxu0 %v2419
        %3123 = vmatpush.bf16.msra.mxu0 %v2414
        %3124 = vmatpush.bf16.msra.mxu0 %v2409
        %3125 = vmatpush.bf16.msra.mxu0 %v2404
        %3126 = vmatpush.bf16.msra.mxu0 %v2399
        %3127 = vmatpush.bf16.msra.mxu0 %v2394
        %3128 = vmatpush.bf16.msra.mxu0 %v2389
        %3129 = vmatpush.bf16.msra.mxu0 %v2384
        %3130 = vmatmul.bf16.gmra.mxu0 %v770
        %v3131 = vpop.f32.mrf.mxu0
        %v3132 = vadd.f32 %v3043, %v3131
        %v3133 = vpop.f32.mrf.mxu0
        %v3134 = vadd.f32 %v3045, %v3133
        %3135 = vmatmul.bf16.gmra.mxu0 %v778
        %v3136 = vpop.f32.mrf.mxu0
        %v3137 = vadd.f32 %v3048, %v3136
        %v3138 = vpop.f32.mrf.mxu0
        %v3139 = vadd.f32 %v3050, %v3138
        %3140 = vmatmul.bf16.gmra.mxu0 %v786
        %v3141 = vpop.f32.mrf.mxu0
        %v3142 = vadd.f32 %v3053, %v3141
        %v3143 = vpop.f32.mrf.mxu0
        %v3144 = vadd.f32 %v3055, %v3143
        %3145 = vmatmul.bf16.gmra.mxu0 %v794
        %v3146 = vpop.f32.mrf.mxu0
        %v3147 = vadd.f32 %v3058, %v3146
        %v3148 = vpop.f32.mrf.mxu0
        %v3149 = vadd.f32 %v3060, %v3148
        %3150 = vmatmul.bf16.gmra.mxu0 %v802
        %v3151 = vpop.f32.mrf.mxu0
        %v3152 = vadd.f32 %v3063, %v3151
        %v3153 = vpop.f32.mrf.mxu0
        %v3154 = vadd.f32 %v3065, %v3153
        %3155 = vmatmul.bf16.gmra.mxu0 %v810
        %v3156 = vpop.f32.mrf.mxu0
        %v3157 = vadd.f32 %v3068, %v3156
        %v3158 = vpop.f32.mrf.mxu0
        %v3159 = vadd.f32 %v3070, %v3158
        %3160 = vmatmul.bf16.gmra.mxu0 %v818
        %v3161 = vpop.f32.mrf.mxu0
        %v3162 = vadd.f32 %v3073, %v3161
        %v3163 = vpop.f32.mrf.mxu0
        %v3164 = vadd.f32 %v3075, %v3163
        %3165 = vmatmul.bf16.gmra.mxu0 %v826
        %v3166 = vpop.f32.mrf.mxu0
        %v3167 = vadd.f32 %v3078, %v3166
        %v3168 = vpop.f32.mrf.mxu0
        %v3169 = vadd.f32 %v3080, %v3168
        %3170 = vmatmul.bf16.gmra.mxu0 %v834
        %v3171 = vpop.f32.mrf.mxu0
        %v3172 = vadd.f32 %v3083, %v3171
        %v3173 = vpop.f32.mrf.mxu0
        %v3174 = vadd.f32 %v3085, %v3173
        %3175 = vmatmul.bf16.gmra.mxu0 %v842
        %v3176 = vpop.f32.mrf.mxu0
        %v3177 = vadd.f32 %v3088, %v3176
        %v3178 = vpop.f32.mrf.mxu0
        %v3179 = vadd.f32 %v3090, %v3178
        %3180 = vmatmul.bf16.gmra.mxu0 %v850
        %v3181 = vpop.f32.mrf.mxu0
        %v3182 = vadd.f32 %v3093, %v3181
        %v3183 = vpop.f32.mrf.mxu0
        %v3184 = vadd.f32 %v3095, %v3183
        %3185 = vmatmul.bf16.gmra.mxu0 %v858
        %v3186 = vpop.f32.mrf.mxu0
        %v3187 = vadd.f32 %v3098, %v3186
        %v3188 = vpop.f32.mrf.mxu0
        %v3189 = vadd.f32 %v3100, %v3188
        %3190 = vmatmul.bf16.gmra.mxu0 %v866
        %v3191 = vpop.f32.mrf.mxu0
        %v3192 = vadd.f32 %v3103, %v3191
        %v3193 = vpop.f32.mrf.mxu0
        %v3194 = vadd.f32 %v3105, %v3193
        %3195 = vmatmul.bf16.gmra.mxu0 %v874
        %v3196 = vpop.f32.mrf.mxu0
        %v3197 = vadd.f32 %v3108, %v3196
        %v3198 = vpop.f32.mrf.mxu0
        %v3199 = vadd.f32 %v3110, %v3198
        %3200 = vmatmul.bf16.gmra.mxu0 %v882
        %v3201 = vpop.f32.mrf.mxu0
        %v3202 = vadd.f32 %v3113, %v3201
        %v3203 = vpop.f32.mrf.mxu0
        %v3204 = vadd.f32 %v3115, %v3203
        %3205 = vmatmul.bf16.gmra.mxu0 %v890
        %v3206 = vpop.f32.mrf.mxu0
        %v3207 = vadd.f32 %v3118, %v3206
        %v3208 = vpop.f32.mrf.mxu0
        %v3209 = vadd.f32 %v3120, %v3208
        %3210 = vdwg.mxu0
        %3211 = vmatpush.bf16.msra.mxu0 %v2459
        %3212 = vmatpush.bf16.msra.mxu0 %v2454
        %3213 = vmatpush.bf16.msra.mxu0 %v2449
        %3214 = vmatpush.bf16.msra.mxu0 %v2444
        %3215 = vmatpush.bf16.msra.mxu0 %v2439
        %3216 = vmatpush.bf16.msra.mxu0 %v2434
        %3217 = vmatpush.bf16.msra.mxu0 %v2429
        %3218 = vmatpush.bf16.msra.mxu0 %v2424
        %3219 = vmatmul.bf16.gmra.mxu0 %v771
        %v3220 = vpop.f32.mrf.mxu0
        %v3221 = vadd.f32 %v3132, %v3220
        %v3222 = vpop.f32.mrf.mxu0
        %v3223 = vadd.f32 %v3134, %v3222
        %3224 = vmatmul.bf16.gmra.mxu0 %v779
        %v3225 = vpop.f32.mrf.mxu0
        %v3226 = vadd.f32 %v3137, %v3225
        %v3227 = vpop.f32.mrf.mxu0
        %v3228 = vadd.f32 %v3139, %v3227
        %3229 = vmatmul.bf16.gmra.mxu0 %v787
        %v3230 = vpop.f32.mrf.mxu0
        %v3231 = vadd.f32 %v3142, %v3230
        %v3232 = vpop.f32.mrf.mxu0
        %v3233 = vadd.f32 %v3144, %v3232
        %3234 = vmatmul.bf16.gmra.mxu0 %v795
        %v3235 = vpop.f32.mrf.mxu0
        %v3236 = vadd.f32 %v3147, %v3235
        %v3237 = vpop.f32.mrf.mxu0
        %v3238 = vadd.f32 %v3149, %v3237
        %3239 = vmatmul.bf16.gmra.mxu0 %v803
        %v3240 = vpop.f32.mrf.mxu0
        %v3241 = vadd.f32 %v3152, %v3240
        %v3242 = vpop.f32.mrf.mxu0
        %v3243 = vadd.f32 %v3154, %v3242
        %3244 = vmatmul.bf16.gmra.mxu0 %v811
        %v3245 = vpop.f32.mrf.mxu0
        %v3246 = vadd.f32 %v3157, %v3245
        %v3247 = vpop.f32.mrf.mxu0
        %v3248 = vadd.f32 %v3159, %v3247
        %3249 = vmatmul.bf16.gmra.mxu0 %v819
        %v3250 = vpop.f32.mrf.mxu0
        %v3251 = vadd.f32 %v3162, %v3250
        %v3252 = vpop.f32.mrf.mxu0
        %v3253 = vadd.f32 %v3164, %v3252
        %3254 = vmatmul.bf16.gmra.mxu0 %v827
        %v3255 = vpop.f32.mrf.mxu0
        %v3256 = vadd.f32 %v3167, %v3255
        %v3257 = vpop.f32.mrf.mxu0
        %v3258 = vadd.f32 %v3169, %v3257
        %3259 = vmatmul.bf16.gmra.mxu0 %v835
        %v3260 = vpop.f32.mrf.mxu0
        %v3261 = vadd.f32 %v3172, %v3260
        %v3262 = vpop.f32.mrf.mxu0
        %v3263 = vadd.f32 %v3174, %v3262
        %3264 = vmatmul.bf16.gmra.mxu0 %v843
        %v3265 = vpop.f32.mrf.mxu0
        %v3266 = vadd.f32 %v3177, %v3265
        %v3267 = vpop.f32.mrf.mxu0
        %v3268 = vadd.f32 %v3179, %v3267
        %3269 = vmatmul.bf16.gmra.mxu0 %v851
        %v3270 = vpop.f32.mrf.mxu0
        %v3271 = vadd.f32 %v3182, %v3270
        %v3272 = vpop.f32.mrf.mxu0
        %v3273 = vadd.f32 %v3184, %v3272
        %3274 = vmatmul.bf16.gmra.mxu0 %v859
        %v3275 = vpop.f32.mrf.mxu0
        %v3276 = vadd.f32 %v3187, %v3275
        %v3277 = vpop.f32.mrf.mxu0
        %v3278 = vadd.f32 %v3189, %v3277
        %3279 = vmatmul.bf16.gmra.mxu0 %v867
        %v3280 = vpop.f32.mrf.mxu0
        %v3281 = vadd.f32 %v3192, %v3280
        %v3282 = vpop.f32.mrf.mxu0
        %v3283 = vadd.f32 %v3194, %v3282
        %3284 = vmatmul.bf16.gmra.mxu0 %v875
        %v3285 = vpop.f32.mrf.mxu0
        %v3286 = vadd.f32 %v3197, %v3285
        %v3287 = vpop.f32.mrf.mxu0
        %v3288 = vadd.f32 %v3199, %v3287
        %3289 = vmatmul.bf16.gmra.mxu0 %v883
        %v3290 = vpop.f32.mrf.mxu0
        %v3291 = vadd.f32 %v3202, %v3290
        %v3292 = vpop.f32.mrf.mxu0
        %v3293 = vadd.f32 %v3204, %v3292
        %3294 = vmatmul.bf16.gmra.mxu0 %v891
        %v3295 = vpop.f32.mrf.mxu0
        %v3296 = vadd.f32 %v3207, %v3295
        %v3297 = vpop.f32.mrf.mxu0
        %v3298 = vadd.f32 %v3209, %v3297
        %3299 = vdwg.mxu0
        %3300 = vmatpush.bf16.msra.mxu0 %v2499
        %3301 = vmatpush.bf16.msra.mxu0 %v2494
        %3302 = vmatpush.bf16.msra.mxu0 %v2489
        %3303 = vmatpush.bf16.msra.mxu0 %v2484
        %3304 = vmatpush.bf16.msra.mxu0 %v2479
        %3305 = vmatpush.bf16.msra.mxu0 %v2474
        %3306 = vmatpush.bf16.msra.mxu0 %v2469
        %3307 = vmatpush.bf16.msra.mxu0 %v2464
        %3308 = vmatmul.bf16.gmra.mxu0 %v772
        %v3309 = vpop.f32.mrf.mxu0
        %v3310 = vadd.f32 %v3221, %v3309
        %v3311 = vpop.f32.mrf.mxu0
        %v3312 = vadd.f32 %v3223, %v3311
        %3313 = vmatmul.bf16.gmra.mxu0 %v780
        %v3314 = vpop.f32.mrf.mxu0
        %v3315 = vadd.f32 %v3226, %v3314
        %v3316 = vpop.f32.mrf.mxu0
        %v3317 = vadd.f32 %v3228, %v3316
        %3318 = vmatmul.bf16.gmra.mxu0 %v788
        %v3319 = vpop.f32.mrf.mxu0
        %v3320 = vadd.f32 %v3231, %v3319
        %v3321 = vpop.f32.mrf.mxu0
        %v3322 = vadd.f32 %v3233, %v3321
        %3323 = vmatmul.bf16.gmra.mxu0 %v796
        %v3324 = vpop.f32.mrf.mxu0
        %v3325 = vadd.f32 %v3236, %v3324
        %v3326 = vpop.f32.mrf.mxu0
        %v3327 = vadd.f32 %v3238, %v3326
        %3328 = vmatmul.bf16.gmra.mxu0 %v804
        %v3329 = vpop.f32.mrf.mxu0
        %v3330 = vadd.f32 %v3241, %v3329
        %v3331 = vpop.f32.mrf.mxu0
        %v3332 = vadd.f32 %v3243, %v3331
        %3333 = vmatmul.bf16.gmra.mxu0 %v812
        %v3334 = vpop.f32.mrf.mxu0
        %v3335 = vadd.f32 %v3246, %v3334
        %v3336 = vpop.f32.mrf.mxu0
        %v3337 = vadd.f32 %v3248, %v3336
        %3338 = vmatmul.bf16.gmra.mxu0 %v820
        %v3339 = vpop.f32.mrf.mxu0
        %v3340 = vadd.f32 %v3251, %v3339
        %v3341 = vpop.f32.mrf.mxu0
        %v3342 = vadd.f32 %v3253, %v3341
        %3343 = vmatmul.bf16.gmra.mxu0 %v828
        %v3344 = vpop.f32.mrf.mxu0
        %v3345 = vadd.f32 %v3256, %v3344
        %v3346 = vpop.f32.mrf.mxu0
        %v3347 = vadd.f32 %v3258, %v3346
        %3348 = vmatmul.bf16.gmra.mxu0 %v836
        %v3349 = vpop.f32.mrf.mxu0
        %v3350 = vadd.f32 %v3261, %v3349
        %v3351 = vpop.f32.mrf.mxu0
        %v3352 = vadd.f32 %v3263, %v3351
        %3353 = vmatmul.bf16.gmra.mxu0 %v844
        %v3354 = vpop.f32.mrf.mxu0
        %v3355 = vadd.f32 %v3266, %v3354
        %v3356 = vpop.f32.mrf.mxu0
        %v3357 = vadd.f32 %v3268, %v3356
        %3358 = vmatmul.bf16.gmra.mxu0 %v852
        %v3359 = vpop.f32.mrf.mxu0
        %v3360 = vadd.f32 %v3271, %v3359
        %v3361 = vpop.f32.mrf.mxu0
        %v3362 = vadd.f32 %v3273, %v3361
        %3363 = vmatmul.bf16.gmra.mxu0 %v860
        %v3364 = vpop.f32.mrf.mxu0
        %v3365 = vadd.f32 %v3276, %v3364
        %v3366 = vpop.f32.mrf.mxu0
        %v3367 = vadd.f32 %v3278, %v3366
        %3368 = vmatmul.bf16.gmra.mxu0 %v868
        %v3369 = vpop.f32.mrf.mxu0
        %v3370 = vadd.f32 %v3281, %v3369
        %v3371 = vpop.f32.mrf.mxu0
        %v3372 = vadd.f32 %v3283, %v3371
        %3373 = vmatmul.bf16.gmra.mxu0 %v876
        %v3374 = vpop.f32.mrf.mxu0
        %v3375 = vadd.f32 %v3286, %v3374
        %v3376 = vpop.f32.mrf.mxu0
        %v3377 = vadd.f32 %v3288, %v3376
        %3378 = vmatmul.bf16.gmra.mxu0 %v884
        %v3379 = vpop.f32.mrf.mxu0
        %v3380 = vadd.f32 %v3291, %v3379
        %v3381 = vpop.f32.mrf.mxu0
        %v3382 = vadd.f32 %v3293, %v3381
        %3383 = vmatmul.bf16.gmra.mxu0 %v892
        %v3384 = vpop.f32.mrf.mxu0
        %v3385 = vadd.f32 %v3296, %v3384
        %v3386 = vpop.f32.mrf.mxu0
        %v3387 = vadd.f32 %v3298, %v3386
        %3388 = vdwg.mxu0
        %3389 = vmatpush.bf16.msra.mxu0 %v2539
        %3390 = vmatpush.bf16.msra.mxu0 %v2534
        %3391 = vmatpush.bf16.msra.mxu0 %v2529
        %3392 = vmatpush.bf16.msra.mxu0 %v2524
        %3393 = vmatpush.bf16.msra.mxu0 %v2519
        %3394 = vmatpush.bf16.msra.mxu0 %v2514
        %3395 = vmatpush.bf16.msra.mxu0 %v2509
        %3396 = vmatpush.bf16.msra.mxu0 %v2504
        %3397 = vmatmul.bf16.gmra.mxu0 %v773
        %v3398 = vpop.f32.mrf.mxu0
        %v3399 = vadd.f32 %v3310, %v3398
        %v3400 = vpop.f32.mrf.mxu0
        %v3401 = vadd.f32 %v3312, %v3400
        %3402 = vmatmul.bf16.gmra.mxu0 %v781
        %v3403 = vpop.f32.mrf.mxu0
        %v3404 = vadd.f32 %v3315, %v3403
        %v3405 = vpop.f32.mrf.mxu0
        %v3406 = vadd.f32 %v3317, %v3405
        %3407 = vmatmul.bf16.gmra.mxu0 %v789
        %v3408 = vpop.f32.mrf.mxu0
        %v3409 = vadd.f32 %v3320, %v3408
        %v3410 = vpop.f32.mrf.mxu0
        %v3411 = vadd.f32 %v3322, %v3410
        %3412 = vmatmul.bf16.gmra.mxu0 %v797
        %v3413 = vpop.f32.mrf.mxu0
        %v3414 = vadd.f32 %v3325, %v3413
        %v3415 = vpop.f32.mrf.mxu0
        %v3416 = vadd.f32 %v3327, %v3415
        %3417 = vmatmul.bf16.gmra.mxu0 %v805
        %v3418 = vpop.f32.mrf.mxu0
        %v3419 = vadd.f32 %v3330, %v3418
        %v3420 = vpop.f32.mrf.mxu0
        %v3421 = vadd.f32 %v3332, %v3420
        %3422 = vmatmul.bf16.gmra.mxu0 %v813
        %v3423 = vpop.f32.mrf.mxu0
        %v3424 = vadd.f32 %v3335, %v3423
        %v3425 = vpop.f32.mrf.mxu0
        %v3426 = vadd.f32 %v3337, %v3425
        %3427 = vmatmul.bf16.gmra.mxu0 %v821
        %v3428 = vpop.f32.mrf.mxu0
        %v3429 = vadd.f32 %v3340, %v3428
        %v3430 = vpop.f32.mrf.mxu0
        %v3431 = vadd.f32 %v3342, %v3430
        %3432 = vmatmul.bf16.gmra.mxu0 %v829
        %v3433 = vpop.f32.mrf.mxu0
        %v3434 = vadd.f32 %v3345, %v3433
        %v3435 = vpop.f32.mrf.mxu0
        %v3436 = vadd.f32 %v3347, %v3435
        %3437 = vmatmul.bf16.gmra.mxu0 %v837
        %v3438 = vpop.f32.mrf.mxu0
        %v3439 = vadd.f32 %v3350, %v3438
        %v3440 = vpop.f32.mrf.mxu0
        %v3441 = vadd.f32 %v3352, %v3440
        %3442 = vmatmul.bf16.gmra.mxu0 %v845
        %v3443 = vpop.f32.mrf.mxu0
        %v3444 = vadd.f32 %v3355, %v3443
        %v3445 = vpop.f32.mrf.mxu0
        %v3446 = vadd.f32 %v3357, %v3445
        %3447 = vmatmul.bf16.gmra.mxu0 %v853
        %v3448 = vpop.f32.mrf.mxu0
        %v3449 = vadd.f32 %v3360, %v3448
        %v3450 = vpop.f32.mrf.mxu0
        %v3451 = vadd.f32 %v3362, %v3450
        %3452 = vmatmul.bf16.gmra.mxu0 %v861
        %v3453 = vpop.f32.mrf.mxu0
        %v3454 = vadd.f32 %v3365, %v3453
        %v3455 = vpop.f32.mrf.mxu0
        %v3456 = vadd.f32 %v3367, %v3455
        %3457 = vmatmul.bf16.gmra.mxu0 %v869
        %v3458 = vpop.f32.mrf.mxu0
        %v3459 = vadd.f32 %v3370, %v3458
        %v3460 = vpop.f32.mrf.mxu0
        %v3461 = vadd.f32 %v3372, %v3460
        %3462 = vmatmul.bf16.gmra.mxu0 %v877
        %v3463 = vpop.f32.mrf.mxu0
        %v3464 = vadd.f32 %v3375, %v3463
        %v3465 = vpop.f32.mrf.mxu0
        %v3466 = vadd.f32 %v3377, %v3465
        %3467 = vmatmul.bf16.gmra.mxu0 %v885
        %v3468 = vpop.f32.mrf.mxu0
        %v3469 = vadd.f32 %v3380, %v3468
        %v3470 = vpop.f32.mrf.mxu0
        %v3471 = vadd.f32 %v3382, %v3470
        %3472 = vmatmul.bf16.gmra.mxu0 %v893
        %v3473 = vpop.f32.mrf.mxu0
        %v3474 = vadd.f32 %v3385, %v3473
        %v3475 = vpop.f32.mrf.mxu0
        %v3476 = vadd.f32 %v3387, %v3475
        %3477 = vdwg.mxu0
        %3478 = vmatpush.bf16.msra.mxu0 %v2579
        %3479 = vmatpush.bf16.msra.mxu0 %v2574
        %3480 = vmatpush.bf16.msra.mxu0 %v2569
        %3481 = vmatpush.bf16.msra.mxu0 %v2564
        %3482 = vmatpush.bf16.msra.mxu0 %v2559
        %3483 = vmatpush.bf16.msra.mxu0 %v2554
        %3484 = vmatpush.bf16.msra.mxu0 %v2549
        %3485 = vmatpush.bf16.msra.mxu0 %v2544
        %3486 = vmatmul.bf16.gmra.mxu0 %v774
        %v3487 = vpop.f32.mrf.mxu0
        %v3488 = vadd.f32 %v3399, %v3487
        %v3489 = vpop.f32.mrf.mxu0
        %v3490 = vadd.f32 %v3401, %v3489
        %3491 = vmatmul.bf16.gmra.mxu0 %v782
        %v3492 = vpop.f32.mrf.mxu0
        %v3493 = vadd.f32 %v3404, %v3492
        %v3494 = vpop.f32.mrf.mxu0
        %v3495 = vadd.f32 %v3406, %v3494
        %3496 = vmatmul.bf16.gmra.mxu0 %v790
        %v3497 = vpop.f32.mrf.mxu0
        %v3498 = vadd.f32 %v3409, %v3497
        %v3499 = vpop.f32.mrf.mxu0
        %v3500 = vadd.f32 %v3411, %v3499
        %3501 = vmatmul.bf16.gmra.mxu0 %v798
        %v3502 = vpop.f32.mrf.mxu0
        %v3503 = vadd.f32 %v3414, %v3502
        %v3504 = vpop.f32.mrf.mxu0
        %v3505 = vadd.f32 %v3416, %v3504
        %3506 = vmatmul.bf16.gmra.mxu0 %v806
        %v3507 = vpop.f32.mrf.mxu0
        %v3508 = vadd.f32 %v3419, %v3507
        %v3509 = vpop.f32.mrf.mxu0
        %v3510 = vadd.f32 %v3421, %v3509
        %3511 = vmatmul.bf16.gmra.mxu0 %v814
        %v3512 = vpop.f32.mrf.mxu0
        %v3513 = vadd.f32 %v3424, %v3512
        %v3514 = vpop.f32.mrf.mxu0
        %v3515 = vadd.f32 %v3426, %v3514
        %3516 = vmatmul.bf16.gmra.mxu0 %v822
        %v3517 = vpop.f32.mrf.mxu0
        %v3518 = vadd.f32 %v3429, %v3517
        %v3519 = vpop.f32.mrf.mxu0
        %v3520 = vadd.f32 %v3431, %v3519
        %3521 = vmatmul.bf16.gmra.mxu0 %v830
        %v3522 = vpop.f32.mrf.mxu0
        %v3523 = vadd.f32 %v3434, %v3522
        %v3524 = vpop.f32.mrf.mxu0
        %v3525 = vadd.f32 %v3436, %v3524
        %3526 = vmatmul.bf16.gmra.mxu0 %v838
        %v3527 = vpop.f32.mrf.mxu0
        %v3528 = vadd.f32 %v3439, %v3527
        %v3529 = vpop.f32.mrf.mxu0
        %v3530 = vadd.f32 %v3441, %v3529
        %3531 = vmatmul.bf16.gmra.mxu0 %v846
        %v3532 = vpop.f32.mrf.mxu0
        %v3533 = vadd.f32 %v3444, %v3532
        %v3534 = vpop.f32.mrf.mxu0
        %v3535 = vadd.f32 %v3446, %v3534
        %3536 = vmatmul.bf16.gmra.mxu0 %v854
        %v3537 = vpop.f32.mrf.mxu0
        %v3538 = vadd.f32 %v3449, %v3537
        %v3539 = vpop.f32.mrf.mxu0
        %v3540 = vadd.f32 %v3451, %v3539
        %3541 = vmatmul.bf16.gmra.mxu0 %v862
        %v3542 = vpop.f32.mrf.mxu0
        %v3543 = vadd.f32 %v3454, %v3542
        %v3544 = vpop.f32.mrf.mxu0
        %v3545 = vadd.f32 %v3456, %v3544
        %3546 = vmatmul.bf16.gmra.mxu0 %v870
        %v3547 = vpop.f32.mrf.mxu0
        %v3548 = vadd.f32 %v3459, %v3547
        %v3549 = vpop.f32.mrf.mxu0
        %v3550 = vadd.f32 %v3461, %v3549
        %3551 = vmatmul.bf16.gmra.mxu0 %v878
        %v3552 = vpop.f32.mrf.mxu0
        %v3553 = vadd.f32 %v3464, %v3552
        %v3554 = vpop.f32.mrf.mxu0
        %v3555 = vadd.f32 %v3466, %v3554
        %3556 = vmatmul.bf16.gmra.mxu0 %v886
        %v3557 = vpop.f32.mrf.mxu0
        %v3558 = vadd.f32 %v3469, %v3557
        %v3559 = vpop.f32.mrf.mxu0
        %v3560 = vadd.f32 %v3471, %v3559
        %3561 = vmatmul.bf16.gmra.mxu0 %v894
        %v3562 = vpop.f32.mrf.mxu0
        %v3563 = vadd.f32 %v3474, %v3562
        %v3564 = vpop.f32.mrf.mxu0
        %v3565 = vadd.f32 %v3476, %v3564
        %3566 = vdwg.mxu0
        %3567 = vmatpush.bf16.msra.mxu0 %v2619
        %3568 = vmatpush.bf16.msra.mxu0 %v2614
        %3569 = vmatpush.bf16.msra.mxu0 %v2609
        %3570 = vmatpush.bf16.msra.mxu0 %v2604
        %3571 = vmatpush.bf16.msra.mxu0 %v2599
        %3572 = vmatpush.bf16.msra.mxu0 %v2594
        %3573 = vmatpush.bf16.msra.mxu0 %v2589
        %3574 = vmatpush.bf16.msra.mxu0 %v2584
        %3575 = vmatmul.bf16.gmra.mxu0 %v775
        %v3576 = vpop.f32.mrf.mxu0
        %v3577 = vadd.f32 %v3488, %v3576
        %v3578 = vpop.f32.mrf.mxu0
        %v3579 = vadd.f32 %v3490, %v3578
        %3580 = vmatmul.bf16.gmra.mxu0 %v783
        %v3581 = vpop.f32.mrf.mxu0
        %v3582 = vadd.f32 %v3493, %v3581
        %v3583 = vpop.f32.mrf.mxu0
        %v3584 = vadd.f32 %v3495, %v3583
        %3585 = vmatmul.bf16.gmra.mxu0 %v791
        %v3586 = vpop.f32.mrf.mxu0
        %v3587 = vadd.f32 %v3498, %v3586
        %v3588 = vpop.f32.mrf.mxu0
        %v3589 = vadd.f32 %v3500, %v3588
        %3590 = vmatmul.bf16.gmra.mxu0 %v799
        %v3591 = vpop.f32.mrf.mxu0
        %v3592 = vadd.f32 %v3503, %v3591
        %v3593 = vpop.f32.mrf.mxu0
        %v3594 = vadd.f32 %v3505, %v3593
        %3595 = vmatmul.bf16.gmra.mxu0 %v807
        %v3596 = vpop.f32.mrf.mxu0
        %v3597 = vadd.f32 %v3508, %v3596
        %v3598 = vpop.f32.mrf.mxu0
        %v3599 = vadd.f32 %v3510, %v3598
        %3600 = vmatmul.bf16.gmra.mxu0 %v815
        %v3601 = vpop.f32.mrf.mxu0
        %v3602 = vadd.f32 %v3513, %v3601
        %v3603 = vpop.f32.mrf.mxu0
        %v3604 = vadd.f32 %v3515, %v3603
        %3605 = vmatmul.bf16.gmra.mxu0 %v823
        %v3606 = vpop.f32.mrf.mxu0
        %v3607 = vadd.f32 %v3518, %v3606
        %v3608 = vpop.f32.mrf.mxu0
        %v3609 = vadd.f32 %v3520, %v3608
        %3610 = vmatmul.bf16.gmra.mxu0 %v831
        %v3611 = vpop.f32.mrf.mxu0
        %v3612 = vadd.f32 %v3523, %v3611
        %v3613 = vpop.f32.mrf.mxu0
        %v3614 = vadd.f32 %v3525, %v3613
        %3615 = vmatmul.bf16.gmra.mxu0 %v839
        %v3616 = vpop.f32.mrf.mxu0
        %v3617 = vadd.f32 %v3528, %v3616
        %v3618 = vpop.f32.mrf.mxu0
        %v3619 = vadd.f32 %v3530, %v3618
        %3620 = vmatmul.bf16.gmra.mxu0 %v847
        %v3621 = vpop.f32.mrf.mxu0
        %v3622 = vadd.f32 %v3533, %v3621
        %v3623 = vpop.f32.mrf.mxu0
        %v3624 = vadd.f32 %v3535, %v3623
        %3625 = vmatmul.bf16.gmra.mxu0 %v855
        %v3626 = vpop.f32.mrf.mxu0
        %v3627 = vadd.f32 %v3538, %v3626
        %v3628 = vpop.f32.mrf.mxu0
        %v3629 = vadd.f32 %v3540, %v3628
        %3630 = vmatmul.bf16.gmra.mxu0 %v863
        %v3631 = vpop.f32.mrf.mxu0
        %v3632 = vadd.f32 %v3543, %v3631
        %v3633 = vpop.f32.mrf.mxu0
        %v3634 = vadd.f32 %v3545, %v3633
        %3635 = vmatmul.bf16.gmra.mxu0 %v871
        %v3636 = vpop.f32.mrf.mxu0
        %v3637 = vadd.f32 %v3548, %v3636
        %v3638 = vpop.f32.mrf.mxu0
        %v3639 = vadd.f32 %v3550, %v3638
        %3640 = vmatmul.bf16.gmra.mxu0 %v879
        %v3641 = vpop.f32.mrf.mxu0
        %v3642 = vadd.f32 %v3553, %v3641
        %v3643 = vpop.f32.mrf.mxu0
        %v3644 = vadd.f32 %v3555, %v3643
        %3645 = vmatmul.bf16.gmra.mxu0 %v887
        %v3646 = vpop.f32.mrf.mxu0
        %v3647 = vadd.f32 %v3558, %v3646
        %v3648 = vpop.f32.mrf.mxu0
        %v3649 = vadd.f32 %v3560, %v3648
        %3650 = vmatmul.bf16.gmra.mxu0 %v895
        %v3651 = vpop.f32.mrf.mxu0
        %v3652 = vadd.f32 %v3563, %v3651
        %v3653 = vpop.f32.mrf.mxu0
        %v3654 = vadd.f32 %v3565, %v3653
        %3655 = vdwg.mxu0
        %3656 = vmatpush.bf16.msra.mxu0 %v2340
        %3657 = vmatpush.bf16.msra.mxu0 %v2335
        %3658 = vmatpush.bf16.msra.mxu0 %v2330
        %3659 = vmatpush.bf16.msra.mxu0 %v2325
        %3660 = vmatpush.bf16.msra.mxu0 %v2320
        %3661 = vmatpush.bf16.msra.mxu0 %v2315
        %3662 = vmatpush.bf16.msra.mxu0 %v2310
        %3663 = vmatpush.bf16.msra.mxu0 %v2305
        %3664 = vmatmul.bf16.gmra.mxu0 %v768
        %v3665 = vpop.f32.mrf.mxu0
        %v3666 = vadd.f32 0.0, %v3665
        %v3667 = vpop.f32.mrf.mxu0
        %v3668 = vadd.f32 0.0, %v3667
        %3669 = vmatmul.bf16.gmra.mxu0 %v776
        %v3670 = vpop.f32.mrf.mxu0
        %v3671 = vadd.f32 0.0, %v3670
        %v3672 = vpop.f32.mrf.mxu0
        %v3673 = vadd.f32 0.0, %v3672
        %3674 = vmatmul.bf16.gmra.mxu0 %v784
        %v3675 = vpop.f32.mrf.mxu0
        %v3676 = vadd.f32 0.0, %v3675
        %v3677 = vpop.f32.mrf.mxu0
        %v3678 = vadd.f32 0.0, %v3677
        %3679 = vmatmul.bf16.gmra.mxu0 %v792
        %v3680 = vpop.f32.mrf.mxu0
        %v3681 = vadd.f32 0.0, %v3680
        %v3682 = vpop.f32.mrf.mxu0
        %v3683 = vadd.f32 0.0, %v3682
        %3684 = vmatmul.bf16.gmra.mxu0 %v800
        %v3685 = vpop.f32.mrf.mxu0
        %v3686 = vadd.f32 0.0, %v3685
        %v3687 = vpop.f32.mrf.mxu0
        %v3688 = vadd.f32 0.0, %v3687
        %3689 = vmatmul.bf16.gmra.mxu0 %v808
        %v3690 = vpop.f32.mrf.mxu0
        %v3691 = vadd.f32 0.0, %v3690
        %v3692 = vpop.f32.mrf.mxu0
        %v3693 = vadd.f32 0.0, %v3692
        %3694 = vmatmul.bf16.gmra.mxu0 %v816
        %v3695 = vpop.f32.mrf.mxu0
        %v3696 = vadd.f32 0.0, %v3695
        %v3697 = vpop.f32.mrf.mxu0
        %v3698 = vadd.f32 0.0, %v3697
        %3699 = vmatmul.bf16.gmra.mxu0 %v824
        %v3700 = vpop.f32.mrf.mxu0
        %v3701 = vadd.f32 0.0, %v3700
        %v3702 = vpop.f32.mrf.mxu0
        %v3703 = vadd.f32 0.0, %v3702
        %3704 = vmatmul.bf16.gmra.mxu0 %v832
        %v3705 = vpop.f32.mrf.mxu0
        %v3706 = vadd.f32 0.0, %v3705
        %v3707 = vpop.f32.mrf.mxu0
        %v3708 = vadd.f32 0.0, %v3707
        %3709 = vmatmul.bf16.gmra.mxu0 %v840
        %v3710 = vpop.f32.mrf.mxu0
        %v3711 = vadd.f32 0.0, %v3710
        %v3712 = vpop.f32.mrf.mxu0
        %v3713 = vadd.f32 0.0, %v3712
        %3714 = vmatmul.bf16.gmra.mxu0 %v848
        %v3715 = vpop.f32.mrf.mxu0
        %v3716 = vadd.f32 0.0, %v3715
        %v3717 = vpop.f32.mrf.mxu0
        %v3718 = vadd.f32 0.0, %v3717
        %3719 = vmatmul.bf16.gmra.mxu0 %v856
        %v3720 = vpop.f32.mrf.mxu0
        %v3721 = vadd.f32 0.0, %v3720
        %v3722 = vpop.f32.mrf.mxu0
        %v3723 = vadd.f32 0.0, %v3722
        %3724 = vmatmul.bf16.gmra.mxu0 %v864
        %v3725 = vpop.f32.mrf.mxu0
        %v3726 = vadd.f32 0.0, %v3725
        %v3727 = vpop.f32.mrf.mxu0
        %v3728 = vadd.f32 0.0, %v3727
        %3729 = vmatmul.bf16.gmra.mxu0 %v872
        %v3730 = vpop.f32.mrf.mxu0
        %v3731 = vadd.f32 0.0, %v3730
        %v3732 = vpop.f32.mrf.mxu0
        %v3733 = vadd.f32 0.0, %v3732
        %3734 = vmatmul.bf16.gmra.mxu0 %v880
        %v3735 = vpop.f32.mrf.mxu0
        %v3736 = vadd.f32 0.0, %v3735
        %v3737 = vpop.f32.mrf.mxu0
        %v3738 = vadd.f32 0.0, %v3737
        %3739 = vmatmul.bf16.gmra.mxu0 %v888
        %v3740 = vpop.f32.mrf.mxu0
        %v3741 = vadd.f32 0.0, %v3740
        %v3742 = vpop.f32.mrf.mxu0
        %v3743 = vadd.f32 0.0, %v3742
        %3744 = vdwg.mxu0
        %3745 = vmatpush.bf16.msra.mxu0 %v2380
        %3746 = vmatpush.bf16.msra.mxu0 %v2375
        %3747 = vmatpush.bf16.msra.mxu0 %v2370
        %3748 = vmatpush.bf16.msra.mxu0 %v2365
        %3749 = vmatpush.bf16.msra.mxu0 %v2360
        %3750 = vmatpush.bf16.msra.mxu0 %v2355
        %3751 = vmatpush.bf16.msra.mxu0 %v2350
        %3752 = vmatpush.bf16.msra.mxu0 %v2345
        %3753 = vmatmul.bf16.gmra.mxu0 %v769
        %v3754 = vpop.f32.mrf.mxu0
        %v3755 = vadd.f32 %v3666, %v3754
        %v3756 = vpop.f32.mrf.mxu0
        %v3757 = vadd.f32 %v3668, %v3756
        %3758 = vmatmul.bf16.gmra.mxu0 %v777
        %v3759 = vpop.f32.mrf.mxu0
        %v3760 = vadd.f32 %v3671, %v3759
        %v3761 = vpop.f32.mrf.mxu0
        %v3762 = vadd.f32 %v3673, %v3761
        %3763 = vmatmul.bf16.gmra.mxu0 %v785
        %v3764 = vpop.f32.mrf.mxu0
        %v3765 = vadd.f32 %v3676, %v3764
        %v3766 = vpop.f32.mrf.mxu0
        %v3767 = vadd.f32 %v3678, %v3766
        %3768 = vmatmul.bf16.gmra.mxu0 %v793
        %v3769 = vpop.f32.mrf.mxu0
        %v3770 = vadd.f32 %v3681, %v3769
        %v3771 = vpop.f32.mrf.mxu0
        %v3772 = vadd.f32 %v3683, %v3771
        %3773 = vmatmul.bf16.gmra.mxu0 %v801
        %v3774 = vpop.f32.mrf.mxu0
        %v3775 = vadd.f32 %v3686, %v3774
        %v3776 = vpop.f32.mrf.mxu0
        %v3777 = vadd.f32 %v3688, %v3776
        %3778 = vmatmul.bf16.gmra.mxu0 %v809
        %v3779 = vpop.f32.mrf.mxu0
        %v3780 = vadd.f32 %v3691, %v3779
        %v3781 = vpop.f32.mrf.mxu0
        %v3782 = vadd.f32 %v3693, %v3781
        %3783 = vmatmul.bf16.gmra.mxu0 %v817
        %v3784 = vpop.f32.mrf.mxu0
        %v3785 = vadd.f32 %v3696, %v3784
        %v3786 = vpop.f32.mrf.mxu0
        %v3787 = vadd.f32 %v3698, %v3786
        %3788 = vmatmul.bf16.gmra.mxu0 %v825
        %v3789 = vpop.f32.mrf.mxu0
        %v3790 = vadd.f32 %v3701, %v3789
        %v3791 = vpop.f32.mrf.mxu0
        %v3792 = vadd.f32 %v3703, %v3791
        %3793 = vmatmul.bf16.gmra.mxu0 %v833
        %v3794 = vpop.f32.mrf.mxu0
        %v3795 = vadd.f32 %v3706, %v3794
        %v3796 = vpop.f32.mrf.mxu0
        %v3797 = vadd.f32 %v3708, %v3796
        %3798 = vmatmul.bf16.gmra.mxu0 %v841
        %v3799 = vpop.f32.mrf.mxu0
        %v3800 = vadd.f32 %v3711, %v3799
        %v3801 = vpop.f32.mrf.mxu0
        %v3802 = vadd.f32 %v3713, %v3801
        %3803 = vmatmul.bf16.gmra.mxu0 %v849
        %v3804 = vpop.f32.mrf.mxu0
        %v3805 = vadd.f32 %v3716, %v3804
        %v3806 = vpop.f32.mrf.mxu0
        %v3807 = vadd.f32 %v3718, %v3806
        %3808 = vmatmul.bf16.gmra.mxu0 %v857
        %v3809 = vpop.f32.mrf.mxu0
        %v3810 = vadd.f32 %v3721, %v3809
        %v3811 = vpop.f32.mrf.mxu0
        %v3812 = vadd.f32 %v3723, %v3811
        %3813 = vmatmul.bf16.gmra.mxu0 %v865
        %v3814 = vpop.f32.mrf.mxu0
        %v3815 = vadd.f32 %v3726, %v3814
        %v3816 = vpop.f32.mrf.mxu0
        %v3817 = vadd.f32 %v3728, %v3816
        %3818 = vmatmul.bf16.gmra.mxu0 %v873
        %v3819 = vpop.f32.mrf.mxu0
        %v3820 = vadd.f32 %v3731, %v3819
        %v3821 = vpop.f32.mrf.mxu0
        %v3822 = vadd.f32 %v3733, %v3821
        %3823 = vmatmul.bf16.gmra.mxu0 %v881
        %v3824 = vpop.f32.mrf.mxu0
        %v3825 = vadd.f32 %v3736, %v3824
        %v3826 = vpop.f32.mrf.mxu0
        %v3827 = vadd.f32 %v3738, %v3826
        %3828 = vmatmul.bf16.gmra.mxu0 %v889
        %v3829 = vpop.f32.mrf.mxu0
        %v3830 = vadd.f32 %v3741, %v3829
        %v3831 = vpop.f32.mrf.mxu0
        %v3832 = vadd.f32 %v3743, %v3831
        %3833 = vdwg.mxu0
        %3834 = vmatpush.bf16.msra.mxu0 %v2420
        %3835 = vmatpush.bf16.msra.mxu0 %v2415
        %3836 = vmatpush.bf16.msra.mxu0 %v2410
        %3837 = vmatpush.bf16.msra.mxu0 %v2405
        %3838 = vmatpush.bf16.msra.mxu0 %v2400
        %3839 = vmatpush.bf16.msra.mxu0 %v2395
        %3840 = vmatpush.bf16.msra.mxu0 %v2390
        %3841 = vmatpush.bf16.msra.mxu0 %v2385
        %3842 = vmatmul.bf16.gmra.mxu0 %v770
        %v3843 = vpop.f32.mrf.mxu0
        %v3844 = vadd.f32 %v3755, %v3843
        %v3845 = vpop.f32.mrf.mxu0
        %v3846 = vadd.f32 %v3757, %v3845
        %3847 = vmatmul.bf16.gmra.mxu0 %v778
        %v3848 = vpop.f32.mrf.mxu0
        %v3849 = vadd.f32 %v3760, %v3848
        %v3850 = vpop.f32.mrf.mxu0
        %v3851 = vadd.f32 %v3762, %v3850
        %3852 = vmatmul.bf16.gmra.mxu0 %v786
        %v3853 = vpop.f32.mrf.mxu0
        %v3854 = vadd.f32 %v3765, %v3853
        %v3855 = vpop.f32.mrf.mxu0
        %v3856 = vadd.f32 %v3767, %v3855
        %3857 = vmatmul.bf16.gmra.mxu0 %v794
        %v3858 = vpop.f32.mrf.mxu0
        %v3859 = vadd.f32 %v3770, %v3858
        %v3860 = vpop.f32.mrf.mxu0
        %v3861 = vadd.f32 %v3772, %v3860
        %3862 = vmatmul.bf16.gmra.mxu0 %v802
        %v3863 = vpop.f32.mrf.mxu0
        %v3864 = vadd.f32 %v3775, %v3863
        %v3865 = vpop.f32.mrf.mxu0
        %v3866 = vadd.f32 %v3777, %v3865
        %3867 = vmatmul.bf16.gmra.mxu0 %v810
        %v3868 = vpop.f32.mrf.mxu0
        %v3869 = vadd.f32 %v3780, %v3868
        %v3870 = vpop.f32.mrf.mxu0
        %v3871 = vadd.f32 %v3782, %v3870
        %3872 = vmatmul.bf16.gmra.mxu0 %v818
        %v3873 = vpop.f32.mrf.mxu0
        %v3874 = vadd.f32 %v3785, %v3873
        %v3875 = vpop.f32.mrf.mxu0
        %v3876 = vadd.f32 %v3787, %v3875
        %3877 = vmatmul.bf16.gmra.mxu0 %v826
        %v3878 = vpop.f32.mrf.mxu0
        %v3879 = vadd.f32 %v3790, %v3878
        %v3880 = vpop.f32.mrf.mxu0
        %v3881 = vadd.f32 %v3792, %v3880
        %3882 = vmatmul.bf16.gmra.mxu0 %v834
        %v3883 = vpop.f32.mrf.mxu0
        %v3884 = vadd.f32 %v3795, %v3883
        %v3885 = vpop.f32.mrf.mxu0
        %v3886 = vadd.f32 %v3797, %v3885
        %3887 = vmatmul.bf16.gmra.mxu0 %v842
        %v3888 = vpop.f32.mrf.mxu0
        %v3889 = vadd.f32 %v3800, %v3888
        %v3890 = vpop.f32.mrf.mxu0
        %v3891 = vadd.f32 %v3802, %v3890
        %3892 = vmatmul.bf16.gmra.mxu0 %v850
        %v3893 = vpop.f32.mrf.mxu0
        %v3894 = vadd.f32 %v3805, %v3893
        %v3895 = vpop.f32.mrf.mxu0
        %v3896 = vadd.f32 %v3807, %v3895
        %3897 = vmatmul.bf16.gmra.mxu0 %v858
        %v3898 = vpop.f32.mrf.mxu0
        %v3899 = vadd.f32 %v3810, %v3898
        %v3900 = vpop.f32.mrf.mxu0
        %v3901 = vadd.f32 %v3812, %v3900
        %3902 = vmatmul.bf16.gmra.mxu0 %v866
        %v3903 = vpop.f32.mrf.mxu0
        %v3904 = vadd.f32 %v3815, %v3903
        %v3905 = vpop.f32.mrf.mxu0
        %v3906 = vadd.f32 %v3817, %v3905
        %3907 = vmatmul.bf16.gmra.mxu0 %v874
        %v3908 = vpop.f32.mrf.mxu0
        %v3909 = vadd.f32 %v3820, %v3908
        %v3910 = vpop.f32.mrf.mxu0
        %v3911 = vadd.f32 %v3822, %v3910
        %3912 = vmatmul.bf16.gmra.mxu0 %v882
        %v3913 = vpop.f32.mrf.mxu0
        %v3914 = vadd.f32 %v3825, %v3913
        %v3915 = vpop.f32.mrf.mxu0
        %v3916 = vadd.f32 %v3827, %v3915
        %3917 = vmatmul.bf16.gmra.mxu0 %v890
        %v3918 = vpop.f32.mrf.mxu0
        %v3919 = vadd.f32 %v3830, %v3918
        %v3920 = vpop.f32.mrf.mxu0
        %v3921 = vadd.f32 %v3832, %v3920
        %3922 = vdwg.mxu0
        %3923 = vmatpush.bf16.msra.mxu0 %v2460
        %3924 = vmatpush.bf16.msra.mxu0 %v2455
        %3925 = vmatpush.bf16.msra.mxu0 %v2450
        %3926 = vmatpush.bf16.msra.mxu0 %v2445
        %3927 = vmatpush.bf16.msra.mxu0 %v2440
        %3928 = vmatpush.bf16.msra.mxu0 %v2435
        %3929 = vmatpush.bf16.msra.mxu0 %v2430
        %3930 = vmatpush.bf16.msra.mxu0 %v2425
        %3931 = vmatmul.bf16.gmra.mxu0 %v771
        %v3932 = vpop.f32.mrf.mxu0
        %v3933 = vadd.f32 %v3844, %v3932
        %v3934 = vpop.f32.mrf.mxu0
        %v3935 = vadd.f32 %v3846, %v3934
        %3936 = vmatmul.bf16.gmra.mxu0 %v779
        %v3937 = vpop.f32.mrf.mxu0
        %v3938 = vadd.f32 %v3849, %v3937
        %v3939 = vpop.f32.mrf.mxu0
        %v3940 = vadd.f32 %v3851, %v3939
        %3941 = vmatmul.bf16.gmra.mxu0 %v787
        %v3942 = vpop.f32.mrf.mxu0
        %v3943 = vadd.f32 %v3854, %v3942
        %v3944 = vpop.f32.mrf.mxu0
        %v3945 = vadd.f32 %v3856, %v3944
        %3946 = vmatmul.bf16.gmra.mxu0 %v795
        %v3947 = vpop.f32.mrf.mxu0
        %v3948 = vadd.f32 %v3859, %v3947
        %v3949 = vpop.f32.mrf.mxu0
        %v3950 = vadd.f32 %v3861, %v3949
        %3951 = vmatmul.bf16.gmra.mxu0 %v803
        %v3952 = vpop.f32.mrf.mxu0
        %v3953 = vadd.f32 %v3864, %v3952
        %v3954 = vpop.f32.mrf.mxu0
        %v3955 = vadd.f32 %v3866, %v3954
        %3956 = vmatmul.bf16.gmra.mxu0 %v811
        %v3957 = vpop.f32.mrf.mxu0
        %v3958 = vadd.f32 %v3869, %v3957
        %v3959 = vpop.f32.mrf.mxu0
        %v3960 = vadd.f32 %v3871, %v3959
        %3961 = vmatmul.bf16.gmra.mxu0 %v819
        %v3962 = vpop.f32.mrf.mxu0
        %v3963 = vadd.f32 %v3874, %v3962
        %v3964 = vpop.f32.mrf.mxu0
        %v3965 = vadd.f32 %v3876, %v3964
        %3966 = vmatmul.bf16.gmra.mxu0 %v827
        %v3967 = vpop.f32.mrf.mxu0
        %v3968 = vadd.f32 %v3879, %v3967
        %v3969 = vpop.f32.mrf.mxu0
        %v3970 = vadd.f32 %v3881, %v3969
        %3971 = vmatmul.bf16.gmra.mxu0 %v835
        %v3972 = vpop.f32.mrf.mxu0
        %v3973 = vadd.f32 %v3884, %v3972
        %v3974 = vpop.f32.mrf.mxu0
        %v3975 = vadd.f32 %v3886, %v3974
        %3976 = vmatmul.bf16.gmra.mxu0 %v843
        %v3977 = vpop.f32.mrf.mxu0
        %v3978 = vadd.f32 %v3889, %v3977
        %v3979 = vpop.f32.mrf.mxu0
        %v3980 = vadd.f32 %v3891, %v3979
        %3981 = vmatmul.bf16.gmra.mxu0 %v851
        %v3982 = vpop.f32.mrf.mxu0
        %v3983 = vadd.f32 %v3894, %v3982
        %v3984 = vpop.f32.mrf.mxu0
        %v3985 = vadd.f32 %v3896, %v3984
        %3986 = vmatmul.bf16.gmra.mxu0 %v859
        %v3987 = vpop.f32.mrf.mxu0
        %v3988 = vadd.f32 %v3899, %v3987
        %v3989 = vpop.f32.mrf.mxu0
        %v3990 = vadd.f32 %v3901, %v3989
        %3991 = vmatmul.bf16.gmra.mxu0 %v867
        %v3992 = vpop.f32.mrf.mxu0
        %v3993 = vadd.f32 %v3904, %v3992
        %v3994 = vpop.f32.mrf.mxu0
        %v3995 = vadd.f32 %v3906, %v3994
        %3996 = vmatmul.bf16.gmra.mxu0 %v875
        %v3997 = vpop.f32.mrf.mxu0
        %v3998 = vadd.f32 %v3909, %v3997
        %v3999 = vpop.f32.mrf.mxu0
        %v4000 = vadd.f32 %v3911, %v3999
        %4001 = vmatmul.bf16.gmra.mxu0 %v883
        %v4002 = vpop.f32.mrf.mxu0
        %v4003 = vadd.f32 %v3914, %v4002
        %v4004 = vpop.f32.mrf.mxu0
        %v4005 = vadd.f32 %v3916, %v4004
        %4006 = vmatmul.bf16.gmra.mxu0 %v891
        %v4007 = vpop.f32.mrf.mxu0
        %v4008 = vadd.f32 %v3919, %v4007
        %v4009 = vpop.f32.mrf.mxu0
        %v4010 = vadd.f32 %v3921, %v4009
        %4011 = vdwg.mxu0
        %4012 = vmatpush.bf16.msra.mxu0 %v2500
        %4013 = vmatpush.bf16.msra.mxu0 %v2495
        %4014 = vmatpush.bf16.msra.mxu0 %v2490
        %4015 = vmatpush.bf16.msra.mxu0 %v2485
        %4016 = vmatpush.bf16.msra.mxu0 %v2480
        %4017 = vmatpush.bf16.msra.mxu0 %v2475
        %4018 = vmatpush.bf16.msra.mxu0 %v2470
        %4019 = vmatpush.bf16.msra.mxu0 %v2465
        %4020 = vmatmul.bf16.gmra.mxu0 %v772
        %v4021 = vpop.f32.mrf.mxu0
        %v4022 = vadd.f32 %v3933, %v4021
        %v4023 = vpop.f32.mrf.mxu0
        %v4024 = vadd.f32 %v3935, %v4023
        %4025 = vmatmul.bf16.gmra.mxu0 %v780
        %v4026 = vpop.f32.mrf.mxu0
        %v4027 = vadd.f32 %v3938, %v4026
        %v4028 = vpop.f32.mrf.mxu0
        %v4029 = vadd.f32 %v3940, %v4028
        %4030 = vmatmul.bf16.gmra.mxu0 %v788
        %v4031 = vpop.f32.mrf.mxu0
        %v4032 = vadd.f32 %v3943, %v4031
        %v4033 = vpop.f32.mrf.mxu0
        %v4034 = vadd.f32 %v3945, %v4033
        %4035 = vmatmul.bf16.gmra.mxu0 %v796
        %v4036 = vpop.f32.mrf.mxu0
        %v4037 = vadd.f32 %v3948, %v4036
        %v4038 = vpop.f32.mrf.mxu0
        %v4039 = vadd.f32 %v3950, %v4038
        %4040 = vmatmul.bf16.gmra.mxu0 %v804
        %v4041 = vpop.f32.mrf.mxu0
        %v4042 = vadd.f32 %v3953, %v4041
        %v4043 = vpop.f32.mrf.mxu0
        %v4044 = vadd.f32 %v3955, %v4043
        %4045 = vmatmul.bf16.gmra.mxu0 %v812
        %v4046 = vpop.f32.mrf.mxu0
        %v4047 = vadd.f32 %v3958, %v4046
        %v4048 = vpop.f32.mrf.mxu0
        %v4049 = vadd.f32 %v3960, %v4048
        %4050 = vmatmul.bf16.gmra.mxu0 %v820
        %v4051 = vpop.f32.mrf.mxu0
        %v4052 = vadd.f32 %v3963, %v4051
        %v4053 = vpop.f32.mrf.mxu0
        %v4054 = vadd.f32 %v3965, %v4053
        %4055 = vmatmul.bf16.gmra.mxu0 %v828
        %v4056 = vpop.f32.mrf.mxu0
        %v4057 = vadd.f32 %v3968, %v4056
        %v4058 = vpop.f32.mrf.mxu0
        %v4059 = vadd.f32 %v3970, %v4058
        %4060 = vmatmul.bf16.gmra.mxu0 %v836
        %v4061 = vpop.f32.mrf.mxu0
        %v4062 = vadd.f32 %v3973, %v4061
        %v4063 = vpop.f32.mrf.mxu0
        %v4064 = vadd.f32 %v3975, %v4063
        %4065 = vmatmul.bf16.gmra.mxu0 %v844
        %v4066 = vpop.f32.mrf.mxu0
        %v4067 = vadd.f32 %v3978, %v4066
        %v4068 = vpop.f32.mrf.mxu0
        %v4069 = vadd.f32 %v3980, %v4068
        %4070 = vmatmul.bf16.gmra.mxu0 %v852
        %v4071 = vpop.f32.mrf.mxu0
        %v4072 = vadd.f32 %v3983, %v4071
        %v4073 = vpop.f32.mrf.mxu0
        %v4074 = vadd.f32 %v3985, %v4073
        %4075 = vmatmul.bf16.gmra.mxu0 %v860
        %v4076 = vpop.f32.mrf.mxu0
        %v4077 = vadd.f32 %v3988, %v4076
        %v4078 = vpop.f32.mrf.mxu0
        %v4079 = vadd.f32 %v3990, %v4078
        %4080 = vmatmul.bf16.gmra.mxu0 %v868
        %v4081 = vpop.f32.mrf.mxu0
        %v4082 = vadd.f32 %v3993, %v4081
        %v4083 = vpop.f32.mrf.mxu0
        %v4084 = vadd.f32 %v3995, %v4083
        %4085 = vmatmul.bf16.gmra.mxu0 %v876
        %v4086 = vpop.f32.mrf.mxu0
        %v4087 = vadd.f32 %v3998, %v4086
        %v4088 = vpop.f32.mrf.mxu0
        %v4089 = vadd.f32 %v4000, %v4088
        %4090 = vmatmul.bf16.gmra.mxu0 %v884
        %v4091 = vpop.f32.mrf.mxu0
        %v4092 = vadd.f32 %v4003, %v4091
        %v4093 = vpop.f32.mrf.mxu0
        %v4094 = vadd.f32 %v4005, %v4093
        %4095 = vmatmul.bf16.gmra.mxu0 %v892
        %v4096 = vpop.f32.mrf.mxu0
        %v4097 = vadd.f32 %v4008, %v4096
        %v4098 = vpop.f32.mrf.mxu0
        %v4099 = vadd.f32 %v4010, %v4098
        %4100 = vdwg.mxu0
        %4101 = vmatpush.bf16.msra.mxu0 %v2540
        %4102 = vmatpush.bf16.msra.mxu0 %v2535
        %4103 = vmatpush.bf16.msra.mxu0 %v2530
        %4104 = vmatpush.bf16.msra.mxu0 %v2525
        %4105 = vmatpush.bf16.msra.mxu0 %v2520
        %4106 = vmatpush.bf16.msra.mxu0 %v2515
        %4107 = vmatpush.bf16.msra.mxu0 %v2510
        %4108 = vmatpush.bf16.msra.mxu0 %v2505
        %4109 = vmatmul.bf16.gmra.mxu0 %v773
        %v4110 = vpop.f32.mrf.mxu0
        %v4111 = vadd.f32 %v4022, %v4110
        %v4112 = vpop.f32.mrf.mxu0
        %v4113 = vadd.f32 %v4024, %v4112
        %4114 = vmatmul.bf16.gmra.mxu0 %v781
        %v4115 = vpop.f32.mrf.mxu0
        %v4116 = vadd.f32 %v4027, %v4115
        %v4117 = vpop.f32.mrf.mxu0
        %v4118 = vadd.f32 %v4029, %v4117
        %4119 = vmatmul.bf16.gmra.mxu0 %v789
        %v4120 = vpop.f32.mrf.mxu0
        %v4121 = vadd.f32 %v4032, %v4120
        %v4122 = vpop.f32.mrf.mxu0
        %v4123 = vadd.f32 %v4034, %v4122
        %4124 = vmatmul.bf16.gmra.mxu0 %v797
        %v4125 = vpop.f32.mrf.mxu0
        %v4126 = vadd.f32 %v4037, %v4125
        %v4127 = vpop.f32.mrf.mxu0
        %v4128 = vadd.f32 %v4039, %v4127
        %4129 = vmatmul.bf16.gmra.mxu0 %v805
        %v4130 = vpop.f32.mrf.mxu0
        %v4131 = vadd.f32 %v4042, %v4130
        %v4132 = vpop.f32.mrf.mxu0
        %v4133 = vadd.f32 %v4044, %v4132
        %4134 = vmatmul.bf16.gmra.mxu0 %v813
        %v4135 = vpop.f32.mrf.mxu0
        %v4136 = vadd.f32 %v4047, %v4135
        %v4137 = vpop.f32.mrf.mxu0
        %v4138 = vadd.f32 %v4049, %v4137
        %4139 = vmatmul.bf16.gmra.mxu0 %v821
        %v4140 = vpop.f32.mrf.mxu0
        %v4141 = vadd.f32 %v4052, %v4140
        %v4142 = vpop.f32.mrf.mxu0
        %v4143 = vadd.f32 %v4054, %v4142
        %4144 = vmatmul.bf16.gmra.mxu0 %v829
        %v4145 = vpop.f32.mrf.mxu0
        %v4146 = vadd.f32 %v4057, %v4145
        %v4147 = vpop.f32.mrf.mxu0
        %v4148 = vadd.f32 %v4059, %v4147
        %4149 = vmatmul.bf16.gmra.mxu0 %v837
        %v4150 = vpop.f32.mrf.mxu0
        %v4151 = vadd.f32 %v4062, %v4150
        %v4152 = vpop.f32.mrf.mxu0
        %v4153 = vadd.f32 %v4064, %v4152
        %4154 = vmatmul.bf16.gmra.mxu0 %v845
        %v4155 = vpop.f32.mrf.mxu0
        %v4156 = vadd.f32 %v4067, %v4155
        %v4157 = vpop.f32.mrf.mxu0
        %v4158 = vadd.f32 %v4069, %v4157
        %4159 = vmatmul.bf16.gmra.mxu0 %v853
        %v4160 = vpop.f32.mrf.mxu0
        %v4161 = vadd.f32 %v4072, %v4160
        %v4162 = vpop.f32.mrf.mxu0
        %v4163 = vadd.f32 %v4074, %v4162
        %4164 = vmatmul.bf16.gmra.mxu0 %v861
        %v4165 = vpop.f32.mrf.mxu0
        %v4166 = vadd.f32 %v4077, %v4165
        %v4167 = vpop.f32.mrf.mxu0
        %v4168 = vadd.f32 %v4079, %v4167
        %4169 = vmatmul.bf16.gmra.mxu0 %v869
        %v4170 = vpop.f32.mrf.mxu0
        %v4171 = vadd.f32 %v4082, %v4170
        %v4172 = vpop.f32.mrf.mxu0
        %v4173 = vadd.f32 %v4084, %v4172
        %4174 = vmatmul.bf16.gmra.mxu0 %v877
        %v4175 = vpop.f32.mrf.mxu0
        %v4176 = vadd.f32 %v4087, %v4175
        %v4177 = vpop.f32.mrf.mxu0
        %v4178 = vadd.f32 %v4089, %v4177
        %4179 = vmatmul.bf16.gmra.mxu0 %v885
        %v4180 = vpop.f32.mrf.mxu0
        %v4181 = vadd.f32 %v4092, %v4180
        %v4182 = vpop.f32.mrf.mxu0
        %v4183 = vadd.f32 %v4094, %v4182
        %4184 = vmatmul.bf16.gmra.mxu0 %v893
        %v4185 = vpop.f32.mrf.mxu0
        %v4186 = vadd.f32 %v4097, %v4185
        %v4187 = vpop.f32.mrf.mxu0
        %v4188 = vadd.f32 %v4099, %v4187
        %4189 = vdwg.mxu0
        %4190 = vmatpush.bf16.msra.mxu0 %v2580
        %4191 = vmatpush.bf16.msra.mxu0 %v2575
        %4192 = vmatpush.bf16.msra.mxu0 %v2570
        %4193 = vmatpush.bf16.msra.mxu0 %v2565
        %4194 = vmatpush.bf16.msra.mxu0 %v2560
        %4195 = vmatpush.bf16.msra.mxu0 %v2555
        %4196 = vmatpush.bf16.msra.mxu0 %v2550
        %4197 = vmatpush.bf16.msra.mxu0 %v2545
        %4198 = vmatmul.bf16.gmra.mxu0 %v774
        %v4199 = vpop.f32.mrf.mxu0
        %v4200 = vadd.f32 %v4111, %v4199
        %v4201 = vpop.f32.mrf.mxu0
        %v4202 = vadd.f32 %v4113, %v4201
        %4203 = vmatmul.bf16.gmra.mxu0 %v782
        %v4204 = vpop.f32.mrf.mxu0
        %v4205 = vadd.f32 %v4116, %v4204
        %v4206 = vpop.f32.mrf.mxu0
        %v4207 = vadd.f32 %v4118, %v4206
        %4208 = vmatmul.bf16.gmra.mxu0 %v790
        %v4209 = vpop.f32.mrf.mxu0
        %v4210 = vadd.f32 %v4121, %v4209
        %v4211 = vpop.f32.mrf.mxu0
        %v4212 = vadd.f32 %v4123, %v4211
        %4213 = vmatmul.bf16.gmra.mxu0 %v798
        %v4214 = vpop.f32.mrf.mxu0
        %v4215 = vadd.f32 %v4126, %v4214
        %v4216 = vpop.f32.mrf.mxu0
        %v4217 = vadd.f32 %v4128, %v4216
        %4218 = vmatmul.bf16.gmra.mxu0 %v806
        %v4219 = vpop.f32.mrf.mxu0
        %v4220 = vadd.f32 %v4131, %v4219
        %v4221 = vpop.f32.mrf.mxu0
        %v4222 = vadd.f32 %v4133, %v4221
        %4223 = vmatmul.bf16.gmra.mxu0 %v814
        %v4224 = vpop.f32.mrf.mxu0
        %v4225 = vadd.f32 %v4136, %v4224
        %v4226 = vpop.f32.mrf.mxu0
        %v4227 = vadd.f32 %v4138, %v4226
        %4228 = vmatmul.bf16.gmra.mxu0 %v822
        %v4229 = vpop.f32.mrf.mxu0
        %v4230 = vadd.f32 %v4141, %v4229
        %v4231 = vpop.f32.mrf.mxu0
        %v4232 = vadd.f32 %v4143, %v4231
        %4233 = vmatmul.bf16.gmra.mxu0 %v830
        %v4234 = vpop.f32.mrf.mxu0
        %v4235 = vadd.f32 %v4146, %v4234
        %v4236 = vpop.f32.mrf.mxu0
        %v4237 = vadd.f32 %v4148, %v4236
        %4238 = vmatmul.bf16.gmra.mxu0 %v838
        %v4239 = vpop.f32.mrf.mxu0
        %v4240 = vadd.f32 %v4151, %v4239
        %v4241 = vpop.f32.mrf.mxu0
        %v4242 = vadd.f32 %v4153, %v4241
        %4243 = vmatmul.bf16.gmra.mxu0 %v846
        %v4244 = vpop.f32.mrf.mxu0
        %v4245 = vadd.f32 %v4156, %v4244
        %v4246 = vpop.f32.mrf.mxu0
        %v4247 = vadd.f32 %v4158, %v4246
        %4248 = vmatmul.bf16.gmra.mxu0 %v854
        %v4249 = vpop.f32.mrf.mxu0
        %v4250 = vadd.f32 %v4161, %v4249
        %v4251 = vpop.f32.mrf.mxu0
        %v4252 = vadd.f32 %v4163, %v4251
        %4253 = vmatmul.bf16.gmra.mxu0 %v862
        %v4254 = vpop.f32.mrf.mxu0
        %v4255 = vadd.f32 %v4166, %v4254
        %v4256 = vpop.f32.mrf.mxu0
        %v4257 = vadd.f32 %v4168, %v4256
        %4258 = vmatmul.bf16.gmra.mxu0 %v870
        %v4259 = vpop.f32.mrf.mxu0
        %v4260 = vadd.f32 %v4171, %v4259
        %v4261 = vpop.f32.mrf.mxu0
        %v4262 = vadd.f32 %v4173, %v4261
        %4263 = vmatmul.bf16.gmra.mxu0 %v878
        %v4264 = vpop.f32.mrf.mxu0
        %v4265 = vadd.f32 %v4176, %v4264
        %v4266 = vpop.f32.mrf.mxu0
        %v4267 = vadd.f32 %v4178, %v4266
        %4268 = vmatmul.bf16.gmra.mxu0 %v886
        %v4269 = vpop.f32.mrf.mxu0
        %v4270 = vadd.f32 %v4181, %v4269
        %v4271 = vpop.f32.mrf.mxu0
        %v4272 = vadd.f32 %v4183, %v4271
        %4273 = vmatmul.bf16.gmra.mxu0 %v894
        %v4274 = vpop.f32.mrf.mxu0
        %v4275 = vadd.f32 %v4186, %v4274
        %v4276 = vpop.f32.mrf.mxu0
        %v4277 = vadd.f32 %v4188, %v4276
        %4278 = vdwg.mxu0
        %4279 = vmatpush.bf16.msra.mxu0 %v2620
        %4280 = vmatpush.bf16.msra.mxu0 %v2615
        %4281 = vmatpush.bf16.msra.mxu0 %v2610
        %4282 = vmatpush.bf16.msra.mxu0 %v2605
        %4283 = vmatpush.bf16.msra.mxu0 %v2600
        %4284 = vmatpush.bf16.msra.mxu0 %v2595
        %4285 = vmatpush.bf16.msra.mxu0 %v2590
        %4286 = vmatpush.bf16.msra.mxu0 %v2585
        %4287 = vmatmul.bf16.gmra.mxu0 %v775
        %v4288 = vpop.f32.mrf.mxu0
        %v4289 = vadd.f32 %v4200, %v4288
        %v4290 = vpop.f32.mrf.mxu0
        %v4291 = vadd.f32 %v4202, %v4290
        %4292 = vmatmul.bf16.gmra.mxu0 %v783
        %v4293 = vpop.f32.mrf.mxu0
        %v4294 = vadd.f32 %v4205, %v4293
        %v4295 = vpop.f32.mrf.mxu0
        %v4296 = vadd.f32 %v4207, %v4295
        %4297 = vmatmul.bf16.gmra.mxu0 %v791
        %v4298 = vpop.f32.mrf.mxu0
        %v4299 = vadd.f32 %v4210, %v4298
        %v4300 = vpop.f32.mrf.mxu0
        %v4301 = vadd.f32 %v4212, %v4300
        %4302 = vmatmul.bf16.gmra.mxu0 %v799
        %v4303 = vpop.f32.mrf.mxu0
        %v4304 = vadd.f32 %v4215, %v4303
        %v4305 = vpop.f32.mrf.mxu0
        %v4306 = vadd.f32 %v4217, %v4305
        %4307 = vmatmul.bf16.gmra.mxu0 %v807
        %v4308 = vpop.f32.mrf.mxu0
        %v4309 = vadd.f32 %v4220, %v4308
        %v4310 = vpop.f32.mrf.mxu0
        %v4311 = vadd.f32 %v4222, %v4310
        %4312 = vmatmul.bf16.gmra.mxu0 %v815
        %v4313 = vpop.f32.mrf.mxu0
        %v4314 = vadd.f32 %v4225, %v4313
        %v4315 = vpop.f32.mrf.mxu0
        %v4316 = vadd.f32 %v4227, %v4315
        %4317 = vmatmul.bf16.gmra.mxu0 %v823
        %v4318 = vpop.f32.mrf.mxu0
        %v4319 = vadd.f32 %v4230, %v4318
        %v4320 = vpop.f32.mrf.mxu0
        %v4321 = vadd.f32 %v4232, %v4320
        %4322 = vmatmul.bf16.gmra.mxu0 %v831
        %v4323 = vpop.f32.mrf.mxu0
        %v4324 = vadd.f32 %v4235, %v4323
        %v4325 = vpop.f32.mrf.mxu0
        %v4326 = vadd.f32 %v4237, %v4325
        %4327 = vmatmul.bf16.gmra.mxu0 %v839
        %v4328 = vpop.f32.mrf.mxu0
        %v4329 = vadd.f32 %v4240, %v4328
        %v4330 = vpop.f32.mrf.mxu0
        %v4331 = vadd.f32 %v4242, %v4330
        %4332 = vmatmul.bf16.gmra.mxu0 %v847
        %v4333 = vpop.f32.mrf.mxu0
        %v4334 = vadd.f32 %v4245, %v4333
        %v4335 = vpop.f32.mrf.mxu0
        %v4336 = vadd.f32 %v4247, %v4335
        %4337 = vmatmul.bf16.gmra.mxu0 %v855
        %v4338 = vpop.f32.mrf.mxu0
        %v4339 = vadd.f32 %v4250, %v4338
        %v4340 = vpop.f32.mrf.mxu0
        %v4341 = vadd.f32 %v4252, %v4340
        %4342 = vmatmul.bf16.gmra.mxu0 %v863
        %v4343 = vpop.f32.mrf.mxu0
        %v4344 = vadd.f32 %v4255, %v4343
        %v4345 = vpop.f32.mrf.mxu0
        %v4346 = vadd.f32 %v4257, %v4345
        %4347 = vmatmul.bf16.gmra.mxu0 %v871
        %v4348 = vpop.f32.mrf.mxu0
        %v4349 = vadd.f32 %v4260, %v4348
        %v4350 = vpop.f32.mrf.mxu0
        %v4351 = vadd.f32 %v4262, %v4350
        %4352 = vmatmul.bf16.gmra.mxu0 %v879
        %v4353 = vpop.f32.mrf.mxu0
        %v4354 = vadd.f32 %v4265, %v4353
        %v4355 = vpop.f32.mrf.mxu0
        %v4356 = vadd.f32 %v4267, %v4355
        %4357 = vmatmul.bf16.gmra.mxu0 %v887
        %v4358 = vpop.f32.mrf.mxu0
        %v4359 = vadd.f32 %v4270, %v4358
        %v4360 = vpop.f32.mrf.mxu0
        %v4361 = vadd.f32 %v4272, %v4360
        %4362 = vmatmul.bf16.gmra.mxu0 %v895
        %v4363 = vpop.f32.mrf.mxu0
        %v4364 = vadd.f32 %v4275, %v4363
        %v4365 = vpop.f32.mrf.mxu0
        %v4366 = vadd.f32 %v4277, %v4365
        %4367 = vdwg.mxu0
        %4368 = vmatpush.bf16.msra.mxu0 %v2341
        %4369 = vmatpush.bf16.msra.mxu0 %v2336
        %4370 = vmatpush.bf16.msra.mxu0 %v2331
        %4371 = vmatpush.bf16.msra.mxu0 %v2326
        %4372 = vmatpush.bf16.msra.mxu0 %v2321
        %4373 = vmatpush.bf16.msra.mxu0 %v2316
        %4374 = vmatpush.bf16.msra.mxu0 %v2311
        %4375 = vmatpush.bf16.msra.mxu0 %v2306
        %4376 = vmatmul.bf16.gmra.mxu0 %v768
        %v4377 = vpop.f32.mrf.mxu0
        %v4378 = vadd.f32 0.0, %v4377
        %v4379 = vpop.f32.mrf.mxu0
        %v4380 = vadd.f32 0.0, %v4379
        %4381 = vmatmul.bf16.gmra.mxu0 %v776
        %v4382 = vpop.f32.mrf.mxu0
        %v4383 = vadd.f32 0.0, %v4382
        %v4384 = vpop.f32.mrf.mxu0
        %v4385 = vadd.f32 0.0, %v4384
        %4386 = vmatmul.bf16.gmra.mxu0 %v784
        %v4387 = vpop.f32.mrf.mxu0
        %v4388 = vadd.f32 0.0, %v4387
        %v4389 = vpop.f32.mrf.mxu0
        %v4390 = vadd.f32 0.0, %v4389
        %4391 = vmatmul.bf16.gmra.mxu0 %v792
        %v4392 = vpop.f32.mrf.mxu0
        %v4393 = vadd.f32 0.0, %v4392
        %v4394 = vpop.f32.mrf.mxu0
        %v4395 = vadd.f32 0.0, %v4394
        %4396 = vmatmul.bf16.gmra.mxu0 %v800
        %v4397 = vpop.f32.mrf.mxu0
        %v4398 = vadd.f32 0.0, %v4397
        %v4399 = vpop.f32.mrf.mxu0
        %v4400 = vadd.f32 0.0, %v4399
        %4401 = vmatmul.bf16.gmra.mxu0 %v808
        %v4402 = vpop.f32.mrf.mxu0
        %v4403 = vadd.f32 0.0, %v4402
        %v4404 = vpop.f32.mrf.mxu0
        %v4405 = vadd.f32 0.0, %v4404
        %4406 = vmatmul.bf16.gmra.mxu0 %v816
        %v4407 = vpop.f32.mrf.mxu0
        %v4408 = vadd.f32 0.0, %v4407
        %v4409 = vpop.f32.mrf.mxu0
        %v4410 = vadd.f32 0.0, %v4409
        %4411 = vmatmul.bf16.gmra.mxu0 %v824
        %v4412 = vpop.f32.mrf.mxu0
        %v4413 = vadd.f32 0.0, %v4412
        %v4414 = vpop.f32.mrf.mxu0
        %v4415 = vadd.f32 0.0, %v4414
        %4416 = vmatmul.bf16.gmra.mxu0 %v832
        %v4417 = vpop.f32.mrf.mxu0
        %v4418 = vadd.f32 0.0, %v4417
        %v4419 = vpop.f32.mrf.mxu0
        %v4420 = vadd.f32 0.0, %v4419
        %4421 = vmatmul.bf16.gmra.mxu0 %v840
        %v4422 = vpop.f32.mrf.mxu0
        %v4423 = vadd.f32 0.0, %v4422
        %v4424 = vpop.f32.mrf.mxu0
        %v4425 = vadd.f32 0.0, %v4424
        %4426 = vmatmul.bf16.gmra.mxu0 %v848
        %v4427 = vpop.f32.mrf.mxu0
        %v4428 = vadd.f32 0.0, %v4427
        %v4429 = vpop.f32.mrf.mxu0
        %v4430 = vadd.f32 0.0, %v4429
        %4431 = vmatmul.bf16.gmra.mxu0 %v856
        %v4432 = vpop.f32.mrf.mxu0
        %v4433 = vadd.f32 0.0, %v4432
        %v4434 = vpop.f32.mrf.mxu0
        %v4435 = vadd.f32 0.0, %v4434
        %4436 = vmatmul.bf16.gmra.mxu0 %v864
        %v4437 = vpop.f32.mrf.mxu0
        %v4438 = vadd.f32 0.0, %v4437
        %v4439 = vpop.f32.mrf.mxu0
        %v4440 = vadd.f32 0.0, %v4439
        %4441 = vmatmul.bf16.gmra.mxu0 %v872
        %v4442 = vpop.f32.mrf.mxu0
        %v4443 = vadd.f32 0.0, %v4442
        %v4444 = vpop.f32.mrf.mxu0
        %v4445 = vadd.f32 0.0, %v4444
        %4446 = vmatmul.bf16.gmra.mxu0 %v880
        %v4447 = vpop.f32.mrf.mxu0
        %v4448 = vadd.f32 0.0, %v4447
        %v4449 = vpop.f32.mrf.mxu0
        %v4450 = vadd.f32 0.0, %v4449
        %4451 = vmatmul.bf16.gmra.mxu0 %v888
        %v4452 = vpop.f32.mrf.mxu0
        %v4453 = vadd.f32 0.0, %v4452
        %v4454 = vpop.f32.mrf.mxu0
        %v4455 = vadd.f32 0.0, %v4454
        %4456 = vdwg.mxu0
        %4457 = vmatpush.bf16.msra.mxu0 %v2381
        %4458 = vmatpush.bf16.msra.mxu0 %v2376
        %4459 = vmatpush.bf16.msra.mxu0 %v2371
        %4460 = vmatpush.bf16.msra.mxu0 %v2366
        %4461 = vmatpush.bf16.msra.mxu0 %v2361
        %4462 = vmatpush.bf16.msra.mxu0 %v2356
        %4463 = vmatpush.bf16.msra.mxu0 %v2351
        %4464 = vmatpush.bf16.msra.mxu0 %v2346
        %4465 = vmatmul.bf16.gmra.mxu0 %v769
        %v4466 = vpop.f32.mrf.mxu0
        %v4467 = vadd.f32 %v4378, %v4466
        %v4468 = vpop.f32.mrf.mxu0
        %v4469 = vadd.f32 %v4380, %v4468
        %4470 = vmatmul.bf16.gmra.mxu0 %v777
        %v4471 = vpop.f32.mrf.mxu0
        %v4472 = vadd.f32 %v4383, %v4471
        %v4473 = vpop.f32.mrf.mxu0
        %v4474 = vadd.f32 %v4385, %v4473
        %4475 = vmatmul.bf16.gmra.mxu0 %v785
        %v4476 = vpop.f32.mrf.mxu0
        %v4477 = vadd.f32 %v4388, %v4476
        %v4478 = vpop.f32.mrf.mxu0
        %v4479 = vadd.f32 %v4390, %v4478
        %4480 = vmatmul.bf16.gmra.mxu0 %v793
        %v4481 = vpop.f32.mrf.mxu0
        %v4482 = vadd.f32 %v4393, %v4481
        %v4483 = vpop.f32.mrf.mxu0
        %v4484 = vadd.f32 %v4395, %v4483
        %4485 = vmatmul.bf16.gmra.mxu0 %v801
        %v4486 = vpop.f32.mrf.mxu0
        %v4487 = vadd.f32 %v4398, %v4486
        %v4488 = vpop.f32.mrf.mxu0
        %v4489 = vadd.f32 %v4400, %v4488
        %4490 = vmatmul.bf16.gmra.mxu0 %v809
        %v4491 = vpop.f32.mrf.mxu0
        %v4492 = vadd.f32 %v4403, %v4491
        %v4493 = vpop.f32.mrf.mxu0
        %v4494 = vadd.f32 %v4405, %v4493
        %4495 = vmatmul.bf16.gmra.mxu0 %v817
        %v4496 = vpop.f32.mrf.mxu0
        %v4497 = vadd.f32 %v4408, %v4496
        %v4498 = vpop.f32.mrf.mxu0
        %v4499 = vadd.f32 %v4410, %v4498
        %4500 = vmatmul.bf16.gmra.mxu0 %v825
        %v4501 = vpop.f32.mrf.mxu0
        %v4502 = vadd.f32 %v4413, %v4501
        %v4503 = vpop.f32.mrf.mxu0
        %v4504 = vadd.f32 %v4415, %v4503
        %4505 = vmatmul.bf16.gmra.mxu0 %v833
        %v4506 = vpop.f32.mrf.mxu0
        %v4507 = vadd.f32 %v4418, %v4506
        %v4508 = vpop.f32.mrf.mxu0
        %v4509 = vadd.f32 %v4420, %v4508
        %4510 = vmatmul.bf16.gmra.mxu0 %v841
        %v4511 = vpop.f32.mrf.mxu0
        %v4512 = vadd.f32 %v4423, %v4511
        %v4513 = vpop.f32.mrf.mxu0
        %v4514 = vadd.f32 %v4425, %v4513
        %4515 = vmatmul.bf16.gmra.mxu0 %v849
        %v4516 = vpop.f32.mrf.mxu0
        %v4517 = vadd.f32 %v4428, %v4516
        %v4518 = vpop.f32.mrf.mxu0
        %v4519 = vadd.f32 %v4430, %v4518
        %4520 = vmatmul.bf16.gmra.mxu0 %v857
        %v4521 = vpop.f32.mrf.mxu0
        %v4522 = vadd.f32 %v4433, %v4521
        %v4523 = vpop.f32.mrf.mxu0
        %v4524 = vadd.f32 %v4435, %v4523
        %4525 = vmatmul.bf16.gmra.mxu0 %v865
        %v4526 = vpop.f32.mrf.mxu0
        %v4527 = vadd.f32 %v4438, %v4526
        %v4528 = vpop.f32.mrf.mxu0
        %v4529 = vadd.f32 %v4440, %v4528
        %4530 = vmatmul.bf16.gmra.mxu0 %v873
        %v4531 = vpop.f32.mrf.mxu0
        %v4532 = vadd.f32 %v4443, %v4531
        %v4533 = vpop.f32.mrf.mxu0
        %v4534 = vadd.f32 %v4445, %v4533
        %4535 = vmatmul.bf16.gmra.mxu0 %v881
        %v4536 = vpop.f32.mrf.mxu0
        %v4537 = vadd.f32 %v4448, %v4536
        %v4538 = vpop.f32.mrf.mxu0
        %v4539 = vadd.f32 %v4450, %v4538
        %4540 = vmatmul.bf16.gmra.mxu0 %v889
        %v4541 = vpop.f32.mrf.mxu0
        %v4542 = vadd.f32 %v4453, %v4541
        %v4543 = vpop.f32.mrf.mxu0
        %v4544 = vadd.f32 %v4455, %v4543
        %4545 = vdwg.mxu0
        %4546 = vmatpush.bf16.msra.mxu0 %v2421
        %4547 = vmatpush.bf16.msra.mxu0 %v2416
        %4548 = vmatpush.bf16.msra.mxu0 %v2411
        %4549 = vmatpush.bf16.msra.mxu0 %v2406
        %4550 = vmatpush.bf16.msra.mxu0 %v2401
        %4551 = vmatpush.bf16.msra.mxu0 %v2396
        %4552 = vmatpush.bf16.msra.mxu0 %v2391
        %4553 = vmatpush.bf16.msra.mxu0 %v2386
        %4554 = vmatmul.bf16.gmra.mxu0 %v770
        %v4555 = vpop.f32.mrf.mxu0
        %v4556 = vadd.f32 %v4467, %v4555
        %v4557 = vpop.f32.mrf.mxu0
        %v4558 = vadd.f32 %v4469, %v4557
        %4559 = vmatmul.bf16.gmra.mxu0 %v778
        %v4560 = vpop.f32.mrf.mxu0
        %v4561 = vadd.f32 %v4472, %v4560
        %v4562 = vpop.f32.mrf.mxu0
        %v4563 = vadd.f32 %v4474, %v4562
        %4564 = vmatmul.bf16.gmra.mxu0 %v786
        %v4565 = vpop.f32.mrf.mxu0
        %v4566 = vadd.f32 %v4477, %v4565
        %v4567 = vpop.f32.mrf.mxu0
        %v4568 = vadd.f32 %v4479, %v4567
        %4569 = vmatmul.bf16.gmra.mxu0 %v794
        %v4570 = vpop.f32.mrf.mxu0
        %v4571 = vadd.f32 %v4482, %v4570
        %v4572 = vpop.f32.mrf.mxu0
        %v4573 = vadd.f32 %v4484, %v4572
        %4574 = vmatmul.bf16.gmra.mxu0 %v802
        %v4575 = vpop.f32.mrf.mxu0
        %v4576 = vadd.f32 %v4487, %v4575
        %v4577 = vpop.f32.mrf.mxu0
        %v4578 = vadd.f32 %v4489, %v4577
        %4579 = vmatmul.bf16.gmra.mxu0 %v810
        %v4580 = vpop.f32.mrf.mxu0
        %v4581 = vadd.f32 %v4492, %v4580
        %v4582 = vpop.f32.mrf.mxu0
        %v4583 = vadd.f32 %v4494, %v4582
        %4584 = vmatmul.bf16.gmra.mxu0 %v818
        %v4585 = vpop.f32.mrf.mxu0
        %v4586 = vadd.f32 %v4497, %v4585
        %v4587 = vpop.f32.mrf.mxu0
        %v4588 = vadd.f32 %v4499, %v4587
        %4589 = vmatmul.bf16.gmra.mxu0 %v826
        %v4590 = vpop.f32.mrf.mxu0
        %v4591 = vadd.f32 %v4502, %v4590
        %v4592 = vpop.f32.mrf.mxu0
        %v4593 = vadd.f32 %v4504, %v4592
        %4594 = vmatmul.bf16.gmra.mxu0 %v834
        %v4595 = vpop.f32.mrf.mxu0
        %v4596 = vadd.f32 %v4507, %v4595
        %v4597 = vpop.f32.mrf.mxu0
        %v4598 = vadd.f32 %v4509, %v4597
        %4599 = vmatmul.bf16.gmra.mxu0 %v842
        %v4600 = vpop.f32.mrf.mxu0
        %v4601 = vadd.f32 %v4512, %v4600
        %v4602 = vpop.f32.mrf.mxu0
        %v4603 = vadd.f32 %v4514, %v4602
        %4604 = vmatmul.bf16.gmra.mxu0 %v850
        %v4605 = vpop.f32.mrf.mxu0
        %v4606 = vadd.f32 %v4517, %v4605
        %v4607 = vpop.f32.mrf.mxu0
        %v4608 = vadd.f32 %v4519, %v4607
        %4609 = vmatmul.bf16.gmra.mxu0 %v858
        %v4610 = vpop.f32.mrf.mxu0
        %v4611 = vadd.f32 %v4522, %v4610
        %v4612 = vpop.f32.mrf.mxu0
        %v4613 = vadd.f32 %v4524, %v4612
        %4614 = vmatmul.bf16.gmra.mxu0 %v866
        %v4615 = vpop.f32.mrf.mxu0
        %v4616 = vadd.f32 %v4527, %v4615
        %v4617 = vpop.f32.mrf.mxu0
        %v4618 = vadd.f32 %v4529, %v4617
        %4619 = vmatmul.bf16.gmra.mxu0 %v874
        %v4620 = vpop.f32.mrf.mxu0
        %v4621 = vadd.f32 %v4532, %v4620
        %v4622 = vpop.f32.mrf.mxu0
        %v4623 = vadd.f32 %v4534, %v4622
        %4624 = vmatmul.bf16.gmra.mxu0 %v882
        %v4625 = vpop.f32.mrf.mxu0
        %v4626 = vadd.f32 %v4537, %v4625
        %v4627 = vpop.f32.mrf.mxu0
        %v4628 = vadd.f32 %v4539, %v4627
        %4629 = vmatmul.bf16.gmra.mxu0 %v890
        %v4630 = vpop.f32.mrf.mxu0
        %v4631 = vadd.f32 %v4542, %v4630
        %v4632 = vpop.f32.mrf.mxu0
        %v4633 = vadd.f32 %v4544, %v4632
        %4634 = vdwg.mxu0
        %4635 = vmatpush.bf16.msra.mxu0 %v2461
        %4636 = vmatpush.bf16.msra.mxu0 %v2456
        %4637 = vmatpush.bf16.msra.mxu0 %v2451
        %4638 = vmatpush.bf16.msra.mxu0 %v2446
        %4639 = vmatpush.bf16.msra.mxu0 %v2441
        %4640 = vmatpush.bf16.msra.mxu0 %v2436
        %4641 = vmatpush.bf16.msra.mxu0 %v2431
        %4642 = vmatpush.bf16.msra.mxu0 %v2426
        %4643 = vmatmul.bf16.gmra.mxu0 %v771
        %v4644 = vpop.f32.mrf.mxu0
        %v4645 = vadd.f32 %v4556, %v4644
        %v4646 = vpop.f32.mrf.mxu0
        %v4647 = vadd.f32 %v4558, %v4646
        %4648 = vmatmul.bf16.gmra.mxu0 %v779
        %v4649 = vpop.f32.mrf.mxu0
        %v4650 = vadd.f32 %v4561, %v4649
        %v4651 = vpop.f32.mrf.mxu0
        %v4652 = vadd.f32 %v4563, %v4651
        %4653 = vmatmul.bf16.gmra.mxu0 %v787
        %v4654 = vpop.f32.mrf.mxu0
        %v4655 = vadd.f32 %v4566, %v4654
        %v4656 = vpop.f32.mrf.mxu0
        %v4657 = vadd.f32 %v4568, %v4656
        %4658 = vmatmul.bf16.gmra.mxu0 %v795
        %v4659 = vpop.f32.mrf.mxu0
        %v4660 = vadd.f32 %v4571, %v4659
        %v4661 = vpop.f32.mrf.mxu0
        %v4662 = vadd.f32 %v4573, %v4661
        %4663 = vmatmul.bf16.gmra.mxu0 %v803
        %v4664 = vpop.f32.mrf.mxu0
        %v4665 = vadd.f32 %v4576, %v4664
        %v4666 = vpop.f32.mrf.mxu0
        %v4667 = vadd.f32 %v4578, %v4666
        %4668 = vmatmul.bf16.gmra.mxu0 %v811
        %v4669 = vpop.f32.mrf.mxu0
        %v4670 = vadd.f32 %v4581, %v4669
        %v4671 = vpop.f32.mrf.mxu0
        %v4672 = vadd.f32 %v4583, %v4671
        %4673 = vmatmul.bf16.gmra.mxu0 %v819
        %v4674 = vpop.f32.mrf.mxu0
        %v4675 = vadd.f32 %v4586, %v4674
        %v4676 = vpop.f32.mrf.mxu0
        %v4677 = vadd.f32 %v4588, %v4676
        %4678 = vmatmul.bf16.gmra.mxu0 %v827
        %v4679 = vpop.f32.mrf.mxu0
        %v4680 = vadd.f32 %v4591, %v4679
        %v4681 = vpop.f32.mrf.mxu0
        %v4682 = vadd.f32 %v4593, %v4681
        %4683 = vmatmul.bf16.gmra.mxu0 %v835
        %v4684 = vpop.f32.mrf.mxu0
        %v4685 = vadd.f32 %v4596, %v4684
        %v4686 = vpop.f32.mrf.mxu0
        %v4687 = vadd.f32 %v4598, %v4686
        %4688 = vmatmul.bf16.gmra.mxu0 %v843
        %v4689 = vpop.f32.mrf.mxu0
        %v4690 = vadd.f32 %v4601, %v4689
        %v4691 = vpop.f32.mrf.mxu0
        %v4692 = vadd.f32 %v4603, %v4691
        %4693 = vmatmul.bf16.gmra.mxu0 %v851
        %v4694 = vpop.f32.mrf.mxu0
        %v4695 = vadd.f32 %v4606, %v4694
        %v4696 = vpop.f32.mrf.mxu0
        %v4697 = vadd.f32 %v4608, %v4696
        %4698 = vmatmul.bf16.gmra.mxu0 %v859
        %v4699 = vpop.f32.mrf.mxu0
        %v4700 = vadd.f32 %v4611, %v4699
        %v4701 = vpop.f32.mrf.mxu0
        %v4702 = vadd.f32 %v4613, %v4701
        %4703 = vmatmul.bf16.gmra.mxu0 %v867
        %v4704 = vpop.f32.mrf.mxu0
        %v4705 = vadd.f32 %v4616, %v4704
        %v4706 = vpop.f32.mrf.mxu0
        %v4707 = vadd.f32 %v4618, %v4706
        %4708 = vmatmul.bf16.gmra.mxu0 %v875
        %v4709 = vpop.f32.mrf.mxu0
        %v4710 = vadd.f32 %v4621, %v4709
        %v4711 = vpop.f32.mrf.mxu0
        %v4712 = vadd.f32 %v4623, %v4711
        %4713 = vmatmul.bf16.gmra.mxu0 %v883
        %v4714 = vpop.f32.mrf.mxu0
        %v4715 = vadd.f32 %v4626, %v4714
        %v4716 = vpop.f32.mrf.mxu0
        %v4717 = vadd.f32 %v4628, %v4716
        %4718 = vmatmul.bf16.gmra.mxu0 %v891
        %v4719 = vpop.f32.mrf.mxu0
        %v4720 = vadd.f32 %v4631, %v4719
        %v4721 = vpop.f32.mrf.mxu0
        %v4722 = vadd.f32 %v4633, %v4721
        %4723 = vdwg.mxu0
        %4724 = vmatpush.bf16.msra.mxu0 %v2501
        %4725 = vmatpush.bf16.msra.mxu0 %v2496
        %4726 = vmatpush.bf16.msra.mxu0 %v2491
        %4727 = vmatpush.bf16.msra.mxu0 %v2486
        %4728 = vmatpush.bf16.msra.mxu0 %v2481
        %4729 = vmatpush.bf16.msra.mxu0 %v2476
        %4730 = vmatpush.bf16.msra.mxu0 %v2471
        %4731 = vmatpush.bf16.msra.mxu0 %v2466
        %4732 = vmatmul.bf16.gmra.mxu0 %v772
        %v4733 = vpop.f32.mrf.mxu0
        %v4734 = vadd.f32 %v4645, %v4733
        %v4735 = vpop.f32.mrf.mxu0
        %v4736 = vadd.f32 %v4647, %v4735
        %4737 = vmatmul.bf16.gmra.mxu0 %v780
        %v4738 = vpop.f32.mrf.mxu0
        %v4739 = vadd.f32 %v4650, %v4738
        %v4740 = vpop.f32.mrf.mxu0
        %v4741 = vadd.f32 %v4652, %v4740
        %4742 = vmatmul.bf16.gmra.mxu0 %v788
        %v4743 = vpop.f32.mrf.mxu0
        %v4744 = vadd.f32 %v4655, %v4743
        %v4745 = vpop.f32.mrf.mxu0
        %v4746 = vadd.f32 %v4657, %v4745
        %4747 = vmatmul.bf16.gmra.mxu0 %v796
        %v4748 = vpop.f32.mrf.mxu0
        %v4749 = vadd.f32 %v4660, %v4748
        %v4750 = vpop.f32.mrf.mxu0
        %v4751 = vadd.f32 %v4662, %v4750
        %4752 = vmatmul.bf16.gmra.mxu0 %v804
        %v4753 = vpop.f32.mrf.mxu0
        %v4754 = vadd.f32 %v4665, %v4753
        %v4755 = vpop.f32.mrf.mxu0
        %v4756 = vadd.f32 %v4667, %v4755
        %4757 = vmatmul.bf16.gmra.mxu0 %v812
        %v4758 = vpop.f32.mrf.mxu0
        %v4759 = vadd.f32 %v4670, %v4758
        %v4760 = vpop.f32.mrf.mxu0
        %v4761 = vadd.f32 %v4672, %v4760
        %4762 = vmatmul.bf16.gmra.mxu0 %v820
        %v4763 = vpop.f32.mrf.mxu0
        %v4764 = vadd.f32 %v4675, %v4763
        %v4765 = vpop.f32.mrf.mxu0
        %v4766 = vadd.f32 %v4677, %v4765
        %4767 = vmatmul.bf16.gmra.mxu0 %v828
        %v4768 = vpop.f32.mrf.mxu0
        %v4769 = vadd.f32 %v4680, %v4768
        %v4770 = vpop.f32.mrf.mxu0
        %v4771 = vadd.f32 %v4682, %v4770
        %4772 = vmatmul.bf16.gmra.mxu0 %v836
        %v4773 = vpop.f32.mrf.mxu0
        %v4774 = vadd.f32 %v4685, %v4773
        %v4775 = vpop.f32.mrf.mxu0
        %v4776 = vadd.f32 %v4687, %v4775
        %4777 = vmatmul.bf16.gmra.mxu0 %v844
        %v4778 = vpop.f32.mrf.mxu0
        %v4779 = vadd.f32 %v4690, %v4778
        %v4780 = vpop.f32.mrf.mxu0
        %v4781 = vadd.f32 %v4692, %v4780
        %4782 = vmatmul.bf16.gmra.mxu0 %v852
        %v4783 = vpop.f32.mrf.mxu0
        %v4784 = vadd.f32 %v4695, %v4783
        %v4785 = vpop.f32.mrf.mxu0
        %v4786 = vadd.f32 %v4697, %v4785
        %4787 = vmatmul.bf16.gmra.mxu0 %v860
        %v4788 = vpop.f32.mrf.mxu0
        %v4789 = vadd.f32 %v4700, %v4788
        %v4790 = vpop.f32.mrf.mxu0
        %v4791 = vadd.f32 %v4702, %v4790
        %4792 = vmatmul.bf16.gmra.mxu0 %v868
        %v4793 = vpop.f32.mrf.mxu0
        %v4794 = vadd.f32 %v4705, %v4793
        %v4795 = vpop.f32.mrf.mxu0
        %v4796 = vadd.f32 %v4707, %v4795
        %4797 = vmatmul.bf16.gmra.mxu0 %v876
        %v4798 = vpop.f32.mrf.mxu0
        %v4799 = vadd.f32 %v4710, %v4798
        %v4800 = vpop.f32.mrf.mxu0
        %v4801 = vadd.f32 %v4712, %v4800
        %4802 = vmatmul.bf16.gmra.mxu0 %v884
        %v4803 = vpop.f32.mrf.mxu0
        %v4804 = vadd.f32 %v4715, %v4803
        %v4805 = vpop.f32.mrf.mxu0
        %v4806 = vadd.f32 %v4717, %v4805
        %4807 = vmatmul.bf16.gmra.mxu0 %v892
        %v4808 = vpop.f32.mrf.mxu0
        %v4809 = vadd.f32 %v4720, %v4808
        %v4810 = vpop.f32.mrf.mxu0
        %v4811 = vadd.f32 %v4722, %v4810
        %4812 = vdwg.mxu0
        %4813 = vmatpush.bf16.msra.mxu0 %v2541
        %4814 = vmatpush.bf16.msra.mxu0 %v2536
        %4815 = vmatpush.bf16.msra.mxu0 %v2531
        %4816 = vmatpush.bf16.msra.mxu0 %v2526
        %4817 = vmatpush.bf16.msra.mxu0 %v2521
        %4818 = vmatpush.bf16.msra.mxu0 %v2516
        %4819 = vmatpush.bf16.msra.mxu0 %v2511
        %4820 = vmatpush.bf16.msra.mxu0 %v2506
        %4821 = vmatmul.bf16.gmra.mxu0 %v773
        %v4822 = vpop.f32.mrf.mxu0
        %v4823 = vadd.f32 %v4734, %v4822
        %v4824 = vpop.f32.mrf.mxu0
        %v4825 = vadd.f32 %v4736, %v4824
        %4826 = vmatmul.bf16.gmra.mxu0 %v781
        %v4827 = vpop.f32.mrf.mxu0
        %v4828 = vadd.f32 %v4739, %v4827
        %v4829 = vpop.f32.mrf.mxu0
        %v4830 = vadd.f32 %v4741, %v4829
        %4831 = vmatmul.bf16.gmra.mxu0 %v789
        %v4832 = vpop.f32.mrf.mxu0
        %v4833 = vadd.f32 %v4744, %v4832
        %v4834 = vpop.f32.mrf.mxu0
        %v4835 = vadd.f32 %v4746, %v4834
        %4836 = vmatmul.bf16.gmra.mxu0 %v797
        %v4837 = vpop.f32.mrf.mxu0
        %v4838 = vadd.f32 %v4749, %v4837
        %v4839 = vpop.f32.mrf.mxu0
        %v4840 = vadd.f32 %v4751, %v4839
        %4841 = vmatmul.bf16.gmra.mxu0 %v805
        %v4842 = vpop.f32.mrf.mxu0
        %v4843 = vadd.f32 %v4754, %v4842
        %v4844 = vpop.f32.mrf.mxu0
        %v4845 = vadd.f32 %v4756, %v4844
        %4846 = vmatmul.bf16.gmra.mxu0 %v813
        %v4847 = vpop.f32.mrf.mxu0
        %v4848 = vadd.f32 %v4759, %v4847
        %v4849 = vpop.f32.mrf.mxu0
        %v4850 = vadd.f32 %v4761, %v4849
        %4851 = vmatmul.bf16.gmra.mxu0 %v821
        %v4852 = vpop.f32.mrf.mxu0
        %v4853 = vadd.f32 %v4764, %v4852
        %v4854 = vpop.f32.mrf.mxu0
        %v4855 = vadd.f32 %v4766, %v4854
        %4856 = vmatmul.bf16.gmra.mxu0 %v829
        %v4857 = vpop.f32.mrf.mxu0
        %v4858 = vadd.f32 %v4769, %v4857
        %v4859 = vpop.f32.mrf.mxu0
        %v4860 = vadd.f32 %v4771, %v4859
        %4861 = vmatmul.bf16.gmra.mxu0 %v837
        %v4862 = vpop.f32.mrf.mxu0
        %v4863 = vadd.f32 %v4774, %v4862
        %v4864 = vpop.f32.mrf.mxu0
        %v4865 = vadd.f32 %v4776, %v4864
        %4866 = vmatmul.bf16.gmra.mxu0 %v845
        %v4867 = vpop.f32.mrf.mxu0
        %v4868 = vadd.f32 %v4779, %v4867
        %v4869 = vpop.f32.mrf.mxu0
        %v4870 = vadd.f32 %v4781, %v4869
        %4871 = vmatmul.bf16.gmra.mxu0 %v853
        %v4872 = vpop.f32.mrf.mxu0
        %v4873 = vadd.f32 %v4784, %v4872
        %v4874 = vpop.f32.mrf.mxu0
        %v4875 = vadd.f32 %v4786, %v4874
        %4876 = vmatmul.bf16.gmra.mxu0 %v861
        %v4877 = vpop.f32.mrf.mxu0
        %v4878 = vadd.f32 %v4789, %v4877
        %v4879 = vpop.f32.mrf.mxu0
        %v4880 = vadd.f32 %v4791, %v4879
        %4881 = vmatmul.bf16.gmra.mxu0 %v869
        %v4882 = vpop.f32.mrf.mxu0
        %v4883 = vadd.f32 %v4794, %v4882
        %v4884 = vpop.f32.mrf.mxu0
        %v4885 = vadd.f32 %v4796, %v4884
        %4886 = vmatmul.bf16.gmra.mxu0 %v877
        %v4887 = vpop.f32.mrf.mxu0
        %v4888 = vadd.f32 %v4799, %v4887
        %v4889 = vpop.f32.mrf.mxu0
        %v4890 = vadd.f32 %v4801, %v4889
        %4891 = vmatmul.bf16.gmra.mxu0 %v885
        %v4892 = vpop.f32.mrf.mxu0
        %v4893 = vadd.f32 %v4804, %v4892
        %v4894 = vpop.f32.mrf.mxu0
        %v4895 = vadd.f32 %v4806, %v4894
        %4896 = vmatmul.bf16.gmra.mxu0 %v893
        %v4897 = vpop.f32.mrf.mxu0
        %v4898 = vadd.f32 %v4809, %v4897
        %v4899 = vpop.f32.mrf.mxu0
        %v4900 = vadd.f32 %v4811, %v4899
        %4901 = vdwg.mxu0
        %4902 = vmatpush.bf16.msra.mxu0 %v2581
        %4903 = vmatpush.bf16.msra.mxu0 %v2576
        %4904 = vmatpush.bf16.msra.mxu0 %v2571
        %4905 = vmatpush.bf16.msra.mxu0 %v2566
        %4906 = vmatpush.bf16.msra.mxu0 %v2561
        %4907 = vmatpush.bf16.msra.mxu0 %v2556
        %4908 = vmatpush.bf16.msra.mxu0 %v2551
        %4909 = vmatpush.bf16.msra.mxu0 %v2546
        %4910 = vmatmul.bf16.gmra.mxu0 %v774
        %v4911 = vpop.f32.mrf.mxu0
        %v4912 = vadd.f32 %v4823, %v4911
        %v4913 = vpop.f32.mrf.mxu0
        %v4914 = vadd.f32 %v4825, %v4913
        %4915 = vmatmul.bf16.gmra.mxu0 %v782
        %v4916 = vpop.f32.mrf.mxu0
        %v4917 = vadd.f32 %v4828, %v4916
        %v4918 = vpop.f32.mrf.mxu0
        %v4919 = vadd.f32 %v4830, %v4918
        %4920 = vmatmul.bf16.gmra.mxu0 %v790
        %v4921 = vpop.f32.mrf.mxu0
        %v4922 = vadd.f32 %v4833, %v4921
        %v4923 = vpop.f32.mrf.mxu0
        %v4924 = vadd.f32 %v4835, %v4923
        %4925 = vmatmul.bf16.gmra.mxu0 %v798
        %v4926 = vpop.f32.mrf.mxu0
        %v4927 = vadd.f32 %v4838, %v4926
        %v4928 = vpop.f32.mrf.mxu0
        %v4929 = vadd.f32 %v4840, %v4928
        %4930 = vmatmul.bf16.gmra.mxu0 %v806
        %v4931 = vpop.f32.mrf.mxu0
        %v4932 = vadd.f32 %v4843, %v4931
        %v4933 = vpop.f32.mrf.mxu0
        %v4934 = vadd.f32 %v4845, %v4933
        %4935 = vmatmul.bf16.gmra.mxu0 %v814
        %v4936 = vpop.f32.mrf.mxu0
        %v4937 = vadd.f32 %v4848, %v4936
        %v4938 = vpop.f32.mrf.mxu0
        %v4939 = vadd.f32 %v4850, %v4938
        %4940 = vmatmul.bf16.gmra.mxu0 %v822
        %v4941 = vpop.f32.mrf.mxu0
        %v4942 = vadd.f32 %v4853, %v4941
        %v4943 = vpop.f32.mrf.mxu0
        %v4944 = vadd.f32 %v4855, %v4943
        %4945 = vmatmul.bf16.gmra.mxu0 %v830
        %v4946 = vpop.f32.mrf.mxu0
        %v4947 = vadd.f32 %v4858, %v4946
        %v4948 = vpop.f32.mrf.mxu0
        %v4949 = vadd.f32 %v4860, %v4948
        %4950 = vmatmul.bf16.gmra.mxu0 %v838
        %v4951 = vpop.f32.mrf.mxu0
        %v4952 = vadd.f32 %v4863, %v4951
        %v4953 = vpop.f32.mrf.mxu0
        %v4954 = vadd.f32 %v4865, %v4953
        %4955 = vmatmul.bf16.gmra.mxu0 %v846
        %v4956 = vpop.f32.mrf.mxu0
        %v4957 = vadd.f32 %v4868, %v4956
        %v4958 = vpop.f32.mrf.mxu0
        %v4959 = vadd.f32 %v4870, %v4958
        %4960 = vmatmul.bf16.gmra.mxu0 %v854
        %v4961 = vpop.f32.mrf.mxu0
        %v4962 = vadd.f32 %v4873, %v4961
        %v4963 = vpop.f32.mrf.mxu0
        %v4964 = vadd.f32 %v4875, %v4963
        %4965 = vmatmul.bf16.gmra.mxu0 %v862
        %v4966 = vpop.f32.mrf.mxu0
        %v4967 = vadd.f32 %v4878, %v4966
        %v4968 = vpop.f32.mrf.mxu0
        %v4969 = vadd.f32 %v4880, %v4968
        %4970 = vmatmul.bf16.gmra.mxu0 %v870
        %v4971 = vpop.f32.mrf.mxu0
        %v4972 = vadd.f32 %v4883, %v4971
        %v4973 = vpop.f32.mrf.mxu0
        %v4974 = vadd.f32 %v4885, %v4973
        %4975 = vmatmul.bf16.gmra.mxu0 %v878
        %v4976 = vpop.f32.mrf.mxu0
        %v4977 = vadd.f32 %v4888, %v4976
        %v4978 = vpop.f32.mrf.mxu0
        %v4979 = vadd.f32 %v4890, %v4978
        %4980 = vmatmul.bf16.gmra.mxu0 %v886
        %v4981 = vpop.f32.mrf.mxu0
        %v4982 = vadd.f32 %v4893, %v4981
        %v4983 = vpop.f32.mrf.mxu0
        %v4984 = vadd.f32 %v4895, %v4983
        %4985 = vmatmul.bf16.gmra.mxu0 %v894
        %v4986 = vpop.f32.mrf.mxu0
        %v4987 = vadd.f32 %v4898, %v4986
        %v4988 = vpop.f32.mrf.mxu0
        %v4989 = vadd.f32 %v4900, %v4988
        %4990 = vdwg.mxu0
        %4991 = vmatpush.bf16.msra.mxu0 %v2621
        %4992 = vmatpush.bf16.msra.mxu0 %v2616
        %4993 = vmatpush.bf16.msra.mxu0 %v2611
        %4994 = vmatpush.bf16.msra.mxu0 %v2606
        %4995 = vmatpush.bf16.msra.mxu0 %v2601
        %4996 = vmatpush.bf16.msra.mxu0 %v2596
        %4997 = vmatpush.bf16.msra.mxu0 %v2591
        %4998 = vmatpush.bf16.msra.mxu0 %v2586
        %4999 = vmatmul.bf16.gmra.mxu0 %v775
        %v5000 = vpop.f32.mrf.mxu0
        %v5001 = vadd.f32 %v4912, %v5000
        %v5002 = vpop.f32.mrf.mxu0
        %v5003 = vadd.f32 %v4914, %v5002
        %5004 = vmatmul.bf16.gmra.mxu0 %v783
        %v5005 = vpop.f32.mrf.mxu0
        %v5006 = vadd.f32 %v4917, %v5005
        %v5007 = vpop.f32.mrf.mxu0
        %v5008 = vadd.f32 %v4919, %v5007
        %5009 = vmatmul.bf16.gmra.mxu0 %v791
        %v5010 = vpop.f32.mrf.mxu0
        %v5011 = vadd.f32 %v4922, %v5010
        %v5012 = vpop.f32.mrf.mxu0
        %v5013 = vadd.f32 %v4924, %v5012
        %5014 = vmatmul.bf16.gmra.mxu0 %v799
        %v5015 = vpop.f32.mrf.mxu0
        %v5016 = vadd.f32 %v4927, %v5015
        %v5017 = vpop.f32.mrf.mxu0
        %v5018 = vadd.f32 %v4929, %v5017
        %5019 = vmatmul.bf16.gmra.mxu0 %v807
        %v5020 = vpop.f32.mrf.mxu0
        %v5021 = vadd.f32 %v4932, %v5020
        %v5022 = vpop.f32.mrf.mxu0
        %v5023 = vadd.f32 %v4934, %v5022
        %5024 = vmatmul.bf16.gmra.mxu0 %v815
        %v5025 = vpop.f32.mrf.mxu0
        %v5026 = vadd.f32 %v4937, %v5025
        %v5027 = vpop.f32.mrf.mxu0
        %v5028 = vadd.f32 %v4939, %v5027
        %5029 = vmatmul.bf16.gmra.mxu0 %v823
        %v5030 = vpop.f32.mrf.mxu0
        %v5031 = vadd.f32 %v4942, %v5030
        %v5032 = vpop.f32.mrf.mxu0
        %v5033 = vadd.f32 %v4944, %v5032
        %5034 = vmatmul.bf16.gmra.mxu0 %v831
        %v5035 = vpop.f32.mrf.mxu0
        %v5036 = vadd.f32 %v4947, %v5035
        %v5037 = vpop.f32.mrf.mxu0
        %v5038 = vadd.f32 %v4949, %v5037
        %5039 = vmatmul.bf16.gmra.mxu0 %v839
        %v5040 = vpop.f32.mrf.mxu0
        %v5041 = vadd.f32 %v4952, %v5040
        %v5042 = vpop.f32.mrf.mxu0
        %v5043 = vadd.f32 %v4954, %v5042
        %5044 = vmatmul.bf16.gmra.mxu0 %v847
        %v5045 = vpop.f32.mrf.mxu0
        %v5046 = vadd.f32 %v4957, %v5045
        %v5047 = vpop.f32.mrf.mxu0
        %v5048 = vadd.f32 %v4959, %v5047
        %5049 = vmatmul.bf16.gmra.mxu0 %v855
        %v5050 = vpop.f32.mrf.mxu0
        %v5051 = vadd.f32 %v4962, %v5050
        %v5052 = vpop.f32.mrf.mxu0
        %v5053 = vadd.f32 %v4964, %v5052
        %5054 = vmatmul.bf16.gmra.mxu0 %v863
        %v5055 = vpop.f32.mrf.mxu0
        %v5056 = vadd.f32 %v4967, %v5055
        %v5057 = vpop.f32.mrf.mxu0
        %v5058 = vadd.f32 %v4969, %v5057
        %5059 = vmatmul.bf16.gmra.mxu0 %v871
        %v5060 = vpop.f32.mrf.mxu0
        %v5061 = vadd.f32 %v4972, %v5060
        %v5062 = vpop.f32.mrf.mxu0
        %v5063 = vadd.f32 %v4974, %v5062
        %5064 = vmatmul.bf16.gmra.mxu0 %v879
        %v5065 = vpop.f32.mrf.mxu0
        %v5066 = vadd.f32 %v4977, %v5065
        %v5067 = vpop.f32.mrf.mxu0
        %v5068 = vadd.f32 %v4979, %v5067
        %5069 = vmatmul.bf16.gmra.mxu0 %v887
        %v5070 = vpop.f32.mrf.mxu0
        %v5071 = vadd.f32 %v4982, %v5070
        %v5072 = vpop.f32.mrf.mxu0
        %v5073 = vadd.f32 %v4984, %v5072
        %5074 = vmatmul.bf16.gmra.mxu0 %v895
        %v5075 = vpop.f32.mrf.mxu0
        %v5076 = vadd.f32 %v4987, %v5075
        %v5077 = vpop.f32.mrf.mxu0
        %v5078 = vadd.f32 %v4989, %v5077
        %5079 = vdwg.mxu0
        %5080 = vmatpush.bf16.msra.mxu0 %v2342
        %5081 = vmatpush.bf16.msra.mxu0 %v2337
        %5082 = vmatpush.bf16.msra.mxu0 %v2332
        %5083 = vmatpush.bf16.msra.mxu0 %v2327
        %5084 = vmatpush.bf16.msra.mxu0 %v2322
        %5085 = vmatpush.bf16.msra.mxu0 %v2317
        %5086 = vmatpush.bf16.msra.mxu0 %v2312
        %5087 = vmatpush.bf16.msra.mxu0 %v2307
        %5088 = vmatmul.bf16.gmra.mxu0 %v768
        %v5089 = vpop.f32.mrf.mxu0
        %v5090 = vadd.f32 0.0, %v5089
        %v5091 = vpop.f32.mrf.mxu0
        %v5092 = vadd.f32 0.0, %v5091
        %5093 = vmatmul.bf16.gmra.mxu0 %v776
        %v5094 = vpop.f32.mrf.mxu0
        %v5095 = vadd.f32 0.0, %v5094
        %v5096 = vpop.f32.mrf.mxu0
        %v5097 = vadd.f32 0.0, %v5096
        %5098 = vmatmul.bf16.gmra.mxu0 %v784
        %v5099 = vpop.f32.mrf.mxu0
        %v5100 = vadd.f32 0.0, %v5099
        %v5101 = vpop.f32.mrf.mxu0
        %v5102 = vadd.f32 0.0, %v5101
        %5103 = vmatmul.bf16.gmra.mxu0 %v792
        %v5104 = vpop.f32.mrf.mxu0
        %v5105 = vadd.f32 0.0, %v5104
        %v5106 = vpop.f32.mrf.mxu0
        %v5107 = vadd.f32 0.0, %v5106
        %5108 = vmatmul.bf16.gmra.mxu0 %v800
        %v5109 = vpop.f32.mrf.mxu0
        %v5110 = vadd.f32 0.0, %v5109
        %v5111 = vpop.f32.mrf.mxu0
        %v5112 = vadd.f32 0.0, %v5111
        %5113 = vmatmul.bf16.gmra.mxu0 %v808
        %v5114 = vpop.f32.mrf.mxu0
        %v5115 = vadd.f32 0.0, %v5114
        %v5116 = vpop.f32.mrf.mxu0
        %v5117 = vadd.f32 0.0, %v5116
        %5118 = vmatmul.bf16.gmra.mxu0 %v816
        %v5119 = vpop.f32.mrf.mxu0
        %v5120 = vadd.f32 0.0, %v5119
        %v5121 = vpop.f32.mrf.mxu0
        %v5122 = vadd.f32 0.0, %v5121
        %5123 = vmatmul.bf16.gmra.mxu0 %v824
        %v5124 = vpop.f32.mrf.mxu0
        %v5125 = vadd.f32 0.0, %v5124
        %v5126 = vpop.f32.mrf.mxu0
        %v5127 = vadd.f32 0.0, %v5126
        %5128 = vmatmul.bf16.gmra.mxu0 %v832
        %v5129 = vpop.f32.mrf.mxu0
        %v5130 = vadd.f32 0.0, %v5129
        %v5131 = vpop.f32.mrf.mxu0
        %v5132 = vadd.f32 0.0, %v5131
        %5133 = vmatmul.bf16.gmra.mxu0 %v840
        %v5134 = vpop.f32.mrf.mxu0
        %v5135 = vadd.f32 0.0, %v5134
        %v5136 = vpop.f32.mrf.mxu0
        %v5137 = vadd.f32 0.0, %v5136
        %5138 = vmatmul.bf16.gmra.mxu0 %v848
        %v5139 = vpop.f32.mrf.mxu0
        %v5140 = vadd.f32 0.0, %v5139
        %v5141 = vpop.f32.mrf.mxu0
        %v5142 = vadd.f32 0.0, %v5141
        %5143 = vmatmul.bf16.gmra.mxu0 %v856
        %v5144 = vpop.f32.mrf.mxu0
        %v5145 = vadd.f32 0.0, %v5144
        %v5146 = vpop.f32.mrf.mxu0
        %v5147 = vadd.f32 0.0, %v5146
        %5148 = vmatmul.bf16.gmra.mxu0 %v864
        %v5149 = vpop.f32.mrf.mxu0
        %v5150 = vadd.f32 0.0, %v5149
        %v5151 = vpop.f32.mrf.mxu0
        %v5152 = vadd.f32 0.0, %v5151
        %5153 = vmatmul.bf16.gmra.mxu0 %v872
        %v5154 = vpop.f32.mrf.mxu0
        %v5155 = vadd.f32 0.0, %v5154
        %v5156 = vpop.f32.mrf.mxu0
        %v5157 = vadd.f32 0.0, %v5156
        %5158 = vmatmul.bf16.gmra.mxu0 %v880
        %v5159 = vpop.f32.mrf.mxu0
        %v5160 = vadd.f32 0.0, %v5159
        %v5161 = vpop.f32.mrf.mxu0
        %v5162 = vadd.f32 0.0, %v5161
        %5163 = vmatmul.bf16.gmra.mxu0 %v888
        %v5164 = vpop.f32.mrf.mxu0
        %v5165 = vadd.f32 0.0, %v5164
        %v5166 = vpop.f32.mrf.mxu0
        %v5167 = vadd.f32 0.0, %v5166
        %5168 = vdwg.mxu0
        %5169 = vmatpush.bf16.msra.mxu0 %v2382
        %5170 = vmatpush.bf16.msra.mxu0 %v2377
        %5171 = vmatpush.bf16.msra.mxu0 %v2372
        %5172 = vmatpush.bf16.msra.mxu0 %v2367
        %5173 = vmatpush.bf16.msra.mxu0 %v2362
        %5174 = vmatpush.bf16.msra.mxu0 %v2357
        %5175 = vmatpush.bf16.msra.mxu0 %v2352
        %5176 = vmatpush.bf16.msra.mxu0 %v2347
        %5177 = vmatmul.bf16.gmra.mxu0 %v769
        %v5178 = vpop.f32.mrf.mxu0
        %v5179 = vadd.f32 %v5090, %v5178
        %v5180 = vpop.f32.mrf.mxu0
        %v5181 = vadd.f32 %v5092, %v5180
        %5182 = vmatmul.bf16.gmra.mxu0 %v777
        %v5183 = vpop.f32.mrf.mxu0
        %v5184 = vadd.f32 %v5095, %v5183
        %v5185 = vpop.f32.mrf.mxu0
        %v5186 = vadd.f32 %v5097, %v5185
        %5187 = vmatmul.bf16.gmra.mxu0 %v785
        %v5188 = vpop.f32.mrf.mxu0
        %v5189 = vadd.f32 %v5100, %v5188
        %v5190 = vpop.f32.mrf.mxu0
        %v5191 = vadd.f32 %v5102, %v5190
        %5192 = vmatmul.bf16.gmra.mxu0 %v793
        %v5193 = vpop.f32.mrf.mxu0
        %v5194 = vadd.f32 %v5105, %v5193
        %v5195 = vpop.f32.mrf.mxu0
        %v5196 = vadd.f32 %v5107, %v5195
        %5197 = vmatmul.bf16.gmra.mxu0 %v801
        %v5198 = vpop.f32.mrf.mxu0
        %v5199 = vadd.f32 %v5110, %v5198
        %v5200 = vpop.f32.mrf.mxu0
        %v5201 = vadd.f32 %v5112, %v5200
        %5202 = vmatmul.bf16.gmra.mxu0 %v809
        %v5203 = vpop.f32.mrf.mxu0
        %v5204 = vadd.f32 %v5115, %v5203
        %v5205 = vpop.f32.mrf.mxu0
        %v5206 = vadd.f32 %v5117, %v5205
        %5207 = vmatmul.bf16.gmra.mxu0 %v817
        %v5208 = vpop.f32.mrf.mxu0
        %v5209 = vadd.f32 %v5120, %v5208
        %v5210 = vpop.f32.mrf.mxu0
        %v5211 = vadd.f32 %v5122, %v5210
        %5212 = vmatmul.bf16.gmra.mxu0 %v825
        %v5213 = vpop.f32.mrf.mxu0
        %v5214 = vadd.f32 %v5125, %v5213
        %v5215 = vpop.f32.mrf.mxu0
        %v5216 = vadd.f32 %v5127, %v5215
        %5217 = vmatmul.bf16.gmra.mxu0 %v833
        %v5218 = vpop.f32.mrf.mxu0
        %v5219 = vadd.f32 %v5130, %v5218
        %v5220 = vpop.f32.mrf.mxu0
        %v5221 = vadd.f32 %v5132, %v5220
        %5222 = vmatmul.bf16.gmra.mxu0 %v841
        %v5223 = vpop.f32.mrf.mxu0
        %v5224 = vadd.f32 %v5135, %v5223
        %v5225 = vpop.f32.mrf.mxu0
        %v5226 = vadd.f32 %v5137, %v5225
        %5227 = vmatmul.bf16.gmra.mxu0 %v849
        %v5228 = vpop.f32.mrf.mxu0
        %v5229 = vadd.f32 %v5140, %v5228
        %v5230 = vpop.f32.mrf.mxu0
        %v5231 = vadd.f32 %v5142, %v5230
        %5232 = vmatmul.bf16.gmra.mxu0 %v857
        %v5233 = vpop.f32.mrf.mxu0
        %v5234 = vadd.f32 %v5145, %v5233
        %v5235 = vpop.f32.mrf.mxu0
        %v5236 = vadd.f32 %v5147, %v5235
        %5237 = vmatmul.bf16.gmra.mxu0 %v865
        %v5238 = vpop.f32.mrf.mxu0
        %v5239 = vadd.f32 %v5150, %v5238
        %v5240 = vpop.f32.mrf.mxu0
        %v5241 = vadd.f32 %v5152, %v5240
        %5242 = vmatmul.bf16.gmra.mxu0 %v873
        %v5243 = vpop.f32.mrf.mxu0
        %v5244 = vadd.f32 %v5155, %v5243
        %v5245 = vpop.f32.mrf.mxu0
        %v5246 = vadd.f32 %v5157, %v5245
        %5247 = vmatmul.bf16.gmra.mxu0 %v881
        %v5248 = vpop.f32.mrf.mxu0
        %v5249 = vadd.f32 %v5160, %v5248
        %v5250 = vpop.f32.mrf.mxu0
        %v5251 = vadd.f32 %v5162, %v5250
        %5252 = vmatmul.bf16.gmra.mxu0 %v889
        %v5253 = vpop.f32.mrf.mxu0
        %v5254 = vadd.f32 %v5165, %v5253
        %v5255 = vpop.f32.mrf.mxu0
        %v5256 = vadd.f32 %v5167, %v5255
        %5257 = vdwg.mxu0
        %5258 = vmatpush.bf16.msra.mxu0 %v2422
        %5259 = vmatpush.bf16.msra.mxu0 %v2417
        %5260 = vmatpush.bf16.msra.mxu0 %v2412
        %5261 = vmatpush.bf16.msra.mxu0 %v2407
        %5262 = vmatpush.bf16.msra.mxu0 %v2402
        %5263 = vmatpush.bf16.msra.mxu0 %v2397
        %5264 = vmatpush.bf16.msra.mxu0 %v2392
        %5265 = vmatpush.bf16.msra.mxu0 %v2387
        %5266 = vmatmul.bf16.gmra.mxu0 %v770
        %v5267 = vpop.f32.mrf.mxu0
        %v5268 = vadd.f32 %v5179, %v5267
        %v5269 = vpop.f32.mrf.mxu0
        %v5270 = vadd.f32 %v5181, %v5269
        %5271 = vmatmul.bf16.gmra.mxu0 %v778
        %v5272 = vpop.f32.mrf.mxu0
        %v5273 = vadd.f32 %v5184, %v5272
        %v5274 = vpop.f32.mrf.mxu0
        %v5275 = vadd.f32 %v5186, %v5274
        %5276 = vmatmul.bf16.gmra.mxu0 %v786
        %v5277 = vpop.f32.mrf.mxu0
        %v5278 = vadd.f32 %v5189, %v5277
        %v5279 = vpop.f32.mrf.mxu0
        %v5280 = vadd.f32 %v5191, %v5279
        %5281 = vmatmul.bf16.gmra.mxu0 %v794
        %v5282 = vpop.f32.mrf.mxu0
        %v5283 = vadd.f32 %v5194, %v5282
        %v5284 = vpop.f32.mrf.mxu0
        %v5285 = vadd.f32 %v5196, %v5284
        %5286 = vmatmul.bf16.gmra.mxu0 %v802
        %v5287 = vpop.f32.mrf.mxu0
        %v5288 = vadd.f32 %v5199, %v5287
        %v5289 = vpop.f32.mrf.mxu0
        %v5290 = vadd.f32 %v5201, %v5289
        %5291 = vmatmul.bf16.gmra.mxu0 %v810
        %v5292 = vpop.f32.mrf.mxu0
        %v5293 = vadd.f32 %v5204, %v5292
        %v5294 = vpop.f32.mrf.mxu0
        %v5295 = vadd.f32 %v5206, %v5294
        %5296 = vmatmul.bf16.gmra.mxu0 %v818
        %v5297 = vpop.f32.mrf.mxu0
        %v5298 = vadd.f32 %v5209, %v5297
        %v5299 = vpop.f32.mrf.mxu0
        %v5300 = vadd.f32 %v5211, %v5299
        %5301 = vmatmul.bf16.gmra.mxu0 %v826
        %v5302 = vpop.f32.mrf.mxu0
        %v5303 = vadd.f32 %v5214, %v5302
        %v5304 = vpop.f32.mrf.mxu0
        %v5305 = vadd.f32 %v5216, %v5304
        %5306 = vmatmul.bf16.gmra.mxu0 %v834
        %v5307 = vpop.f32.mrf.mxu0
        %v5308 = vadd.f32 %v5219, %v5307
        %v5309 = vpop.f32.mrf.mxu0
        %v5310 = vadd.f32 %v5221, %v5309
        %5311 = vmatmul.bf16.gmra.mxu0 %v842
        %v5312 = vpop.f32.mrf.mxu0
        %v5313 = vadd.f32 %v5224, %v5312
        %v5314 = vpop.f32.mrf.mxu0
        %v5315 = vadd.f32 %v5226, %v5314
        %5316 = vmatmul.bf16.gmra.mxu0 %v850
        %v5317 = vpop.f32.mrf.mxu0
        %v5318 = vadd.f32 %v5229, %v5317
        %v5319 = vpop.f32.mrf.mxu0
        %v5320 = vadd.f32 %v5231, %v5319
        %5321 = vmatmul.bf16.gmra.mxu0 %v858
        %v5322 = vpop.f32.mrf.mxu0
        %v5323 = vadd.f32 %v5234, %v5322
        %v5324 = vpop.f32.mrf.mxu0
        %v5325 = vadd.f32 %v5236, %v5324
        %5326 = vmatmul.bf16.gmra.mxu0 %v866
        %v5327 = vpop.f32.mrf.mxu0
        %v5328 = vadd.f32 %v5239, %v5327
        %v5329 = vpop.f32.mrf.mxu0
        %v5330 = vadd.f32 %v5241, %v5329
        %5331 = vmatmul.bf16.gmra.mxu0 %v874
        %v5332 = vpop.f32.mrf.mxu0
        %v5333 = vadd.f32 %v5244, %v5332
        %v5334 = vpop.f32.mrf.mxu0
        %v5335 = vadd.f32 %v5246, %v5334
        %5336 = vmatmul.bf16.gmra.mxu0 %v882
        %v5337 = vpop.f32.mrf.mxu0
        %v5338 = vadd.f32 %v5249, %v5337
        %v5339 = vpop.f32.mrf.mxu0
        %v5340 = vadd.f32 %v5251, %v5339
        %5341 = vmatmul.bf16.gmra.mxu0 %v890
        %v5342 = vpop.f32.mrf.mxu0
        %v5343 = vadd.f32 %v5254, %v5342
        %v5344 = vpop.f32.mrf.mxu0
        %v5345 = vadd.f32 %v5256, %v5344
        %5346 = vdwg.mxu0
        %5347 = vmatpush.bf16.msra.mxu0 %v2462
        %5348 = vmatpush.bf16.msra.mxu0 %v2457
        %5349 = vmatpush.bf16.msra.mxu0 %v2452
        %5350 = vmatpush.bf16.msra.mxu0 %v2447
        %5351 = vmatpush.bf16.msra.mxu0 %v2442
        %5352 = vmatpush.bf16.msra.mxu0 %v2437
        %5353 = vmatpush.bf16.msra.mxu0 %v2432
        %5354 = vmatpush.bf16.msra.mxu0 %v2427
        %5355 = vmatmul.bf16.gmra.mxu0 %v771
        %v5356 = vpop.f32.mrf.mxu0
        %v5357 = vadd.f32 %v5268, %v5356
        %v5358 = vpop.f32.mrf.mxu0
        %v5359 = vadd.f32 %v5270, %v5358
        %5360 = vmatmul.bf16.gmra.mxu0 %v779
        %v5361 = vpop.f32.mrf.mxu0
        %v5362 = vadd.f32 %v5273, %v5361
        %v5363 = vpop.f32.mrf.mxu0
        %v5364 = vadd.f32 %v5275, %v5363
        %5365 = vmatmul.bf16.gmra.mxu0 %v787
        %v5366 = vpop.f32.mrf.mxu0
        %v5367 = vadd.f32 %v5278, %v5366
        %v5368 = vpop.f32.mrf.mxu0
        %v5369 = vadd.f32 %v5280, %v5368
        %5370 = vmatmul.bf16.gmra.mxu0 %v795
        %v5371 = vpop.f32.mrf.mxu0
        %v5372 = vadd.f32 %v5283, %v5371
        %v5373 = vpop.f32.mrf.mxu0
        %v5374 = vadd.f32 %v5285, %v5373
        %5375 = vmatmul.bf16.gmra.mxu0 %v803
        %v5376 = vpop.f32.mrf.mxu0
        %v5377 = vadd.f32 %v5288, %v5376
        %v5378 = vpop.f32.mrf.mxu0
        %v5379 = vadd.f32 %v5290, %v5378
        %5380 = vmatmul.bf16.gmra.mxu0 %v811
        %v5381 = vpop.f32.mrf.mxu0
        %v5382 = vadd.f32 %v5293, %v5381
        %v5383 = vpop.f32.mrf.mxu0
        %v5384 = vadd.f32 %v5295, %v5383
        %5385 = vmatmul.bf16.gmra.mxu0 %v819
        %v5386 = vpop.f32.mrf.mxu0
        %v5387 = vadd.f32 %v5298, %v5386
        %v5388 = vpop.f32.mrf.mxu0
        %v5389 = vadd.f32 %v5300, %v5388
        %5390 = vmatmul.bf16.gmra.mxu0 %v827
        %v5391 = vpop.f32.mrf.mxu0
        %v5392 = vadd.f32 %v5303, %v5391
        %v5393 = vpop.f32.mrf.mxu0
        %v5394 = vadd.f32 %v5305, %v5393
        %5395 = vmatmul.bf16.gmra.mxu0 %v835
        %v5396 = vpop.f32.mrf.mxu0
        %v5397 = vadd.f32 %v5308, %v5396
        %v5398 = vpop.f32.mrf.mxu0
        %v5399 = vadd.f32 %v5310, %v5398
        %5400 = vmatmul.bf16.gmra.mxu0 %v843
        %v5401 = vpop.f32.mrf.mxu0
        %v5402 = vadd.f32 %v5313, %v5401
        %v5403 = vpop.f32.mrf.mxu0
        %v5404 = vadd.f32 %v5315, %v5403
        %5405 = vmatmul.bf16.gmra.mxu0 %v851
        %v5406 = vpop.f32.mrf.mxu0
        %v5407 = vadd.f32 %v5318, %v5406
        %v5408 = vpop.f32.mrf.mxu0
        %v5409 = vadd.f32 %v5320, %v5408
        %5410 = vmatmul.bf16.gmra.mxu0 %v859
        %v5411 = vpop.f32.mrf.mxu0
        %v5412 = vadd.f32 %v5323, %v5411
        %v5413 = vpop.f32.mrf.mxu0
        %v5414 = vadd.f32 %v5325, %v5413
        %5415 = vmatmul.bf16.gmra.mxu0 %v867
        %v5416 = vpop.f32.mrf.mxu0
        %v5417 = vadd.f32 %v5328, %v5416
        %v5418 = vpop.f32.mrf.mxu0
        %v5419 = vadd.f32 %v5330, %v5418
        %5420 = vmatmul.bf16.gmra.mxu0 %v875
        %v5421 = vpop.f32.mrf.mxu0
        %v5422 = vadd.f32 %v5333, %v5421
        %v5423 = vpop.f32.mrf.mxu0
        %v5424 = vadd.f32 %v5335, %v5423
        %5425 = vmatmul.bf16.gmra.mxu0 %v883
        %v5426 = vpop.f32.mrf.mxu0
        %v5427 = vadd.f32 %v5338, %v5426
        %v5428 = vpop.f32.mrf.mxu0
        %v5429 = vadd.f32 %v5340, %v5428
        %5430 = vmatmul.bf16.gmra.mxu0 %v891
        %v5431 = vpop.f32.mrf.mxu0
        %v5432 = vadd.f32 %v5343, %v5431
        %v5433 = vpop.f32.mrf.mxu0
        %v5434 = vadd.f32 %v5345, %v5433
        %5435 = vdwg.mxu0
        %5436 = vmatpush.bf16.msra.mxu0 %v2502
        %5437 = vmatpush.bf16.msra.mxu0 %v2497
        %5438 = vmatpush.bf16.msra.mxu0 %v2492
        %5439 = vmatpush.bf16.msra.mxu0 %v2487
        %5440 = vmatpush.bf16.msra.mxu0 %v2482
        %5441 = vmatpush.bf16.msra.mxu0 %v2477
        %5442 = vmatpush.bf16.msra.mxu0 %v2472
        %5443 = vmatpush.bf16.msra.mxu0 %v2467
        %5444 = vmatmul.bf16.gmra.mxu0 %v772
        %v5445 = vpop.f32.mrf.mxu0
        %v5446 = vadd.f32 %v5357, %v5445
        %v5447 = vpop.f32.mrf.mxu0
        %v5448 = vadd.f32 %v5359, %v5447
        %5449 = vmatmul.bf16.gmra.mxu0 %v780
        %v5450 = vpop.f32.mrf.mxu0
        %v5451 = vadd.f32 %v5362, %v5450
        %v5452 = vpop.f32.mrf.mxu0
        %v5453 = vadd.f32 %v5364, %v5452
        %5454 = vmatmul.bf16.gmra.mxu0 %v788
        %v5455 = vpop.f32.mrf.mxu0
        %v5456 = vadd.f32 %v5367, %v5455
        %v5457 = vpop.f32.mrf.mxu0
        %v5458 = vadd.f32 %v5369, %v5457
        %5459 = vmatmul.bf16.gmra.mxu0 %v796
        %v5460 = vpop.f32.mrf.mxu0
        %v5461 = vadd.f32 %v5372, %v5460
        %v5462 = vpop.f32.mrf.mxu0
        %v5463 = vadd.f32 %v5374, %v5462
        %5464 = vmatmul.bf16.gmra.mxu0 %v804
        %v5465 = vpop.f32.mrf.mxu0
        %v5466 = vadd.f32 %v5377, %v5465
        %v5467 = vpop.f32.mrf.mxu0
        %v5468 = vadd.f32 %v5379, %v5467
        %5469 = vmatmul.bf16.gmra.mxu0 %v812
        %v5470 = vpop.f32.mrf.mxu0
        %v5471 = vadd.f32 %v5382, %v5470
        %v5472 = vpop.f32.mrf.mxu0
        %v5473 = vadd.f32 %v5384, %v5472
        %5474 = vmatmul.bf16.gmra.mxu0 %v820
        %v5475 = vpop.f32.mrf.mxu0
        %v5476 = vadd.f32 %v5387, %v5475
        %v5477 = vpop.f32.mrf.mxu0
        %v5478 = vadd.f32 %v5389, %v5477
        %5479 = vmatmul.bf16.gmra.mxu0 %v828
        %v5480 = vpop.f32.mrf.mxu0
        %v5481 = vadd.f32 %v5392, %v5480
        %v5482 = vpop.f32.mrf.mxu0
        %v5483 = vadd.f32 %v5394, %v5482
        %5484 = vmatmul.bf16.gmra.mxu0 %v836
        %v5485 = vpop.f32.mrf.mxu0
        %v5486 = vadd.f32 %v5397, %v5485
        %v5487 = vpop.f32.mrf.mxu0
        %v5488 = vadd.f32 %v5399, %v5487
        %5489 = vmatmul.bf16.gmra.mxu0 %v844
        %v5490 = vpop.f32.mrf.mxu0
        %v5491 = vadd.f32 %v5402, %v5490
        %v5492 = vpop.f32.mrf.mxu0
        %v5493 = vadd.f32 %v5404, %v5492
        %5494 = vmatmul.bf16.gmra.mxu0 %v852
        %v5495 = vpop.f32.mrf.mxu0
        %v5496 = vadd.f32 %v5407, %v5495
        %v5497 = vpop.f32.mrf.mxu0
        %v5498 = vadd.f32 %v5409, %v5497
        %5499 = vmatmul.bf16.gmra.mxu0 %v860
        %v5500 = vpop.f32.mrf.mxu0
        %v5501 = vadd.f32 %v5412, %v5500
        %v5502 = vpop.f32.mrf.mxu0
        %v5503 = vadd.f32 %v5414, %v5502
        %5504 = vmatmul.bf16.gmra.mxu0 %v868
        %v5505 = vpop.f32.mrf.mxu0
        %v5506 = vadd.f32 %v5417, %v5505
        %v5507 = vpop.f32.mrf.mxu0
        %v5508 = vadd.f32 %v5419, %v5507
        %5509 = vmatmul.bf16.gmra.mxu0 %v876
        %v5510 = vpop.f32.mrf.mxu0
        %v5511 = vadd.f32 %v5422, %v5510
        %v5512 = vpop.f32.mrf.mxu0
        %v5513 = vadd.f32 %v5424, %v5512
        %5514 = vmatmul.bf16.gmra.mxu0 %v884
        %v5515 = vpop.f32.mrf.mxu0
        %v5516 = vadd.f32 %v5427, %v5515
        %v5517 = vpop.f32.mrf.mxu0
        %v5518 = vadd.f32 %v5429, %v5517
        %5519 = vmatmul.bf16.gmra.mxu0 %v892
        %v5520 = vpop.f32.mrf.mxu0
        %v5521 = vadd.f32 %v5432, %v5520
        %v5522 = vpop.f32.mrf.mxu0
        %v5523 = vadd.f32 %v5434, %v5522
        %5524 = vdwg.mxu0
        %5525 = vmatpush.bf16.msra.mxu0 %v2542
        %5526 = vmatpush.bf16.msra.mxu0 %v2537
        %5527 = vmatpush.bf16.msra.mxu0 %v2532
        %5528 = vmatpush.bf16.msra.mxu0 %v2527
        %5529 = vmatpush.bf16.msra.mxu0 %v2522
        %5530 = vmatpush.bf16.msra.mxu0 %v2517
        %5531 = vmatpush.bf16.msra.mxu0 %v2512
        %5532 = vmatpush.bf16.msra.mxu0 %v2507
        %5533 = vmatmul.bf16.gmra.mxu0 %v773
        %v5534 = vpop.f32.mrf.mxu0
        %v5535 = vadd.f32 %v5446, %v5534
        %v5536 = vpop.f32.mrf.mxu0
        %v5537 = vadd.f32 %v5448, %v5536
        %5538 = vmatmul.bf16.gmra.mxu0 %v781
        %v5539 = vpop.f32.mrf.mxu0
        %v5540 = vadd.f32 %v5451, %v5539
        %v5541 = vpop.f32.mrf.mxu0
        %v5542 = vadd.f32 %v5453, %v5541
        %5543 = vmatmul.bf16.gmra.mxu0 %v789
        %v5544 = vpop.f32.mrf.mxu0
        %v5545 = vadd.f32 %v5456, %v5544
        %v5546 = vpop.f32.mrf.mxu0
        %v5547 = vadd.f32 %v5458, %v5546
        %5548 = vmatmul.bf16.gmra.mxu0 %v797
        %v5549 = vpop.f32.mrf.mxu0
        %v5550 = vadd.f32 %v5461, %v5549
        %v5551 = vpop.f32.mrf.mxu0
        %v5552 = vadd.f32 %v5463, %v5551
        %5553 = vmatmul.bf16.gmra.mxu0 %v805
        %v5554 = vpop.f32.mrf.mxu0
        %v5555 = vadd.f32 %v5466, %v5554
        %v5556 = vpop.f32.mrf.mxu0
        %v5557 = vadd.f32 %v5468, %v5556
        %5558 = vmatmul.bf16.gmra.mxu0 %v813
        %v5559 = vpop.f32.mrf.mxu0
        %v5560 = vadd.f32 %v5471, %v5559
        %v5561 = vpop.f32.mrf.mxu0
        %v5562 = vadd.f32 %v5473, %v5561
        %5563 = vmatmul.bf16.gmra.mxu0 %v821
        %v5564 = vpop.f32.mrf.mxu0
        %v5565 = vadd.f32 %v5476, %v5564
        %v5566 = vpop.f32.mrf.mxu0
        %v5567 = vadd.f32 %v5478, %v5566
        %5568 = vmatmul.bf16.gmra.mxu0 %v829
        %v5569 = vpop.f32.mrf.mxu0
        %v5570 = vadd.f32 %v5481, %v5569
        %v5571 = vpop.f32.mrf.mxu0
        %v5572 = vadd.f32 %v5483, %v5571
        %5573 = vmatmul.bf16.gmra.mxu0 %v837
        %v5574 = vpop.f32.mrf.mxu0
        %v5575 = vadd.f32 %v5486, %v5574
        %v5576 = vpop.f32.mrf.mxu0
        %v5577 = vadd.f32 %v5488, %v5576
        %5578 = vmatmul.bf16.gmra.mxu0 %v845
        %v5579 = vpop.f32.mrf.mxu0
        %v5580 = vadd.f32 %v5491, %v5579
        %v5581 = vpop.f32.mrf.mxu0
        %v5582 = vadd.f32 %v5493, %v5581
        %5583 = vmatmul.bf16.gmra.mxu0 %v853
        %v5584 = vpop.f32.mrf.mxu0
        %v5585 = vadd.f32 %v5496, %v5584
        %v5586 = vpop.f32.mrf.mxu0
        %v5587 = vadd.f32 %v5498, %v5586
        %5588 = vmatmul.bf16.gmra.mxu0 %v861
        %v5589 = vpop.f32.mrf.mxu0
        %v5590 = vadd.f32 %v5501, %v5589
        %v5591 = vpop.f32.mrf.mxu0
        %v5592 = vadd.f32 %v5503, %v5591
        %5593 = vmatmul.bf16.gmra.mxu0 %v869
        %v5594 = vpop.f32.mrf.mxu0
        %v5595 = vadd.f32 %v5506, %v5594
        %v5596 = vpop.f32.mrf.mxu0
        %v5597 = vadd.f32 %v5508, %v5596
        %5598 = vmatmul.bf16.gmra.mxu0 %v877
        %v5599 = vpop.f32.mrf.mxu0
        %v5600 = vadd.f32 %v5511, %v5599
        %v5601 = vpop.f32.mrf.mxu0
        %v5602 = vadd.f32 %v5513, %v5601
        %5603 = vmatmul.bf16.gmra.mxu0 %v885
        %v5604 = vpop.f32.mrf.mxu0
        %v5605 = vadd.f32 %v5516, %v5604
        %v5606 = vpop.f32.mrf.mxu0
        %v5607 = vadd.f32 %v5518, %v5606
        %5608 = vmatmul.bf16.gmra.mxu0 %v893
        %v5609 = vpop.f32.mrf.mxu0
        %v5610 = vadd.f32 %v5521, %v5609
        %v5611 = vpop.f32.mrf.mxu0
        %v5612 = vadd.f32 %v5523, %v5611
        %5613 = vdwg.mxu0
        %5614 = vmatpush.bf16.msra.mxu0 %v2582
        %5615 = vmatpush.bf16.msra.mxu0 %v2577
        %5616 = vmatpush.bf16.msra.mxu0 %v2572
        %5617 = vmatpush.bf16.msra.mxu0 %v2567
        %5618 = vmatpush.bf16.msra.mxu0 %v2562
        %5619 = vmatpush.bf16.msra.mxu0 %v2557
        %5620 = vmatpush.bf16.msra.mxu0 %v2552
        %5621 = vmatpush.bf16.msra.mxu0 %v2547
        %5622 = vmatmul.bf16.gmra.mxu0 %v774
        %v5623 = vpop.f32.mrf.mxu0
        %v5624 = vadd.f32 %v5535, %v5623
        %v5625 = vpop.f32.mrf.mxu0
        %v5626 = vadd.f32 %v5537, %v5625
        %5627 = vmatmul.bf16.gmra.mxu0 %v782
        %v5628 = vpop.f32.mrf.mxu0
        %v5629 = vadd.f32 %v5540, %v5628
        %v5630 = vpop.f32.mrf.mxu0
        %v5631 = vadd.f32 %v5542, %v5630
        %5632 = vmatmul.bf16.gmra.mxu0 %v790
        %v5633 = vpop.f32.mrf.mxu0
        %v5634 = vadd.f32 %v5545, %v5633
        %v5635 = vpop.f32.mrf.mxu0
        %v5636 = vadd.f32 %v5547, %v5635
        %5637 = vmatmul.bf16.gmra.mxu0 %v798
        %v5638 = vpop.f32.mrf.mxu0
        %v5639 = vadd.f32 %v5550, %v5638
        %v5640 = vpop.f32.mrf.mxu0
        %v5641 = vadd.f32 %v5552, %v5640
        %5642 = vmatmul.bf16.gmra.mxu0 %v806
        %v5643 = vpop.f32.mrf.mxu0
        %v5644 = vadd.f32 %v5555, %v5643
        %v5645 = vpop.f32.mrf.mxu0
        %v5646 = vadd.f32 %v5557, %v5645
        %5647 = vmatmul.bf16.gmra.mxu0 %v814
        %v5648 = vpop.f32.mrf.mxu0
        %v5649 = vadd.f32 %v5560, %v5648
        %v5650 = vpop.f32.mrf.mxu0
        %v5651 = vadd.f32 %v5562, %v5650
        %5652 = vmatmul.bf16.gmra.mxu0 %v822
        %v5653 = vpop.f32.mrf.mxu0
        %v5654 = vadd.f32 %v5565, %v5653
        %v5655 = vpop.f32.mrf.mxu0
        %v5656 = vadd.f32 %v5567, %v5655
        %5657 = vmatmul.bf16.gmra.mxu0 %v830
        %v5658 = vpop.f32.mrf.mxu0
        %v5659 = vadd.f32 %v5570, %v5658
        %v5660 = vpop.f32.mrf.mxu0
        %v5661 = vadd.f32 %v5572, %v5660
        %5662 = vmatmul.bf16.gmra.mxu0 %v838
        %v5663 = vpop.f32.mrf.mxu0
        %v5664 = vadd.f32 %v5575, %v5663
        %v5665 = vpop.f32.mrf.mxu0
        %v5666 = vadd.f32 %v5577, %v5665
        %5667 = vmatmul.bf16.gmra.mxu0 %v846
        %v5668 = vpop.f32.mrf.mxu0
        %v5669 = vadd.f32 %v5580, %v5668
        %v5670 = vpop.f32.mrf.mxu0
        %v5671 = vadd.f32 %v5582, %v5670
        %5672 = vmatmul.bf16.gmra.mxu0 %v854
        %v5673 = vpop.f32.mrf.mxu0
        %v5674 = vadd.f32 %v5585, %v5673
        %v5675 = vpop.f32.mrf.mxu0
        %v5676 = vadd.f32 %v5587, %v5675
        %5677 = vmatmul.bf16.gmra.mxu0 %v862
        %v5678 = vpop.f32.mrf.mxu0
        %v5679 = vadd.f32 %v5590, %v5678
        %v5680 = vpop.f32.mrf.mxu0
        %v5681 = vadd.f32 %v5592, %v5680
        %5682 = vmatmul.bf16.gmra.mxu0 %v870
        %v5683 = vpop.f32.mrf.mxu0
        %v5684 = vadd.f32 %v5595, %v5683
        %v5685 = vpop.f32.mrf.mxu0
        %v5686 = vadd.f32 %v5597, %v5685
        %5687 = vmatmul.bf16.gmra.mxu0 %v878
        %v5688 = vpop.f32.mrf.mxu0
        %v5689 = vadd.f32 %v5600, %v5688
        %v5690 = vpop.f32.mrf.mxu0
        %v5691 = vadd.f32 %v5602, %v5690
        %5692 = vmatmul.bf16.gmra.mxu0 %v886
        %v5693 = vpop.f32.mrf.mxu0
        %v5694 = vadd.f32 %v5605, %v5693
        %v5695 = vpop.f32.mrf.mxu0
        %v5696 = vadd.f32 %v5607, %v5695
        %5697 = vmatmul.bf16.gmra.mxu0 %v894
        %v5698 = vpop.f32.mrf.mxu0
        %v5699 = vadd.f32 %v5610, %v5698
        %v5700 = vpop.f32.mrf.mxu0
        %v5701 = vadd.f32 %v5612, %v5700
        %5702 = vdwg.mxu0
        %5703 = vmatpush.bf16.msra.mxu0 %v2622
        %5704 = vmatpush.bf16.msra.mxu0 %v2617
        %5705 = vmatpush.bf16.msra.mxu0 %v2612
        %5706 = vmatpush.bf16.msra.mxu0 %v2607
        %5707 = vmatpush.bf16.msra.mxu0 %v2602
        %5708 = vmatpush.bf16.msra.mxu0 %v2597
        %5709 = vmatpush.bf16.msra.mxu0 %v2592
        %5710 = vmatpush.bf16.msra.mxu0 %v2587
        %5711 = vmatmul.bf16.gmra.mxu0 %v775
        %v5712 = vpop.f32.mrf.mxu0
        %v5713 = vadd.f32 %v5624, %v5712
        %v5714 = vpop.f32.mrf.mxu0
        %v5715 = vadd.f32 %v5626, %v5714
        %5716 = vmatmul.bf16.gmra.mxu0 %v783
        %v5717 = vpop.f32.mrf.mxu0
        %v5718 = vadd.f32 %v5629, %v5717
        %v5719 = vpop.f32.mrf.mxu0
        %v5720 = vadd.f32 %v5631, %v5719
        %5721 = vmatmul.bf16.gmra.mxu0 %v791
        %v5722 = vpop.f32.mrf.mxu0
        %v5723 = vadd.f32 %v5634, %v5722
        %v5724 = vpop.f32.mrf.mxu0
        %v5725 = vadd.f32 %v5636, %v5724
        %5726 = vmatmul.bf16.gmra.mxu0 %v799
        %v5727 = vpop.f32.mrf.mxu0
        %v5728 = vadd.f32 %v5639, %v5727
        %v5729 = vpop.f32.mrf.mxu0
        %v5730 = vadd.f32 %v5641, %v5729
        %5731 = vmatmul.bf16.gmra.mxu0 %v807
        %v5732 = vpop.f32.mrf.mxu0
        %v5733 = vadd.f32 %v5644, %v5732
        %v5734 = vpop.f32.mrf.mxu0
        %v5735 = vadd.f32 %v5646, %v5734
        %5736 = vmatmul.bf16.gmra.mxu0 %v815
        %v5737 = vpop.f32.mrf.mxu0
        %v5738 = vadd.f32 %v5649, %v5737
        %v5739 = vpop.f32.mrf.mxu0
        %v5740 = vadd.f32 %v5651, %v5739
        %5741 = vmatmul.bf16.gmra.mxu0 %v823
        %v5742 = vpop.f32.mrf.mxu0
        %v5743 = vadd.f32 %v5654, %v5742
        %v5744 = vpop.f32.mrf.mxu0
        %v5745 = vadd.f32 %v5656, %v5744
        %5746 = vmatmul.bf16.gmra.mxu0 %v831
        %v5747 = vpop.f32.mrf.mxu0
        %v5748 = vadd.f32 %v5659, %v5747
        %v5749 = vpop.f32.mrf.mxu0
        %v5750 = vadd.f32 %v5661, %v5749
        %5751 = vmatmul.bf16.gmra.mxu0 %v839
        %v5752 = vpop.f32.mrf.mxu0
        %v5753 = vadd.f32 %v5664, %v5752
        %v5754 = vpop.f32.mrf.mxu0
        %v5755 = vadd.f32 %v5666, %v5754
        %5756 = vmatmul.bf16.gmra.mxu0 %v847
        %v5757 = vpop.f32.mrf.mxu0
        %v5758 = vadd.f32 %v5669, %v5757
        %v5759 = vpop.f32.mrf.mxu0
        %v5760 = vadd.f32 %v5671, %v5759
        %5761 = vmatmul.bf16.gmra.mxu0 %v855
        %v5762 = vpop.f32.mrf.mxu0
        %v5763 = vadd.f32 %v5674, %v5762
        %v5764 = vpop.f32.mrf.mxu0
        %v5765 = vadd.f32 %v5676, %v5764
        %5766 = vmatmul.bf16.gmra.mxu0 %v863
        %v5767 = vpop.f32.mrf.mxu0
        %v5768 = vadd.f32 %v5679, %v5767
        %v5769 = vpop.f32.mrf.mxu0
        %v5770 = vadd.f32 %v5681, %v5769
        %5771 = vmatmul.bf16.gmra.mxu0 %v871
        %v5772 = vpop.f32.mrf.mxu0
        %v5773 = vadd.f32 %v5684, %v5772
        %v5774 = vpop.f32.mrf.mxu0
        %v5775 = vadd.f32 %v5686, %v5774
        %5776 = vmatmul.bf16.gmra.mxu0 %v879
        %v5777 = vpop.f32.mrf.mxu0
        %v5778 = vadd.f32 %v5689, %v5777
        %v5779 = vpop.f32.mrf.mxu0
        %v5780 = vadd.f32 %v5691, %v5779
        %5781 = vmatmul.bf16.gmra.mxu0 %v887
        %v5782 = vpop.f32.mrf.mxu0
        %v5783 = vadd.f32 %v5694, %v5782
        %v5784 = vpop.f32.mrf.mxu0
        %v5785 = vadd.f32 %v5696, %v5784
        %5786 = vmatmul.bf16.gmra.mxu0 %v895
        %v5787 = vpop.f32.mrf.mxu0
        %v5788 = vadd.f32 %v5699, %v5787
        %v5789 = vpop.f32.mrf.mxu0
        %v5790 = vadd.f32 %v5701, %v5789
        %5791 = vdwg.mxu0
        %5792 = vmatpush.bf16.msra.mxu0 %v2343
        %5793 = vmatpush.bf16.msra.mxu0 %v2338
        %5794 = vmatpush.bf16.msra.mxu0 %v2333
        %5795 = vmatpush.bf16.msra.mxu0 %v2328
        %5796 = vmatpush.bf16.msra.mxu0 %v2323
        %5797 = vmatpush.bf16.msra.mxu0 %v2318
        %5798 = vmatpush.bf16.msra.mxu0 %v2313
        %5799 = vmatpush.bf16.msra.mxu0 %v2308
        %5800 = vmatmul.bf16.gmra.mxu0 %v768
        %v5801 = vpop.f32.mrf.mxu0
        %v5802 = vadd.f32 0.0, %v5801
        %v5803 = vpop.f32.mrf.mxu0
        %v5804 = vadd.f32 0.0, %v5803
        %5805 = vmatmul.bf16.gmra.mxu0 %v776
        %v5806 = vpop.f32.mrf.mxu0
        %v5807 = vadd.f32 0.0, %v5806
        %v5808 = vpop.f32.mrf.mxu0
        %v5809 = vadd.f32 0.0, %v5808
        %5810 = vmatmul.bf16.gmra.mxu0 %v784
        %v5811 = vpop.f32.mrf.mxu0
        %v5812 = vadd.f32 0.0, %v5811
        %v5813 = vpop.f32.mrf.mxu0
        %v5814 = vadd.f32 0.0, %v5813
        %5815 = vmatmul.bf16.gmra.mxu0 %v792
        %v5816 = vpop.f32.mrf.mxu0
        %v5817 = vadd.f32 0.0, %v5816
        %v5818 = vpop.f32.mrf.mxu0
        %v5819 = vadd.f32 0.0, %v5818
        %5820 = vmatmul.bf16.gmra.mxu0 %v800
        %v5821 = vpop.f32.mrf.mxu0
        %v5822 = vadd.f32 0.0, %v5821
        %v5823 = vpop.f32.mrf.mxu0
        %v5824 = vadd.f32 0.0, %v5823
        %5825 = vmatmul.bf16.gmra.mxu0 %v808
        %v5826 = vpop.f32.mrf.mxu0
        %v5827 = vadd.f32 0.0, %v5826
        %v5828 = vpop.f32.mrf.mxu0
        %v5829 = vadd.f32 0.0, %v5828
        %5830 = vmatmul.bf16.gmra.mxu0 %v816
        %v5831 = vpop.f32.mrf.mxu0
        %v5832 = vadd.f32 0.0, %v5831
        %v5833 = vpop.f32.mrf.mxu0
        %v5834 = vadd.f32 0.0, %v5833
        %5835 = vmatmul.bf16.gmra.mxu0 %v824
        %v5836 = vpop.f32.mrf.mxu0
        %v5837 = vadd.f32 0.0, %v5836
        %v5838 = vpop.f32.mrf.mxu0
        %v5839 = vadd.f32 0.0, %v5838
        %5840 = vmatmul.bf16.gmra.mxu0 %v832
        %v5841 = vpop.f32.mrf.mxu0
        %v5842 = vadd.f32 0.0, %v5841
        %v5843 = vpop.f32.mrf.mxu0
        %v5844 = vadd.f32 0.0, %v5843
        %5845 = vmatmul.bf16.gmra.mxu0 %v840
        %v5846 = vpop.f32.mrf.mxu0
        %v5847 = vadd.f32 0.0, %v5846
        %v5848 = vpop.f32.mrf.mxu0
        %v5849 = vadd.f32 0.0, %v5848
        %5850 = vmatmul.bf16.gmra.mxu0 %v848
        %v5851 = vpop.f32.mrf.mxu0
        %v5852 = vadd.f32 0.0, %v5851
        %v5853 = vpop.f32.mrf.mxu0
        %v5854 = vadd.f32 0.0, %v5853
        %5855 = vmatmul.bf16.gmra.mxu0 %v856
        %v5856 = vpop.f32.mrf.mxu0
        %v5857 = vadd.f32 0.0, %v5856
        %v5858 = vpop.f32.mrf.mxu0
        %v5859 = vadd.f32 0.0, %v5858
        %5860 = vmatmul.bf16.gmra.mxu0 %v864
        %v5861 = vpop.f32.mrf.mxu0
        %v5862 = vadd.f32 0.0, %v5861
        %v5863 = vpop.f32.mrf.mxu0
        %v5864 = vadd.f32 0.0, %v5863
        %5865 = vmatmul.bf16.gmra.mxu0 %v872
        %v5866 = vpop.f32.mrf.mxu0
        %v5867 = vadd.f32 0.0, %v5866
        %v5868 = vpop.f32.mrf.mxu0
        %v5869 = vadd.f32 0.0, %v5868
        %5870 = vmatmul.bf16.gmra.mxu0 %v880
        %v5871 = vpop.f32.mrf.mxu0
        %v5872 = vadd.f32 0.0, %v5871
        %v5873 = vpop.f32.mrf.mxu0
        %v5874 = vadd.f32 0.0, %v5873
        %5875 = vmatmul.bf16.gmra.mxu0 %v888
        %v5876 = vpop.f32.mrf.mxu0
        %v5877 = vadd.f32 0.0, %v5876
        %v5878 = vpop.f32.mrf.mxu0
        %v5879 = vadd.f32 0.0, %v5878
        %5880 = vdwg.mxu0
        %5881 = vmatpush.bf16.msra.mxu0 %v2383
        %5882 = vmatpush.bf16.msra.mxu0 %v2378
        %5883 = vmatpush.bf16.msra.mxu0 %v2373
        %5884 = vmatpush.bf16.msra.mxu0 %v2368
        %5885 = vmatpush.bf16.msra.mxu0 %v2363
        %5886 = vmatpush.bf16.msra.mxu0 %v2358
        %5887 = vmatpush.bf16.msra.mxu0 %v2353
        %5888 = vmatpush.bf16.msra.mxu0 %v2348
        %5889 = vmatmul.bf16.gmra.mxu0 %v769
        %v5890 = vpop.f32.mrf.mxu0
        %v5891 = vadd.f32 %v5802, %v5890
        %v5892 = vpop.f32.mrf.mxu0
        %v5893 = vadd.f32 %v5804, %v5892
        %5894 = vmatmul.bf16.gmra.mxu0 %v777
        %v5895 = vpop.f32.mrf.mxu0
        %v5896 = vadd.f32 %v5807, %v5895
        %v5897 = vpop.f32.mrf.mxu0
        %v5898 = vadd.f32 %v5809, %v5897
        %5899 = vmatmul.bf16.gmra.mxu0 %v785
        %v5900 = vpop.f32.mrf.mxu0
        %v5901 = vadd.f32 %v5812, %v5900
        %v5902 = vpop.f32.mrf.mxu0
        %v5903 = vadd.f32 %v5814, %v5902
        %5904 = vmatmul.bf16.gmra.mxu0 %v793
        %v5905 = vpop.f32.mrf.mxu0
        %v5906 = vadd.f32 %v5817, %v5905
        %v5907 = vpop.f32.mrf.mxu0
        %v5908 = vadd.f32 %v5819, %v5907
        %5909 = vmatmul.bf16.gmra.mxu0 %v801
        %v5910 = vpop.f32.mrf.mxu0
        %v5911 = vadd.f32 %v5822, %v5910
        %v5912 = vpop.f32.mrf.mxu0
        %v5913 = vadd.f32 %v5824, %v5912
        %5914 = vmatmul.bf16.gmra.mxu0 %v809
        %v5915 = vpop.f32.mrf.mxu0
        %v5916 = vadd.f32 %v5827, %v5915
        %v5917 = vpop.f32.mrf.mxu0
        %v5918 = vadd.f32 %v5829, %v5917
        %5919 = vmatmul.bf16.gmra.mxu0 %v817
        %v5920 = vpop.f32.mrf.mxu0
        %v5921 = vadd.f32 %v5832, %v5920
        %v5922 = vpop.f32.mrf.mxu0
        %v5923 = vadd.f32 %v5834, %v5922
        %5924 = vmatmul.bf16.gmra.mxu0 %v825
        %v5925 = vpop.f32.mrf.mxu0
        %v5926 = vadd.f32 %v5837, %v5925
        %v5927 = vpop.f32.mrf.mxu0
        %v5928 = vadd.f32 %v5839, %v5927
        %5929 = vmatmul.bf16.gmra.mxu0 %v833
        %v5930 = vpop.f32.mrf.mxu0
        %v5931 = vadd.f32 %v5842, %v5930
        %v5932 = vpop.f32.mrf.mxu0
        %v5933 = vadd.f32 %v5844, %v5932
        %5934 = vmatmul.bf16.gmra.mxu0 %v841
        %v5935 = vpop.f32.mrf.mxu0
        %v5936 = vadd.f32 %v5847, %v5935
        %v5937 = vpop.f32.mrf.mxu0
        %v5938 = vadd.f32 %v5849, %v5937
        %5939 = vmatmul.bf16.gmra.mxu0 %v849
        %v5940 = vpop.f32.mrf.mxu0
        %v5941 = vadd.f32 %v5852, %v5940
        %v5942 = vpop.f32.mrf.mxu0
        %v5943 = vadd.f32 %v5854, %v5942
        %5944 = vmatmul.bf16.gmra.mxu0 %v857
        %v5945 = vpop.f32.mrf.mxu0
        %v5946 = vadd.f32 %v5857, %v5945
        %v5947 = vpop.f32.mrf.mxu0
        %v5948 = vadd.f32 %v5859, %v5947
        %5949 = vmatmul.bf16.gmra.mxu0 %v865
        %v5950 = vpop.f32.mrf.mxu0
        %v5951 = vadd.f32 %v5862, %v5950
        %v5952 = vpop.f32.mrf.mxu0
        %v5953 = vadd.f32 %v5864, %v5952
        %5954 = vmatmul.bf16.gmra.mxu0 %v873
        %v5955 = vpop.f32.mrf.mxu0
        %v5956 = vadd.f32 %v5867, %v5955
        %v5957 = vpop.f32.mrf.mxu0
        %v5958 = vadd.f32 %v5869, %v5957
        %5959 = vmatmul.bf16.gmra.mxu0 %v881
        %v5960 = vpop.f32.mrf.mxu0
        %v5961 = vadd.f32 %v5872, %v5960
        %v5962 = vpop.f32.mrf.mxu0
        %v5963 = vadd.f32 %v5874, %v5962
        %5964 = vmatmul.bf16.gmra.mxu0 %v889
        %v5965 = vpop.f32.mrf.mxu0
        %v5966 = vadd.f32 %v5877, %v5965
        %v5967 = vpop.f32.mrf.mxu0
        %v5968 = vadd.f32 %v5879, %v5967
        %5969 = vdwg.mxu0
        %5970 = vmatpush.bf16.msra.mxu0 %v2423
        %5971 = vmatpush.bf16.msra.mxu0 %v2418
        %5972 = vmatpush.bf16.msra.mxu0 %v2413
        %5973 = vmatpush.bf16.msra.mxu0 %v2408
        %5974 = vmatpush.bf16.msra.mxu0 %v2403
        %5975 = vmatpush.bf16.msra.mxu0 %v2398
        %5976 = vmatpush.bf16.msra.mxu0 %v2393
        %5977 = vmatpush.bf16.msra.mxu0 %v2388
        %5978 = vmatmul.bf16.gmra.mxu0 %v770
        %v5979 = vpop.f32.mrf.mxu0
        %v5980 = vadd.f32 %v5891, %v5979
        %v5981 = vpop.f32.mrf.mxu0
        %v5982 = vadd.f32 %v5893, %v5981
        %5983 = vmatmul.bf16.gmra.mxu0 %v778
        %v5984 = vpop.f32.mrf.mxu0
        %v5985 = vadd.f32 %v5896, %v5984
        %v5986 = vpop.f32.mrf.mxu0
        %v5987 = vadd.f32 %v5898, %v5986
        %5988 = vmatmul.bf16.gmra.mxu0 %v786
        %v5989 = vpop.f32.mrf.mxu0
        %v5990 = vadd.f32 %v5901, %v5989
        %v5991 = vpop.f32.mrf.mxu0
        %v5992 = vadd.f32 %v5903, %v5991
        %5993 = vmatmul.bf16.gmra.mxu0 %v794
        %v5994 = vpop.f32.mrf.mxu0
        %v5995 = vadd.f32 %v5906, %v5994
        %v5996 = vpop.f32.mrf.mxu0
        %v5997 = vadd.f32 %v5908, %v5996
        %5998 = vmatmul.bf16.gmra.mxu0 %v802
        %v5999 = vpop.f32.mrf.mxu0
        %v6000 = vadd.f32 %v5911, %v5999
        %v6001 = vpop.f32.mrf.mxu0
        %v6002 = vadd.f32 %v5913, %v6001
        %6003 = vmatmul.bf16.gmra.mxu0 %v810
        %v6004 = vpop.f32.mrf.mxu0
        %v6005 = vadd.f32 %v5916, %v6004
        %v6006 = vpop.f32.mrf.mxu0
        %v6007 = vadd.f32 %v5918, %v6006
        %6008 = vmatmul.bf16.gmra.mxu0 %v818
        %v6009 = vpop.f32.mrf.mxu0
        %v6010 = vadd.f32 %v5921, %v6009
        %v6011 = vpop.f32.mrf.mxu0
        %v6012 = vadd.f32 %v5923, %v6011
        %6013 = vmatmul.bf16.gmra.mxu0 %v826
        %v6014 = vpop.f32.mrf.mxu0
        %v6015 = vadd.f32 %v5926, %v6014
        %v6016 = vpop.f32.mrf.mxu0
        %v6017 = vadd.f32 %v5928, %v6016
        %6018 = vmatmul.bf16.gmra.mxu0 %v834
        %v6019 = vpop.f32.mrf.mxu0
        %v6020 = vadd.f32 %v5931, %v6019
        %v6021 = vpop.f32.mrf.mxu0
        %v6022 = vadd.f32 %v5933, %v6021
        %6023 = vmatmul.bf16.gmra.mxu0 %v842
        %v6024 = vpop.f32.mrf.mxu0
        %v6025 = vadd.f32 %v5936, %v6024
        %v6026 = vpop.f32.mrf.mxu0
        %v6027 = vadd.f32 %v5938, %v6026
        %6028 = vmatmul.bf16.gmra.mxu0 %v850
        %v6029 = vpop.f32.mrf.mxu0
        %v6030 = vadd.f32 %v5941, %v6029
        %v6031 = vpop.f32.mrf.mxu0
        %v6032 = vadd.f32 %v5943, %v6031
        %6033 = vmatmul.bf16.gmra.mxu0 %v858
        %v6034 = vpop.f32.mrf.mxu0
        %v6035 = vadd.f32 %v5946, %v6034
        %v6036 = vpop.f32.mrf.mxu0
        %v6037 = vadd.f32 %v5948, %v6036
        %6038 = vmatmul.bf16.gmra.mxu0 %v866
        %v6039 = vpop.f32.mrf.mxu0
        %v6040 = vadd.f32 %v5951, %v6039
        %v6041 = vpop.f32.mrf.mxu0
        %v6042 = vadd.f32 %v5953, %v6041
        %6043 = vmatmul.bf16.gmra.mxu0 %v874
        %v6044 = vpop.f32.mrf.mxu0
        %v6045 = vadd.f32 %v5956, %v6044
        %v6046 = vpop.f32.mrf.mxu0
        %v6047 = vadd.f32 %v5958, %v6046
        %6048 = vmatmul.bf16.gmra.mxu0 %v882
        %v6049 = vpop.f32.mrf.mxu0
        %v6050 = vadd.f32 %v5961, %v6049
        %v6051 = vpop.f32.mrf.mxu0
        %v6052 = vadd.f32 %v5963, %v6051
        %6053 = vmatmul.bf16.gmra.mxu0 %v890
        %v6054 = vpop.f32.mrf.mxu0
        %v6055 = vadd.f32 %v5966, %v6054
        %v6056 = vpop.f32.mrf.mxu0
        %v6057 = vadd.f32 %v5968, %v6056
        %6058 = vdwg.mxu0
        %6059 = vmatpush.bf16.msra.mxu0 %v2463
        %6060 = vmatpush.bf16.msra.mxu0 %v2458
        %6061 = vmatpush.bf16.msra.mxu0 %v2453
        %6062 = vmatpush.bf16.msra.mxu0 %v2448
        %6063 = vmatpush.bf16.msra.mxu0 %v2443
        %6064 = vmatpush.bf16.msra.mxu0 %v2438
        %6065 = vmatpush.bf16.msra.mxu0 %v2433
        %6066 = vmatpush.bf16.msra.mxu0 %v2428
        %6067 = vmatmul.bf16.gmra.mxu0 %v771
        %v6068 = vpop.f32.mrf.mxu0
        %v6069 = vadd.f32 %v5980, %v6068
        %v6070 = vpop.f32.mrf.mxu0
        %v6071 = vadd.f32 %v5982, %v6070
        %6072 = vmatmul.bf16.gmra.mxu0 %v779
        %v6073 = vpop.f32.mrf.mxu0
        %v6074 = vadd.f32 %v5985, %v6073
        %v6075 = vpop.f32.mrf.mxu0
        %v6076 = vadd.f32 %v5987, %v6075
        %6077 = vmatmul.bf16.gmra.mxu0 %v787
        %v6078 = vpop.f32.mrf.mxu0
        %v6079 = vadd.f32 %v5990, %v6078
        %v6080 = vpop.f32.mrf.mxu0
        %v6081 = vadd.f32 %v5992, %v6080
        %6082 = vmatmul.bf16.gmra.mxu0 %v795
        %v6083 = vpop.f32.mrf.mxu0
        %v6084 = vadd.f32 %v5995, %v6083
        %v6085 = vpop.f32.mrf.mxu0
        %v6086 = vadd.f32 %v5997, %v6085
        %6087 = vmatmul.bf16.gmra.mxu0 %v803
        %v6088 = vpop.f32.mrf.mxu0
        %v6089 = vadd.f32 %v6000, %v6088
        %v6090 = vpop.f32.mrf.mxu0
        %v6091 = vadd.f32 %v6002, %v6090
        %6092 = vmatmul.bf16.gmra.mxu0 %v811
        %v6093 = vpop.f32.mrf.mxu0
        %v6094 = vadd.f32 %v6005, %v6093
        %v6095 = vpop.f32.mrf.mxu0
        %v6096 = vadd.f32 %v6007, %v6095
        %6097 = vmatmul.bf16.gmra.mxu0 %v819
        %v6098 = vpop.f32.mrf.mxu0
        %v6099 = vadd.f32 %v6010, %v6098
        %v6100 = vpop.f32.mrf.mxu0
        %v6101 = vadd.f32 %v6012, %v6100
        %6102 = vmatmul.bf16.gmra.mxu0 %v827
        %v6103 = vpop.f32.mrf.mxu0
        %v6104 = vadd.f32 %v6015, %v6103
        %v6105 = vpop.f32.mrf.mxu0
        %v6106 = vadd.f32 %v6017, %v6105
        %6107 = vmatmul.bf16.gmra.mxu0 %v835
        %v6108 = vpop.f32.mrf.mxu0
        %v6109 = vadd.f32 %v6020, %v6108
        %v6110 = vpop.f32.mrf.mxu0
        %v6111 = vadd.f32 %v6022, %v6110
        %6112 = vmatmul.bf16.gmra.mxu0 %v843
        %v6113 = vpop.f32.mrf.mxu0
        %v6114 = vadd.f32 %v6025, %v6113
        %v6115 = vpop.f32.mrf.mxu0
        %v6116 = vadd.f32 %v6027, %v6115
        %6117 = vmatmul.bf16.gmra.mxu0 %v851
        %v6118 = vpop.f32.mrf.mxu0
        %v6119 = vadd.f32 %v6030, %v6118
        %v6120 = vpop.f32.mrf.mxu0
        %v6121 = vadd.f32 %v6032, %v6120
        %6122 = vmatmul.bf16.gmra.mxu0 %v859
        %v6123 = vpop.f32.mrf.mxu0
        %v6124 = vadd.f32 %v6035, %v6123
        %v6125 = vpop.f32.mrf.mxu0
        %v6126 = vadd.f32 %v6037, %v6125
        %6127 = vmatmul.bf16.gmra.mxu0 %v867
        %v6128 = vpop.f32.mrf.mxu0
        %v6129 = vadd.f32 %v6040, %v6128
        %v6130 = vpop.f32.mrf.mxu0
        %v6131 = vadd.f32 %v6042, %v6130
        %6132 = vmatmul.bf16.gmra.mxu0 %v875
        %v6133 = vpop.f32.mrf.mxu0
        %v6134 = vadd.f32 %v6045, %v6133
        %v6135 = vpop.f32.mrf.mxu0
        %v6136 = vadd.f32 %v6047, %v6135
        %6137 = vmatmul.bf16.gmra.mxu0 %v883
        %v6138 = vpop.f32.mrf.mxu0
        %v6139 = vadd.f32 %v6050, %v6138
        %v6140 = vpop.f32.mrf.mxu0
        %v6141 = vadd.f32 %v6052, %v6140
        %6142 = vmatmul.bf16.gmra.mxu0 %v891
        %v6143 = vpop.f32.mrf.mxu0
        %v6144 = vadd.f32 %v6055, %v6143
        %v6145 = vpop.f32.mrf.mxu0
        %v6146 = vadd.f32 %v6057, %v6145
        %6147 = vdwg.mxu0
        %6148 = vmatpush.bf16.msra.mxu0 %v2503
        %6149 = vmatpush.bf16.msra.mxu0 %v2498
        %6150 = vmatpush.bf16.msra.mxu0 %v2493
        %6151 = vmatpush.bf16.msra.mxu0 %v2488
        %6152 = vmatpush.bf16.msra.mxu0 %v2483
        %6153 = vmatpush.bf16.msra.mxu0 %v2478
        %6154 = vmatpush.bf16.msra.mxu0 %v2473
        %6155 = vmatpush.bf16.msra.mxu0 %v2468
        %6156 = vmatmul.bf16.gmra.mxu0 %v772
        %v6157 = vpop.f32.mrf.mxu0
        %v6158 = vadd.f32 %v6069, %v6157
        %v6159 = vpop.f32.mrf.mxu0
        %v6160 = vadd.f32 %v6071, %v6159
        %6161 = vmatmul.bf16.gmra.mxu0 %v780
        %v6162 = vpop.f32.mrf.mxu0
        %v6163 = vadd.f32 %v6074, %v6162
        %v6164 = vpop.f32.mrf.mxu0
        %v6165 = vadd.f32 %v6076, %v6164
        %6166 = vmatmul.bf16.gmra.mxu0 %v788
        %v6167 = vpop.f32.mrf.mxu0
        %v6168 = vadd.f32 %v6079, %v6167
        %v6169 = vpop.f32.mrf.mxu0
        %v6170 = vadd.f32 %v6081, %v6169
        %6171 = vmatmul.bf16.gmra.mxu0 %v796
        %v6172 = vpop.f32.mrf.mxu0
        %v6173 = vadd.f32 %v6084, %v6172
        %v6174 = vpop.f32.mrf.mxu0
        %v6175 = vadd.f32 %v6086, %v6174
        %6176 = vmatmul.bf16.gmra.mxu0 %v804
        %v6177 = vpop.f32.mrf.mxu0
        %v6178 = vadd.f32 %v6089, %v6177
        %v6179 = vpop.f32.mrf.mxu0
        %v6180 = vadd.f32 %v6091, %v6179
        %6181 = vmatmul.bf16.gmra.mxu0 %v812
        %v6182 = vpop.f32.mrf.mxu0
        %v6183 = vadd.f32 %v6094, %v6182
        %v6184 = vpop.f32.mrf.mxu0
        %v6185 = vadd.f32 %v6096, %v6184
        %6186 = vmatmul.bf16.gmra.mxu0 %v820
        %v6187 = vpop.f32.mrf.mxu0
        %v6188 = vadd.f32 %v6099, %v6187
        %v6189 = vpop.f32.mrf.mxu0
        %v6190 = vadd.f32 %v6101, %v6189
        %6191 = vmatmul.bf16.gmra.mxu0 %v828
        %v6192 = vpop.f32.mrf.mxu0
        %v6193 = vadd.f32 %v6104, %v6192
        %v6194 = vpop.f32.mrf.mxu0
        %v6195 = vadd.f32 %v6106, %v6194
        %6196 = vmatmul.bf16.gmra.mxu0 %v836
        %v6197 = vpop.f32.mrf.mxu0
        %v6198 = vadd.f32 %v6109, %v6197
        %v6199 = vpop.f32.mrf.mxu0
        %v6200 = vadd.f32 %v6111, %v6199
        %6201 = vmatmul.bf16.gmra.mxu0 %v844
        %v6202 = vpop.f32.mrf.mxu0
        %v6203 = vadd.f32 %v6114, %v6202
        %v6204 = vpop.f32.mrf.mxu0
        %v6205 = vadd.f32 %v6116, %v6204
        %6206 = vmatmul.bf16.gmra.mxu0 %v852
        %v6207 = vpop.f32.mrf.mxu0
        %v6208 = vadd.f32 %v6119, %v6207
        %v6209 = vpop.f32.mrf.mxu0
        %v6210 = vadd.f32 %v6121, %v6209
        %6211 = vmatmul.bf16.gmra.mxu0 %v860
        %v6212 = vpop.f32.mrf.mxu0
        %v6213 = vadd.f32 %v6124, %v6212
        %v6214 = vpop.f32.mrf.mxu0
        %v6215 = vadd.f32 %v6126, %v6214
        %6216 = vmatmul.bf16.gmra.mxu0 %v868
        %v6217 = vpop.f32.mrf.mxu0
        %v6218 = vadd.f32 %v6129, %v6217
        %v6219 = vpop.f32.mrf.mxu0
        %v6220 = vadd.f32 %v6131, %v6219
        %6221 = vmatmul.bf16.gmra.mxu0 %v876
        %v6222 = vpop.f32.mrf.mxu0
        %v6223 = vadd.f32 %v6134, %v6222
        %v6224 = vpop.f32.mrf.mxu0
        %v6225 = vadd.f32 %v6136, %v6224
        %6226 = vmatmul.bf16.gmra.mxu0 %v884
        %v6227 = vpop.f32.mrf.mxu0
        %v6228 = vadd.f32 %v6139, %v6227
        %v6229 = vpop.f32.mrf.mxu0
        %v6230 = vadd.f32 %v6141, %v6229
        %6231 = vmatmul.bf16.gmra.mxu0 %v892
        %v6232 = vpop.f32.mrf.mxu0
        %v6233 = vadd.f32 %v6144, %v6232
        %v6234 = vpop.f32.mrf.mxu0
        %v6235 = vadd.f32 %v6146, %v6234
        %6236 = vdwg.mxu0
        %6237 = vmatpush.bf16.msra.mxu0 %v2543
        %6238 = vmatpush.bf16.msra.mxu0 %v2538
        %6239 = vmatpush.bf16.msra.mxu0 %v2533
        %6240 = vmatpush.bf16.msra.mxu0 %v2528
        %6241 = vmatpush.bf16.msra.mxu0 %v2523
        %6242 = vmatpush.bf16.msra.mxu0 %v2518
        %6243 = vmatpush.bf16.msra.mxu0 %v2513
        %6244 = vmatpush.bf16.msra.mxu0 %v2508
        %6245 = vmatmul.bf16.gmra.mxu0 %v773
        %v6246 = vpop.f32.mrf.mxu0
        %v6247 = vadd.f32 %v6158, %v6246
        %v6248 = vpop.f32.mrf.mxu0
        %v6249 = vadd.f32 %v6160, %v6248
        %6250 = vmatmul.bf16.gmra.mxu0 %v781
        %v6251 = vpop.f32.mrf.mxu0
        %v6252 = vadd.f32 %v6163, %v6251
        %v6253 = vpop.f32.mrf.mxu0
        %v6254 = vadd.f32 %v6165, %v6253
        %6255 = vmatmul.bf16.gmra.mxu0 %v789
        %v6256 = vpop.f32.mrf.mxu0
        %v6257 = vadd.f32 %v6168, %v6256
        %v6258 = vpop.f32.mrf.mxu0
        %v6259 = vadd.f32 %v6170, %v6258
        %6260 = vmatmul.bf16.gmra.mxu0 %v797
        %v6261 = vpop.f32.mrf.mxu0
        %v6262 = vadd.f32 %v6173, %v6261
        %v6263 = vpop.f32.mrf.mxu0
        %v6264 = vadd.f32 %v6175, %v6263
        %6265 = vmatmul.bf16.gmra.mxu0 %v805
        %v6266 = vpop.f32.mrf.mxu0
        %v6267 = vadd.f32 %v6178, %v6266
        %v6268 = vpop.f32.mrf.mxu0
        %v6269 = vadd.f32 %v6180, %v6268
        %6270 = vmatmul.bf16.gmra.mxu0 %v813
        %v6271 = vpop.f32.mrf.mxu0
        %v6272 = vadd.f32 %v6183, %v6271
        %v6273 = vpop.f32.mrf.mxu0
        %v6274 = vadd.f32 %v6185, %v6273
        %6275 = vmatmul.bf16.gmra.mxu0 %v821
        %v6276 = vpop.f32.mrf.mxu0
        %v6277 = vadd.f32 %v6188, %v6276
        %v6278 = vpop.f32.mrf.mxu0
        %v6279 = vadd.f32 %v6190, %v6278
        %6280 = vmatmul.bf16.gmra.mxu0 %v829
        %v6281 = vpop.f32.mrf.mxu0
        %v6282 = vadd.f32 %v6193, %v6281
        %v6283 = vpop.f32.mrf.mxu0
        %v6284 = vadd.f32 %v6195, %v6283
        %6285 = vmatmul.bf16.gmra.mxu0 %v837
        %v6286 = vpop.f32.mrf.mxu0
        %v6287 = vadd.f32 %v6198, %v6286
        %v6288 = vpop.f32.mrf.mxu0
        %v6289 = vadd.f32 %v6200, %v6288
        %6290 = vmatmul.bf16.gmra.mxu0 %v845
        %v6291 = vpop.f32.mrf.mxu0
        %v6292 = vadd.f32 %v6203, %v6291
        %v6293 = vpop.f32.mrf.mxu0
        %v6294 = vadd.f32 %v6205, %v6293
        %6295 = vmatmul.bf16.gmra.mxu0 %v853
        %v6296 = vpop.f32.mrf.mxu0
        %v6297 = vadd.f32 %v6208, %v6296
        %v6298 = vpop.f32.mrf.mxu0
        %v6299 = vadd.f32 %v6210, %v6298
        %6300 = vmatmul.bf16.gmra.mxu0 %v861
        %v6301 = vpop.f32.mrf.mxu0
        %v6302 = vadd.f32 %v6213, %v6301
        %v6303 = vpop.f32.mrf.mxu0
        %v6304 = vadd.f32 %v6215, %v6303
        %6305 = vmatmul.bf16.gmra.mxu0 %v869
        %v6306 = vpop.f32.mrf.mxu0
        %v6307 = vadd.f32 %v6218, %v6306
        %v6308 = vpop.f32.mrf.mxu0
        %v6309 = vadd.f32 %v6220, %v6308
        %6310 = vmatmul.bf16.gmra.mxu0 %v877
        %v6311 = vpop.f32.mrf.mxu0
        %v6312 = vadd.f32 %v6223, %v6311
        %v6313 = vpop.f32.mrf.mxu0
        %v6314 = vadd.f32 %v6225, %v6313
        %6315 = vmatmul.bf16.gmra.mxu0 %v885
        %v6316 = vpop.f32.mrf.mxu0
        %v6317 = vadd.f32 %v6228, %v6316
        %v6318 = vpop.f32.mrf.mxu0
        %v6319 = vadd.f32 %v6230, %v6318
        %6320 = vmatmul.bf16.gmra.mxu0 %v893
        %v6321 = vpop.f32.mrf.mxu0
        %v6322 = vadd.f32 %v6233, %v6321
        %v6323 = vpop.f32.mrf.mxu0
        %v6324 = vadd.f32 %v6235, %v6323
        %6325 = vdwg.mxu0
        %6326 = vmatpush.bf16.msra.mxu0 %v2583
        %6327 = vmatpush.bf16.msra.mxu0 %v2578
        %6328 = vmatpush.bf16.msra.mxu0 %v2573
        %6329 = vmatpush.bf16.msra.mxu0 %v2568
        %6330 = vmatpush.bf16.msra.mxu0 %v2563
        %6331 = vmatpush.bf16.msra.mxu0 %v2558
        %6332 = vmatpush.bf16.msra.mxu0 %v2553
        %6333 = vmatpush.bf16.msra.mxu0 %v2548
        %6334 = vmatmul.bf16.gmra.mxu0 %v774
        %v6335 = vpop.f32.mrf.mxu0
        %v6336 = vadd.f32 %v6247, %v6335
        %v6337 = vpop.f32.mrf.mxu0
        %v6338 = vadd.f32 %v6249, %v6337
        %6339 = vmatmul.bf16.gmra.mxu0 %v782
        %v6340 = vpop.f32.mrf.mxu0
        %v6341 = vadd.f32 %v6252, %v6340
        %v6342 = vpop.f32.mrf.mxu0
        %v6343 = vadd.f32 %v6254, %v6342
        %6344 = vmatmul.bf16.gmra.mxu0 %v790
        %v6345 = vpop.f32.mrf.mxu0
        %v6346 = vadd.f32 %v6257, %v6345
        %v6347 = vpop.f32.mrf.mxu0
        %v6348 = vadd.f32 %v6259, %v6347
        %6349 = vmatmul.bf16.gmra.mxu0 %v798
        %v6350 = vpop.f32.mrf.mxu0
        %v6351 = vadd.f32 %v6262, %v6350
        %v6352 = vpop.f32.mrf.mxu0
        %v6353 = vadd.f32 %v6264, %v6352
        %6354 = vmatmul.bf16.gmra.mxu0 %v806
        %v6355 = vpop.f32.mrf.mxu0
        %v6356 = vadd.f32 %v6267, %v6355
        %v6357 = vpop.f32.mrf.mxu0
        %v6358 = vadd.f32 %v6269, %v6357
        %6359 = vmatmul.bf16.gmra.mxu0 %v814
        %v6360 = vpop.f32.mrf.mxu0
        %v6361 = vadd.f32 %v6272, %v6360
        %v6362 = vpop.f32.mrf.mxu0
        %v6363 = vadd.f32 %v6274, %v6362
        %6364 = vmatmul.bf16.gmra.mxu0 %v822
        %v6365 = vpop.f32.mrf.mxu0
        %v6366 = vadd.f32 %v6277, %v6365
        %v6367 = vpop.f32.mrf.mxu0
        %v6368 = vadd.f32 %v6279, %v6367
        %6369 = vmatmul.bf16.gmra.mxu0 %v830
        %v6370 = vpop.f32.mrf.mxu0
        %v6371 = vadd.f32 %v6282, %v6370
        %v6372 = vpop.f32.mrf.mxu0
        %v6373 = vadd.f32 %v6284, %v6372
        %6374 = vmatmul.bf16.gmra.mxu0 %v838
        %v6375 = vpop.f32.mrf.mxu0
        %v6376 = vadd.f32 %v6287, %v6375
        %v6377 = vpop.f32.mrf.mxu0
        %v6378 = vadd.f32 %v6289, %v6377
        %6379 = vmatmul.bf16.gmra.mxu0 %v846
        %v6380 = vpop.f32.mrf.mxu0
        %v6381 = vadd.f32 %v6292, %v6380
        %v6382 = vpop.f32.mrf.mxu0
        %v6383 = vadd.f32 %v6294, %v6382
        %6384 = vmatmul.bf16.gmra.mxu0 %v854
        %v6385 = vpop.f32.mrf.mxu0
        %v6386 = vadd.f32 %v6297, %v6385
        %v6387 = vpop.f32.mrf.mxu0
        %v6388 = vadd.f32 %v6299, %v6387
        %6389 = vmatmul.bf16.gmra.mxu0 %v862
        %v6390 = vpop.f32.mrf.mxu0
        %v6391 = vadd.f32 %v6302, %v6390
        %v6392 = vpop.f32.mrf.mxu0
        %v6393 = vadd.f32 %v6304, %v6392
        %6394 = vmatmul.bf16.gmra.mxu0 %v870
        %v6395 = vpop.f32.mrf.mxu0
        %v6396 = vadd.f32 %v6307, %v6395
        %v6397 = vpop.f32.mrf.mxu0
        %v6398 = vadd.f32 %v6309, %v6397
        %6399 = vmatmul.bf16.gmra.mxu0 %v878
        %v6400 = vpop.f32.mrf.mxu0
        %v6401 = vadd.f32 %v6312, %v6400
        %v6402 = vpop.f32.mrf.mxu0
        %v6403 = vadd.f32 %v6314, %v6402
        %6404 = vmatmul.bf16.gmra.mxu0 %v886
        %v6405 = vpop.f32.mrf.mxu0
        %v6406 = vadd.f32 %v6317, %v6405
        %v6407 = vpop.f32.mrf.mxu0
        %v6408 = vadd.f32 %v6319, %v6407
        %6409 = vmatmul.bf16.gmra.mxu0 %v894
        %v6410 = vpop.f32.mrf.mxu0
        %v6411 = vadd.f32 %v6322, %v6410
        %v6412 = vpop.f32.mrf.mxu0
        %v6413 = vadd.f32 %v6324, %v6412
        %6414 = vdwg.mxu0
        %6415 = vmatpush.bf16.msra.mxu0 %v2623
        %6416 = vmatpush.bf16.msra.mxu0 %v2618
        %6417 = vmatpush.bf16.msra.mxu0 %v2613
        %6418 = vmatpush.bf16.msra.mxu0 %v2608
        %6419 = vmatpush.bf16.msra.mxu0 %v2603
        %6420 = vmatpush.bf16.msra.mxu0 %v2598
        %6421 = vmatpush.bf16.msra.mxu0 %v2593
        %6422 = vmatpush.bf16.msra.mxu0 %v2588
        %6423 = vmatmul.bf16.gmra.mxu0 %v775
        %v6424 = vpop.f32.mrf.mxu0
        %v6425 = vadd.f32 %v6336, %v6424
        %v6426 = vpop.f32.mrf.mxu0
        %v6427 = vadd.f32 %v6338, %v6426
        %6428 = vmatmul.bf16.gmra.mxu0 %v783
        %v6429 = vpop.f32.mrf.mxu0
        %v6430 = vadd.f32 %v6341, %v6429
        %v6431 = vpop.f32.mrf.mxu0
        %v6432 = vadd.f32 %v6343, %v6431
        %6433 = vmatmul.bf16.gmra.mxu0 %v791
        %v6434 = vpop.f32.mrf.mxu0
        %v6435 = vadd.f32 %v6346, %v6434
        %v6436 = vpop.f32.mrf.mxu0
        %v6437 = vadd.f32 %v6348, %v6436
        %6438 = vmatmul.bf16.gmra.mxu0 %v799
        %v6439 = vpop.f32.mrf.mxu0
        %v6440 = vadd.f32 %v6351, %v6439
        %v6441 = vpop.f32.mrf.mxu0
        %v6442 = vadd.f32 %v6353, %v6441
        %6443 = vmatmul.bf16.gmra.mxu0 %v807
        %v6444 = vpop.f32.mrf.mxu0
        %v6445 = vadd.f32 %v6356, %v6444
        %v6446 = vpop.f32.mrf.mxu0
        %v6447 = vadd.f32 %v6358, %v6446
        %6448 = vmatmul.bf16.gmra.mxu0 %v815
        %v6449 = vpop.f32.mrf.mxu0
        %v6450 = vadd.f32 %v6361, %v6449
        %v6451 = vpop.f32.mrf.mxu0
        %v6452 = vadd.f32 %v6363, %v6451
        %6453 = vmatmul.bf16.gmra.mxu0 %v823
        %v6454 = vpop.f32.mrf.mxu0
        %v6455 = vadd.f32 %v6366, %v6454
        %v6456 = vpop.f32.mrf.mxu0
        %v6457 = vadd.f32 %v6368, %v6456
        %6458 = vmatmul.bf16.gmra.mxu0 %v831
        %v6459 = vpop.f32.mrf.mxu0
        %v6460 = vadd.f32 %v6371, %v6459
        %v6461 = vpop.f32.mrf.mxu0
        %v6462 = vadd.f32 %v6373, %v6461
        %6463 = vmatmul.bf16.gmra.mxu0 %v839
        %v6464 = vpop.f32.mrf.mxu0
        %v6465 = vadd.f32 %v6376, %v6464
        %v6466 = vpop.f32.mrf.mxu0
        %v6467 = vadd.f32 %v6378, %v6466
        %6468 = vmatmul.bf16.gmra.mxu0 %v847
        %v6469 = vpop.f32.mrf.mxu0
        %v6470 = vadd.f32 %v6381, %v6469
        %v6471 = vpop.f32.mrf.mxu0
        %v6472 = vadd.f32 %v6383, %v6471
        %6473 = vmatmul.bf16.gmra.mxu0 %v855
        %v6474 = vpop.f32.mrf.mxu0
        %v6475 = vadd.f32 %v6386, %v6474
        %v6476 = vpop.f32.mrf.mxu0
        %v6477 = vadd.f32 %v6388, %v6476
        %6478 = vmatmul.bf16.gmra.mxu0 %v863
        %v6479 = vpop.f32.mrf.mxu0
        %v6480 = vadd.f32 %v6391, %v6479
        %v6481 = vpop.f32.mrf.mxu0
        %v6482 = vadd.f32 %v6393, %v6481
        %6483 = vmatmul.bf16.gmra.mxu0 %v871
        %v6484 = vpop.f32.mrf.mxu0
        %v6485 = vadd.f32 %v6396, %v6484
        %v6486 = vpop.f32.mrf.mxu0
        %v6487 = vadd.f32 %v6398, %v6486
        %6488 = vmatmul.bf16.gmra.mxu0 %v879
        %v6489 = vpop.f32.mrf.mxu0
        %v6490 = vadd.f32 %v6401, %v6489
        %v6491 = vpop.f32.mrf.mxu0
        %v6492 = vadd.f32 %v6403, %v6491
        %6493 = vmatmul.bf16.gmra.mxu0 %v887
        %v6494 = vpop.f32.mrf.mxu0
        %v6495 = vadd.f32 %v6406, %v6494
        %v6496 = vpop.f32.mrf.mxu0
        %v6497 = vadd.f32 %v6408, %v6496
        %6498 = vmatmul.bf16.gmra.mxu0 %v895
        %v6499 = vpop.f32.mrf.mxu0
        %v6500 = vadd.f32 %v6411, %v6499
        %v6501 = vpop.f32.mrf.mxu0
        %v6502 = vadd.f32 %v6413, %v6501
        %6503 = vdwg.mxu0
        %v6504 = vpack.c.bf16 %v4289, %v3577
        %v6505 = vpack.c.bf16 %v5713, %v5001
        %v6506 = vpack.c.bf16 %v6425, %v6425
        %v6507 = vpack.c.bf16 %v4291, %v3579
        %v6508 = vpack.c.bf16 %v5715, %v5003
        %v6509 = vpack.c.bf16 %v6427, %v6427
        %v6510 = vpack.c.bf16 %v4294, %v3582
        %v6511 = vpack.c.bf16 %v5718, %v5006
        %v6512 = vpack.c.bf16 %v6430, %v6430
        %v6513 = vpack.c.bf16 %v4296, %v3584
        %v6514 = vpack.c.bf16 %v5720, %v5008
        %v6515 = vpack.c.bf16 %v6432, %v6432
        %v6516 = vpack.c.bf16 %v4299, %v3587
        %v6517 = vpack.c.bf16 %v5723, %v5011
        %v6518 = vpack.c.bf16 %v6435, %v6435
        %v6519 = vpack.c.bf16 %v4301, %v3589
        %v6520 = vpack.c.bf16 %v5725, %v5013
        %v6521 = vpack.c.bf16 %v6437, %v6437
        %v6522 = vpack.c.bf16 %v4304, %v3592
        %v6523 = vpack.c.bf16 %v5728, %v5016
        %v6524 = vpack.c.bf16 %v6440, %v6440
        %v6525 = vpack.c.bf16 %v4306, %v3594
        %v6526 = vpack.c.bf16 %v5730, %v5018
        %v6527 = vpack.c.bf16 %v6442, %v6442
        %v6528 = vpack.c.bf16 %v4309, %v3597
        %v6529 = vpack.c.bf16 %v5733, %v5021
        %v6530 = vpack.c.bf16 %v6445, %v6445
        %v6531 = vpack.c.bf16 %v4311, %v3599
        %v6532 = vpack.c.bf16 %v5735, %v5023
        %v6533 = vpack.c.bf16 %v6447, %v6447
        %v6534 = vpack.c.bf16 %v4314, %v3602
        %v6535 = vpack.c.bf16 %v5738, %v5026
        %v6536 = vpack.c.bf16 %v6450, %v6450
        %v6537 = vpack.c.bf16 %v4316, %v3604
        %v6538 = vpack.c.bf16 %v5740, %v5028
        %v6539 = vpack.c.bf16 %v6452, %v6452
        %v6540 = vpack.c.bf16 %v4319, %v3607
        %v6541 = vpack.c.bf16 %v5743, %v5031
        %v6542 = vpack.c.bf16 %v6455, %v6455
        %v6543 = vpack.c.bf16 %v4321, %v3609
        %v6544 = vpack.c.bf16 %v5745, %v5033
        %v6545 = vpack.c.bf16 %v6457, %v6457
        %v6546 = vpack.c.bf16 %v4324, %v3612
        %v6547 = vpack.c.bf16 %v5748, %v5036
        %v6548 = vpack.c.bf16 %v6460, %v6460
        %v6549 = vpack.c.bf16 %v4326, %v3614
        %v6550 = vpack.c.bf16 %v5750, %v5038
        %v6551 = vpack.c.bf16 %v6462, %v6462
        %v6552 = vpack.c.bf16 %v4329, %v3617
        %v6553 = vpack.c.bf16 %v5753, %v5041
        %v6554 = vpack.c.bf16 %v6465, %v6465
        %v6555 = vpack.c.bf16 %v4331, %v3619
        %v6556 = vpack.c.bf16 %v5755, %v5043
        %v6557 = vpack.c.bf16 %v6467, %v6467
        %v6558 = vpack.c.bf16 %v4334, %v3622
        %v6559 = vpack.c.bf16 %v5758, %v5046
        %v6560 = vpack.c.bf16 %v6470, %v6470
        %v6561 = vpack.c.bf16 %v4336, %v3624
        %v6562 = vpack.c.bf16 %v5760, %v5048
        %v6563 = vpack.c.bf16 %v6472, %v6472
        %v6564 = vpack.c.bf16 %v4339, %v3627
        %v6565 = vpack.c.bf16 %v5763, %v5051
        %v6566 = vpack.c.bf16 %v6475, %v6475
        %v6567 = vpack.c.bf16 %v4341, %v3629
        %v6568 = vpack.c.bf16 %v5765, %v5053
        %v6569 = vpack.c.bf16 %v6477, %v6477
        %v6570 = vpack.c.bf16 %v4344, %v3632
        %v6571 = vpack.c.bf16 %v5768, %v5056
        %v6572 = vpack.c.bf16 %v6480, %v6480
        %v6573 = vpack.c.bf16 %v4346, %v3634
        %v6574 = vpack.c.bf16 %v5770, %v5058
        %v6575 = vpack.c.bf16 %v6482, %v6482
        %v6576 = vpack.c.bf16 %v4349, %v3637
        %v6577 = vpack.c.bf16 %v5773, %v5061
        %v6578 = vpack.c.bf16 %v6485, %v6485
        %v6579 = vpack.c.bf16 %v4351, %v3639
        %v6580 = vpack.c.bf16 %v5775, %v5063
        %v6581 = vpack.c.bf16 %v6487, %v6487
        %v6582 = vpack.c.bf16 %v4354, %v3642
        %v6583 = vpack.c.bf16 %v5778, %v5066
        %v6584 = vpack.c.bf16 %v6490, %v6490
        %v6585 = vpack.c.bf16 %v4356, %v3644
        %v6586 = vpack.c.bf16 %v5780, %v5068
        %v6587 = vpack.c.bf16 %v6492, %v6492
        %v6588 = vpack.c.bf16 %v4359, %v3647
        %v6589 = vpack.c.bf16 %v5783, %v5071
        %v6590 = vpack.c.bf16 %v6495, %v6495
        %v6591 = vpack.c.bf16 %v4361, %v3649
        %v6592 = vpack.c.bf16 %v5785, %v5073
        %v6593 = vpack.c.bf16 %v6497, %v6497
        %v6594 = vpack.c.bf16 %v4364, %v3652
        %v6595 = vpack.c.bf16 %v5788, %v5076
        %v6596 = vpack.c.bf16 %v6500, %v6500
        %v6597 = vpack.c.bf16 %v4366, %v3654
        %v6598 = vpack.c.bf16 %v5790, %v5078
        %v6599 = vpack.c.bf16 %v6502, %v6502
        %6600 = vst [vmem:[%s230] sm:$0xff] %v6504
        %6601 = vst [vmem:[%s230 + $0x8] sm:$0xff] %v6505
        %6602 = vst [vmem:[%s230 + $0x10] sm:$0xf] %v6506
        %6603 = vst [vmem:[%s230 + $0x14] sm:$0xff] %v6507
        %6604 = vst [vmem:[%s230 + $0x1c] sm:$0xff] %v6508
        %6605 = vst [vmem:[%s230 + $0x24] sm:$0xf] %v6509
        %6606 = vst [vmem:[%s230 + $0x28] sm:$0xff] %v6510
        %6607 = vst [vmem:[%s230 + $0x30] sm:$0xff] %v6511
        %6608 = vst [vmem:[%s230 + $0x38] sm:$0xf] %v6512
        %6609 = vst [vmem:[%s230 + $0x3c] sm:$0xff] %v6513
        %6610 = vst [vmem:[%s230 + $0x44] sm:$0xff] %v6514
        %6611 = vst [vmem:[%s230 + $0x4c] sm:$0xf] %v6515
        %6612 = vst [vmem:[%s230 + $0x50] sm:$0xff] %v6516
        %6613 = vst [vmem:[%s230 + $0x58] sm:$0xff] %v6517
        %6614 = vst [vmem:[%s230 + $0x60] sm:$0xf] %v6518
        %6615 = vst [vmem:[%s230 + $0x64] sm:$0xff] %v6519
        %6616 = vst [vmem:[%s230 + $0x6c] sm:$0xff] %v6520
        %6617 = vst [vmem:[%s230 + $0x74] sm:$0xf] %v6521
        %6618 = vst [vmem:[%s230 + $0x78] sm:$0xff] %v6522
        %6619 = vst [vmem:[%s230 + $0x80] sm:$0xff] %v6523
        %6620 = vst [vmem:[%s230 + $0x88] sm:$0xf] %v6524
        %6621 = vst [vmem:[%s230 + $0x8c] sm:$0xff] %v6525
        %6622 = vst [vmem:[%s230 + $0x94] sm:$0xff] %v6526
        %6623 = vst [vmem:[%s230 + $0x9c] sm:$0xf] %v6527
        %6624 = vst [vmem:[%s230 + $0xa0] sm:$0xff] %v6528
        %6625 = vst [vmem:[%s230 + $0xa8] sm:$0xff] %v6529
        %6626 = vst [vmem:[%s230 + $0xb0] sm:$0xf] %v6530
        %6627 = vst [vmem:[%s230 + $0xb4] sm:$0xff] %v6531
        %6628 = vst [vmem:[%s230 + $0xbc] sm:$0xff] %v6532
        %6629 = vst [vmem:[%s230 + $0xc4] sm:$0xf] %v6533
        %6630 = vst [vmem:[%s230 + $0xc8] sm:$0xff] %v6534
        %6631 = vst [vmem:[%s230 + $0xd0] sm:$0xff] %v6535
        %6632 = vst [vmem:[%s230 + $0xd8] sm:$0xf] %v6536
        %6633 = vst [vmem:[%s230 + $0xdc] sm:$0xff] %v6537
        %6634 = vst [vmem:[%s230 + $0xe4] sm:$0xff] %v6538
        %6635 = vst [vmem:[%s230 + $0xec] sm:$0xf] %v6539
        %6636 = vst [vmem:[%s230 + $0xf0] sm:$0xff] %v6540
        %6637 = vst [vmem:[%s230 + $0xf8] sm:$0xff] %v6541
        %6638 = vst [vmem:[%s230 + $0x100] sm:$0xf] %v6542
        %6639 = vst [vmem:[%s230 + $0x104] sm:$0xff] %v6543
        %6640 = vst [vmem:[%s230 + $0x10c] sm:$0xff] %v6544
        %6641 = vst [vmem:[%s230 + $0x114] sm:$0xf] %v6545
        %6642 = vst [vmem:[%s230 + $0x118] sm:$0xff] %v6546
        %6643 = vst [vmem:[%s230 + $0x120] sm:$0xff] %v6547
        %6644 = vst [vmem:[%s230 + $0x128] sm:$0xf] %v6548
        %6645 = vst [vmem:[%s230 + $0x12c] sm:$0xff] %v6549
        %6646 = vst [vmem:[%s230 + $0x134] sm:$0xff] %v6550
        %6647 = vst [vmem:[%s230 + $0x13c] sm:$0xf] %v6551
        %6648 = vst [vmem:[%s230 + $0x140] sm:$0xff] %v6552
        %6649 = vst [vmem:[%s230 + $0x148] sm:$0xff] %v6553
        %6650 = vst [vmem:[%s230 + $0x150] sm:$0xf] %v6554
        %6651 = vst [vmem:[%s230 + $0x154] sm:$0xff] %v6555
        %6652 = vst [vmem:[%s230 + $0x15c] sm:$0xff] %v6556
        %6653 = vst [vmem:[%s230 + $0x164] sm:$0xf] %v6557
        %6654 = vst [vmem:[%s230 + $0x168] sm:$0xff] %v6558
        %6655 = vst [vmem:[%s230 + $0x170] sm:$0xff] %v6559
        %6656 = vst [vmem:[%s230 + $0x178] sm:$0xf] %v6560
        %6657 = vst [vmem:[%s230 + $0x17c] sm:$0xff] %v6561
        %6658 = vst [vmem:[%s230 + $0x184] sm:$0xff] %v6562
        %6659 = vst [vmem:[%s230 + $0x18c] sm:$0xf] %v6563
        %6660 = vst [vmem:[%s230 + $0x190] sm:$0xff] %v6564
        %6661 = vst [vmem:[%s230 + $0x198] sm:$0xff] %v6565
        %6662 = vst [vmem:[%s230 + $0x1a0] sm:$0xf] %v6566
        %6663 = vst [vmem:[%s230 + $0x1a4] sm:$0xff] %v6567
        %6664 = vst [vmem:[%s230 + $0x1ac] sm:$0xff] %v6568
        %6665 = vst [vmem:[%s230 + $0x1b4] sm:$0xf] %v6569
        %6666 = vst [vmem:[%s230 + $0x1b8] sm:$0xff] %v6570
        %6667 = vst [vmem:[%s230 + $0x1c0] sm:$0xff] %v6571
        %6668 = vst [vmem:[%s230 + $0x1c8] sm:$0xf] %v6572
        %6669 = vst [vmem:[%s230 + $0x1cc] sm:$0xff] %v6573
        %6670 = vst [vmem:[%s230 + $0x1d4] sm:$0xff] %v6574
        %6671 = vst [vmem:[%s230 + $0x1dc] sm:$0xf] %v6575
        %6672 = vst [vmem:[%s230 + $0x1e0] sm:$0xff] %v6576
        %6673 = vst [vmem:[%s230 + $0x1e8] sm:$0xff] %v6577
        %6674 = vst [vmem:[%s230 + $0x1f0] sm:$0xf] %v6578
        %6675 = vst [vmem:[%s230 + $0x1f4] sm:$0xff] %v6579
        %6676 = vst [vmem:[%s230 + $0x1fc] sm:$0xff] %v6580
        %6677 = vst [vmem:[%s230 + $0x204] sm:$0xf] %v6581
        %6678 = vst [vmem:[%s230 + $0x208] sm:$0xff] %v6582
        %6679 = vst [vmem:[%s230 + $0x210] sm:$0xff] %v6583
        %6680 = vst [vmem:[%s230 + $0x218] sm:$0xf] %v6584
        %6681 = vst [vmem:[%s230 + $0x21c] sm:$0xff] %v6585
        %6682 = vst [vmem:[%s230 + $0x224] sm:$0xff] %v6586
        %6683 = vst [vmem:[%s230 + $0x22c] sm:$0xf] %v6587
        %6684 = vst [vmem:[%s230 + $0x230] sm:$0xff] %v6588
        %6685 = vst [vmem:[%s230 + $0x238] sm:$0xff] %v6589
        %6686 = vst [vmem:[%s230 + $0x240] sm:$0xf] %v6590
        %6687 = vst [vmem:[%s230 + $0x244] sm:$0xff] %v6591
        %6688 = vst [vmem:[%s230 + $0x24c] sm:$0xff] %v6592
        %6689 = vst [vmem:[%s230 + $0x254] sm:$0xf] %v6593
        %6690 = vst [vmem:[%s230 + $0x258] sm:$0xff] %v6594
        %6691 = vst [vmem:[%s230 + $0x260] sm:$0xff] %v6595
        %6692 = vst [vmem:[%s230 + $0x268] sm:$0xf] %v6596
        %6693 = vst [vmem:[%s230 + $0x26c] sm:$0xff] %v6597
        %6694 = vst [vmem:[%s230 + $0x274] sm:$0xff] %v6598
        %6695 = vst [vmem:[%s230 + $0x27c] sm:$0xf] %v6599
        %s6696 = sand.u32 %s113, 1
        %s6697 = sand.u32 %s113, 1
        %s6698 = smul.addr %s6697, 640
        %s6699 = scalar_lea.vmem [#allocation6], %s6698
        // Predicated region
        $region41: #{forward_pallas.2} parent=31 // pred_check
          %p6700 = pneg %p123
        $region42: #{forward_pallas.2} parent=31 // pred_check_branch
          %6702 = sbr.rel (%p6700) target = $region44
        $region43: #{forward_pallas.2} parent=31 // pred_region
          %s6703 = smul.u32 32, %s23
          %s6704 = smul.u32 5, %s22
          %s6705 = smul.addr %s6703, 25
          %s6706 = sadd.s32 %s6704, %s6705
          %s6707 = smul.addr %s6706, 4
          %s6708 = scalar_lea.vmem %s3, %s6707
          // Predicated region
          $region45: #{forward_pallas.2} parent=43 // pred_check
            _
          $region46: #{forward_pallas.2} parent=43 // pred_check_branch
            %6710 = sbr.rel (0) target = $region48
          $region47: #{forward_pallas.2} parent=43 // pred_region
            // Predicated region
            $region49: #{forward_pallas.2} parent=47 // pred_check
              _
            $region50: #{forward_pallas.2} parent=47 // pred_check_branch
              %6712 = sbr.rel (0) target = $region52
            $region51: #{forward_pallas.2} parent=47 // pred_region
              %s6713 = scalar_lea.vmem %s6699, 16 [#allocation6]
              %s6714 = scalar_lea.vmem %s6708, 16
              loop: start=0, step=1, limit=1
              $region53: #{forward_pallas.2} parent=51 // loop_pre_header
                _
              $region54: #{forward_pallas.2} parent=51 // loop_header
                %s6716 = sphi 0, %s6720
                %p6717 = scmp.ge.s32.totalorder %s6716, 1
                %s6721 = sphi %s6699, %s6699
                %s6722 = sphi %s6708, %s6708
              $region55: #{forward_pallas.2} parent=51 // loop_header_branch
                %6719 = sbr.rel (%p6717) target = $region59
              $region56: #{forward_pallas.2} parent=51 // loop_body
                %v6723 = vld [vmem:[%s6721] sm:$0xff]
                %6724 = vst [vmem:[%s6722] sm:$0xff] %v6723
                %v6725 = vld [vmem:[%s6721 + $0x8] sm:$0xff]
                %6726 = vst [vmem:[%s6722 + $0x8] sm:$0xff] %v6725
                %v6727 = vld [vmem:[%s6721 + $0x14] sm:$0xff]
                %6728 = vst [vmem:[%s6722 + $0x64] sm:$0xff] %v6727
                %v6729 = vld [vmem:[%s6721 + $0x1c] sm:$0xff]
                %6730 = vst [vmem:[%s6722 + $0x6c] sm:$0xff] %v6729
                %v6731 = vld [vmem:[%s6721 + $0x28] sm:$0xff]
                %6732 = vst [vmem:[%s6722 + $0xc8] sm:$0xff] %v6731
                %v6733 = vld [vmem:[%s6721 + $0x30] sm:$0xff]
                %6734 = vst [vmem:[%s6722 + $0xd0] sm:$0xff] %v6733
                %v6735 = vld [vmem:[%s6721 + $0x3c] sm:$0xff]
                %6736 = vst [vmem:[%s6722 + $0x12c] sm:$0xff] %v6735
                %v6737 = vld [vmem:[%s6721 + $0x44] sm:$0xff]
                %6738 = vst [vmem:[%s6722 + $0x134] sm:$0xff] %v6737
                %v6739 = vld [vmem:[%s6721 + $0x50] sm:$0xff]
                %6740 = vst [vmem:[%s6722 + $0x190] sm:$0xff] %v6739
                %v6741 = vld [vmem:[%s6721 + $0x58] sm:$0xff]
                %6742 = vst [vmem:[%s6722 + $0x198] sm:$0xff] %v6741
                %v6743 = vld [vmem:[%s6721 + $0x64] sm:$0xff]
                %6744 = vst [vmem:[%s6722 + $0x1f4] sm:$0xff] %v6743
                %v6745 = vld [vmem:[%s6721 + $0x6c] sm:$0xff]
                %6746 = vst [vmem:[%s6722 + $0x1fc] sm:$0xff] %v6745
                %v6747 = vld [vmem:[%s6721 + $0x78] sm:$0xff]
                %6748 = vst [vmem:[%s6722 + $0x258] sm:$0xff] %v6747
                %v6749 = vld [vmem:[%s6721 + $0x80] sm:$0xff]
                %6750 = vst [vmem:[%s6722 + $0x260] sm:$0xff] %v6749
                %v6751 = vld [vmem:[%s6721 + $0x8c] sm:$0xff]
                %6752 = vst [vmem:[%s6722 + $0x2bc] sm:$0xff] %v6751
                %v6753 = vld [vmem:[%s6721 + $0x94] sm:$0xff]
                %6754 = vst [vmem:[%s6722 + $0x2c4] sm:$0xff] %v6753
                %v6755 = vld [vmem:[%s6721 + $0xa0] sm:$0xff]
                %6756 = vst [vmem:[%s6722 + $0x320] sm:$0xff] %v6755
                %v6757 = vld [vmem:[%s6721 + $0xa8] sm:$0xff]
                %6758 = vst [vmem:[%s6722 + $0x328] sm:$0xff] %v6757
                %v6759 = vld [vmem:[%s6721 + $0xb4] sm:$0xff]
                %6760 = vst [vmem:[%s6722 + $0x384] sm:$0xff] %v6759
                %v6761 = vld [vmem:[%s6721 + $0xbc] sm:$0xff]
                %6762 = vst [vmem:[%s6722 + $0x38c] sm:$0xff] %v6761
                %v6763 = vld [vmem:[%s6721 + $0xc8] sm:$0xff]
                %6764 = vst [vmem:[%s6722 + $0x3e8] sm:$0xff] %v6763
                %v6765 = vld [vmem:[%s6721 + $0xd0] sm:$0xff]
                %6766 = vst [vmem:[%s6722 + $0x3f0] sm:$0xff] %v6765
                %v6767 = vld [vmem:[%s6721 + $0xdc] sm:$0xff]
                %6768 = vst [vmem:[%s6722 + $0x44c] sm:$0xff] %v6767
                %v6769 = vld [vmem:[%s6721 + $0xe4] sm:$0xff]
                %6770 = vst [vmem:[%s6722 + $0x454] sm:$0xff] %v6769
                %v6771 = vld [vmem:[%s6721 + $0xf0] sm:$0xff]
                %6772 = vst [vmem:[%s6722 + $0x4b0] sm:$0xff] %v6771
                %v6773 = vld [vmem:[%s6721 + $0xf8] sm:$0xff]
                %6774 = vst [vmem:[%s6722 + $0x4b8] sm:$0xff] %v6773
                %v6775 = vld [vmem:[%s6721 + $0x104] sm:$0xff]
                %6776 = vst [vmem:[%s6722 + $0x514] sm:$0xff] %v6775
                %v6777 = vld [vmem:[%s6721 + $0x10c] sm:$0xff]
                %6778 = vst [vmem:[%s6722 + $0x51c] sm:$0xff] %v6777
                %v6779 = vld [vmem:[%s6721 + $0x118] sm:$0xff]
                %6780 = vst [vmem:[%s6722 + $0x578] sm:$0xff] %v6779
                %v6781 = vld [vmem:[%s6721 + $0x120] sm:$0xff]
                %6782 = vst [vmem:[%s6722 + $0x580] sm:$0xff] %v6781
                %v6783 = vld [vmem:[%s6721 + $0x12c] sm:$0xff]
                %6784 = vst [vmem:[%s6722 + $0x5dc] sm:$0xff] %v6783
                %v6785 = vld [vmem:[%s6721 + $0x134] sm:$0xff]
                %6786 = vst [vmem:[%s6722 + $0x5e4] sm:$0xff] %v6785
                %v6787 = vld [vmem:[%s6721 + $0x140] sm:$0xff]
                %6788 = vst [vmem:[%s6722 + $0x640] sm:$0xff] %v6787
                %v6789 = vld [vmem:[%s6721 + $0x148] sm:$0xff]
                %6790 = vst [vmem:[%s6722 + $0x648] sm:$0xff] %v6789
                %v6791 = vld [vmem:[%s6721 + $0x154] sm:$0xff]
                %6792 = vst [vmem:[%s6722 + $0x6a4] sm:$0xff] %v6791
                %v6793 = vld [vmem:[%s6721 + $0x15c] sm:$0xff]
                %6794 = vst [vmem:[%s6722 + $0x6ac] sm:$0xff] %v6793
                %v6795 = vld [vmem:[%s6721 + $0x168] sm:$0xff]
                %6796 = vst [vmem:[%s6722 + $0x708] sm:$0xff] %v6795
                %v6797 = vld [vmem:[%s6721 + $0x170] sm:$0xff]
                %6798 = vst [vmem:[%s6722 + $0x710] sm:$0xff] %v6797
                %v6799 = vld [vmem:[%s6721 + $0x17c] sm:$0xff]
                %6800 = vst [vmem:[%s6722 + $0x76c] sm:$0xff] %v6799
                %v6801 = vld [vmem:[%s6721 + $0x184] sm:$0xff]
                %6802 = vst [vmem:[%s6722 + $0x774] sm:$0xff] %v6801
                %v6803 = vld [vmem:[%s6721 + $0x190] sm:$0xff]
                %6804 = vst [vmem:[%s6722 + $0x7d0] sm:$0xff] %v6803
                %v6805 = vld [vmem:[%s6721 + $0x198] sm:$0xff]
                %6806 = vst [vmem:[%s6722 + $0x7d8] sm:$0xff] %v6805
                %v6807 = vld [vmem:[%s6721 + $0x1a4] sm:$0xff]
                %6808 = vst [vmem:[%s6722 + $0x834] sm:$0xff] %v6807
                %v6809 = vld [vmem:[%s6721 + $0x1ac] sm:$0xff]
                %6810 = vst [vmem:[%s6722 + $0x83c] sm:$0xff] %v6809
                %v6811 = vld [vmem:[%s6721 + $0x1b8] sm:$0xff]
                %6812 = vst [vmem:[%s6722 + $0x898] sm:$0xff] %v6811
                %v6813 = vld [vmem:[%s6721 + $0x1c0] sm:$0xff]
                %6814 = vst [vmem:[%s6722 + $0x8a0] sm:$0xff] %v6813
                %v6815 = vld [vmem:[%s6721 + $0x1cc] sm:$0xff]
                %6816 = vst [vmem:[%s6722 + $0x8fc] sm:$0xff] %v6815
                %v6817 = vld [vmem:[%s6721 + $0x1d4] sm:$0xff]
                %6818 = vst [vmem:[%s6722 + $0x904] sm:$0xff] %v6817
                %v6819 = vld [vmem:[%s6721 + $0x1e0] sm:$0xff]
                %6820 = vst [vmem:[%s6722 + $0x960] sm:$0xff] %v6819
                %v6821 = vld [vmem:[%s6721 + $0x1e8] sm:$0xff]
                %6822 = vst [vmem:[%s6722 + $0x968] sm:$0xff] %v6821
                %v6823 = vld [vmem:[%s6721 + $0x1f4] sm:$0xff]
                %6824 = vst [vmem:[%s6722 + $0x9c4] sm:$0xff] %v6823
                %v6825 = vld [vmem:[%s6721 + $0x1fc] sm:$0xff]
                %6826 = vst [vmem:[%s6722 + $0x9cc] sm:$0xff] %v6825
                %v6827 = vld [vmem:[%s6721 + $0x208] sm:$0xff]
                %6828 = vst [vmem:[%s6722 + $0xa28] sm:$0xff] %v6827
                %v6829 = vld [vmem:[%s6721 + $0x210] sm:$0xff]
                %6830 = vst [vmem:[%s6722 + $0xa30] sm:$0xff] %v6829
                %v6831 = vld [vmem:[%s6721 + $0x21c] sm:$0xff]
                %6832 = vst [vmem:[%s6722 + $0xa8c] sm:$0xff] %v6831
                %v6833 = vld [vmem:[%s6721 + $0x224] sm:$0xff]
                %6834 = vst [vmem:[%s6722 + $0xa94] sm:$0xff] %v6833
                %v6835 = vld [vmem:[%s6721 + $0x230] sm:$0xff]
                %6836 = vst [vmem:[%s6722 + $0xaf0] sm:$0xff] %v6835
                %v6837 = vld [vmem:[%s6721 + $0x238] sm:$0xff]
                %6838 = vst [vmem:[%s6722 + $0xaf8] sm:$0xff] %v6837
                %v6839 = vld [vmem:[%s6721 + $0x244] sm:$0xff]
                %6840 = vst [vmem:[%s6722 + $0xb54] sm:$0xff] %v6839
                %v6841 = vld [vmem:[%s6721 + $0x24c] sm:$0xff]
                %6842 = vst [vmem:[%s6722 + $0xb5c] sm:$0xff] %v6841
                %v6843 = vld [vmem:[%s6721 + $0x258] sm:$0xff]
                %6844 = vst [vmem:[%s6722 + $0xbb8] sm:$0xff] %v6843
                %v6845 = vld [vmem:[%s6721 + $0x260] sm:$0xff]
                %6846 = vst [vmem:[%s6722 + $0xbc0] sm:$0xff] %v6845
                %v6847 = vld [vmem:[%s6721 + $0x26c] sm:$0xff]
                %6848 = vst [vmem:[%s6722 + $0xc1c] sm:$0xff] %v6847
                %v6849 = vld [vmem:[%s6721 + $0x274] sm:$0xff]
                %6850 = vst [vmem:[%s6722 + $0xc24] sm:$0xff] %v6849
              $region57: #{forward_pallas.2} parent=51 // loop_footer
                %s6720 = sadd.s32 1, %s6716
              $region58: #{forward_pallas.2} parent=51 // loop_footer_branch
                %6715 = sbr.rel target = $region54
              $region59: #{forward_pallas.2} parent=51 // loop_exit
                _
              %s6852 = ssub.s32 16, 1
              loop: start=0, step=1, limit=1
              $region60: #{forward_pallas.2} parent=51 // loop_pre_header
                _
              $region61: #{forward_pallas.2} parent=51 // loop_header
                %s6854 = sphi 0, %s6858
                %p6855 = scmp.ge.s32.totalorder %s6854, 1
                %s6859 = sphi %s6713, %s6713
                %s6860 = sphi %s6714, %s6714
              $region62: #{forward_pallas.2} parent=51 // loop_header_branch
                %6857 = sbr.rel (%p6855) target = $region66
              $region63: #{forward_pallas.2} parent=51 // loop_body
                %v6861 = vld [vmem:[%s6859] sm:%s6852]
                %6862 = vst [vmem:[%s6860] sm:%s6852] %v6861
                %v6863 = vld [vmem:[%s6859 + $0x14] sm:%s6852]
                %6864 = vst [vmem:[%s6860 + $0x64] sm:%s6852] %v6863
                %v6865 = vld [vmem:[%s6859 + $0x28] sm:%s6852]
                %6866 = vst [vmem:[%s6860 + $0xc8] sm:%s6852] %v6865
                %v6867 = vld [vmem:[%s6859 + $0x3c] sm:%s6852]
                %6868 = vst [vmem:[%s6860 + $0x12c] sm:%s6852] %v6867
                %v6869 = vld [vmem:[%s6859 + $0x50] sm:%s6852]
                %6870 = vst [vmem:[%s6860 + $0x190] sm:%s6852] %v6869
                %v6871 = vld [vmem:[%s6859 + $0x64] sm:%s6852]
                %6872 = vst [vmem:[%s6860 + $0x1f4] sm:%s6852] %v6871
                %v6873 = vld [vmem:[%s6859 + $0x78] sm:%s6852]
                %6874 = vst [vmem:[%s6860 + $0x258] sm:%s6852] %v6873
                %v6875 = vld [vmem:[%s6859 + $0x8c] sm:%s6852]
                %6876 = vst [vmem:[%s6860 + $0x2bc] sm:%s6852] %v6875
                %v6877 = vld [vmem:[%s6859 + $0xa0] sm:%s6852]
                %6878 = vst [vmem:[%s6860 + $0x320] sm:%s6852] %v6877
                %v6879 = vld [vmem:[%s6859 + $0xb4] sm:%s6852]
                %6880 = vst [vmem:[%s6860 + $0x384] sm:%s6852] %v6879
                %v6881 = vld [vmem:[%s6859 + $0xc8] sm:%s6852]
                %6882 = vst [vmem:[%s6860 + $0x3e8] sm:%s6852] %v6881
                %v6883 = vld [vmem:[%s6859 + $0xdc] sm:%s6852]
                %6884 = vst [vmem:[%s6860 + $0x44c] sm:%s6852] %v6883
                %v6885 = vld [vmem:[%s6859 + $0xf0] sm:%s6852]
                %6886 = vst [vmem:[%s6860 + $0x4b0] sm:%s6852] %v6885
                %v6887 = vld [vmem:[%s6859 + $0x104] sm:%s6852]
                %6888 = vst [vmem:[%s6860 + $0x514] sm:%s6852] %v6887
                %v6889 = vld [vmem:[%s6859 + $0x118] sm:%s6852]
                %6890 = vst [vmem:[%s6860 + $0x578] sm:%s6852] %v6889
                %v6891 = vld [vmem:[%s6859 + $0x12c] sm:%s6852]
                %6892 = vst [vmem:[%s6860 + $0x5dc] sm:%s6852] %v6891
                %v6893 = vld [vmem:[%s6859 + $0x140] sm:%s6852]
                %6894 = vst [vmem:[%s6860 + $0x640] sm:%s6852] %v6893
                %v6895 = vld [vmem:[%s6859 + $0x154] sm:%s6852]
                %6896 = vst [vmem:[%s6860 + $0x6a4] sm:%s6852] %v6895
                %v6897 = vld [vmem:[%s6859 + $0x168] sm:%s6852]
                %6898 = vst [vmem:[%s6860 + $0x708] sm:%s6852] %v6897
                %v6899 = vld [vmem:[%s6859 + $0x17c] sm:%s6852]
                %6900 = vst [vmem:[%s6860 + $0x76c] sm:%s6852] %v6899
                %v6901 = vld [vmem:[%s6859 + $0x190] sm:%s6852]
                %6902 = vst [vmem:[%s6860 + $0x7d0] sm:%s6852] %v6901
                %v6903 = vld [vmem:[%s6859 + $0x1a4] sm:%s6852]
                %6904 = vst [vmem:[%s6860 + $0x834] sm:%s6852] %v6903
                %v6905 = vld [vmem:[%s6859 + $0x1b8] sm:%s6852]
                %6906 = vst [vmem:[%s6860 + $0x898] sm:%s6852] %v6905
                %v6907 = vld [vmem:[%s6859 + $0x1cc] sm:%s6852]
                %6908 = vst [vmem:[%s6860 + $0x8fc] sm:%s6852] %v6907
                %v6909 = vld [vmem:[%s6859 + $0x1e0] sm:%s6852]
                %6910 = vst [vmem:[%s6860 + $0x960] sm:%s6852] %v6909
                %v6911 = vld [vmem:[%s6859 + $0x1f4] sm:%s6852]
                %6912 = vst [vmem:[%s6860 + $0x9c4] sm:%s6852] %v6911
                %v6913 = vld [vmem:[%s6859 + $0x208] sm:%s6852]
                %6914 = vst [vmem:[%s6860 + $0xa28] sm:%s6852] %v6913
                %v6915 = vld [vmem:[%s6859 + $0x21c] sm:%s6852]
                %6916 = vst [vmem:[%s6860 + $0xa8c] sm:%s6852] %v6915
                %v6917 = vld [vmem:[%s6859 + $0x230] sm:%s6852]
                %6918 = vst [vmem:[%s6860 + $0xaf0] sm:%s6852] %v6917
                %v6919 = vld [vmem:[%s6859 + $0x244] sm:%s6852]
                %6920 = vst [vmem:[%s6860 + $0xb54] sm:%s6852] %v6919
                %v6921 = vld [vmem:[%s6859 + $0x258] sm:%s6852]
                %6922 = vst [vmem:[%s6860 + $0xbb8] sm:%s6852] %v6921
                %v6923 = vld [vmem:[%s6859 + $0x26c] sm:%s6852]
                %6924 = vst [vmem:[%s6860 + $0xc1c] sm:%s6852] %v6923
              $region64: #{forward_pallas.2} parent=51 // loop_footer
                %s6858 = sadd.s32 1, %s6854
              $region65: #{forward_pallas.2} parent=51 // loop_footer_branch
                %6853 = sbr.rel target = $region61
              $region66: #{forward_pallas.2} parent=51 // loop_exit
                _
            $region52: #{forward_pallas.2} parent=47 // pred_fallthru
              _
          $region48: #{forward_pallas.2} parent=43 // pred_fallthru
            _
          %6925 = vnop
        $region44: #{forward_pallas.2} parent=31 // pred_fallthru
          _
      $region32: #{forward_pallas.2} parent=5 // pred_fallthru
        _
      %p6926 = scmp.le.s32.totalorder 2, %s13
      // Predicated region
      $region67: #{forward_pallas.2} parent=5 // pred_check
        %p6927 = pneg %p6926
      $region68: #{forward_pallas.2} parent=5 // pred_check_branch
        %6929 = sbr.rel (%p6927) target = $region70
      $region69: #{forward_pallas.2} parent=5 // pred_region
        %s6930 = ssub.s32 %s13, 2
        // Predicated region
        $region71: #{forward_pallas.2} parent=69 // pred_check
          %p6931 = pneg %p129
        $region72: #{forward_pallas.2} parent=69 // pred_check_branch
          %6933 = sbr.rel (%p6931) target = $region74
        $region73: #{forward_pallas.2} parent=69 // pred_region
          %s6934 = sand.u32 %s114, 1
          %s6935 = sand.u32 %s114, 1
          %s6936 = smul.addr %s6935, 640
          %s6937 = scalar_lea.vmem [#allocation6], %s6936
        $region74: #{forward_pallas.2} parent=69 // pred_fallthru
          _
      $region70: #{forward_pallas.2} parent=5 // pred_fallthru
        _
    $region6: #{forward_pallas.2} parent=1 // loop_footer
      %s17 = sadd.s32 1, %s13
    $region7: #{forward_pallas.2} parent=1 // loop_footer_branch
      %12 = sbr.rel target = $region3
    $region8: #{forward_pallas.2} parent=1 // loop_exit
      _
    %6938 = vsyncpa [#allocation3], 1
    %s6939 = scalar_lea.sflag [#allocation3], 1
    %6940 = vsyncpa %s6939, 1
    %6941 = vsyncpa [#allocation5], 1
    %s6942 = scalar_lea.sflag [#allocation5], 1
    %6943 = vsyncpa %s6942, 1

// kernel: forward_pallas.3
$region0: #{forward_pallas.3}
  #allocation0 [shape = 'u32[]', space=smem, size = 0x4, offset = 0x4, fixed_abs, tag = 'smem constant byte address 0x4 - core index']
  #allocation1 [shape = 'u32[72,128]{1,0:T(1,128)}', space=vmem, size = 0x9000, scoped, tag = 'internal scratch']
  %s0 = inlined_call_operand.vmem [shape: bf16[722,200], index: 0, kind: input, shape index: {}]
  %s1 = inlined_call_operand.vmem [shape: bf16[200,896], index: 1, kind: input, shape index: {}]
  %s2 = inlined_call_operand.vmem [shape: bf16[722,896], index: 2, kind: output, shape index: {}]
  %s3 = sld [smem:[#allocation0]]
  $region77: #{forward_pallas.3} parent=0
    _
  %s5 = ssub.s32 1, %s3
  %s6 = scalar_select 0, %s5, %s3
  $region1: #{forward_pallas.3} parent=0
    #allocation2 [shape = 'u8[1318912]{0}', space=vmem, size = 0x142000, scoped, tag = 'output window, operand 0']
    loop: start=0, step=1, limit=4
    $region2: #{forward_pallas.3} parent=1 // loop_pre_header
      _
    $region3: #{forward_pallas.3} parent=1 // loop_header
      %s8 = sphi 0, %s12
      %p9 = scmp.ge.s32.totalorder %s8, 4
      %s18 = sphi 0, %s20
      %s21 = sphi 0, %s18
      %s22 = sphi 0, %s21
      %s38 = sphi 0, %s22
      %s42 = sphi 0, %s42
      %s44 = sphi 0, %s42
      %s45 = sphi 0, %s44
      %s59 = sphi 0, %s45
      %s65 = sphi 0, %s67
      %s68 = sphi 0, %s65
      %s69 = sphi 0, %s68
      %s85 = sphi 0, %s69
    $region4: #{forward_pallas.3} parent=1 // loop_header_branch
      %11 = sbr.rel (%p9) target = $region8
    $region5: #{forward_pallas.3} parent=1 // loop_body
      %s13 = ssub.s32 %s8, 1
      %s14 = ssub.s32 %s8, 2
      %s15 = sadd.s32 %s8, 1
      %s16 = ssub.s32 %s8, %s15
      %p17 = scmp.eq.s32.totalorder %s16, 0
      %s19 = sadd.s32 %s18, 1
      %s20 = scalar_select %p17, %s18, %s19
      %p23 = pneg %p17
      %p24 = scmp.eq.s32.totalorder %s8, 1
      %p25 = por %p23, %p24
      %p26 = scmp.ne.s32.totalorder %s18, %s21
      %p27 = scmp.eq.s32.totalorder %s8, 0
      %p28 = por %p26, %p27
      %p29 = scmp.ne.s32.totalorder %s18, %s21
      %p30 = scmp.eq.s32.totalorder %s13, 1
      %p31 = por %p29, %p30
      %p32 = scmp.ne.s32.totalorder %s21, %s22
      %p33 = scmp.eq.s32.totalorder %s13, 0
      %p34 = por %p32, %p33
      %p35 = scmp.ne.s32.totalorder %s21, %s22
      %p36 = scmp.eq.s32.totalorder %s14, 1
      %p37 = por %p35, %p36
      %p39 = scmp.ne.s32.totalorder %s22, %s38
      %p40 = scmp.eq.s32.totalorder %s14, 0
      %p41 = por %p39, %p40
      %s43 = sadd.s32 %s42, 1
      %p46 = scmp.eq.s32.totalorder %s8, 1
      %p47 = scmp.ne.s32.totalorder %s42, %s44
      %p48 = scmp.eq.s32.totalorder %s8, 0
      %p49 = por %p47, %p48
      %p50 = scmp.ne.s32.totalorder %s42, %s44
      %p51 = scmp.eq.s32.totalorder %s13, 1
      %p52 = por %p50, %p51
      %p53 = scmp.ne.s32.totalorder %s44, %s45
      %p54 = scmp.eq.s32.totalorder %s13, 0
      %p55 = por %p53, %p54
      %p56 = scmp.ne.s32.totalorder %s44, %s45
      %p57 = scmp.eq.s32.totalorder %s14, 1
      %p58 = por %p56, %p57
      %p60 = scmp.ne.s32.totalorder %s45, %s59
      %p61 = scmp.eq.s32.totalorder %s14, 0
      %p62 = por %p60, %p61
      %s63 = ssub.s32 %s8, %s15
      %p64 = scmp.eq.s32.totalorder %s63, 0
      %s66 = sadd.s32 %s65, 1
      %s67 = scalar_select %p64, %s65, %s66
      %p70 = pneg %p64
      %p71 = scmp.eq.s32.totalorder %s8, 1
      %p72 = por %p70, %p71
      %p73 = scmp.ne.s32.totalorder %s65, %s68
      %p74 = scmp.eq.s32.totalorder %s8, 0
      %p75 = por %p73, %p74
      %p76 = scmp.ne.s32.totalorder %s65, %s68
      %p77 = scmp.eq.s32.totalorder %s13, 1
      %p78 = por %p76, %p77
      %p79 = scmp.ne.s32.totalorder %s68, %s69
      %p80 = scmp.eq.s32.totalorder %s13, 0
      %p81 = por %p79, %p80
      %p82 = scmp.ne.s32.totalorder %s68, %s69
      %p83 = scmp.eq.s32.totalorder %s14, 1
      %p84 = por %p82, %p83
      %p86 = scmp.ne.s32.totalorder %s69, %s85
      %p87 = scmp.eq.s32.totalorder %s14, 0
      %p88 = por %p86, %p87
      %p89 = scmp.le.s32.totalorder 1, %s8
      %p90 = scmp.lt.s32.totalorder %s8, 3
      %p91 = pnand %p89, %p90
      %p92 = pneg %p91
      // Predicated region
      $region9: #{forward_pallas.3} parent=5 // pred_check
        _
      $region10: #{forward_pallas.3} parent=5 // pred_check_branch
        %94 = sbr.rel (%p91) target = $region12
      $region11: #{forward_pallas.3} parent=5 // pred_region
        %s95 = ssub.s32 %s8, 1
        // Predicated region
        $region13: #{forward_pallas.3} parent=11 // pred_check
          %p96 = pneg %p55
        $region14: #{forward_pallas.3} parent=11 // pred_check_branch
          %98 = sbr.rel (%p96) target = $region16
        $region15: #{forward_pallas.3} parent=11 // pred_region
          _
        $region16: #{forward_pallas.3} parent=11 // pred_fallthru
          _
      $region12: #{forward_pallas.3} parent=5 // pred_fallthru
        _
      %p99 = scmp.lt.s32.totalorder %s8, 2
      // Predicated region
      $region17: #{forward_pallas.3} parent=5 // pred_check
        %p100 = pneg %p99
      $region18: #{forward_pallas.3} parent=5 // pred_check_branch
        %102 = sbr.rel (%p100) target = $region20
      $region19: #{forward_pallas.3} parent=5 // pred_region
        // Predicated region
        $region21: #{forward_pallas.3} parent=19 // pred_check
          %p103 = pneg %p28
        $region22: #{forward_pallas.3} parent=19 // pred_check_branch
          %105 = sbr.rel (%p103) target = $region24
        $region23: #{forward_pallas.3} parent=19 // pred_region
          %s106 = smul.u32 46, %s8
          %s107 = ssub.s32 91, %s106
          %p108 = scmp.lt.s32.totalorder %s107, 46
          %s109 = scalar_select %p108, %s107, 46
          %s110 = smul.u32 4, %s109
          %s111 = smul.u32 %s110, 2
          %p112 = scmp.lt.s32.totalorder %s106, 90
          %s113 = scalar_select %p112, %s106, 90
          %s114 = smul.addr %s113, 2
          %s115 = smul.addr %s114, 4
          %s116 = scalar_lea.vmem %s0, %s115
          %s117 = smul.u32 46, %s8
          %s118 = ssub.s32 91, %s117
          %p119 = scmp.lt.s32.totalorder %s118, 46
          %s120 = scalar_select %p119, %s118, 46
          %s121 = smul.u32 4, %s120
          %s122 = smul.u32 %s121, 2
        $region24: #{forward_pallas.3} parent=19 // pred_fallthru
          _
      $region20: #{forward_pallas.3} parent=5 // pred_fallthru
        _
      %p123 = scmp.le.s32.totalorder 1, %s8
      %p124 = scmp.lt.s32.totalorder %s8, 3
      %p125 = pnand %p123, %p124
      %p126 = pneg %p125
      // Predicated region
      $region25: #{forward_pallas.3} parent=5 // pred_check
        _
      $region26: #{forward_pallas.3} parent=5 // pred_check_branch
        %128 = sbr.rel (%p125) target = $region28
      $region27: #{forward_pallas.3} parent=5 // pred_region
        %s129 = ssub.s32 %s8, 1
        %s130 = smul.u32 46, %s13
        %s131 = ssub.s32 91, %s130
        %p132 = scmp.lt.s32.totalorder %s131, 46
        %s133 = scalar_select %p132, %s131, 46
        %s134 = smul.u32 4, %s133
        %s135 = smul.u32 %s134, 2
        %p136 = scmp.lt.s32.totalorder %s130, 90
        %s137 = scalar_select %p136, %s130, 90
        %s138 = smul.addr %s137, 2
        %s139 = smul.addr %s138, 4
        %s140 = scalar_lea.vmem %s0, %s139
        %p141 = pneg %p34
        %p142 = pneg %p31
        %p143 = pneg %p55
        %p144 = pneg %p52
        %p145 = pneg %p81
        %p146 = pneg %p78
        %s147 = sand.u32 %s68, 1
        %s148 = sand.u32 %s68, 1
        %s149 = smul.addr %s148, 1288
        %s150 = scalar_lea.vmem [#allocation2], %s149
        %s151 = smul.u32 46, %s13
        %s152 = ssub.s32 91, %s151
        %p153 = scmp.lt.s32.totalorder %s152, 46
        %s154 = scalar_select %p153, %s152, 46
        %s155 = smul.u32 4, %s154
        %s156 = smul.u32 %s155, 2
        %p157 = scmp.lt.s32.totalorder %s151, 90
        %s158 = scalar_select %p157, %s151, 90
        %s159 = smul.addr %s158, 2
        %s160 = smul.addr %s159, 4
        %s161 = scalar_lea.vmem %s0, %s160
        %s162 = smul.u32 46, %s13
        %s163 = ssub.s32 91, %s162
        %p164 = scmp.lt.s32.totalorder %s163, 46
        %s165 = scalar_select %p164, %s163, 46
        %s166 = smul.u32 4, %s165
        %s167 = smul.u32 %s166, 2
        %s168 = smul.u32 46, %s13
        %s169 = ssub.s32 91, %s168
        %p170 = scmp.lt.s32.totalorder %s169, 46
        %s171 = scalar_select %p170, %s169, 46
        %s172 = smul.u32 4, %s171
        %s173 = smul.u32 %s172, 7
        %v175 = vld [vmem:[%s161] sm:$0xff]
        %v176 = vld [vmem:[%s161 + $0x8] sm:$0xff]
        %v177 = vld [vmem:[%s161 + $0x10] sm:$0xff]
        %v178 = vld [vmem:[%s161 + $0x18] sm:$0xff]
        %v179 = vld [vmem:[%s161 + $0x20] sm:$0xff]
        %v180 = vld [vmem:[%s161 + $0x28] sm:$0xff]
        %v181 = vld [vmem:[%s161 + $0x30] sm:$0xff]
        %v182 = vld [vmem:[%s161 + $0x38] sm:$0xff]
        %v183 = vld [vmem:[%s161 + $0x40] sm:$0xff]
        %v184 = vld [vmem:[%s161 + $0x48] sm:$0xff]
        %v185 = vld [vmem:[%s161 + $0x50] sm:$0xff]
        %v186 = vld [vmem:[%s161 + $0x58] sm:$0xff]
        %v187 = vld [vmem:[%s161 + $0x60] sm:$0xff]
        %v188 = vld [vmem:[%s161 + $0x68] sm:$0xff]
        %v189 = vld [vmem:[%s161 + $0x70] sm:$0xff]
        %v190 = vld [vmem:[%s161 + $0x78] sm:$0xff]
        %v191 = vld [vmem:[%s161 + $0x80] sm:$0xff]
        %v192 = vld [vmem:[%s161 + $0x88] sm:$0xff]
        %v193 = vld [vmem:[%s161 + $0x90] sm:$0xff]
        %v194 = vld [vmem:[%s161 + $0x98] sm:$0xff]
        %v195 = vld [vmem:[%s161 + $0xa0] sm:$0xff]
        %v196 = vld [vmem:[%s161 + $0xa8] sm:$0xff]
        %v197 = vld [vmem:[%s161 + $0xb0] sm:$0xff]
        %v198 = vld [vmem:[%s161 + $0xb8] sm:$0xff]
        %v199 = vld [vmem:[%s161 + $0xc0] sm:$0xff]
        %v200 = vld [vmem:[%s161 + $0xc8] sm:$0xff]
        %v201 = vld [vmem:[%s161 + $0xd0] sm:$0xff]
        %v202 = vld [vmem:[%s161 + $0xd8] sm:$0xff]
        %v203 = vld [vmem:[%s161 + $0xe0] sm:$0xff]
        %v204 = vld [vmem:[%s161 + $0xe8] sm:$0xff]
        %v205 = vld [vmem:[%s161 + $0xf0] sm:$0xff]
        %v206 = vld [vmem:[%s161 + $0xf8] sm:$0xff]
        %v207 = vld [vmem:[%s161 + $0x100] sm:$0xff]
        %v208 = vld [vmem:[%s161 + $0x108] sm:$0xff]
        %v209 = vld [vmem:[%s161 + $0x110] sm:$0xff]
        %v210 = vld [vmem:[%s161 + $0x118] sm:$0xff]
        %v211 = vld [vmem:[%s161 + $0x120] sm:$0xff]
        %v212 = vld [vmem:[%s161 + $0x128] sm:$0xff]
        %v213 = vld [vmem:[%s161 + $0x130] sm:$0xff]
        %v214 = vld [vmem:[%s161 + $0x138] sm:$0xff]
        %v215 = vld [vmem:[%s161 + $0x140] sm:$0xff]
        %v216 = vld [vmem:[%s161 + $0x148] sm:$0xff]
        %v217 = vld [vmem:[%s161 + $0x150] sm:$0xff]
        %v218 = vld [vmem:[%s161 + $0x158] sm:$0xff]
        %v219 = vld [vmem:[%s161 + $0x160] sm:$0xff]
        %v220 = vld [vmem:[%s161 + $0x168] sm:$0xff]
        %v221 = vld [vmem:[%s1] sm:$0xff]
        %v222 = vld [vmem:[%s1 + $0x8] sm:$0xff]
        %v223 = vld [vmem:[%s1 + $0x10] sm:$0xff]
        %v224 = vld [vmem:[%s1 + $0x18] sm:$0xf]
        %v225 = vld [vmem:[%s1 + $0x1c] sm:$0xff]
        %v226 = vld [vmem:[%s1 + $0x24] sm:$0xff]
        %v227 = vld [vmem:[%s1 + $0x2c] sm:$0xff]
        %v228 = vld [vmem:[%s1 + $0x34] sm:$0xf]
        %v229 = vld [vmem:[%s1 + $0x38] sm:$0xff]
        %v230 = vld [vmem:[%s1 + $0x40] sm:$0xff]
        %v231 = vld [vmem:[%s1 + $0x48] sm:$0xff]
        %v232 = vld [vmem:[%s1 + $0x50] sm:$0xf]
        %v233 = vld [vmem:[%s1 + $0x54] sm:$0xff]
        %v234 = vld [vmem:[%s1 + $0x5c] sm:$0xff]
        %v235 = vld [vmem:[%s1 + $0x64] sm:$0xff]
        %v236 = vld [vmem:[%s1 + $0x6c] sm:$0xf]
        %v237 = vld [vmem:[%s1 + $0x70] sm:$0xff]
        %v238 = vld [vmem:[%s1 + $0x78] sm:$0xff]
        %v239 = vld [vmem:[%s1 + $0x80] sm:$0xff]
        %v240 = vld [vmem:[%s1 + $0x88] sm:$0xf]
        %v241 = vld [vmem:[%s1 + $0x8c] sm:$0xff]
        %v242 = vld [vmem:[%s1 + $0x94] sm:$0xff]
        %v243 = vld [vmem:[%s1 + $0x9c] sm:$0xff]
        %v244 = vld [vmem:[%s1 + $0xa4] sm:$0xf]
        %v245 = vld [vmem:[%s1 + $0xa8] sm:$0xff]
        %v246 = vld [vmem:[%s1 + $0xb0] sm:$0xff]
        %v247 = vld [vmem:[%s1 + $0xb8] sm:$0xff]
        %v248 = vld [vmem:[%s1 + $0xc0] sm:$0xf]
        %v249 = vld [vmem:[%s1 + $0xc4] sm:$0xff]
        %v250 = vld [vmem:[%s1 + $0xcc] sm:$0xff]
        %v251 = vld [vmem:[%s1 + $0xd4] sm:$0xff]
        %v252 = vld [vmem:[%s1 + $0xdc] sm:$0xf]
        %v253 = vld [vmem:[%s1 + $0xe0] sm:$0xff]
        %v254 = vld [vmem:[%s1 + $0xe8] sm:$0xff]
        %v255 = vld [vmem:[%s1 + $0xf0] sm:$0xff]
        %v256 = vld [vmem:[%s1 + $0xf8] sm:$0xf]
        %v257 = vld [vmem:[%s1 + $0xfc] sm:$0xff]
        %v258 = vld [vmem:[%s1 + $0x104] sm:$0xff]
        %v259 = vld [vmem:[%s1 + $0x10c] sm:$0xff]
        %v260 = vld [vmem:[%s1 + $0x114] sm:$0xf]
        %v261 = vld [vmem:[%s1 + $0x118] sm:$0xff]
        %v262 = vld [vmem:[%s1 + $0x120] sm:$0xff]
        %v263 = vld [vmem:[%s1 + $0x128] sm:$0xff]
        %v264 = vld [vmem:[%s1 + $0x130] sm:$0xf]
        %v265 = vld [vmem:[%s1 + $0x134] sm:$0xff]
        %v266 = vld [vmem:[%s1 + $0x13c] sm:$0xff]
        %v267 = vld [vmem:[%s1 + $0x144] sm:$0xff]
        %v268 = vld [vmem:[%s1 + $0x14c] sm:$0xf]
        %v269 = vld [vmem:[%s1 + $0x150] sm:$0xff]
        %v270 = vld [vmem:[%s1 + $0x158] sm:$0xff]
        %v271 = vld [vmem:[%s1 + $0x160] sm:$0xff]
        %v272 = vld [vmem:[%s1 + $0x168] sm:$0xf]
        %v273 = vld [vmem:[%s1 + $0x16c] sm:$0xff]
        %v274 = vld [vmem:[%s1 + $0x174] sm:$0xff]
        %v275 = vld [vmem:[%s1 + $0x17c] sm:$0xff]
        %v276 = vld [vmem:[%s1 + $0x184] sm:$0xf]
        %v277 = vld [vmem:[%s1 + $0x188] sm:$0xff]
        %v278 = vld [vmem:[%s1 + $0x190] sm:$0xff]
        %v279 = vld [vmem:[%s1 + $0x198] sm:$0xff]
        %v280 = vld [vmem:[%s1 + $0x1a0] sm:$0xf]
        %v281 = vld [vmem:[%s1 + $0x1a4] sm:$0xff]
        %v282 = vld [vmem:[%s1 + $0x1ac] sm:$0xff]
        %v283 = vld [vmem:[%s1 + $0x1b4] sm:$0xff]
        %v284 = vld [vmem:[%s1 + $0x1bc] sm:$0xf]
        %v285 = vld [vmem:[%s1 + $0x1c0] sm:$0xff]
        %v286 = vld [vmem:[%s1 + $0x1c8] sm:$0xff]
        %v287 = vld [vmem:[%s1 + $0x1d0] sm:$0xff]
        %v288 = vld [vmem:[%s1 + $0x1d8] sm:$0xf]
        %v289 = vld [vmem:[%s1 + $0x1dc] sm:$0xff]
        %v290 = vld [vmem:[%s1 + $0x1e4] sm:$0xff]
        %v291 = vld [vmem:[%s1 + $0x1ec] sm:$0xff]
        %v292 = vld [vmem:[%s1 + $0x1f4] sm:$0xf]
        %v293 = vld [vmem:[%s1 + $0x1f8] sm:$0xff]
        %v294 = vld [vmem:[%s1 + $0x200] sm:$0xff]
        %v295 = vld [vmem:[%s1 + $0x208] sm:$0xff]
        %v296 = vld [vmem:[%s1 + $0x210] sm:$0xf]
        %v297 = vld [vmem:[%s1 + $0x214] sm:$0xff]
        %v298 = vld [vmem:[%s1 + $0x21c] sm:$0xff]
        %v299 = vld [vmem:[%s1 + $0x224] sm:$0xff]
        %v300 = vld [vmem:[%s1 + $0x22c] sm:$0xf]
        %v301 = vld [vmem:[%s1 + $0x230] sm:$0xff]
        %v302 = vld [vmem:[%s1 + $0x238] sm:$0xff]
        %v303 = vld [vmem:[%s1 + $0x240] sm:$0xff]
        %v304 = vld [vmem:[%s1 + $0x248] sm:$0xf]
        %v305 = vld [vmem:[%s1 + $0x24c] sm:$0xff]
        %v306 = vld [vmem:[%s1 + $0x254] sm:$0xff]
        %v307 = vld [vmem:[%s1 + $0x25c] sm:$0xff]
        %v308 = vld [vmem:[%s1 + $0x264] sm:$0xf]
        %v309 = vld [vmem:[%s1 + $0x268] sm:$0xff]
        %v310 = vld [vmem:[%s1 + $0x270] sm:$0xff]
        %v311 = vld [vmem:[%s1 + $0x278] sm:$0xff]
        %v312 = vld [vmem:[%s1 + $0x280] sm:$0xf]
        %v313 = vld [vmem:[%s1 + $0x284] sm:$0xff]
        %v314 = vld [vmem:[%s1 + $0x28c] sm:$0xff]
        %v315 = vld [vmem:[%s1 + $0x294] sm:$0xff]
        %v316 = vld [vmem:[%s1 + $0x29c] sm:$0xf]
        %v317 = vld [vmem:[%s1 + $0x2a0] sm:$0xff]
        %v318 = vld [vmem:[%s1 + $0x2a8] sm:$0xff]
        %v319 = vld [vmem:[%s1 + $0x2b0] sm:$0xff]
        %v320 = vld [vmem:[%s1 + $0x2b8] sm:$0xf]
        %v367 = vunpack.c.l.b16 %v175
        %v368 = vunpack.c.h.b16 %v175
        %v369 = vunpack.c.l.b16 %v176
        %v370 = vunpack.c.h.b16 %v176
        %v371 = vunpack.c.l.b16 %v177
        %v372 = vunpack.c.h.b16 %v177
        %v373 = vunpack.c.l.b16 %v178
        %v374 = vunpack.c.h.b16 %v178
        %v375 = vunpack.c.l.b16 %v179
        %v376 = vunpack.c.h.b16 %v179
        %v377 = vunpack.c.l.b16 %v180
        %v378 = vunpack.c.h.b16 %v180
        %v379 = vunpack.c.l.b16 %v181
        %v380 = vunpack.c.h.b16 %v181
        %v381 = vunpack.c.l.b16 %v182
        %v382 = vunpack.c.h.b16 %v182
        %v383 = vunpack.c.l.b16 %v183
        %v384 = vunpack.c.h.b16 %v183
        %v385 = vunpack.c.l.b16 %v184
        %v386 = vunpack.c.h.b16 %v184
        %v387 = vunpack.c.l.b16 %v185
        %v388 = vunpack.c.h.b16 %v185
        %v389 = vunpack.c.l.b16 %v186
        %v390 = vunpack.c.h.b16 %v186
        %v391 = vunpack.c.l.b16 %v187
        %v392 = vunpack.c.h.b16 %v187
        %v393 = vunpack.c.l.b16 %v188
        %v394 = vunpack.c.h.b16 %v188
        %v395 = vunpack.c.l.b16 %v189
        %v396 = vunpack.c.h.b16 %v189
        %v397 = vunpack.c.l.b16 %v190
        %v398 = vunpack.c.h.b16 %v190
        %v399 = vunpack.c.l.b16 %v191
        %v400 = vunpack.c.h.b16 %v191
        %v401 = vunpack.c.l.b16 %v192
        %v402 = vunpack.c.h.b16 %v192
        %v403 = vunpack.c.l.b16 %v193
        %v404 = vunpack.c.h.b16 %v193
        %v405 = vunpack.c.l.b16 %v194
        %v406 = vunpack.c.h.b16 %v194
        %v407 = vunpack.c.l.b16 %v195
        %v408 = vunpack.c.h.b16 %v195
        %v409 = vunpack.c.l.b16 %v196
        %v410 = vunpack.c.h.b16 %v196
        %v411 = vunpack.c.l.b16 %v197
        %v412 = vunpack.c.h.b16 %v197
        %v413 = vunpack.c.l.b16 %v198
        %v414 = vunpack.c.h.b16 %v198
        %v415 = vunpack.c.l.b16 %v199
        %v416 = vunpack.c.h.b16 %v199
        %v417 = vunpack.c.l.b16 %v200
        %v418 = vunpack.c.h.b16 %v200
        %v419 = vunpack.c.l.b16 %v201
        %v420 = vunpack.c.h.b16 %v201
        %v421 = vunpack.c.l.b16 %v202
        %v422 = vunpack.c.h.b16 %v202
        %v423 = vunpack.c.l.b16 %v203
        %v424 = vunpack.c.h.b16 %v203
        %v425 = vunpack.c.l.b16 %v204
        %v426 = vunpack.c.h.b16 %v204
        %v427 = vunpack.c.l.b16 %v205
        %v428 = vunpack.c.h.b16 %v205
        %v429 = vunpack.c.l.b16 %v206
        %v430 = vunpack.c.h.b16 %v206
        %v431 = vunpack.c.l.b16 %v207
        %v432 = vunpack.c.h.b16 %v207
        %v433 = vunpack.c.l.b16 %v208
        %v434 = vunpack.c.h.b16 %v208
        %v435 = vunpack.c.l.b16 %v209
        %v436 = vunpack.c.h.b16 %v209
        %v437 = vunpack.c.l.b16 %v210
        %v438 = vunpack.c.h.b16 %v210
        %v439 = vunpack.c.l.b16 %v211
        %v440 = vunpack.c.h.b16 %v211
        %v441 = vunpack.c.l.b16 %v212
        %v442 = vunpack.c.h.b16 %v212
        %v443 = vunpack.c.l.b16 %v213
        %v444 = vunpack.c.h.b16 %v213
        %v445 = vunpack.c.l.b16 %v214
        %v446 = vunpack.c.h.b16 %v214
        %v447 = vunpack.c.l.b16 %v215
        %v448 = vunpack.c.h.b16 %v215
        %v449 = vunpack.c.l.b16 %v216
        %v450 = vunpack.c.h.b16 %v216
        %v451 = vunpack.c.l.b16 %v217
        %v452 = vunpack.c.h.b16 %v217
        %v453 = vunpack.c.l.b16 %v218
        %v454 = vunpack.c.h.b16 %v218
        %v455 = vunpack.c.l.b16 %v219
        %v456 = vunpack.c.h.b16 %v219
        %v457 = vunpack.c.l.b16 %v220
        %v458 = vunpack.c.h.b16 %v220
        %v459 = vpack.c.b16 %v369, %v367
        %v460 = vpack.c.b16 %v370, %v368
        %v461 = vpack.c.b16 %v373, %v371
        %v462 = vpack.c.b16 %v374, %v372
        %v463 = vpack.c.b16 %v377, %v375
        %v464 = vpack.c.b16 %v378, %v376
        %v465 = vpack.c.b16 %v381, %v379
        %v466 = vpack.c.b16 %v382, %v380
        %v467 = vpack.c.b16 %v385, %v383
        %v468 = vpack.c.b16 %v386, %v384
        %v469 = vpack.c.b16 %v389, %v387
        %v470 = vpack.c.b16 %v390, %v388
        %v471 = vpack.c.b16 %v393, %v391
        %v472 = vpack.c.b16 %v394, %v392
        %v473 = vpack.c.b16 %v397, %v395
        %v474 = vpack.c.b16 %v398, %v396
        %v475 = vpack.c.b16 %v401, %v399
        %v476 = vpack.c.b16 %v402, %v400
        %v477 = vpack.c.b16 %v405, %v403
        %v478 = vpack.c.b16 %v406, %v404
        %v479 = vpack.c.b16 %v409, %v407
        %v480 = vpack.c.b16 %v410, %v408
        %v481 = vpack.c.b16 %v413, %v411
        %v482 = vpack.c.b16 %v414, %v412
        %v483 = vpack.c.b16 %v417, %v415
        %v484 = vpack.c.b16 %v418, %v416
        %v485 = vpack.c.b16 %v421, %v419
        %v486 = vpack.c.b16 %v422, %v420
        %v487 = vpack.c.b16 %v425, %v423
        %v488 = vpack.c.b16 %v426, %v424
        %v489 = vpack.c.b16 %v429, %v427
        %v490 = vpack.c.b16 %v430, %v428
        %v491 = vpack.c.b16 %v433, %v431
        %v492 = vpack.c.b16 %v434, %v432
        %v493 = vpack.c.b16 %v437, %v435
        %v494 = vpack.c.b16 %v438, %v436
        %v495 = vpack.c.b16 %v441, %v439
        %v496 = vpack.c.b16 %v442, %v440
        %v497 = vpack.c.b16 %v445, %v443
        %v498 = vpack.c.b16 %v446, %v444
        %v499 = vpack.c.b16 %v449, %v447
        %v500 = vpack.c.b16 %v450, %v448
        %v501 = vpack.c.b16 %v453, %v451
        %v502 = vpack.c.b16 %v454, %v452
        %v503 = vpack.c.b16 %v457, %v455
        %v504 = vpack.c.b16 %v458, %v456
        %v628 = vunpack.c.l.b16 %v221
        %v629 = vunpack.c.h.b16 %v221
        %v630 = vunpack.c.l.b16 %v222
        %v631 = vunpack.c.h.b16 %v222
        %v632 = vunpack.c.l.b16 %v223
        %v633 = vunpack.c.h.b16 %v223
        %v634 = vunpack.c.l.b16 %v224
        %v635 = vunpack.c.l.b16 %v225
        %v636 = vunpack.c.h.b16 %v225
        %v637 = vunpack.c.l.b16 %v226
        %v638 = vunpack.c.h.b16 %v226
        %v639 = vunpack.c.l.b16 %v227
        %v640 = vunpack.c.h.b16 %v227
        %v641 = vunpack.c.l.b16 %v228
        %v642 = vunpack.c.l.b16 %v229
        %v643 = vunpack.c.h.b16 %v229
        %v644 = vunpack.c.l.b16 %v230
        %v645 = vunpack.c.h.b16 %v230
        %v646 = vunpack.c.l.b16 %v231
        %v647 = vunpack.c.h.b16 %v231
        %v648 = vunpack.c.l.b16 %v232
        %v649 = vunpack.c.l.b16 %v233
        %v650 = vunpack.c.h.b16 %v233
        %v651 = vunpack.c.l.b16 %v234
        %v652 = vunpack.c.h.b16 %v234
        %v653 = vunpack.c.l.b16 %v235
        %v654 = vunpack.c.h.b16 %v235
        %v655 = vunpack.c.l.b16 %v236
        %v656 = vunpack.c.l.b16 %v237
        %v657 = vunpack.c.h.b16 %v237
        %v658 = vunpack.c.l.b16 %v238
        %v659 = vunpack.c.h.b16 %v238
        %v660 = vunpack.c.l.b16 %v239
        %v661 = vunpack.c.h.b16 %v239
        %v662 = vunpack.c.l.b16 %v240
        %v663 = vunpack.c.l.b16 %v241
        %v664 = vunpack.c.h.b16 %v241
        %v665 = vunpack.c.l.b16 %v242
        %v666 = vunpack.c.h.b16 %v242
        %v667 = vunpack.c.l.b16 %v243
        %v668 = vunpack.c.h.b16 %v243
        %v669 = vunpack.c.l.b16 %v244
        %v670 = vunpack.c.l.b16 %v245
        %v671 = vunpack.c.h.b16 %v245
        %v672 = vunpack.c.l.b16 %v246
        %v673 = vunpack.c.h.b16 %v246
        %v674 = vunpack.c.l.b16 %v247
        %v675 = vunpack.c.h.b16 %v247
        %v676 = vunpack.c.l.b16 %v248
        %v677 = vunpack.c.l.b16 %v249
        %v678 = vunpack.c.h.b16 %v249
        %v679 = vunpack.c.l.b16 %v250
        %v680 = vunpack.c.h.b16 %v250
        %v681 = vunpack.c.l.b16 %v251
        %v682 = vunpack.c.h.b16 %v251
        %v683 = vunpack.c.l.b16 %v252
        %v684 = vunpack.c.l.b16 %v253
        %v685 = vunpack.c.h.b16 %v253
        %v686 = vunpack.c.l.b16 %v254
        %v687 = vunpack.c.h.b16 %v254
        %v688 = vunpack.c.l.b16 %v255
        %v689 = vunpack.c.h.b16 %v255
        %v690 = vunpack.c.l.b16 %v256
        %v691 = vunpack.c.l.b16 %v257
        %v692 = vunpack.c.h.b16 %v257
        %v693 = vunpack.c.l.b16 %v258
        %v694 = vunpack.c.h.b16 %v258
        %v695 = vunpack.c.l.b16 %v259
        %v696 = vunpack.c.h.b16 %v259
        %v697 = vunpack.c.l.b16 %v260
        %v698 = vunpack.c.l.b16 %v261
        %v699 = vunpack.c.h.b16 %v261
        %v700 = vunpack.c.l.b16 %v262
        %v701 = vunpack.c.h.b16 %v262
        %v702 = vunpack.c.l.b16 %v263
        %v703 = vunpack.c.h.b16 %v263
        %v704 = vunpack.c.l.b16 %v264
        %v705 = vunpack.c.l.b16 %v265
        %v706 = vunpack.c.h.b16 %v265
        %v707 = vunpack.c.l.b16 %v266
        %v708 = vunpack.c.h.b16 %v266
        %v709 = vunpack.c.l.b16 %v267
        %v710 = vunpack.c.h.b16 %v267
        %v711 = vunpack.c.l.b16 %v268
        %v712 = vunpack.c.l.b16 %v269
        %v713 = vunpack.c.h.b16 %v269
        %v714 = vunpack.c.l.b16 %v270
        %v715 = vunpack.c.h.b16 %v270
        %v716 = vunpack.c.l.b16 %v271
        %v717 = vunpack.c.h.b16 %v271
        %v718 = vunpack.c.l.b16 %v272
        %v719 = vunpack.c.l.b16 %v273
        %v720 = vunpack.c.h.b16 %v273
        %v721 = vunpack.c.l.b16 %v274
        %v722 = vunpack.c.h.b16 %v274
        %v723 = vunpack.c.l.b16 %v275
        %v724 = vunpack.c.h.b16 %v275
        %v725 = vunpack.c.l.b16 %v276
        %v726 = vunpack.c.l.b16 %v277
        %v727 = vunpack.c.h.b16 %v277
        %v728 = vunpack.c.l.b16 %v278
        %v729 = vunpack.c.h.b16 %v278
        %v730 = vunpack.c.l.b16 %v279
        %v731 = vunpack.c.h.b16 %v279
        %v732 = vunpack.c.l.b16 %v280
        %v733 = vunpack.c.l.b16 %v281
        %v734 = vunpack.c.h.b16 %v281
        %v735 = vunpack.c.l.b16 %v282
        %v736 = vunpack.c.h.b16 %v282
        %v737 = vunpack.c.l.b16 %v283
        %v738 = vunpack.c.h.b16 %v283
        %v739 = vunpack.c.l.b16 %v284
        %v740 = vunpack.c.l.b16 %v285
        %v741 = vunpack.c.h.b16 %v285
        %v742 = vunpack.c.l.b16 %v286
        %v743 = vunpack.c.h.b16 %v286
        %v744 = vunpack.c.l.b16 %v287
        %v745 = vunpack.c.h.b16 %v287
        %v746 = vunpack.c.l.b16 %v288
        %v747 = vunpack.c.l.b16 %v289
        %v748 = vunpack.c.h.b16 %v289
        %v749 = vunpack.c.l.b16 %v290
        %v750 = vunpack.c.h.b16 %v290
        %v751 = vunpack.c.l.b16 %v291
        %v752 = vunpack.c.h.b16 %v291
        %v753 = vunpack.c.l.b16 %v292
        %v754 = vunpack.c.l.b16 %v293
        %v755 = vunpack.c.h.b16 %v293
        %v756 = vunpack.c.l.b16 %v294
        %v757 = vunpack.c.h.b16 %v294
        %v758 = vunpack.c.l.b16 %v295
        %v759 = vunpack.c.h.b16 %v295
        %v760 = vunpack.c.l.b16 %v296
        %v761 = vunpack.c.l.b16 %v297
        %v762 = vunpack.c.h.b16 %v297
        %v763 = vunpack.c.l.b16 %v298
        %v764 = vunpack.c.h.b16 %v298
        %v765 = vunpack.c.l.b16 %v299
        %v766 = vunpack.c.h.b16 %v299
        %v767 = vunpack.c.l.b16 %v300
        %v768 = vunpack.c.l.b16 %v301
        %v769 = vunpack.c.h.b16 %v301
        %v770 = vunpack.c.l.b16 %v302
        %v771 = vunpack.c.h.b16 %v302
        %v772 = vunpack.c.l.b16 %v303
        %v773 = vunpack.c.h.b16 %v303
        %v774 = vunpack.c.l.b16 %v304
        %v775 = vunpack.c.l.b16 %v305
        %v776 = vunpack.c.h.b16 %v305
        %v777 = vunpack.c.l.b16 %v306
        %v778 = vunpack.c.h.b16 %v306
        %v779 = vunpack.c.l.b16 %v307
        %v780 = vunpack.c.h.b16 %v307
        %v781 = vunpack.c.l.b16 %v308
        %v782 = vunpack.c.l.b16 %v309
        %v783 = vunpack.c.h.b16 %v309
        %v784 = vunpack.c.l.b16 %v310
        %v785 = vunpack.c.h.b16 %v310
        %v786 = vunpack.c.l.b16 %v311
        %v787 = vunpack.c.h.b16 %v311
        %v788 = vunpack.c.l.b16 %v312
        %v789 = vunpack.c.l.b16 %v313
        %v790 = vunpack.c.h.b16 %v313
        %v791 = vunpack.c.l.b16 %v314
        %v792 = vunpack.c.h.b16 %v314
        %v793 = vunpack.c.l.b16 %v315
        %v794 = vunpack.c.h.b16 %v315
        %v795 = vunpack.c.l.b16 %v316
        %v796 = vunpack.c.l.b16 %v317
        %v797 = vunpack.c.h.b16 %v317
        %v798 = vunpack.c.l.b16 %v318
        %v799 = vunpack.c.h.b16 %v318
        %v800 = vunpack.c.l.b16 %v319
        %v801 = vunpack.c.h.b16 %v319
        %v802 = vunpack.c.l.b16 %v320
        %v803 = vpack.c.b16 %v635, %v628
        %v804 = vpack.c.b16 %v636, %v629
        %v805 = vpack.c.b16 %v637, %v630
        %v806 = vpack.c.b16 %v638, %v631
        %v807 = vpack.c.b16 %v639, %v632
        %v808 = vpack.c.b16 %v640, %v633
        %v809 = vpack.c.b16 %v641, %v634
        %v810 = vpack.c.b16 %v649, %v642
        %v811 = vpack.c.b16 %v650, %v643
        %v812 = vpack.c.b16 %v651, %v644
        %v813 = vpack.c.b16 %v652, %v645
        %v814 = vpack.c.b16 %v653, %v646
        %v815 = vpack.c.b16 %v654, %v647
        %v816 = vpack.c.b16 %v655, %v648
        %v817 = vpack.c.b16 %v663, %v656
        %v818 = vpack.c.b16 %v664, %v657
        %v819 = vpack.c.b16 %v665, %v658
        %v820 = vpack.c.b16 %v666, %v659
        %v821 = vpack.c.b16 %v667, %v660
        %v822 = vpack.c.b16 %v668, %v661
        %v823 = vpack.c.b16 %v669, %v662
        %v824 = vpack.c.b16 %v677, %v670
        %v825 = vpack.c.b16 %v678, %v671
        %v826 = vpack.c.b16 %v679, %v672
        %v827 = vpack.c.b16 %v680, %v673
        %v828 = vpack.c.b16 %v681, %v674
        %v829 = vpack.c.b16 %v682, %v675
        %v830 = vpack.c.b16 %v683, %v676
        %v831 = vpack.c.b16 %v691, %v684
        %v832 = vpack.c.b16 %v692, %v685
        %v833 = vpack.c.b16 %v693, %v686
        %v834 = vpack.c.b16 %v694, %v687
        %v835 = vpack.c.b16 %v695, %v688
        %v836 = vpack.c.b16 %v696, %v689
        %v837 = vpack.c.b16 %v697, %v690
        %v838 = vpack.c.b16 %v705, %v698
        %v839 = vpack.c.b16 %v706, %v699
        %v840 = vpack.c.b16 %v707, %v700
        %v841 = vpack.c.b16 %v708, %v701
        %v842 = vpack.c.b16 %v709, %v702
        %v843 = vpack.c.b16 %v710, %v703
        %v844 = vpack.c.b16 %v711, %v704
        %v845 = vpack.c.b16 %v719, %v712
        %v846 = vpack.c.b16 %v720, %v713
        %v847 = vpack.c.b16 %v721, %v714
        %v848 = vpack.c.b16 %v722, %v715
        %v849 = vpack.c.b16 %v723, %v716
        %v850 = vpack.c.b16 %v724, %v717
        %v851 = vpack.c.b16 %v725, %v718
        %v852 = vpack.c.b16 %v733, %v726
        %v853 = vpack.c.b16 %v734, %v727
        %v854 = vpack.c.b16 %v735, %v728
        %v855 = vpack.c.b16 %v736, %v729
        %v856 = vpack.c.b16 %v737, %v730
        %v857 = vpack.c.b16 %v738, %v731
        %v858 = vpack.c.b16 %v739, %v732
        %v859 = vpack.c.b16 %v747, %v740
        %v860 = vpack.c.b16 %v748, %v741
        %v861 = vpack.c.b16 %v749, %v742
        %v862 = vpack.c.b16 %v750, %v743
        %v863 = vpack.c.b16 %v751, %v744
        %v864 = vpack.c.b16 %v752, %v745
        %v865 = vpack.c.b16 %v753, %v746
        %v866 = vpack.c.b16 %v761, %v754
        %v867 = vpack.c.b16 %v762, %v755
        %v868 = vpack.c.b16 %v763, %v756
        %v869 = vpack.c.b16 %v764, %v757
        %v870 = vpack.c.b16 %v765, %v758
        %v871 = vpack.c.b16 %v766, %v759
        %v872 = vpack.c.b16 %v767, %v760
        %v873 = vpack.c.b16 %v775, %v768
        %v874 = vpack.c.b16 %v776, %v769
        %v875 = vpack.c.b16 %v777, %v770
        %v876 = vpack.c.b16 %v778, %v771
        %v877 = vpack.c.b16 %v779, %v772
        %v878 = vpack.c.b16 %v780, %v773
        %v879 = vpack.c.b16 %v781, %v774
        %v880 = vpack.c.b16 %v789, %v782
        %v881 = vpack.c.b16 %v790, %v783
        %v882 = vpack.c.b16 %v791, %v784
        %v883 = vpack.c.b16 %v792, %v785
        %v884 = vpack.c.b16 %v793, %v786
        %v885 = vpack.c.b16 %v794, %v787
        %v886 = vpack.c.b16 %v795, %v788
        %v887 = vpack.c.b16 %v796, %v796
        %v888 = vpack.c.b16 %v797, %v797
        %v889 = vpack.c.b16 %v798, %v798
        %v890 = vpack.c.b16 %v799, %v799
        %v891 = vpack.c.b16 %v800, %v800
        %v892 = vpack.c.b16 %v801, %v801
        %v893 = vpack.c.b16 %v802, %v802
        %vm978 = vcmask 588800
        %v980 = vsel %vm978, %v460, 0
        %v983 = vsel %vm978, %v462, 0
        %v986 = vsel %vm978, %v464, 0
        %v989 = vsel %vm978, %v466, 0
        %v992 = vsel %vm978, %v468, 0
        %v995 = vsel %vm978, %v470, 0
        %v998 = vsel %vm978, %v472, 0
        %v1001 = vsel %vm978, %v474, 0
        %v1004 = vsel %vm978, %v476, 0
        %v1007 = vsel %vm978, %v478, 0
        %v1010 = vsel %vm978, %v480, 0
        %v1013 = vsel %vm978, %v482, 0
        %v1016 = vsel %vm978, %v484, 0
        %v1019 = vsel %vm978, %v486, 0
        %v1022 = vsel %vm978, %v488, 0
        %v1025 = vsel %vm978, %v490, 0
        %v1028 = vsel %vm978, %v492, 0
        %v1031 = vsel %vm978, %v494, 0
        %v1034 = vsel %vm978, %v496, 0
        %v1037 = vsel %vm978, %v498, 0
        %v1040 = vsel %vm978, %v500, 0
        %v1043 = vsel %vm978, %v502, 0
        %v1046 = vsel %vm978, %v504, 0
        %vm1048 = vcmask 1043456
        %v1050 = vsel %vm1048, %v887, 0
        %v1053 = vsel %vm1048, %v888, 0
        %v1056 = vsel %vm1048, %v889, 0
        %v1059 = vsel %vm1048, %v890, 0
        %v1062 = vsel %vm1048, %v891, 0
        %v1065 = vsel %vm1048, %v892, 0
        %v1068 = vsel %vm1048, %v893, 0
        %1070 = vmatpush.bf16.msra.mxu0 %v852
        %1071 = vmatpush.bf16.msra.mxu0 %v845
        %1072 = vmatpush.bf16.msra.mxu0 %v838
        %1073 = vmatpush.bf16.msra.mxu0 %v831
        %1074 = vmatpush.bf16.msra.mxu0 %v824
        %1075 = vmatpush.bf16.msra.mxu0 %v817
        %1076 = vmatpush.bf16.msra.mxu0 %v810
        %1077 = vmatpush.bf16.msra.mxu0 %v803
        %1078 = vmatmul.bf16.gmra.mxu0 %v459
        %v1079 = vpop.f32.mrf.mxu0
        %v1080 = vadd.f32 0.0, %v1079
        %v1081 = vpop.f32.mrf.mxu0
        %v1082 = vadd.f32 0.0, %v1081
        %1083 = vmatmul.bf16.gmra.mxu0 %v461
        %v1084 = vpop.f32.mrf.mxu0
        %v1085 = vadd.f32 0.0, %v1084
        %v1086 = vpop.f32.mrf.mxu0
        %v1087 = vadd.f32 0.0, %v1086
        %1088 = vmatmul.bf16.gmra.mxu0 %v463
        %v1089 = vpop.f32.mrf.mxu0
        %v1090 = vadd.f32 0.0, %v1089
        %v1091 = vpop.f32.mrf.mxu0
        %v1092 = vadd.f32 0.0, %v1091
        %1093 = vmatmul.bf16.gmra.mxu0 %v465
        %v1094 = vpop.f32.mrf.mxu0
        %v1095 = vadd.f32 0.0, %v1094
        %v1096 = vpop.f32.mrf.mxu0
        %v1097 = vadd.f32 0.0, %v1096
        %1098 = vmatmul.bf16.gmra.mxu0 %v467
        %v1099 = vpop.f32.mrf.mxu0
        %v1100 = vadd.f32 0.0, %v1099
        %v1101 = vpop.f32.mrf.mxu0
        %v1102 = vadd.f32 0.0, %v1101
        %1103 = vmatmul.bf16.gmra.mxu0 %v469
        %v1104 = vpop.f32.mrf.mxu0
        %v1105 = vadd.f32 0.0, %v1104
        %v1106 = vpop.f32.mrf.mxu0
        %v1107 = vadd.f32 0.0, %v1106
        %1108 = vmatmul.bf16.gmra.mxu0 %v471
        %v1109 = vpop.f32.mrf.mxu0
        %v1110 = vadd.f32 0.0, %v1109
        %v1111 = vpop.f32.mrf.mxu0
        %v1112 = vadd.f32 0.0, %v1111
        %1113 = vmatmul.bf16.gmra.mxu0 %v473
        %v1114 = vpop.f32.mrf.mxu0
        %v1115 = vadd.f32 0.0, %v1114
        %v1116 = vpop.f32.mrf.mxu0
        %v1117 = vadd.f32 0.0, %v1116
        %1118 = vmatmul.bf16.gmra.mxu0 %v475
        %v1119 = vpop.f32.mrf.mxu0
        %v1120 = vadd.f32 0.0, %v1119
        %v1121 = vpop.f32.mrf.mxu0
        %v1122 = vadd.f32 0.0, %v1121
        %1123 = vmatmul.bf16.gmra.mxu0 %v477
        %v1124 = vpop.f32.mrf.mxu0
        %v1125 = vadd.f32 0.0, %v1124
        %v1126 = vpop.f32.mrf.mxu0
        %v1127 = vadd.f32 0.0, %v1126
        %1128 = vmatmul.bf16.gmra.mxu0 %v479
        %v1129 = vpop.f32.mrf.mxu0
        %v1130 = vadd.f32 0.0, %v1129
        %v1131 = vpop.f32.mrf.mxu0
        %v1132 = vadd.f32 0.0, %v1131
        %1133 = vmatmul.bf16.gmra.mxu0 %v481
        %v1134 = vpop.f32.mrf.mxu0
        %v1135 = vadd.f32 0.0, %v1134
        %v1136 = vpop.f32.mrf.mxu0
        %v1137 = vadd.f32 0.0, %v1136
        %1138 = vmatmul.bf16.gmra.mxu0 %v483
        %v1139 = vpop.f32.mrf.mxu0
        %v1140 = vadd.f32 0.0, %v1139
        %v1141 = vpop.f32.mrf.mxu0
        %v1142 = vadd.f32 0.0, %v1141
        %1143 = vmatmul.bf16.gmra.mxu0 %v485
        %v1144 = vpop.f32.mrf.mxu0
        %v1145 = vadd.f32 0.0, %v1144
        %v1146 = vpop.f32.mrf.mxu0
        %v1147 = vadd.f32 0.0, %v1146
        %1148 = vmatmul.bf16.gmra.mxu0 %v487
        %v1149 = vpop.f32.mrf.mxu0
        %v1150 = vadd.f32 0.0, %v1149
        %v1151 = vpop.f32.mrf.mxu0
        %v1152 = vadd.f32 0.0, %v1151
        %1153 = vmatmul.bf16.gmra.mxu0 %v489
        %v1154 = vpop.f32.mrf.mxu0
        %v1155 = vadd.f32 0.0, %v1154
        %v1156 = vpop.f32.mrf.mxu0
        %v1157 = vadd.f32 0.0, %v1156
        %1158 = vmatmul.bf16.gmra.mxu0 %v491
        %v1159 = vpop.f32.mrf.mxu0
        %v1160 = vadd.f32 0.0, %v1159
        %v1161 = vpop.f32.mrf.mxu0
        %v1162 = vadd.f32 0.0, %v1161
        %1163 = vmatmul.bf16.gmra.mxu0 %v493
        %v1164 = vpop.f32.mrf.mxu0
        %v1165 = vadd.f32 0.0, %v1164
        %v1166 = vpop.f32.mrf.mxu0
        %v1167 = vadd.f32 0.0, %v1166
        %1168 = vmatmul.bf16.gmra.mxu0 %v495
        %v1169 = vpop.f32.mrf.mxu0
        %v1170 = vadd.f32 0.0, %v1169
        %v1171 = vpop.f32.mrf.mxu0
        %v1172 = vadd.f32 0.0, %v1171
        %1173 = vmatmul.bf16.gmra.mxu0 %v497
        %v1174 = vpop.f32.mrf.mxu0
        %v1175 = vadd.f32 0.0, %v1174
        %v1176 = vpop.f32.mrf.mxu0
        %v1177 = vadd.f32 0.0, %v1176
        %1178 = vmatmul.bf16.gmra.mxu0 %v499
        %v1179 = vpop.f32.mrf.mxu0
        %v1180 = vadd.f32 0.0, %v1179
        %v1181 = vpop.f32.mrf.mxu0
        %v1182 = vadd.f32 0.0, %v1181
        %1183 = vmatmul.bf16.gmra.mxu0 %v501
        %v1184 = vpop.f32.mrf.mxu0
        %v1185 = vadd.f32 0.0, %v1184
        %v1186 = vpop.f32.mrf.mxu0
        %v1187 = vadd.f32 0.0, %v1186
        %1188 = vmatmul.bf16.gmra.mxu0 %v503
        %v1189 = vpop.f32.mrf.mxu0
        %v1190 = vadd.f32 0.0, %v1189
        %v1191 = vpop.f32.mrf.mxu0
        %v1192 = vadd.f32 0.0, %v1191
        %1193 = vdwg.mxu0
        %1194 = vmatpush.bf16.msra.mxu0 0
        %1195 = vmatpush.bf16.msra.mxu0 0
        %1196 = vmatpush.bf16.msra.mxu0 0
        %1197 = vmatpush.bf16.msra.mxu0 %v1050
        %1198 = vmatpush.bf16.msra.mxu0 %v880
        %1199 = vmatpush.bf16.msra.mxu0 %v873
        %1200 = vmatpush.bf16.msra.mxu0 %v866
        %1201 = vmatpush.bf16.msra.mxu0 %v859
        %1202 = vmatmul.bf16.gmra.mxu0 %v980
        %v1203 = vpop.f32.mrf.mxu0
        %v1204 = vadd.f32 %v1080, %v1203
        %v1205 = vpop.f32.mrf.mxu0
        %v1206 = vadd.f32 %v1082, %v1205
        %1207 = vmatmul.bf16.gmra.mxu0 %v983
        %v1208 = vpop.f32.mrf.mxu0
        %v1209 = vadd.f32 %v1085, %v1208
        %v1210 = vpop.f32.mrf.mxu0
        %v1211 = vadd.f32 %v1087, %v1210
        %1212 = vmatmul.bf16.gmra.mxu0 %v986
        %v1213 = vpop.f32.mrf.mxu0
        %v1214 = vadd.f32 %v1090, %v1213
        %v1215 = vpop.f32.mrf.mxu0
        %v1216 = vadd.f32 %v1092, %v1215
        %1217 = vmatmul.bf16.gmra.mxu0 %v989
        %v1218 = vpop.f32.mrf.mxu0
        %v1219 = vadd.f32 %v1095, %v1218
        %v1220 = vpop.f32.mrf.mxu0
        %v1221 = vadd.f32 %v1097, %v1220
        %1222 = vmatmul.bf16.gmra.mxu0 %v992
        %v1223 = vpop.f32.mrf.mxu0
        %v1224 = vadd.f32 %v1100, %v1223
        %v1225 = vpop.f32.mrf.mxu0
        %v1226 = vadd.f32 %v1102, %v1225
        %1227 = vmatmul.bf16.gmra.mxu0 %v995
        %v1228 = vpop.f32.mrf.mxu0
        %v1229 = vadd.f32 %v1105, %v1228
        %v1230 = vpop.f32.mrf.mxu0
        %v1231 = vadd.f32 %v1107, %v1230
        %1232 = vmatmul.bf16.gmra.mxu0 %v998
        %v1233 = vpop.f32.mrf.mxu0
        %v1234 = vadd.f32 %v1110, %v1233
        %v1235 = vpop.f32.mrf.mxu0
        %v1236 = vadd.f32 %v1112, %v1235
        %1237 = vmatmul.bf16.gmra.mxu0 %v1001
        %v1238 = vpop.f32.mrf.mxu0
        %v1239 = vadd.f32 %v1115, %v1238
        %v1240 = vpop.f32.mrf.mxu0
        %v1241 = vadd.f32 %v1117, %v1240
        %1242 = vmatmul.bf16.gmra.mxu0 %v1004
        %v1243 = vpop.f32.mrf.mxu0
        %v1244 = vadd.f32 %v1120, %v1243
        %v1245 = vpop.f32.mrf.mxu0
        %v1246 = vadd.f32 %v1122, %v1245
        %1247 = vmatmul.bf16.gmra.mxu0 %v1007
        %v1248 = vpop.f32.mrf.mxu0
        %v1249 = vadd.f32 %v1125, %v1248
        %v1250 = vpop.f32.mrf.mxu0
        %v1251 = vadd.f32 %v1127, %v1250
        %1252 = vmatmul.bf16.gmra.mxu0 %v1010
        %v1253 = vpop.f32.mrf.mxu0
        %v1254 = vadd.f32 %v1130, %v1253
        %v1255 = vpop.f32.mrf.mxu0
        %v1256 = vadd.f32 %v1132, %v1255
        %1257 = vmatmul.bf16.gmra.mxu0 %v1013
        %v1258 = vpop.f32.mrf.mxu0
        %v1259 = vadd.f32 %v1135, %v1258
        %v1260 = vpop.f32.mrf.mxu0
        %v1261 = vadd.f32 %v1137, %v1260
        %1262 = vmatmul.bf16.gmra.mxu0 %v1016
        %v1263 = vpop.f32.mrf.mxu0
        %v1264 = vadd.f32 %v1140, %v1263
        %v1265 = vpop.f32.mrf.mxu0
        %v1266 = vadd.f32 %v1142, %v1265
        %1267 = vmatmul.bf16.gmra.mxu0 %v1019
        %v1268 = vpop.f32.mrf.mxu0
        %v1269 = vadd.f32 %v1145, %v1268
        %v1270 = vpop.f32.mrf.mxu0
        %v1271 = vadd.f32 %v1147, %v1270
        %1272 = vmatmul.bf16.gmra.mxu0 %v1022
        %v1273 = vpop.f32.mrf.mxu0
        %v1274 = vadd.f32 %v1150, %v1273
        %v1275 = vpop.f32.mrf.mxu0
        %v1276 = vadd.f32 %v1152, %v1275
        %1277 = vmatmul.bf16.gmra.mxu0 %v1025
        %v1278 = vpop.f32.mrf.mxu0
        %v1279 = vadd.f32 %v1155, %v1278
        %v1280 = vpop.f32.mrf.mxu0
        %v1281 = vadd.f32 %v1157, %v1280
        %1282 = vmatmul.bf16.gmra.mxu0 %v1028
        %v1283 = vpop.f32.mrf.mxu0
        %v1284 = vadd.f32 %v1160, %v1283
        %v1285 = vpop.f32.mrf.mxu0
        %v1286 = vadd.f32 %v1162, %v1285
        %1287 = vmatmul.bf16.gmra.mxu0 %v1031
        %v1288 = vpop.f32.mrf.mxu0
        %v1289 = vadd.f32 %v1165, %v1288
        %v1290 = vpop.f32.mrf.mxu0
        %v1291 = vadd.f32 %v1167, %v1290
        %1292 = vmatmul.bf16.gmra.mxu0 %v1034
        %v1293 = vpop.f32.mrf.mxu0
        %v1294 = vadd.f32 %v1170, %v1293
        %v1295 = vpop.f32.mrf.mxu0
        %v1296 = vadd.f32 %v1172, %v1295
        %1297 = vmatmul.bf16.gmra.mxu0 %v1037
        %v1298 = vpop.f32.mrf.mxu0
        %v1299 = vadd.f32 %v1175, %v1298
        %v1300 = vpop.f32.mrf.mxu0
        %v1301 = vadd.f32 %v1177, %v1300
        %1302 = vmatmul.bf16.gmra.mxu0 %v1040
        %v1303 = vpop.f32.mrf.mxu0
        %v1304 = vadd.f32 %v1180, %v1303
        %v1305 = vpop.f32.mrf.mxu0
        %v1306 = vadd.f32 %v1182, %v1305
        %1307 = vmatmul.bf16.gmra.mxu0 %v1043
        %v1308 = vpop.f32.mrf.mxu0
        %v1309 = vadd.f32 %v1185, %v1308
        %v1310 = vpop.f32.mrf.mxu0
        %v1311 = vadd.f32 %v1187, %v1310
        %1312 = vmatmul.bf16.gmra.mxu0 %v1046
        %v1313 = vpop.f32.mrf.mxu0
        %v1314 = vadd.f32 %v1190, %v1313
        %v1315 = vpop.f32.mrf.mxu0
        %v1316 = vadd.f32 %v1192, %v1315
        %1317 = vdwg.mxu0
        %1318 = vmatpush.bf16.msra.mxu0 %v853
        %1319 = vmatpush.bf16.msra.mxu0 %v846
        %1320 = vmatpush.bf16.msra.mxu0 %v839
        %1321 = vmatpush.bf16.msra.mxu0 %v832
        %1322 = vmatpush.bf16.msra.mxu0 %v825
        %1323 = vmatpush.bf16.msra.mxu0 %v818
        %1324 = vmatpush.bf16.msra.mxu0 %v811
        %1325 = vmatpush.bf16.msra.mxu0 %v804
        %1326 = vmatmul.bf16.gmra.mxu0 %v459
        %v1327 = vpop.f32.mrf.mxu0
        %v1328 = vadd.f32 0.0, %v1327
        %v1329 = vpop.f32.mrf.mxu0
        %v1330 = vadd.f32 0.0, %v1329
        %1331 = vmatmul.bf16.gmra.mxu0 %v461
        %v1332 = vpop.f32.mrf.mxu0
        %v1333 = vadd.f32 0.0, %v1332
        %v1334 = vpop.f32.mrf.mxu0
        %v1335 = vadd.f32 0.0, %v1334
        %1336 = vmatmul.bf16.gmra.mxu0 %v463
        %v1337 = vpop.f32.mrf.mxu0
        %v1338 = vadd.f32 0.0, %v1337
        %v1339 = vpop.f32.mrf.mxu0
        %v1340 = vadd.f32 0.0, %v1339
        %1341 = vmatmul.bf16.gmra.mxu0 %v465
        %v1342 = vpop.f32.mrf.mxu0
        %v1343 = vadd.f32 0.0, %v1342
        %v1344 = vpop.f32.mrf.mxu0
        %v1345 = vadd.f32 0.0, %v1344
        %1346 = vmatmul.bf16.gmra.mxu0 %v467
        %v1347 = vpop.f32.mrf.mxu0
        %v1348 = vadd.f32 0.0, %v1347
        %v1349 = vpop.f32.mrf.mxu0
        %v1350 = vadd.f32 0.0, %v1349
        %1351 = vmatmul.bf16.gmra.mxu0 %v469
        %v1352 = vpop.f32.mrf.mxu0
        %v1353 = vadd.f32 0.0, %v1352
        %v1354 = vpop.f32.mrf.mxu0
        %v1355 = vadd.f32 0.0, %v1354
        %1356 = vmatmul.bf16.gmra.mxu0 %v471
        %v1357 = vpop.f32.mrf.mxu0
        %v1358 = vadd.f32 0.0, %v1357
        %v1359 = vpop.f32.mrf.mxu0
        %v1360 = vadd.f32 0.0, %v1359
        %1361 = vmatmul.bf16.gmra.mxu0 %v473
        %v1362 = vpop.f32.mrf.mxu0
        %v1363 = vadd.f32 0.0, %v1362
        %v1364 = vpop.f32.mrf.mxu0
        %v1365 = vadd.f32 0.0, %v1364
        %1366 = vmatmul.bf16.gmra.mxu0 %v475
        %v1367 = vpop.f32.mrf.mxu0
        %v1368 = vadd.f32 0.0, %v1367
        %v1369 = vpop.f32.mrf.mxu0
        %v1370 = vadd.f32 0.0, %v1369
        %1371 = vmatmul.bf16.gmra.mxu0 %v477
        %v1372 = vpop.f32.mrf.mxu0
        %v1373 = vadd.f32 0.0, %v1372
        %v1374 = vpop.f32.mrf.mxu0
        %v1375 = vadd.f32 0.0, %v1374
        %1376 = vmatmul.bf16.gmra.mxu0 %v479
        %v1377 = vpop.f32.mrf.mxu0
        %v1378 = vadd.f32 0.0, %v1377
        %v1379 = vpop.f32.mrf.mxu0
        %v1380 = vadd.f32 0.0, %v1379
        %1381 = vmatmul.bf16.gmra.mxu0 %v481
        %v1382 = vpop.f32.mrf.mxu0
        %v1383 = vadd.f32 0.0, %v1382
        %v1384 = vpop.f32.mrf.mxu0
        %v1385 = vadd.f32 0.0, %v1384
        %1386 = vmatmul.bf16.gmra.mxu0 %v483
        %v1387 = vpop.f32.mrf.mxu0
        %v1388 = vadd.f32 0.0, %v1387
        %v1389 = vpop.f32.mrf.mxu0
        %v1390 = vadd.f32 0.0, %v1389
        %1391 = vmatmul.bf16.gmra.mxu0 %v485
        %v1392 = vpop.f32.mrf.mxu0
        %v1393 = vadd.f32 0.0, %v1392
        %v1394 = vpop.f32.mrf.mxu0
        %v1395 = vadd.f32 0.0, %v1394
        %1396 = vmatmul.bf16.gmra.mxu0 %v487
        %v1397 = vpop.f32.mrf.mxu0
        %v1398 = vadd.f32 0.0, %v1397
        %v1399 = vpop.f32.mrf.mxu0
        %v1400 = vadd.f32 0.0, %v1399
        %1401 = vmatmul.bf16.gmra.mxu0 %v489
        %v1402 = vpop.f32.mrf.mxu0
        %v1403 = vadd.f32 0.0, %v1402
        %v1404 = vpop.f32.mrf.mxu0
        %v1405 = vadd.f32 0.0, %v1404
        %1406 = vmatmul.bf16.gmra.mxu0 %v491
        %v1407 = vpop.f32.mrf.mxu0
        %v1408 = vadd.f32 0.0, %v1407
        %v1409 = vpop.f32.mrf.mxu0
        %v1410 = vadd.f32 0.0, %v1409
        %1411 = vmatmul.bf16.gmra.mxu0 %v493
        %v1412 = vpop.f32.mrf.mxu0
        %v1413 = vadd.f32 0.0, %v1412
        %v1414 = vpop.f32.mrf.mxu0
        %v1415 = vadd.f32 0.0, %v1414
        %1416 = vmatmul.bf16.gmra.mxu0 %v495
        %v1417 = vpop.f32.mrf.mxu0
        %v1418 = vadd.f32 0.0, %v1417
        %v1419 = vpop.f32.mrf.mxu0
        %v1420 = vadd.f32 0.0, %v1419
        %1421 = vmatmul.bf16.gmra.mxu0 %v497
        %v1422 = vpop.f32.mrf.mxu0
        %v1423 = vadd.f32 0.0, %v1422
        %v1424 = vpop.f32.mrf.mxu0
        %v1425 = vadd.f32 0.0, %v1424
        %1426 = vmatmul.bf16.gmra.mxu0 %v499
        %v1427 = vpop.f32.mrf.mxu0
        %v1428 = vadd.f32 0.0, %v1427
        %v1429 = vpop.f32.mrf.mxu0
        %v1430 = vadd.f32 0.0, %v1429
        %1431 = vmatmul.bf16.gmra.mxu0 %v501
        %v1432 = vpop.f32.mrf.mxu0
        %v1433 = vadd.f32 0.0, %v1432
        %v1434 = vpop.f32.mrf.mxu0
        %v1435 = vadd.f32 0.0, %v1434
        %1436 = vmatmul.bf16.gmra.mxu0 %v503
        %v1437 = vpop.f32.mrf.mxu0
        %v1438 = vadd.f32 0.0, %v1437
        %v1439 = vpop.f32.mrf.mxu0
        %v1440 = vadd.f32 0.0, %v1439
        %1441 = vdwg.mxu0
        %1442 = vmatpush.bf16.msra.mxu0 0
        %1443 = vmatpush.bf16.msra.mxu0 0
        %1444 = vmatpush.bf16.msra.mxu0 0
        %1445 = vmatpush.bf16.msra.mxu0 %v1053
        %1446 = vmatpush.bf16.msra.mxu0 %v881
        %1447 = vmatpush.bf16.msra.mxu0 %v874
        %1448 = vmatpush.bf16.msra.mxu0 %v867
        %1449 = vmatpush.bf16.msra.mxu0 %v860
        %1450 = vmatmul.bf16.gmra.mxu0 %v980
        %v1451 = vpop.f32.mrf.mxu0
        %v1452 = vadd.f32 %v1328, %v1451
        %v1453 = vpop.f32.mrf.mxu0
        %v1454 = vadd.f32 %v1330, %v1453
        %1455 = vmatmul.bf16.gmra.mxu0 %v983
        %v1456 = vpop.f32.mrf.mxu0
        %v1457 = vadd.f32 %v1333, %v1456
        %v1458 = vpop.f32.mrf.mxu0
        %v1459 = vadd.f32 %v1335, %v1458
        %1460 = vmatmul.bf16.gmra.mxu0 %v986
        %v1461 = vpop.f32.mrf.mxu0
        %v1462 = vadd.f32 %v1338, %v1461
        %v1463 = vpop.f32.mrf.mxu0
        %v1464 = vadd.f32 %v1340, %v1463
        %1465 = vmatmul.bf16.gmra.mxu0 %v989
        %v1466 = vpop.f32.mrf.mxu0
        %v1467 = vadd.f32 %v1343, %v1466
        %v1468 = vpop.f32.mrf.mxu0
        %v1469 = vadd.f32 %v1345, %v1468
        %1470 = vmatmul.bf16.gmra.mxu0 %v992
        %v1471 = vpop.f32.mrf.mxu0
        %v1472 = vadd.f32 %v1348, %v1471
        %v1473 = vpop.f32.mrf.mxu0
        %v1474 = vadd.f32 %v1350, %v1473
        %1475 = vmatmul.bf16.gmra.mxu0 %v995
        %v1476 = vpop.f32.mrf.mxu0
        %v1477 = vadd.f32 %v1353, %v1476
        %v1478 = vpop.f32.mrf.mxu0
        %v1479 = vadd.f32 %v1355, %v1478
        %1480 = vmatmul.bf16.gmra.mxu0 %v998
        %v1481 = vpop.f32.mrf.mxu0
        %v1482 = vadd.f32 %v1358, %v1481
        %v1483 = vpop.f32.mrf.mxu0
        %v1484 = vadd.f32 %v1360, %v1483
        %1485 = vmatmul.bf16.gmra.mxu0 %v1001
        %v1486 = vpop.f32.mrf.mxu0
        %v1487 = vadd.f32 %v1363, %v1486
        %v1488 = vpop.f32.mrf.mxu0
        %v1489 = vadd.f32 %v1365, %v1488
        %1490 = vmatmul.bf16.gmra.mxu0 %v1004
        %v1491 = vpop.f32.mrf.mxu0
        %v1492 = vadd.f32 %v1368, %v1491
        %v1493 = vpop.f32.mrf.mxu0
        %v1494 = vadd.f32 %v1370, %v1493
        %1495 = vmatmul.bf16.gmra.mxu0 %v1007
        %v1496 = vpop.f32.mrf.mxu0
        %v1497 = vadd.f32 %v1373, %v1496
        %v1498 = vpop.f32.mrf.mxu0
        %v1499 = vadd.f32 %v1375, %v1498
        %1500 = vmatmul.bf16.gmra.mxu0 %v1010
        %v1501 = vpop.f32.mrf.mxu0
        %v1502 = vadd.f32 %v1378, %v1501
        %v1503 = vpop.f32.mrf.mxu0
        %v1504 = vadd.f32 %v1380, %v1503
        %1505 = vmatmul.bf16.gmra.mxu0 %v1013
        %v1506 = vpop.f32.mrf.mxu0
        %v1507 = vadd.f32 %v1383, %v1506
        %v1508 = vpop.f32.mrf.mxu0
        %v1509 = vadd.f32 %v1385, %v1508
        %1510 = vmatmul.bf16.gmra.mxu0 %v1016
        %v1511 = vpop.f32.mrf.mxu0
        %v1512 = vadd.f32 %v1388, %v1511
        %v1513 = vpop.f32.mrf.mxu0
        %v1514 = vadd.f32 %v1390, %v1513
        %1515 = vmatmul.bf16.gmra.mxu0 %v1019
        %v1516 = vpop.f32.mrf.mxu0
        %v1517 = vadd.f32 %v1393, %v1516
        %v1518 = vpop.f32.mrf.mxu0
        %v1519 = vadd.f32 %v1395, %v1518
        %1520 = vmatmul.bf16.gmra.mxu0 %v1022
        %v1521 = vpop.f32.mrf.mxu0
        %v1522 = vadd.f32 %v1398, %v1521
        %v1523 = vpop.f32.mrf.mxu0
        %v1524 = vadd.f32 %v1400, %v1523
        %1525 = vmatmul.bf16.gmra.mxu0 %v1025
        %v1526 = vpop.f32.mrf.mxu0
        %v1527 = vadd.f32 %v1403, %v1526
        %v1528 = vpop.f32.mrf.mxu0
        %v1529 = vadd.f32 %v1405, %v1528
        %1530 = vmatmul.bf16.gmra.mxu0 %v1028
        %v1531 = vpop.f32.mrf.mxu0
        %v1532 = vadd.f32 %v1408, %v1531
        %v1533 = vpop.f32.mrf.mxu0
        %v1534 = vadd.f32 %v1410, %v1533
        %1535 = vmatmul.bf16.gmra.mxu0 %v1031
        %v1536 = vpop.f32.mrf.mxu0
        %v1537 = vadd.f32 %v1413, %v1536
        %v1538 = vpop.f32.mrf.mxu0
        %v1539 = vadd.f32 %v1415, %v1538
        %1540 = vmatmul.bf16.gmra.mxu0 %v1034
        %v1541 = vpop.f32.mrf.mxu0
        %v1542 = vadd.f32 %v1418, %v1541
        %v1543 = vpop.f32.mrf.mxu0
        %v1544 = vadd.f32 %v1420, %v1543
        %1545 = vmatmul.bf16.gmra.mxu0 %v1037
        %v1546 = vpop.f32.mrf.mxu0
        %v1547 = vadd.f32 %v1423, %v1546
        %v1548 = vpop.f32.mrf.mxu0
        %v1549 = vadd.f32 %v1425, %v1548
        %1550 = vmatmul.bf16.gmra.mxu0 %v1040
        %v1551 = vpop.f32.mrf.mxu0
        %v1552 = vadd.f32 %v1428, %v1551
        %v1553 = vpop.f32.mrf.mxu0
        %v1554 = vadd.f32 %v1430, %v1553
        %1555 = vmatmul.bf16.gmra.mxu0 %v1043
        %v1556 = vpop.f32.mrf.mxu0
        %v1557 = vadd.f32 %v1433, %v1556
        %v1558 = vpop.f32.mrf.mxu0
        %v1559 = vadd.f32 %v1435, %v1558
        %1560 = vmatmul.bf16.gmra.mxu0 %v1046
        %v1561 = vpop.f32.mrf.mxu0
        %v1562 = vadd.f32 %v1438, %v1561
        %v1563 = vpop.f32.mrf.mxu0
        %v1564 = vadd.f32 %v1440, %v1563
        %1565 = vdwg.mxu0
        %1566 = vmatpush.bf16.msra.mxu0 %v854
        %1567 = vmatpush.bf16.msra.mxu0 %v847
        %1568 = vmatpush.bf16.msra.mxu0 %v840
        %1569 = vmatpush.bf16.msra.mxu0 %v833
        %1570 = vmatpush.bf16.msra.mxu0 %v826
        %1571 = vmatpush.bf16.msra.mxu0 %v819
        %1572 = vmatpush.bf16.msra.mxu0 %v812
        %1573 = vmatpush.bf16.msra.mxu0 %v805
        %1574 = vmatmul.bf16.gmra.mxu0 %v459
        %v1575 = vpop.f32.mrf.mxu0
        %v1576 = vadd.f32 0.0, %v1575
        %v1577 = vpop.f32.mrf.mxu0
        %v1578 = vadd.f32 0.0, %v1577
        %1579 = vmatmul.bf16.gmra.mxu0 %v461
        %v1580 = vpop.f32.mrf.mxu0
        %v1581 = vadd.f32 0.0, %v1580
        %v1582 = vpop.f32.mrf.mxu0
        %v1583 = vadd.f32 0.0, %v1582
        %1584 = vmatmul.bf16.gmra.mxu0 %v463
        %v1585 = vpop.f32.mrf.mxu0
        %v1586 = vadd.f32 0.0, %v1585
        %v1587 = vpop.f32.mrf.mxu0
        %v1588 = vadd.f32 0.0, %v1587
        %1589 = vmatmul.bf16.gmra.mxu0 %v465
        %v1590 = vpop.f32.mrf.mxu0
        %v1591 = vadd.f32 0.0, %v1590
        %v1592 = vpop.f32.mrf.mxu0
        %v1593 = vadd.f32 0.0, %v1592
        %1594 = vmatmul.bf16.gmra.mxu0 %v467
        %v1595 = vpop.f32.mrf.mxu0
        %v1596 = vadd.f32 0.0, %v1595
        %v1597 = vpop.f32.mrf.mxu0
        %v1598 = vadd.f32 0.0, %v1597
        %1599 = vmatmul.bf16.gmra.mxu0 %v469
        %v1600 = vpop.f32.mrf.mxu0
        %v1601 = vadd.f32 0.0, %v1600
        %v1602 = vpop.f32.mrf.mxu0
        %v1603 = vadd.f32 0.0, %v1602
        %1604 = vmatmul.bf16.gmra.mxu0 %v471
        %v1605 = vpop.f32.mrf.mxu0
        %v1606 = vadd.f32 0.0, %v1605
        %v1607 = vpop.f32.mrf.mxu0
        %v1608 = vadd.f32 0.0, %v1607
        %1609 = vmatmul.bf16.gmra.mxu0 %v473
        %v1610 = vpop.f32.mrf.mxu0
        %v1611 = vadd.f32 0.0, %v1610
        %v1612 = vpop.f32.mrf.mxu0
        %v1613 = vadd.f32 0.0, %v1612
        %1614 = vmatmul.bf16.gmra.mxu0 %v475
        %v1615 = vpop.f32.mrf.mxu0
        %v1616 = vadd.f32 0.0, %v1615
        %v1617 = vpop.f32.mrf.mxu0
        %v1618 = vadd.f32 0.0, %v1617
        %1619 = vmatmul.bf16.gmra.mxu0 %v477
        %v1620 = vpop.f32.mrf.mxu0
        %v1621 = vadd.f32 0.0, %v1620
        %v1622 = vpop.f32.mrf.mxu0
        %v1623 = vadd.f32 0.0, %v1622
        %1624 = vmatmul.bf16.gmra.mxu0 %v479
        %v1625 = vpop.f32.mrf.mxu0
        %v1626 = vadd.f32 0.0, %v1625
        %v1627 = vpop.f32.mrf.mxu0
        %v1628 = vadd.f32 0.0, %v1627
        %1629 = vmatmul.bf16.gmra.mxu0 %v481
        %v1630 = vpop.f32.mrf.mxu0
        %v1631 = vadd.f32 0.0, %v1630
        %v1632 = vpop.f32.mrf.mxu0
        %v1633 = vadd.f32 0.0, %v1632
        %1634 = vmatmul.bf16.gmra.mxu0 %v483
        %v1635 = vpop.f32.mrf.mxu0
        %v1636 = vadd.f32 0.0, %v1635
        %v1637 = vpop.f32.mrf.mxu0
        %v1638 = vadd.f32 0.0, %v1637
        %1639 = vmatmul.bf16.gmra.mxu0 %v485
        %v1640 = vpop.f32.mrf.mxu0
        %v1641 = vadd.f32 0.0, %v1640
        %v1642 = vpop.f32.mrf.mxu0
        %v1643 = vadd.f32 0.0, %v1642
        %1644 = vmatmul.bf16.gmra.mxu0 %v487
        %v1645 = vpop.f32.mrf.mxu0
        %v1646 = vadd.f32 0.0, %v1645
        %v1647 = vpop.f32.mrf.mxu0
        %v1648 = vadd.f32 0.0, %v1647
        %1649 = vmatmul.bf16.gmra.mxu0 %v489
        %v1650 = vpop.f32.mrf.mxu0
        %v1651 = vadd.f32 0.0, %v1650
        %v1652 = vpop.f32.mrf.mxu0
        %v1653 = vadd.f32 0.0, %v1652
        %1654 = vmatmul.bf16.gmra.mxu0 %v491
        %v1655 = vpop.f32.mrf.mxu0
        %v1656 = vadd.f32 0.0, %v1655
        %v1657 = vpop.f32.mrf.mxu0
        %v1658 = vadd.f32 0.0, %v1657
        %1659 = vmatmul.bf16.gmra.mxu0 %v493
        %v1660 = vpop.f32.mrf.mxu0
        %v1661 = vadd.f32 0.0, %v1660
        %v1662 = vpop.f32.mrf.mxu0
        %v1663 = vadd.f32 0.0, %v1662
        %1664 = vmatmul.bf16.gmra.mxu0 %v495
        %v1665 = vpop.f32.mrf.mxu0
        %v1666 = vadd.f32 0.0, %v1665
        %v1667 = vpop.f32.mrf.mxu0
        %v1668 = vadd.f32 0.0, %v1667
        %1669 = vmatmul.bf16.gmra.mxu0 %v497
        %v1670 = vpop.f32.mrf.mxu0
        %v1671 = vadd.f32 0.0, %v1670
        %v1672 = vpop.f32.mrf.mxu0
        %v1673 = vadd.f32 0.0, %v1672
        %1674 = vmatmul.bf16.gmra.mxu0 %v499
        %v1675 = vpop.f32.mrf.mxu0
        %v1676 = vadd.f32 0.0, %v1675
        %v1677 = vpop.f32.mrf.mxu0
        %v1678 = vadd.f32 0.0, %v1677
        %1679 = vmatmul.bf16.gmra.mxu0 %v501
        %v1680 = vpop.f32.mrf.mxu0
        %v1681 = vadd.f32 0.0, %v1680
        %v1682 = vpop.f32.mrf.mxu0
        %v1683 = vadd.f32 0.0, %v1682
        %1684 = vmatmul.bf16.gmra.mxu0 %v503
        %v1685 = vpop.f32.mrf.mxu0
        %v1686 = vadd.f32 0.0, %v1685
        %v1687 = vpop.f32.mrf.mxu0
        %v1688 = vadd.f32 0.0, %v1687
        %1689 = vdwg.mxu0
        %1690 = vmatpush.bf16.msra.mxu0 0
        %1691 = vmatpush.bf16.msra.mxu0 0
        %1692 = vmatpush.bf16.msra.mxu0 0
        %1693 = vmatpush.bf16.msra.mxu0 %v1056
        %1694 = vmatpush.bf16.msra.mxu0 %v882
        %1695 = vmatpush.bf16.msra.mxu0 %v875
        %1696 = vmatpush.bf16.msra.mxu0 %v868
        %1697 = vmatpush.bf16.msra.mxu0 %v861
        %1698 = vmatmul.bf16.gmra.mxu0 %v980
        %v1699 = vpop.f32.mrf.mxu0
        %v1700 = vadd.f32 %v1576, %v1699
        %v1701 = vpop.f32.mrf.mxu0
        %v1702 = vadd.f32 %v1578, %v1701
        %1703 = vmatmul.bf16.gmra.mxu0 %v983
        %v1704 = vpop.f32.mrf.mxu0
        %v1705 = vadd.f32 %v1581, %v1704
        %v1706 = vpop.f32.mrf.mxu0
        %v1707 = vadd.f32 %v1583, %v1706
        %1708 = vmatmul.bf16.gmra.mxu0 %v986
        %v1709 = vpop.f32.mrf.mxu0
        %v1710 = vadd.f32 %v1586, %v1709
        %v1711 = vpop.f32.mrf.mxu0
        %v1712 = vadd.f32 %v1588, %v1711
        %1713 = vmatmul.bf16.gmra.mxu0 %v989
        %v1714 = vpop.f32.mrf.mxu0
        %v1715 = vadd.f32 %v1591, %v1714
        %v1716 = vpop.f32.mrf.mxu0
        %v1717 = vadd.f32 %v1593, %v1716
        %1718 = vmatmul.bf16.gmra.mxu0 %v992
        %v1719 = vpop.f32.mrf.mxu0
        %v1720 = vadd.f32 %v1596, %v1719
        %v1721 = vpop.f32.mrf.mxu0
        %v1722 = vadd.f32 %v1598, %v1721
        %1723 = vmatmul.bf16.gmra.mxu0 %v995
        %v1724 = vpop.f32.mrf.mxu0
        %v1725 = vadd.f32 %v1601, %v1724
        %v1726 = vpop.f32.mrf.mxu0
        %v1727 = vadd.f32 %v1603, %v1726
        %1728 = vmatmul.bf16.gmra.mxu0 %v998
        %v1729 = vpop.f32.mrf.mxu0
        %v1730 = vadd.f32 %v1606, %v1729
        %v1731 = vpop.f32.mrf.mxu0
        %v1732 = vadd.f32 %v1608, %v1731
        %1733 = vmatmul.bf16.gmra.mxu0 %v1001
        %v1734 = vpop.f32.mrf.mxu0
        %v1735 = vadd.f32 %v1611, %v1734
        %v1736 = vpop.f32.mrf.mxu0
        %v1737 = vadd.f32 %v1613, %v1736
        %1738 = vmatmul.bf16.gmra.mxu0 %v1004
        %v1739 = vpop.f32.mrf.mxu0
        %v1740 = vadd.f32 %v1616, %v1739
        %v1741 = vpop.f32.mrf.mxu0
        %v1742 = vadd.f32 %v1618, %v1741
        %1743 = vmatmul.bf16.gmra.mxu0 %v1007
        %v1744 = vpop.f32.mrf.mxu0
        %v1745 = vadd.f32 %v1621, %v1744
        %v1746 = vpop.f32.mrf.mxu0
        %v1747 = vadd.f32 %v1623, %v1746
        %1748 = vmatmul.bf16.gmra.mxu0 %v1010
        %v1749 = vpop.f32.mrf.mxu0
        %v1750 = vadd.f32 %v1626, %v1749
        %v1751 = vpop.f32.mrf.mxu0
        %v1752 = vadd.f32 %v1628, %v1751
        %1753 = vmatmul.bf16.gmra.mxu0 %v1013
        %v1754 = vpop.f32.mrf.mxu0
        %v1755 = vadd.f32 %v1631, %v1754
        %v1756 = vpop.f32.mrf.mxu0
        %v1757 = vadd.f32 %v1633, %v1756
        %1758 = vmatmul.bf16.gmra.mxu0 %v1016
        %v1759 = vpop.f32.mrf.mxu0
        %v1760 = vadd.f32 %v1636, %v1759
        %v1761 = vpop.f32.mrf.mxu0
        %v1762 = vadd.f32 %v1638, %v1761
        %1763 = vmatmul.bf16.gmra.mxu0 %v1019
        %v1764 = vpop.f32.mrf.mxu0
        %v1765 = vadd.f32 %v1641, %v1764
        %v1766 = vpop.f32.mrf.mxu0
        %v1767 = vadd.f32 %v1643, %v1766
        %1768 = vmatmul.bf16.gmra.mxu0 %v1022
        %v1769 = vpop.f32.mrf.mxu0
        %v1770 = vadd.f32 %v1646, %v1769
        %v1771 = vpop.f32.mrf.mxu0
        %v1772 = vadd.f32 %v1648, %v1771
        %1773 = vmatmul.bf16.gmra.mxu0 %v1025
        %v1774 = vpop.f32.mrf.mxu0
        %v1775 = vadd.f32 %v1651, %v1774
        %v1776 = vpop.f32.mrf.mxu0
        %v1777 = vadd.f32 %v1653, %v1776
        %1778 = vmatmul.bf16.gmra.mxu0 %v1028
        %v1779 = vpop.f32.mrf.mxu0
        %v1780 = vadd.f32 %v1656, %v1779
        %v1781 = vpop.f32.mrf.mxu0
        %v1782 = vadd.f32 %v1658, %v1781
        %1783 = vmatmul.bf16.gmra.mxu0 %v1031
        %v1784 = vpop.f32.mrf.mxu0
        %v1785 = vadd.f32 %v1661, %v1784
        %v1786 = vpop.f32.mrf.mxu0
        %v1787 = vadd.f32 %v1663, %v1786
        %1788 = vmatmul.bf16.gmra.mxu0 %v1034
        %v1789 = vpop.f32.mrf.mxu0
        %v1790 = vadd.f32 %v1666, %v1789
        %v1791 = vpop.f32.mrf.mxu0
        %v1792 = vadd.f32 %v1668, %v1791
        %1793 = vmatmul.bf16.gmra.mxu0 %v1037
        %v1794 = vpop.f32.mrf.mxu0
        %v1795 = vadd.f32 %v1671, %v1794
        %v1796 = vpop.f32.mrf.mxu0
        %v1797 = vadd.f32 %v1673, %v1796
        %1798 = vmatmul.bf16.gmra.mxu0 %v1040
        %v1799 = vpop.f32.mrf.mxu0
        %v1800 = vadd.f32 %v1676, %v1799
        %v1801 = vpop.f32.mrf.mxu0
        %v1802 = vadd.f32 %v1678, %v1801
        %1803 = vmatmul.bf16.gmra.mxu0 %v1043
        %v1804 = vpop.f32.mrf.mxu0
        %v1805 = vadd.f32 %v1681, %v1804
        %v1806 = vpop.f32.mrf.mxu0
        %v1807 = vadd.f32 %v1683, %v1806
        %1808 = vmatmul.bf16.gmra.mxu0 %v1046
        %v1809 = vpop.f32.mrf.mxu0
        %v1810 = vadd.f32 %v1686, %v1809
        %v1811 = vpop.f32.mrf.mxu0
        %v1812 = vadd.f32 %v1688, %v1811
        %1813 = vdwg.mxu0
        %1814 = vmatpush.bf16.msra.mxu0 %v855
        %1815 = vmatpush.bf16.msra.mxu0 %v848
        %1816 = vmatpush.bf16.msra.mxu0 %v841
        %1817 = vmatpush.bf16.msra.mxu0 %v834
        %1818 = vmatpush.bf16.msra.mxu0 %v827
        %1819 = vmatpush.bf16.msra.mxu0 %v820
        %1820 = vmatpush.bf16.msra.mxu0 %v813
        %1821 = vmatpush.bf16.msra.mxu0 %v806
        %1822 = vmatmul.bf16.gmra.mxu0 %v459
        %v1823 = vpop.f32.mrf.mxu0
        %v1824 = vadd.f32 0.0, %v1823
        %v1825 = vpop.f32.mrf.mxu0
        %v1826 = vadd.f32 0.0, %v1825
        %1827 = vmatmul.bf16.gmra.mxu0 %v461
        %v1828 = vpop.f32.mrf.mxu0
        %v1829 = vadd.f32 0.0, %v1828
        %v1830 = vpop.f32.mrf.mxu0
        %v1831 = vadd.f32 0.0, %v1830
        %1832 = vmatmul.bf16.gmra.mxu0 %v463
        %v1833 = vpop.f32.mrf.mxu0
        %v1834 = vadd.f32 0.0, %v1833
        %v1835 = vpop.f32.mrf.mxu0
        %v1836 = vadd.f32 0.0, %v1835
        %1837 = vmatmul.bf16.gmra.mxu0 %v465
        %v1838 = vpop.f32.mrf.mxu0
        %v1839 = vadd.f32 0.0, %v1838
        %v1840 = vpop.f32.mrf.mxu0
        %v1841 = vadd.f32 0.0, %v1840
        %1842 = vmatmul.bf16.gmra.mxu0 %v467
        %v1843 = vpop.f32.mrf.mxu0
        %v1844 = vadd.f32 0.0, %v1843
        %v1845 = vpop.f32.mrf.mxu0
        %v1846 = vadd.f32 0.0, %v1845
        %1847 = vmatmul.bf16.gmra.mxu0 %v469
        %v1848 = vpop.f32.mrf.mxu0
        %v1849 = vadd.f32 0.0, %v1848
        %v1850 = vpop.f32.mrf.mxu0
        %v1851 = vadd.f32 0.0, %v1850
        %1852 = vmatmul.bf16.gmra.mxu0 %v471
        %v1853 = vpop.f32.mrf.mxu0
        %v1854 = vadd.f32 0.0, %v1853
        %v1855 = vpop.f32.mrf.mxu0
        %v1856 = vadd.f32 0.0, %v1855
        %1857 = vmatmul.bf16.gmra.mxu0 %v473
        %v1858 = vpop.f32.mrf.mxu0
        %v1859 = vadd.f32 0.0, %v1858
        %v1860 = vpop.f32.mrf.mxu0
        %v1861 = vadd.f32 0.0, %v1860
        %1862 = vmatmul.bf16.gmra.mxu0 %v475
        %v1863 = vpop.f32.mrf.mxu0
        %v1864 = vadd.f32 0.0, %v1863
        %v1865 = vpop.f32.mrf.mxu0
        %v1866 = vadd.f32 0.0, %v1865
        %1867 = vmatmul.bf16.gmra.mxu0 %v477
        %v1868 = vpop.f32.mrf.mxu0
        %v1869 = vadd.f32 0.0, %v1868
        %v1870 = vpop.f32.mrf.mxu0
        %v1871 = vadd.f32 0.0, %v1870
        %1872 = vmatmul.bf16.gmra.mxu0 %v479
        %v1873 = vpop.f32.mrf.mxu0
        %v1874 = vadd.f32 0.0, %v1873
        %v1875 = vpop.f32.mrf.mxu0
        %v1876 = vadd.f32 0.0, %v1875
        %1877 = vmatmul.bf16.gmra.mxu0 %v481
        %v1878 = vpop.f32.mrf.mxu0
        %v1879 = vadd.f32 0.0, %v1878
        %v1880 = vpop.f32.mrf.mxu0
        %v1881 = vadd.f32 0.0, %v1880
        %1882 = vmatmul.bf16.gmra.mxu0 %v483
        %v1883 = vpop.f32.mrf.mxu0
        %v1884 = vadd.f32 0.0, %v1883
        %v1885 = vpop.f32.mrf.mxu0
        %v1886 = vadd.f32 0.0, %v1885
        %1887 = vmatmul.bf16.gmra.mxu0 %v485
        %v1888 = vpop.f32.mrf.mxu0
        %v1889 = vadd.f32 0.0, %v1888
        %v1890 = vpop.f32.mrf.mxu0
        %v1891 = vadd.f32 0.0, %v1890
        %1892 = vmatmul.bf16.gmra.mxu0 %v487
        %v1893 = vpop.f32.mrf.mxu0
        %v1894 = vadd.f32 0.0, %v1893
        %v1895 = vpop.f32.mrf.mxu0
        %v1896 = vadd.f32 0.0, %v1895
        %1897 = vmatmul.bf16.gmra.mxu0 %v489
        %v1898 = vpop.f32.mrf.mxu0
        %v1899 = vadd.f32 0.0, %v1898
        %v1900 = vpop.f32.mrf.mxu0
        %v1901 = vadd.f32 0.0, %v1900
        %1902 = vmatmul.bf16.gmra.mxu0 %v491
        %v1903 = vpop.f32.mrf.mxu0
        %v1904 = vadd.f32 0.0, %v1903
        %v1905 = vpop.f32.mrf.mxu0
        %v1906 = vadd.f32 0.0, %v1905
        %1907 = vmatmul.bf16.gmra.mxu0 %v493
        %v1908 = vpop.f32.mrf.mxu0
        %v1909 = vadd.f32 0.0, %v1908
        %v1910 = vpop.f32.mrf.mxu0
        %v1911 = vadd.f32 0.0, %v1910
        %1912 = vmatmul.bf16.gmra.mxu0 %v495
        %v1913 = vpop.f32.mrf.mxu0
        %v1914 = vadd.f32 0.0, %v1913
        %v1915 = vpop.f32.mrf.mxu0
        %v1916 = vadd.f32 0.0, %v1915
        %1917 = vmatmul.bf16.gmra.mxu0 %v497
        %v1918 = vpop.f32.mrf.mxu0
        %v1919 = vadd.f32 0.0, %v1918
        %v1920 = vpop.f32.mrf.mxu0
        %v1921 = vadd.f32 0.0, %v1920
        %1922 = vmatmul.bf16.gmra.mxu0 %v499
        %v1923 = vpop.f32.mrf.mxu0
        %v1924 = vadd.f32 0.0, %v1923
        %v1925 = vpop.f32.mrf.mxu0
        %v1926 = vadd.f32 0.0, %v1925
        %1927 = vmatmul.bf16.gmra.mxu0 %v501
        %v1928 = vpop.f32.mrf.mxu0
        %v1929 = vadd.f32 0.0, %v1928
        %v1930 = vpop.f32.mrf.mxu0
        %v1931 = vadd.f32 0.0, %v1930
        %1932 = vmatmul.bf16.gmra.mxu0 %v503
        %v1933 = vpop.f32.mrf.mxu0
        %v1934 = vadd.f32 0.0, %v1933
        %v1935 = vpop.f32.mrf.mxu0
        %v1936 = vadd.f32 0.0, %v1935
        %1937 = vdwg.mxu0
        %1938 = vmatpush.bf16.msra.mxu0 0
        %1939 = vmatpush.bf16.msra.mxu0 0
        %1940 = vmatpush.bf16.msra.mxu0 0
        %1941 = vmatpush.bf16.msra.mxu0 %v1059
        %1942 = vmatpush.bf16.msra.mxu0 %v883
        %1943 = vmatpush.bf16.msra.mxu0 %v876
        %1944 = vmatpush.bf16.msra.mxu0 %v869
        %1945 = vmatpush.bf16.msra.mxu0 %v862
        %1946 = vmatmul.bf16.gmra.mxu0 %v980
        %v1947 = vpop.f32.mrf.mxu0
        %v1948 = vadd.f32 %v1824, %v1947
        %v1949 = vpop.f32.mrf.mxu0
        %v1950 = vadd.f32 %v1826, %v1949
        %1951 = vmatmul.bf16.gmra.mxu0 %v983
        %v1952 = vpop.f32.mrf.mxu0
        %v1953 = vadd.f32 %v1829, %v1952
        %v1954 = vpop.f32.mrf.mxu0
        %v1955 = vadd.f32 %v1831, %v1954
        %1956 = vmatmul.bf16.gmra.mxu0 %v986
        %v1957 = vpop.f32.mrf.mxu0
        %v1958 = vadd.f32 %v1834, %v1957
        %v1959 = vpop.f32.mrf.mxu0
        %v1960 = vadd.f32 %v1836, %v1959
        %1961 = vmatmul.bf16.gmra.mxu0 %v989
        %v1962 = vpop.f32.mrf.mxu0
        %v1963 = vadd.f32 %v1839, %v1962
        %v1964 = vpop.f32.mrf.mxu0
        %v1965 = vadd.f32 %v1841, %v1964
        %1966 = vmatmul.bf16.gmra.mxu0 %v992
        %v1967 = vpop.f32.mrf.mxu0
        %v1968 = vadd.f32 %v1844, %v1967
        %v1969 = vpop.f32.mrf.mxu0
        %v1970 = vadd.f32 %v1846, %v1969
        %1971 = vmatmul.bf16.gmra.mxu0 %v995
        %v1972 = vpop.f32.mrf.mxu0
        %v1973 = vadd.f32 %v1849, %v1972
        %v1974 = vpop.f32.mrf.mxu0
        %v1975 = vadd.f32 %v1851, %v1974
        %1976 = vmatmul.bf16.gmra.mxu0 %v998
        %v1977 = vpop.f32.mrf.mxu0
        %v1978 = vadd.f32 %v1854, %v1977
        %v1979 = vpop.f32.mrf.mxu0
        %v1980 = vadd.f32 %v1856, %v1979
        %1981 = vmatmul.bf16.gmra.mxu0 %v1001
        %v1982 = vpop.f32.mrf.mxu0
        %v1983 = vadd.f32 %v1859, %v1982
        %v1984 = vpop.f32.mrf.mxu0
        %v1985 = vadd.f32 %v1861, %v1984
        %1986 = vmatmul.bf16.gmra.mxu0 %v1004
        %v1987 = vpop.f32.mrf.mxu0
        %v1988 = vadd.f32 %v1864, %v1987
        %v1989 = vpop.f32.mrf.mxu0
        %v1990 = vadd.f32 %v1866, %v1989
        %1991 = vmatmul.bf16.gmra.mxu0 %v1007
        %v1992 = vpop.f32.mrf.mxu0
        %v1993 = vadd.f32 %v1869, %v1992
        %v1994 = vpop.f32.mrf.mxu0
        %v1995 = vadd.f32 %v1871, %v1994
        %1996 = vmatmul.bf16.gmra.mxu0 %v1010
        %v1997 = vpop.f32.mrf.mxu0
        %v1998 = vadd.f32 %v1874, %v1997
        %v1999 = vpop.f32.mrf.mxu0
        %v2000 = vadd.f32 %v1876, %v1999
        %2001 = vmatmul.bf16.gmra.mxu0 %v1013
        %v2002 = vpop.f32.mrf.mxu0
        %v2003 = vadd.f32 %v1879, %v2002
        %v2004 = vpop.f32.mrf.mxu0
        %v2005 = vadd.f32 %v1881, %v2004
        %2006 = vmatmul.bf16.gmra.mxu0 %v1016
        %v2007 = vpop.f32.mrf.mxu0
        %v2008 = vadd.f32 %v1884, %v2007
        %v2009 = vpop.f32.mrf.mxu0
        %v2010 = vadd.f32 %v1886, %v2009
        %2011 = vmatmul.bf16.gmra.mxu0 %v1019
        %v2012 = vpop.f32.mrf.mxu0
        %v2013 = vadd.f32 %v1889, %v2012
        %v2014 = vpop.f32.mrf.mxu0
        %v2015 = vadd.f32 %v1891, %v2014
        %2016 = vmatmul.bf16.gmra.mxu0 %v1022
        %v2017 = vpop.f32.mrf.mxu0
        %v2018 = vadd.f32 %v1894, %v2017
        %v2019 = vpop.f32.mrf.mxu0
        %v2020 = vadd.f32 %v1896, %v2019
        %2021 = vmatmul.bf16.gmra.mxu0 %v1025
        %v2022 = vpop.f32.mrf.mxu0
        %v2023 = vadd.f32 %v1899, %v2022
        %v2024 = vpop.f32.mrf.mxu0
        %v2025 = vadd.f32 %v1901, %v2024
        %2026 = vmatmul.bf16.gmra.mxu0 %v1028
        %v2027 = vpop.f32.mrf.mxu0
        %v2028 = vadd.f32 %v1904, %v2027
        %v2029 = vpop.f32.mrf.mxu0
        %v2030 = vadd.f32 %v1906, %v2029
        %2031 = vmatmul.bf16.gmra.mxu0 %v1031
        %v2032 = vpop.f32.mrf.mxu0
        %v2033 = vadd.f32 %v1909, %v2032
        %v2034 = vpop.f32.mrf.mxu0
        %v2035 = vadd.f32 %v1911, %v2034
        %2036 = vmatmul.bf16.gmra.mxu0 %v1034
        %v2037 = vpop.f32.mrf.mxu0
        %v2038 = vadd.f32 %v1914, %v2037
        %v2039 = vpop.f32.mrf.mxu0
        %v2040 = vadd.f32 %v1916, %v2039
        %2041 = vmatmul.bf16.gmra.mxu0 %v1037
        %v2042 = vpop.f32.mrf.mxu0
        %v2043 = vadd.f32 %v1919, %v2042
        %v2044 = vpop.f32.mrf.mxu0
        %v2045 = vadd.f32 %v1921, %v2044
        %2046 = vmatmul.bf16.gmra.mxu0 %v1040
        %v2047 = vpop.f32.mrf.mxu0
        %v2048 = vadd.f32 %v1924, %v2047
        %v2049 = vpop.f32.mrf.mxu0
        %v2050 = vadd.f32 %v1926, %v2049
        %2051 = vmatmul.bf16.gmra.mxu0 %v1043
        %v2052 = vpop.f32.mrf.mxu0
        %v2053 = vadd.f32 %v1929, %v2052
        %v2054 = vpop.f32.mrf.mxu0
        %v2055 = vadd.f32 %v1931, %v2054
        %2056 = vmatmul.bf16.gmra.mxu0 %v1046
        %v2057 = vpop.f32.mrf.mxu0
        %v2058 = vadd.f32 %v1934, %v2057
        %v2059 = vpop.f32.mrf.mxu0
        %v2060 = vadd.f32 %v1936, %v2059
        %2061 = vdwg.mxu0
        %2062 = vmatpush.bf16.msra.mxu0 %v856
        %2063 = vmatpush.bf16.msra.mxu0 %v849
        %2064 = vmatpush.bf16.msra.mxu0 %v842
        %2065 = vmatpush.bf16.msra.mxu0 %v835
        %2066 = vmatpush.bf16.msra.mxu0 %v828
        %2067 = vmatpush.bf16.msra.mxu0 %v821
        %2068 = vmatpush.bf16.msra.mxu0 %v814
        %2069 = vmatpush.bf16.msra.mxu0 %v807
        %2070 = vmatmul.bf16.gmra.mxu0 %v459
        %v2071 = vpop.f32.mrf.mxu0
        %v2072 = vadd.f32 0.0, %v2071
        %v2073 = vpop.f32.mrf.mxu0
        %v2074 = vadd.f32 0.0, %v2073
        %2075 = vmatmul.bf16.gmra.mxu0 %v461
        %v2076 = vpop.f32.mrf.mxu0
        %v2077 = vadd.f32 0.0, %v2076
        %v2078 = vpop.f32.mrf.mxu0
        %v2079 = vadd.f32 0.0, %v2078
        %2080 = vmatmul.bf16.gmra.mxu0 %v463
        %v2081 = vpop.f32.mrf.mxu0
        %v2082 = vadd.f32 0.0, %v2081
        %v2083 = vpop.f32.mrf.mxu0
        %v2084 = vadd.f32 0.0, %v2083
        %2085 = vmatmul.bf16.gmra.mxu0 %v465
        %v2086 = vpop.f32.mrf.mxu0
        %v2087 = vadd.f32 0.0, %v2086
        %v2088 = vpop.f32.mrf.mxu0
        %v2089 = vadd.f32 0.0, %v2088
        %2090 = vmatmul.bf16.gmra.mxu0 %v467
        %v2091 = vpop.f32.mrf.mxu0
        %v2092 = vadd.f32 0.0, %v2091
        %v2093 = vpop.f32.mrf.mxu0
        %v2094 = vadd.f32 0.0, %v2093
        %2095 = vmatmul.bf16.gmra.mxu0 %v469
        %v2096 = vpop.f32.mrf.mxu0
        %v2097 = vadd.f32 0.0, %v2096
        %v2098 = vpop.f32.mrf.mxu0
        %v2099 = vadd.f32 0.0, %v2098
        %2100 = vmatmul.bf16.gmra.mxu0 %v471
        %v2101 = vpop.f32.mrf.mxu0
        %v2102 = vadd.f32 0.0, %v2101
        %v2103 = vpop.f32.mrf.mxu0
        %v2104 = vadd.f32 0.0, %v2103
        %2105 = vmatmul.bf16.gmra.mxu0 %v473
        %v2106 = vpop.f32.mrf.mxu0
        %v2107 = vadd.f32 0.0, %v2106
        %v2108 = vpop.f32.mrf.mxu0
        %v2109 = vadd.f32 0.0, %v2108
        %2110 = vmatmul.bf16.gmra.mxu0 %v475
        %v2111 = vpop.f32.mrf.mxu0
        %v2112 = vadd.f32 0.0, %v2111
        %v2113 = vpop.f32.mrf.mxu0
        %v2114 = vadd.f32 0.0, %v2113
        %2115 = vmatmul.bf16.gmra.mxu0 %v477
        %v2116 = vpop.f32.mrf.mxu0
        %v2117 = vadd.f32 0.0, %v2116
        %v2118 = vpop.f32.mrf.mxu0
        %v2119 = vadd.f32 0.0, %v2118
        %2120 = vmatmul.bf16.gmra.mxu0 %v479
        %v2121 = vpop.f32.mrf.mxu0
        %v2122 = vadd.f32 0.0, %v2121
        %v2123 = vpop.f32.mrf.mxu0
        %v2124 = vadd.f32 0.0, %v2123
        %2125 = vmatmul.bf16.gmra.mxu0 %v481
        %v2126 = vpop.f32.mrf.mxu0
        %v2127 = vadd.f32 0.0, %v2126
        %v2128 = vpop.f32.mrf.mxu0
        %v2129 = vadd.f32 0.0, %v2128
        %2130 = vmatmul.bf16.gmra.mxu0 %v483
        %v2131 = vpop.f32.mrf.mxu0
        %v2132 = vadd.f32 0.0, %v2131
        %v2133 = vpop.f32.mrf.mxu0
        %v2134 = vadd.f32 0.0, %v2133
        %2135 = vmatmul.bf16.gmra.mxu0 %v485
        %v2136 = vpop.f32.mrf.mxu0
        %v2137 = vadd.f32 0.0, %v2136
        %v2138 = vpop.f32.mrf.mxu0
        %v2139 = vadd.f32 0.0, %v2138
        %2140 = vmatmul.bf16.gmra.mxu0 %v487
        %v2141 = vpop.f32.mrf.mxu0
        %v2142 = vadd.f32 0.0, %v2141
        %v2143 = vpop.f32.mrf.mxu0
        %v2144 = vadd.f32 0.0, %v2143
        %2145 = vmatmul.bf16.gmra.mxu0 %v489
        %v2146 = vpop.f32.mrf.mxu0
        %v2147 = vadd.f32 0.0, %v2146
        %v2148 = vpop.f32.mrf.mxu0
        %v2149 = vadd.f32 0.0, %v2148
        %2150 = vmatmul.bf16.gmra.mxu0 %v491
        %v2151 = vpop.f32.mrf.mxu0
        %v2152 = vadd.f32 0.0, %v2151
        %v2153 = vpop.f32.mrf.mxu0
        %v2154 = vadd.f32 0.0, %v2153
        %2155 = vmatmul.bf16.gmra.mxu0 %v493
        %v2156 = vpop.f32.mrf.mxu0
        %v2157 = vadd.f32 0.0, %v2156
        %v2158 = vpop.f32.mrf.mxu0
        %v2159 = vadd.f32 0.0, %v2158
        %2160 = vmatmul.bf16.gmra.mxu0 %v495
        %v2161 = vpop.f32.mrf.mxu0
        %v2162 = vadd.f32 0.0, %v2161
        %v2163 = vpop.f32.mrf.mxu0
        %v2164 = vadd.f32 0.0, %v2163
        %2165 = vmatmul.bf16.gmra.mxu0 %v497
        %v2166 = vpop.f32.mrf.mxu0
        %v2167 = vadd.f32 0.0, %v2166
        %v2168 = vpop.f32.mrf.mxu0
        %v2169 = vadd.f32 0.0, %v2168
        %2170 = vmatmul.bf16.gmra.mxu0 %v499
        %v2171 = vpop.f32.mrf.mxu0
        %v2172 = vadd.f32 0.0, %v2171
        %v2173 = vpop.f32.mrf.mxu0
        %v2174 = vadd.f32 0.0, %v2173
        %2175 = vmatmul.bf16.gmra.mxu0 %v501
        %v2176 = vpop.f32.mrf.mxu0
        %v2177 = vadd.f32 0.0, %v2176
        %v2178 = vpop.f32.mrf.mxu0
        %v2179 = vadd.f32 0.0, %v2178
        %2180 = vmatmul.bf16.gmra.mxu0 %v503
        %v2181 = vpop.f32.mrf.mxu0
        %v2182 = vadd.f32 0.0, %v2181
        %v2183 = vpop.f32.mrf.mxu0
        %v2184 = vadd.f32 0.0, %v2183
        %2185 = vdwg.mxu0
        %2186 = vmatpush.bf16.msra.mxu0 0
        %2187 = vmatpush.bf16.msra.mxu0 0
        %2188 = vmatpush.bf16.msra.mxu0 0
        %2189 = vmatpush.bf16.msra.mxu0 %v1062
        %2190 = vmatpush.bf16.msra.mxu0 %v884
        %2191 = vmatpush.bf16.msra.mxu0 %v877
        %2192 = vmatpush.bf16.msra.mxu0 %v870
        %2193 = vmatpush.bf16.msra.mxu0 %v863
        %2194 = vmatmul.bf16.gmra.mxu0 %v980
        %v2195 = vpop.f32.mrf.mxu0
        %v2196 = vadd.f32 %v2072, %v2195
        %v2197 = vpop.f32.mrf.mxu0
        %v2198 = vadd.f32 %v2074, %v2197
        %2199 = vmatmul.bf16.gmra.mxu0 %v983
        %v2200 = vpop.f32.mrf.mxu0
        %v2201 = vadd.f32 %v2077, %v2200
        %v2202 = vpop.f32.mrf.mxu0
        %v2203 = vadd.f32 %v2079, %v2202
        %2204 = vmatmul.bf16.gmra.mxu0 %v986
        %v2205 = vpop.f32.mrf.mxu0
        %v2206 = vadd.f32 %v2082, %v2205
        %v2207 = vpop.f32.mrf.mxu0
        %v2208 = vadd.f32 %v2084, %v2207
        %2209 = vmatmul.bf16.gmra.mxu0 %v989
        %v2210 = vpop.f32.mrf.mxu0
        %v2211 = vadd.f32 %v2087, %v2210
        %v2212 = vpop.f32.mrf.mxu0
        %v2213 = vadd.f32 %v2089, %v2212
        %2214 = vmatmul.bf16.gmra.mxu0 %v992
        %v2215 = vpop.f32.mrf.mxu0
        %v2216 = vadd.f32 %v2092, %v2215
        %v2217 = vpop.f32.mrf.mxu0
        %v2218 = vadd.f32 %v2094, %v2217
        %2219 = vmatmul.bf16.gmra.mxu0 %v995
        %v2220 = vpop.f32.mrf.mxu0
        %v2221 = vadd.f32 %v2097, %v2220
        %v2222 = vpop.f32.mrf.mxu0
        %v2223 = vadd.f32 %v2099, %v2222
        %2224 = vmatmul.bf16.gmra.mxu0 %v998
        %v2225 = vpop.f32.mrf.mxu0
        %v2226 = vadd.f32 %v2102, %v2225
        %v2227 = vpop.f32.mrf.mxu0
        %v2228 = vadd.f32 %v2104, %v2227
        %2229 = vmatmul.bf16.gmra.mxu0 %v1001
        %v2230 = vpop.f32.mrf.mxu0
        %v2231 = vadd.f32 %v2107, %v2230
        %v2232 = vpop.f32.mrf.mxu0
        %v2233 = vadd.f32 %v2109, %v2232
        %2234 = vmatmul.bf16.gmra.mxu0 %v1004
        %v2235 = vpop.f32.mrf.mxu0
        %v2236 = vadd.f32 %v2112, %v2235
        %v2237 = vpop.f32.mrf.mxu0
        %v2238 = vadd.f32 %v2114, %v2237
        %2239 = vmatmul.bf16.gmra.mxu0 %v1007
        %v2240 = vpop.f32.mrf.mxu0
        %v2241 = vadd.f32 %v2117, %v2240
        %v2242 = vpop.f32.mrf.mxu0
        %v2243 = vadd.f32 %v2119, %v2242
        %2244 = vmatmul.bf16.gmra.mxu0 %v1010
        %v2245 = vpop.f32.mrf.mxu0
        %v2246 = vadd.f32 %v2122, %v2245
        %v2247 = vpop.f32.mrf.mxu0
        %v2248 = vadd.f32 %v2124, %v2247
        %2249 = vmatmul.bf16.gmra.mxu0 %v1013
        %v2250 = vpop.f32.mrf.mxu0
        %v2251 = vadd.f32 %v2127, %v2250
        %v2252 = vpop.f32.mrf.mxu0
        %v2253 = vadd.f32 %v2129, %v2252
        %2254 = vmatmul.bf16.gmra.mxu0 %v1016
        %v2255 = vpop.f32.mrf.mxu0
        %v2256 = vadd.f32 %v2132, %v2255
        %v2257 = vpop.f32.mrf.mxu0
        %v2258 = vadd.f32 %v2134, %v2257
        %2259 = vmatmul.bf16.gmra.mxu0 %v1019
        %v2260 = vpop.f32.mrf.mxu0
        %v2261 = vadd.f32 %v2137, %v2260
        %v2262 = vpop.f32.mrf.mxu0
        %v2263 = vadd.f32 %v2139, %v2262
        %2264 = vmatmul.bf16.gmra.mxu0 %v1022
        %v2265 = vpop.f32.mrf.mxu0
        %v2266 = vadd.f32 %v2142, %v2265
        %v2267 = vpop.f32.mrf.mxu0
        %v2268 = vadd.f32 %v2144, %v2267
        %2269 = vmatmul.bf16.gmra.mxu0 %v1025
        %v2270 = vpop.f32.mrf.mxu0
        %v2271 = vadd.f32 %v2147, %v2270
        %v2272 = vpop.f32.mrf.mxu0
        %v2273 = vadd.f32 %v2149, %v2272
        %2274 = vmatmul.bf16.gmra.mxu0 %v1028
        %v2275 = vpop.f32.mrf.mxu0
        %v2276 = vadd.f32 %v2152, %v2275
        %v2277 = vpop.f32.mrf.mxu0
        %v2278 = vadd.f32 %v2154, %v2277
        %2279 = vmatmul.bf16.gmra.mxu0 %v1031
        %v2280 = vpop.f32.mrf.mxu0
        %v2281 = vadd.f32 %v2157, %v2280
        %v2282 = vpop.f32.mrf.mxu0
        %v2283 = vadd.f32 %v2159, %v2282
        %2284 = vmatmul.bf16.gmra.mxu0 %v1034
        %v2285 = vpop.f32.mrf.mxu0
        %v2286 = vadd.f32 %v2162, %v2285
        %v2287 = vpop.f32.mrf.mxu0
        %v2288 = vadd.f32 %v2164, %v2287
        %2289 = vmatmul.bf16.gmra.mxu0 %v1037
        %v2290 = vpop.f32.mrf.mxu0
        %v2291 = vadd.f32 %v2167, %v2290
        %v2292 = vpop.f32.mrf.mxu0
        %v2293 = vadd.f32 %v2169, %v2292
        %2294 = vmatmul.bf16.gmra.mxu0 %v1040
        %v2295 = vpop.f32.mrf.mxu0
        %v2296 = vadd.f32 %v2172, %v2295
        %v2297 = vpop.f32.mrf.mxu0
        %v2298 = vadd.f32 %v2174, %v2297
        %2299 = vmatmul.bf16.gmra.mxu0 %v1043
        %v2300 = vpop.f32.mrf.mxu0
        %v2301 = vadd.f32 %v2177, %v2300
        %v2302 = vpop.f32.mrf.mxu0
        %v2303 = vadd.f32 %v2179, %v2302
        %2304 = vmatmul.bf16.gmra.mxu0 %v1046
        %v2305 = vpop.f32.mrf.mxu0
        %v2306 = vadd.f32 %v2182, %v2305
        %v2307 = vpop.f32.mrf.mxu0
        %v2308 = vadd.f32 %v2184, %v2307
        %2309 = vdwg.mxu0
        %2310 = vmatpush.bf16.msra.mxu0 %v857
        %2311 = vmatpush.bf16.msra.mxu0 %v850
        %2312 = vmatpush.bf16.msra.mxu0 %v843
        %2313 = vmatpush.bf16.msra.mxu0 %v836
        %2314 = vmatpush.bf16.msra.mxu0 %v829
        %2315 = vmatpush.bf16.msra.mxu0 %v822
        %2316 = vmatpush.bf16.msra.mxu0 %v815
        %2317 = vmatpush.bf16.msra.mxu0 %v808
        %2318 = vmatmul.bf16.gmra.mxu0 %v459
        %v2319 = vpop.f32.mrf.mxu0
        %v2320 = vadd.f32 0.0, %v2319
        %v2321 = vpop.f32.mrf.mxu0
        %v2322 = vadd.f32 0.0, %v2321
        %2323 = vmatmul.bf16.gmra.mxu0 %v461
        %v2324 = vpop.f32.mrf.mxu0
        %v2325 = vadd.f32 0.0, %v2324
        %v2326 = vpop.f32.mrf.mxu0
        %v2327 = vadd.f32 0.0, %v2326
        %2328 = vmatmul.bf16.gmra.mxu0 %v463
        %v2329 = vpop.f32.mrf.mxu0
        %v2330 = vadd.f32 0.0, %v2329
        %v2331 = vpop.f32.mrf.mxu0
        %v2332 = vadd.f32 0.0, %v2331
        %2333 = vmatmul.bf16.gmra.mxu0 %v465
        %v2334 = vpop.f32.mrf.mxu0
        %v2335 = vadd.f32 0.0, %v2334
        %v2336 = vpop.f32.mrf.mxu0
        %v2337 = vadd.f32 0.0, %v2336
        %2338 = vmatmul.bf16.gmra.mxu0 %v467
        %v2339 = vpop.f32.mrf.mxu0
        %v2340 = vadd.f32 0.0, %v2339
        %v2341 = vpop.f32.mrf.mxu0
        %v2342 = vadd.f32 0.0, %v2341
        %2343 = vmatmul.bf16.gmra.mxu0 %v469
        %v2344 = vpop.f32.mrf.mxu0
        %v2345 = vadd.f32 0.0, %v2344
        %v2346 = vpop.f32.mrf.mxu0
        %v2347 = vadd.f32 0.0, %v2346
        %2348 = vmatmul.bf16.gmra.mxu0 %v471
        %v2349 = vpop.f32.mrf.mxu0
        %v2350 = vadd.f32 0.0, %v2349
        %v2351 = vpop.f32.mrf.mxu0
        %v2352 = vadd.f32 0.0, %v2351
        %2353 = vmatmul.bf16.gmra.mxu0 %v473
        %v2354 = vpop.f32.mrf.mxu0
        %v2355 = vadd.f32 0.0, %v2354
        %v2356 = vpop.f32.mrf.mxu0
        %v2357 = vadd.f32 0.0, %v2356
        %2358 = vmatmul.bf16.gmra.mxu0 %v475
        %v2359 = vpop.f32.mrf.mxu0
        %v2360 = vadd.f32 0.0, %v2359
        %v2361 = vpop.f32.mrf.mxu0
        %v2362 = vadd.f32 0.0, %v2361
        %2363 = vmatmul.bf16.gmra.mxu0 %v477
        %v2364 = vpop.f32.mrf.mxu0
        %v2365 = vadd.f32 0.0, %v2364
        %v2366 = vpop.f32.mrf.mxu0
        %v2367 = vadd.f32 0.0, %v2366
        %2368 = vmatmul.bf16.gmra.mxu0 %v479
        %v2369 = vpop.f32.mrf.mxu0
        %v2370 = vadd.f32 0.0, %v2369
        %v2371 = vpop.f32.mrf.mxu0
        %v2372 = vadd.f32 0.0, %v2371
        %2373 = vmatmul.bf16.gmra.mxu0 %v481
        %v2374 = vpop.f32.mrf.mxu0
        %v2375 = vadd.f32 0.0, %v2374
        %v2376 = vpop.f32.mrf.mxu0
        %v2377 = vadd.f32 0.0, %v2376
        %2378 = vmatmul.bf16.gmra.mxu0 %v483
        %v2379 = vpop.f32.mrf.mxu0
        %v2380 = vadd.f32 0.0, %v2379
        %v2381 = vpop.f32.mrf.mxu0
        %v2382 = vadd.f32 0.0, %v2381
        %2383 = vmatmul.bf16.gmra.mxu0 %v485
        %v2384 = vpop.f32.mrf.mxu0
        %v2385 = vadd.f32 0.0, %v2384
        %v2386 = vpop.f32.mrf.mxu0
        %v2387 = vadd.f32 0.0, %v2386
        %2388 = vmatmul.bf16.gmra.mxu0 %v487
        %v2389 = vpop.f32.mrf.mxu0
        %v2390 = vadd.f32 0.0, %v2389
        %v2391 = vpop.f32.mrf.mxu0
        %v2392 = vadd.f32 0.0, %v2391
        %2393 = vmatmul.bf16.gmra.mxu0 %v489
        %v2394 = vpop.f32.mrf.mxu0
        %v2395 = vadd.f32 0.0, %v2394
        %v2396 = vpop.f32.mrf.mxu0
        %v2397 = vadd.f32 0.0, %v2396
        %2398 = vmatmul.bf16.gmra.mxu0 %v491
        %v2399 = vpop.f32.mrf.mxu0
        %v2400 = vadd.f32 0.0, %v2399
        %v2401 = vpop.f32.mrf.mxu0
        %v2402 = vadd.f32 0.0, %v2401
        %2403 = vmatmul.bf16.gmra.mxu0 %v493
        %v2404 = vpop.f32.mrf.mxu0
        %v2405 = vadd.f32 0.0, %v2404
        %v2406 = vpop.f32.mrf.mxu0
        %v2407 = vadd.f32 0.0, %v2406
        %2408 = vmatmul.bf16.gmra.mxu0 %v495
        %v2409 = vpop.f32.mrf.mxu0
        %v2410 = vadd.f32 0.0, %v2409
        %v2411 = vpop.f32.mrf.mxu0
        %v2412 = vadd.f32 0.0, %v2411
        %2413 = vmatmul.bf16.gmra.mxu0 %v497
        %v2414 = vpop.f32.mrf.mxu0
        %v2415 = vadd.f32 0.0, %v2414
        %v2416 = vpop.f32.mrf.mxu0
        %v2417 = vadd.f32 0.0, %v2416
        %2418 = vmatmul.bf16.gmra.mxu0 %v499
        %v2419 = vpop.f32.mrf.mxu0
        %v2420 = vadd.f32 0.0, %v2419
        %v2421 = vpop.f32.mrf.mxu0
        %v2422 = vadd.f32 0.0, %v2421
        %2423 = vmatmul.bf16.gmra.mxu0 %v501
        %v2424 = vpop.f32.mrf.mxu0
        %v2425 = vadd.f32 0.0, %v2424
        %v2426 = vpop.f32.mrf.mxu0
        %v2427 = vadd.f32 0.0, %v2426
        %2428 = vmatmul.bf16.gmra.mxu0 %v503
        %v2429 = vpop.f32.mrf.mxu0
        %v2430 = vadd.f32 0.0, %v2429
        %v2431 = vpop.f32.mrf.mxu0
        %v2432 = vadd.f32 0.0, %v2431
        %2433 = vdwg.mxu0
        %2434 = vmatpush.bf16.msra.mxu0 0
        %2435 = vmatpush.bf16.msra.mxu0 0
        %2436 = vmatpush.bf16.msra.mxu0 0
        %2437 = vmatpush.bf16.msra.mxu0 %v1065
        %2438 = vmatpush.bf16.msra.mxu0 %v885
        %2439 = vmatpush.bf16.msra.mxu0 %v878
        %2440 = vmatpush.bf16.msra.mxu0 %v871
        %2441 = vmatpush.bf16.msra.mxu0 %v864
        %2442 = vmatmul.bf16.gmra.mxu0 %v980
        %v2443 = vpop.f32.mrf.mxu0
        %v2444 = vadd.f32 %v2320, %v2443
        %v2445 = vpop.f32.mrf.mxu0
        %v2446 = vadd.f32 %v2322, %v2445
        %2447 = vmatmul.bf16.gmra.mxu0 %v983
        %v2448 = vpop.f32.mrf.mxu0
        %v2449 = vadd.f32 %v2325, %v2448
        %v2450 = vpop.f32.mrf.mxu0
        %v2451 = vadd.f32 %v2327, %v2450
        %2452 = vmatmul.bf16.gmra.mxu0 %v986
        %v2453 = vpop.f32.mrf.mxu0
        %v2454 = vadd.f32 %v2330, %v2453
        %v2455 = vpop.f32.mrf.mxu0
        %v2456 = vadd.f32 %v2332, %v2455
        %2457 = vmatmul.bf16.gmra.mxu0 %v989
        %v2458 = vpop.f32.mrf.mxu0
        %v2459 = vadd.f32 %v2335, %v2458
        %v2460 = vpop.f32.mrf.mxu0
        %v2461 = vadd.f32 %v2337, %v2460
        %2462 = vmatmul.bf16.gmra.mxu0 %v992
        %v2463 = vpop.f32.mrf.mxu0
        %v2464 = vadd.f32 %v2340, %v2463
        %v2465 = vpop.f32.mrf.mxu0
        %v2466 = vadd.f32 %v2342, %v2465
        %2467 = vmatmul.bf16.gmra.mxu0 %v995
        %v2468 = vpop.f32.mrf.mxu0
        %v2469 = vadd.f32 %v2345, %v2468
        %v2470 = vpop.f32.mrf.mxu0
        %v2471 = vadd.f32 %v2347, %v2470
        %2472 = vmatmul.bf16.gmra.mxu0 %v998
        %v2473 = vpop.f32.mrf.mxu0
        %v2474 = vadd.f32 %v2350, %v2473
        %v2475 = vpop.f32.mrf.mxu0
        %v2476 = vadd.f32 %v2352, %v2475
        %2477 = vmatmul.bf16.gmra.mxu0 %v1001
        %v2478 = vpop.f32.mrf.mxu0
        %v2479 = vadd.f32 %v2355, %v2478
        %v2480 = vpop.f32.mrf.mxu0
        %v2481 = vadd.f32 %v2357, %v2480
        %2482 = vmatmul.bf16.gmra.mxu0 %v1004
        %v2483 = vpop.f32.mrf.mxu0
        %v2484 = vadd.f32 %v2360, %v2483
        %v2485 = vpop.f32.mrf.mxu0
        %v2486 = vadd.f32 %v2362, %v2485
        %2487 = vmatmul.bf16.gmra.mxu0 %v1007
        %v2488 = vpop.f32.mrf.mxu0
        %v2489 = vadd.f32 %v2365, %v2488
        %v2490 = vpop.f32.mrf.mxu0
        %v2491 = vadd.f32 %v2367, %v2490
        %2492 = vmatmul.bf16.gmra.mxu0 %v1010
        %v2493 = vpop.f32.mrf.mxu0
        %v2494 = vadd.f32 %v2370, %v2493
        %v2495 = vpop.f32.mrf.mxu0
        %v2496 = vadd.f32 %v2372, %v2495
        %2497 = vmatmul.bf16.gmra.mxu0 %v1013
        %v2498 = vpop.f32.mrf.mxu0
        %v2499 = vadd.f32 %v2375, %v2498
        %v2500 = vpop.f32.mrf.mxu0
        %v2501 = vadd.f32 %v2377, %v2500
        %2502 = vmatmul.bf16.gmra.mxu0 %v1016
        %v2503 = vpop.f32.mrf.mxu0
        %v2504 = vadd.f32 %v2380, %v2503
        %v2505 = vpop.f32.mrf.mxu0
        %v2506 = vadd.f32 %v2382, %v2505
        %2507 = vmatmul.bf16.gmra.mxu0 %v1019
        %v2508 = vpop.f32.mrf.mxu0
        %v2509 = vadd.f32 %v2385, %v2508
        %v2510 = vpop.f32.mrf.mxu0
        %v2511 = vadd.f32 %v2387, %v2510
        %2512 = vmatmul.bf16.gmra.mxu0 %v1022
        %v2513 = vpop.f32.mrf.mxu0
        %v2514 = vadd.f32 %v2390, %v2513
        %v2515 = vpop.f32.mrf.mxu0
        %v2516 = vadd.f32 %v2392, %v2515
        %2517 = vmatmul.bf16.gmra.mxu0 %v1025
        %v2518 = vpop.f32.mrf.mxu0
        %v2519 = vadd.f32 %v2395, %v2518
        %v2520 = vpop.f32.mrf.mxu0
        %v2521 = vadd.f32 %v2397, %v2520
        %2522 = vmatmul.bf16.gmra.mxu0 %v1028
        %v2523 = vpop.f32.mrf.mxu0
        %v2524 = vadd.f32 %v2400, %v2523
        %v2525 = vpop.f32.mrf.mxu0
        %v2526 = vadd.f32 %v2402, %v2525
        %2527 = vmatmul.bf16.gmra.mxu0 %v1031
        %v2528 = vpop.f32.mrf.mxu0
        %v2529 = vadd.f32 %v2405, %v2528
        %v2530 = vpop.f32.mrf.mxu0
        %v2531 = vadd.f32 %v2407, %v2530
        %2532 = vmatmul.bf16.gmra.mxu0 %v1034
        %v2533 = vpop.f32.mrf.mxu0
        %v2534 = vadd.f32 %v2410, %v2533
        %v2535 = vpop.f32.mrf.mxu0
        %v2536 = vadd.f32 %v2412, %v2535
        %2537 = vmatmul.bf16.gmra.mxu0 %v1037
        %v2538 = vpop.f32.mrf.mxu0
        %v2539 = vadd.f32 %v2415, %v2538
        %v2540 = vpop.f32.mrf.mxu0
        %v2541 = vadd.f32 %v2417, %v2540
        %2542 = vmatmul.bf16.gmra.mxu0 %v1040
        %v2543 = vpop.f32.mrf.mxu0
        %v2544 = vadd.f32 %v2420, %v2543
        %v2545 = vpop.f32.mrf.mxu0
        %v2546 = vadd.f32 %v2422, %v2545
        %2547 = vmatmul.bf16.gmra.mxu0 %v1043
        %v2548 = vpop.f32.mrf.mxu0
        %v2549 = vadd.f32 %v2425, %v2548
        %v2550 = vpop.f32.mrf.mxu0
        %v2551 = vadd.f32 %v2427, %v2550
        %2552 = vmatmul.bf16.gmra.mxu0 %v1046
        %v2553 = vpop.f32.mrf.mxu0
        %v2554 = vadd.f32 %v2430, %v2553
        %v2555 = vpop.f32.mrf.mxu0
        %v2556 = vadd.f32 %v2432, %v2555
        %2557 = vdwg.mxu0
        %2558 = vmatpush.bf16.msra.mxu0 %v858
        %2559 = vmatpush.bf16.msra.mxu0 %v851
        %2560 = vmatpush.bf16.msra.mxu0 %v844
        %2561 = vmatpush.bf16.msra.mxu0 %v837
        %2562 = vmatpush.bf16.msra.mxu0 %v830
        %2563 = vmatpush.bf16.msra.mxu0 %v823
        %2564 = vmatpush.bf16.msra.mxu0 %v816
        %2565 = vmatpush.bf16.msra.mxu0 %v809
        %2566 = vmatmul.bf16.gmra.mxu0 %v459
        %v2567 = vpop.f32.mrf.mxu0
        %v2568 = vadd.f32 0.0, %v2567
        %v2569 = vpop.f32.mrf.mxu0
        %v2570 = vadd.f32 0.0, %v2569
        %2571 = vmatmul.bf16.gmra.mxu0 %v461
        %v2572 = vpop.f32.mrf.mxu0
        %v2573 = vadd.f32 0.0, %v2572
        %v2574 = vpop.f32.mrf.mxu0
        %v2575 = vadd.f32 0.0, %v2574
        %2576 = vmatmul.bf16.gmra.mxu0 %v463
        %v2577 = vpop.f32.mrf.mxu0
        %v2578 = vadd.f32 0.0, %v2577
        %v2579 = vpop.f32.mrf.mxu0
        %v2580 = vadd.f32 0.0, %v2579
        %2581 = vmatmul.bf16.gmra.mxu0 %v465
        %v2582 = vpop.f32.mrf.mxu0
        %v2583 = vadd.f32 0.0, %v2582
        %v2584 = vpop.f32.mrf.mxu0
        %v2585 = vadd.f32 0.0, %v2584
        %2586 = vmatmul.bf16.gmra.mxu0 %v467
        %v2587 = vpop.f32.mrf.mxu0
        %v2588 = vadd.f32 0.0, %v2587
        %v2589 = vpop.f32.mrf.mxu0
        %v2590 = vadd.f32 0.0, %v2589
        %2591 = vmatmul.bf16.gmra.mxu0 %v469
        %v2592 = vpop.f32.mrf.mxu0
        %v2593 = vadd.f32 0.0, %v2592
        %v2594 = vpop.f32.mrf.mxu0
        %v2595 = vadd.f32 0.0, %v2594
        %2596 = vmatmul.bf16.gmra.mxu0 %v471
        %v2597 = vpop.f32.mrf.mxu0
        %v2598 = vadd.f32 0.0, %v2597
        %v2599 = vpop.f32.mrf.mxu0
        %v2600 = vadd.f32 0.0, %v2599
        %2601 = vmatmul.bf16.gmra.mxu0 %v473
        %v2602 = vpop.f32.mrf.mxu0
        %v2603 = vadd.f32 0.0, %v2602
        %v2604 = vpop.f32.mrf.mxu0
        %v2605 = vadd.f32 0.0, %v2604
        %2606 = vmatmul.bf16.gmra.mxu0 %v475
        %v2607 = vpop.f32.mrf.mxu0
        %v2608 = vadd.f32 0.0, %v2607
        %v2609 = vpop.f32.mrf.mxu0
        %v2610 = vadd.f32 0.0, %v2609
        %2611 = vmatmul.bf16.gmra.mxu0 %v477
        %v2612 = vpop.f32.mrf.mxu0
        %v2613 = vadd.f32 0.0, %v2612
        %v2614 = vpop.f32.mrf.mxu0
        %v2615 = vadd.f32 0.0, %v2614
        %2616 = vmatmul.bf16.gmra.mxu0 %v479
        %v2617 = vpop.f32.mrf.mxu0
        %v2618 = vadd.f32 0.0, %v2617
        %v2619 = vpop.f32.mrf.mxu0
        %v2620 = vadd.f32 0.0, %v2619
        %2621 = vmatmul.bf16.gmra.mxu0 %v481
        %v2622 = vpop.f32.mrf.mxu0
        %v2623 = vadd.f32 0.0, %v2622
        %v2624 = vpop.f32.mrf.mxu0
        %v2625 = vadd.f32 0.0, %v2624
        %2626 = vmatmul.bf16.gmra.mxu0 %v483
        %v2627 = vpop.f32.mrf.mxu0
        %v2628 = vadd.f32 0.0, %v2627
        %v2629 = vpop.f32.mrf.mxu0
        %v2630 = vadd.f32 0.0, %v2629
        %2631 = vmatmul.bf16.gmra.mxu0 %v485
        %v2632 = vpop.f32.mrf.mxu0
        %v2633 = vadd.f32 0.0, %v2632
        %v2634 = vpop.f32.mrf.mxu0
        %v2635 = vadd.f32 0.0, %v2634
        %2636 = vmatmul.bf16.gmra.mxu0 %v487
        %v2637 = vpop.f32.mrf.mxu0
        %v2638 = vadd.f32 0.0, %v2637
        %v2639 = vpop.f32.mrf.mxu0
        %v2640 = vadd.f32 0.0, %v2639
        %2641 = vmatmul.bf16.gmra.mxu0 %v489
        %v2642 = vpop.f32.mrf.mxu0
        %v2643 = vadd.f32 0.0, %v2642
        %v2644 = vpop.f32.mrf.mxu0
        %v2645 = vadd.f32 0.0, %v2644
        %2646 = vmatmul.bf16.gmra.mxu0 %v491
        %v2647 = vpop.f32.mrf.mxu0
        %v2648 = vadd.f32 0.0, %v2647
        %v2649 = vpop.f32.mrf.mxu0
        %v2650 = vadd.f32 0.0, %v2649
        %2651 = vmatmul.bf16.gmra.mxu0 %v493
        %v2652 = vpop.f32.mrf.mxu0
        %v2653 = vadd.f32 0.0, %v2652
        %v2654 = vpop.f32.mrf.mxu0
        %v2655 = vadd.f32 0.0, %v2654
        %2656 = vmatmul.bf16.gmra.mxu0 %v495
        %v2657 = vpop.f32.mrf.mxu0
        %v2658 = vadd.f32 0.0, %v2657
        %v2659 = vpop.f32.mrf.mxu0
        %v2660 = vadd.f32 0.0, %v2659
        %2661 = vmatmul.bf16.gmra.mxu0 %v497
        %v2662 = vpop.f32.mrf.mxu0
        %v2663 = vadd.f32 0.0, %v2662
        %v2664 = vpop.f32.mrf.mxu0
        %v2665 = vadd.f32 0.0, %v2664
        %2666 = vmatmul.bf16.gmra.mxu0 %v499
        %v2667 = vpop.f32.mrf.mxu0
        %v2668 = vadd.f32 0.0, %v2667
        %v2669 = vpop.f32.mrf.mxu0
        %v2670 = vadd.f32 0.0, %v2669
        %2671 = vmatmul.bf16.gmra.mxu0 %v501
        %v2672 = vpop.f32.mrf.mxu0
        %v2673 = vadd.f32 0.0, %v2672
        %v2674 = vpop.f32.mrf.mxu0
        %v2675 = vadd.f32 0.0, %v2674
        %2676 = vmatmul.bf16.gmra.mxu0 %v503
        %v2677 = vpop.f32.mrf.mxu0
        %v2678 = vadd.f32 0.0, %v2677
        %v2679 = vpop.f32.mrf.mxu0
        %v2680 = vadd.f32 0.0, %v2679
        %2681 = vdwg.mxu0
        %2682 = vmatpush.bf16.msra.mxu0 0
        %2683 = vmatpush.bf16.msra.mxu0 0
        %2684 = vmatpush.bf16.msra.mxu0 0
        %2685 = vmatpush.bf16.msra.mxu0 %v1068
        %2686 = vmatpush.bf16.msra.mxu0 %v886
        %2687 = vmatpush.bf16.msra.mxu0 %v879
        %2688 = vmatpush.bf16.msra.mxu0 %v872
        %2689 = vmatpush.bf16.msra.mxu0 %v865
        %2690 = vmatmul.bf16.gmra.mxu0 %v980
        %v2691 = vpop.f32.mrf.mxu0
        %v2692 = vadd.f32 %v2568, %v2691
        %v2693 = vpop.f32.mrf.mxu0
        %v2694 = vadd.f32 %v2570, %v2693
        %2695 = vmatmul.bf16.gmra.mxu0 %v983
        %v2696 = vpop.f32.mrf.mxu0
        %v2697 = vadd.f32 %v2573, %v2696
        %v2698 = vpop.f32.mrf.mxu0
        %v2699 = vadd.f32 %v2575, %v2698
        %2700 = vmatmul.bf16.gmra.mxu0 %v986
        %v2701 = vpop.f32.mrf.mxu0
        %v2702 = vadd.f32 %v2578, %v2701
        %v2703 = vpop.f32.mrf.mxu0
        %v2704 = vadd.f32 %v2580, %v2703
        %2705 = vmatmul.bf16.gmra.mxu0 %v989
        %v2706 = vpop.f32.mrf.mxu0
        %v2707 = vadd.f32 %v2583, %v2706
        %v2708 = vpop.f32.mrf.mxu0
        %v2709 = vadd.f32 %v2585, %v2708
        %2710 = vmatmul.bf16.gmra.mxu0 %v992
        %v2711 = vpop.f32.mrf.mxu0
        %v2712 = vadd.f32 %v2588, %v2711
        %v2713 = vpop.f32.mrf.mxu0
        %v2714 = vadd.f32 %v2590, %v2713
        %2715 = vmatmul.bf16.gmra.mxu0 %v995
        %v2716 = vpop.f32.mrf.mxu0
        %v2717 = vadd.f32 %v2593, %v2716
        %v2718 = vpop.f32.mrf.mxu0
        %v2719 = vadd.f32 %v2595, %v2718
        %2720 = vmatmul.bf16.gmra.mxu0 %v998
        %v2721 = vpop.f32.mrf.mxu0
        %v2722 = vadd.f32 %v2598, %v2721
        %v2723 = vpop.f32.mrf.mxu0
        %v2724 = vadd.f32 %v2600, %v2723
        %2725 = vmatmul.bf16.gmra.mxu0 %v1001
        %v2726 = vpop.f32.mrf.mxu0
        %v2727 = vadd.f32 %v2603, %v2726
        %v2728 = vpop.f32.mrf.mxu0
        %v2729 = vadd.f32 %v2605, %v2728
        %2730 = vmatmul.bf16.gmra.mxu0 %v1004
        %v2731 = vpop.f32.mrf.mxu0
        %v2732 = vadd.f32 %v2608, %v2731
        %v2733 = vpop.f32.mrf.mxu0
        %v2734 = vadd.f32 %v2610, %v2733
        %2735 = vmatmul.bf16.gmra.mxu0 %v1007
        %v2736 = vpop.f32.mrf.mxu0
        %v2737 = vadd.f32 %v2613, %v2736
        %v2738 = vpop.f32.mrf.mxu0
        %v2739 = vadd.f32 %v2615, %v2738
        %2740 = vmatmul.bf16.gmra.mxu0 %v1010
        %v2741 = vpop.f32.mrf.mxu0
        %v2742 = vadd.f32 %v2618, %v2741
        %v2743 = vpop.f32.mrf.mxu0
        %v2744 = vadd.f32 %v2620, %v2743
        %2745 = vmatmul.bf16.gmra.mxu0 %v1013
        %v2746 = vpop.f32.mrf.mxu0
        %v2747 = vadd.f32 %v2623, %v2746
        %v2748 = vpop.f32.mrf.mxu0
        %v2749 = vadd.f32 %v2625, %v2748
        %2750 = vmatmul.bf16.gmra.mxu0 %v1016
        %v2751 = vpop.f32.mrf.mxu0
        %v2752 = vadd.f32 %v2628, %v2751
        %v2753 = vpop.f32.mrf.mxu0
        %v2754 = vadd.f32 %v2630, %v2753
        %2755 = vmatmul.bf16.gmra.mxu0 %v1019
        %v2756 = vpop.f32.mrf.mxu0
        %v2757 = vadd.f32 %v2633, %v2756
        %v2758 = vpop.f32.mrf.mxu0
        %v2759 = vadd.f32 %v2635, %v2758
        %2760 = vmatmul.bf16.gmra.mxu0 %v1022
        %v2761 = vpop.f32.mrf.mxu0
        %v2762 = vadd.f32 %v2638, %v2761
        %v2763 = vpop.f32.mrf.mxu0
        %v2764 = vadd.f32 %v2640, %v2763
        %2765 = vmatmul.bf16.gmra.mxu0 %v1025
        %v2766 = vpop.f32.mrf.mxu0
        %v2767 = vadd.f32 %v2643, %v2766
        %v2768 = vpop.f32.mrf.mxu0
        %v2769 = vadd.f32 %v2645, %v2768
        %2770 = vmatmul.bf16.gmra.mxu0 %v1028
        %v2771 = vpop.f32.mrf.mxu0
        %v2772 = vadd.f32 %v2648, %v2771
        %v2773 = vpop.f32.mrf.mxu0
        %v2774 = vadd.f32 %v2650, %v2773
        %2775 = vmatmul.bf16.gmra.mxu0 %v1031
        %v2776 = vpop.f32.mrf.mxu0
        %v2777 = vadd.f32 %v2653, %v2776
        %v2778 = vpop.f32.mrf.mxu0
        %v2779 = vadd.f32 %v2655, %v2778
        %2780 = vmatmul.bf16.gmra.mxu0 %v1034
        %v2781 = vpop.f32.mrf.mxu0
        %v2782 = vadd.f32 %v2658, %v2781
        %v2783 = vpop.f32.mrf.mxu0
        %v2784 = vadd.f32 %v2660, %v2783
        %2785 = vmatmul.bf16.gmra.mxu0 %v1037
        %v2786 = vpop.f32.mrf.mxu0
        %v2787 = vadd.f32 %v2663, %v2786
        %v2788 = vpop.f32.mrf.mxu0
        %v2789 = vadd.f32 %v2665, %v2788
        %2790 = vmatmul.bf16.gmra.mxu0 %v1040
        %v2791 = vpop.f32.mrf.mxu0
        %v2792 = vadd.f32 %v2668, %v2791
        %v2793 = vpop.f32.mrf.mxu0
        %v2794 = vadd.f32 %v2670, %v2793
        %2795 = vmatmul.bf16.gmra.mxu0 %v1043
        %v2796 = vpop.f32.mrf.mxu0
        %v2797 = vadd.f32 %v2673, %v2796
        %v2798 = vpop.f32.mrf.mxu0
        %v2799 = vadd.f32 %v2675, %v2798
        %2800 = vmatmul.bf16.gmra.mxu0 %v1046
        %v2801 = vpop.f32.mrf.mxu0
        %v2802 = vadd.f32 %v2678, %v2801
        %v2803 = vpop.f32.mrf.mxu0
        %v2804 = vadd.f32 %v2680, %v2803
        %2805 = vdwg.mxu0
        %v2806 = vpack.c.bf16 %v1452, %v1204
        %v2807 = vpack.c.bf16 %v1948, %v1700
        %v2808 = vpack.c.bf16 %v2444, %v2196
        %v2809 = vpack.c.bf16 %v2692, %v2692
        %v2810 = vpack.c.bf16 %v1454, %v1206
        %v2811 = vpack.c.bf16 %v1950, %v1702
        %v2812 = vpack.c.bf16 %v2446, %v2198
        %v2813 = vpack.c.bf16 %v2694, %v2694
        %v2814 = vpack.c.bf16 %v1457, %v1209
        %v2815 = vpack.c.bf16 %v1953, %v1705
        %v2816 = vpack.c.bf16 %v2449, %v2201
        %v2817 = vpack.c.bf16 %v2697, %v2697
        %v2818 = vpack.c.bf16 %v1459, %v1211
        %v2819 = vpack.c.bf16 %v1955, %v1707
        %v2820 = vpack.c.bf16 %v2451, %v2203
        %v2821 = vpack.c.bf16 %v2699, %v2699
        %v2822 = vpack.c.bf16 %v1462, %v1214
        %v2823 = vpack.c.bf16 %v1958, %v1710
        %v2824 = vpack.c.bf16 %v2454, %v2206
        %v2825 = vpack.c.bf16 %v2702, %v2702
        %v2826 = vpack.c.bf16 %v1464, %v1216
        %v2827 = vpack.c.bf16 %v1960, %v1712
        %v2828 = vpack.c.bf16 %v2456, %v2208
        %v2829 = vpack.c.bf16 %v2704, %v2704
        %v2830 = vpack.c.bf16 %v1467, %v1219
        %v2831 = vpack.c.bf16 %v1963, %v1715
        %v2832 = vpack.c.bf16 %v2459, %v2211
        %v2833 = vpack.c.bf16 %v2707, %v2707
        %v2834 = vpack.c.bf16 %v1469, %v1221
        %v2835 = vpack.c.bf16 %v1965, %v1717
        %v2836 = vpack.c.bf16 %v2461, %v2213
        %v2837 = vpack.c.bf16 %v2709, %v2709
        %v2838 = vpack.c.bf16 %v1472, %v1224
        %v2839 = vpack.c.bf16 %v1968, %v1720
        %v2840 = vpack.c.bf16 %v2464, %v2216
        %v2841 = vpack.c.bf16 %v2712, %v2712
        %v2842 = vpack.c.bf16 %v1474, %v1226
        %v2843 = vpack.c.bf16 %v1970, %v1722
        %v2844 = vpack.c.bf16 %v2466, %v2218
        %v2845 = vpack.c.bf16 %v2714, %v2714
        %v2846 = vpack.c.bf16 %v1477, %v1229
        %v2847 = vpack.c.bf16 %v1973, %v1725
        %v2848 = vpack.c.bf16 %v2469, %v2221
        %v2849 = vpack.c.bf16 %v2717, %v2717
        %v2850 = vpack.c.bf16 %v1479, %v1231
        %v2851 = vpack.c.bf16 %v1975, %v1727
        %v2852 = vpack.c.bf16 %v2471, %v2223
        %v2853 = vpack.c.bf16 %v2719, %v2719
        %v2854 = vpack.c.bf16 %v1482, %v1234
        %v2855 = vpack.c.bf16 %v1978, %v1730
        %v2856 = vpack.c.bf16 %v2474, %v2226
        %v2857 = vpack.c.bf16 %v2722, %v2722
        %v2858 = vpack.c.bf16 %v1484, %v1236
        %v2859 = vpack.c.bf16 %v1980, %v1732
        %v2860 = vpack.c.bf16 %v2476, %v2228
        %v2861 = vpack.c.bf16 %v2724, %v2724
        %v2862 = vpack.c.bf16 %v1487, %v1239
        %v2863 = vpack.c.bf16 %v1983, %v1735
        %v2864 = vpack.c.bf16 %v2479, %v2231
        %v2865 = vpack.c.bf16 %v2727, %v2727
        %v2866 = vpack.c.bf16 %v1489, %v1241
        %v2867 = vpack.c.bf16 %v1985, %v1737
        %v2868 = vpack.c.bf16 %v2481, %v2233
        %v2869 = vpack.c.bf16 %v2729, %v2729
        %v2870 = vpack.c.bf16 %v1492, %v1244
        %v2871 = vpack.c.bf16 %v1988, %v1740
        %v2872 = vpack.c.bf16 %v2484, %v2236
        %v2873 = vpack.c.bf16 %v2732, %v2732
        %v2874 = vpack.c.bf16 %v1494, %v1246
        %v2875 = vpack.c.bf16 %v1990, %v1742
        %v2876 = vpack.c.bf16 %v2486, %v2238
        %v2877 = vpack.c.bf16 %v2734, %v2734
        %v2878 = vpack.c.bf16 %v1497, %v1249
        %v2879 = vpack.c.bf16 %v1993, %v1745
        %v2880 = vpack.c.bf16 %v2489, %v2241
        %v2881 = vpack.c.bf16 %v2737, %v2737
        %v2882 = vpack.c.bf16 %v1499, %v1251
        %v2883 = vpack.c.bf16 %v1995, %v1747
        %v2884 = vpack.c.bf16 %v2491, %v2243
        %v2885 = vpack.c.bf16 %v2739, %v2739
        %v2886 = vpack.c.bf16 %v1502, %v1254
        %v2887 = vpack.c.bf16 %v1998, %v1750
        %v2888 = vpack.c.bf16 %v2494, %v2246
        %v2889 = vpack.c.bf16 %v2742, %v2742
        %v2890 = vpack.c.bf16 %v1504, %v1256
        %v2891 = vpack.c.bf16 %v2000, %v1752
        %v2892 = vpack.c.bf16 %v2496, %v2248
        %v2893 = vpack.c.bf16 %v2744, %v2744
        %v2894 = vpack.c.bf16 %v1507, %v1259
        %v2895 = vpack.c.bf16 %v2003, %v1755
        %v2896 = vpack.c.bf16 %v2499, %v2251
        %v2897 = vpack.c.bf16 %v2747, %v2747
        %v2898 = vpack.c.bf16 %v1509, %v1261
        %v2899 = vpack.c.bf16 %v2005, %v1757
        %v2900 = vpack.c.bf16 %v2501, %v2253
        %v2901 = vpack.c.bf16 %v2749, %v2749
        %v2902 = vpack.c.bf16 %v1512, %v1264
        %v2903 = vpack.c.bf16 %v2008, %v1760
        %v2904 = vpack.c.bf16 %v2504, %v2256
        %v2905 = vpack.c.bf16 %v2752, %v2752
        %v2906 = vpack.c.bf16 %v1514, %v1266
        %v2907 = vpack.c.bf16 %v2010, %v1762
        %v2908 = vpack.c.bf16 %v2506, %v2258
        %v2909 = vpack.c.bf16 %v2754, %v2754
        %v2910 = vpack.c.bf16 %v1517, %v1269
        %v2911 = vpack.c.bf16 %v2013, %v1765
        %v2912 = vpack.c.bf16 %v2509, %v2261
        %v2913 = vpack.c.bf16 %v2757, %v2757
        %v2914 = vpack.c.bf16 %v1519, %v1271
        %v2915 = vpack.c.bf16 %v2015, %v1767
        %v2916 = vpack.c.bf16 %v2511, %v2263
        %v2917 = vpack.c.bf16 %v2759, %v2759
        %v2918 = vpack.c.bf16 %v1522, %v1274
        %v2919 = vpack.c.bf16 %v2018, %v1770
        %v2920 = vpack.c.bf16 %v2514, %v2266
        %v2921 = vpack.c.bf16 %v2762, %v2762
        %v2922 = vpack.c.bf16 %v1524, %v1276
        %v2923 = vpack.c.bf16 %v2020, %v1772
        %v2924 = vpack.c.bf16 %v2516, %v2268
        %v2925 = vpack.c.bf16 %v2764, %v2764
        %v2926 = vpack.c.bf16 %v1527, %v1279
        %v2927 = vpack.c.bf16 %v2023, %v1775
        %v2928 = vpack.c.bf16 %v2519, %v2271
        %v2929 = vpack.c.bf16 %v2767, %v2767
        %v2930 = vpack.c.bf16 %v1529, %v1281
        %v2931 = vpack.c.bf16 %v2025, %v1777
        %v2932 = vpack.c.bf16 %v2521, %v2273
        %v2933 = vpack.c.bf16 %v2769, %v2769
        %v2934 = vpack.c.bf16 %v1532, %v1284
        %v2935 = vpack.c.bf16 %v2028, %v1780
        %v2936 = vpack.c.bf16 %v2524, %v2276
        %v2937 = vpack.c.bf16 %v2772, %v2772
        %v2938 = vpack.c.bf16 %v1534, %v1286
        %v2939 = vpack.c.bf16 %v2030, %v1782
        %v2940 = vpack.c.bf16 %v2526, %v2278
        %v2941 = vpack.c.bf16 %v2774, %v2774
        %v2942 = vpack.c.bf16 %v1537, %v1289
        %v2943 = vpack.c.bf16 %v2033, %v1785
        %v2944 = vpack.c.bf16 %v2529, %v2281
        %v2945 = vpack.c.bf16 %v2777, %v2777
        %v2946 = vpack.c.bf16 %v1539, %v1291
        %v2947 = vpack.c.bf16 %v2035, %v1787
        %v2948 = vpack.c.bf16 %v2531, %v2283
        %v2949 = vpack.c.bf16 %v2779, %v2779
        %v2950 = vpack.c.bf16 %v1542, %v1294
        %v2951 = vpack.c.bf16 %v2038, %v1790
        %v2952 = vpack.c.bf16 %v2534, %v2286
        %v2953 = vpack.c.bf16 %v2782, %v2782
        %v2954 = vpack.c.bf16 %v1544, %v1296
        %v2955 = vpack.c.bf16 %v2040, %v1792
        %v2956 = vpack.c.bf16 %v2536, %v2288
        %v2957 = vpack.c.bf16 %v2784, %v2784
        %v2958 = vpack.c.bf16 %v1547, %v1299
        %v2959 = vpack.c.bf16 %v2043, %v1795
        %v2960 = vpack.c.bf16 %v2539, %v2291
        %v2961 = vpack.c.bf16 %v2787, %v2787
        %v2962 = vpack.c.bf16 %v1549, %v1301
        %v2963 = vpack.c.bf16 %v2045, %v1797
        %v2964 = vpack.c.bf16 %v2541, %v2293
        %v2965 = vpack.c.bf16 %v2789, %v2789
        %v2966 = vpack.c.bf16 %v1552, %v1304
        %v2967 = vpack.c.bf16 %v2048, %v1800
        %v2968 = vpack.c.bf16 %v2544, %v2296
        %v2969 = vpack.c.bf16 %v2792, %v2792
        %v2970 = vpack.c.bf16 %v1554, %v1306
        %v2971 = vpack.c.bf16 %v2050, %v1802
        %v2972 = vpack.c.bf16 %v2546, %v2298
        %v2973 = vpack.c.bf16 %v2794, %v2794
        %v2974 = vpack.c.bf16 %v1557, %v1309
        %v2975 = vpack.c.bf16 %v2053, %v1805
        %v2976 = vpack.c.bf16 %v2549, %v2301
        %v2977 = vpack.c.bf16 %v2797, %v2797
        %v2978 = vpack.c.bf16 %v1559, %v1311
        %v2979 = vpack.c.bf16 %v2055, %v1807
        %v2980 = vpack.c.bf16 %v2551, %v2303
        %v2981 = vpack.c.bf16 %v2799, %v2799
        %v2982 = vpack.c.bf16 %v1562, %v1314
        %v2983 = vpack.c.bf16 %v2058, %v1810
        %v2984 = vpack.c.bf16 %v2554, %v2306
        %v2985 = vpack.c.bf16 %v2802, %v2802
        %v2986 = vpack.c.bf16 %v1564, %v1316
        %v2987 = vpack.c.bf16 %v2060, %v1812
        %v2988 = vpack.c.bf16 %v2556, %v2308
        %v2989 = vpack.c.bf16 %v2804, %v2804
        %2990 = vst [vmem:[%s150] sm:$0xff] %v2806
        %2991 = vst [vmem:[%s150 + $0x8] sm:$0xff] %v2807
        %2992 = vst [vmem:[%s150 + $0x10] sm:$0xff] %v2808
        %2993 = vst [vmem:[%s150 + $0x18] sm:$0xf] %v2809
        %2994 = vst [vmem:[%s150 + $0x1c] sm:$0xff] %v2810
        %2995 = vst [vmem:[%s150 + $0x24] sm:$0xff] %v2811
        %2996 = vst [vmem:[%s150 + $0x2c] sm:$0xff] %v2812
        %2997 = vst [vmem:[%s150 + $0x34] sm:$0xf] %v2813
        %2998 = vst [vmem:[%s150 + $0x38] sm:$0xff] %v2814
        %2999 = vst [vmem:[%s150 + $0x40] sm:$0xff] %v2815
        %3000 = vst [vmem:[%s150 + $0x48] sm:$0xff] %v2816
        %3001 = vst [vmem:[%s150 + $0x50] sm:$0xf] %v2817
        %3002 = vst [vmem:[%s150 + $0x54] sm:$0xff] %v2818
        %3003 = vst [vmem:[%s150 + $0x5c] sm:$0xff] %v2819
        %3004 = vst [vmem:[%s150 + $0x64] sm:$0xff] %v2820
        %3005 = vst [vmem:[%s150 + $0x6c] sm:$0xf] %v2821
        %3006 = vst [vmem:[%s150 + $0x70] sm:$0xff] %v2822
        %3007 = vst [vmem:[%s150 + $0x78] sm:$0xff] %v2823
        %3008 = vst [vmem:[%s150 + $0x80] sm:$0xff] %v2824
        %3009 = vst [vmem:[%s150 + $0x88] sm:$0xf] %v2825
        %3010 = vst [vmem:[%s150 + $0x8c] sm:$0xff] %v2826
        %3011 = vst [vmem:[%s150 + $0x94] sm:$0xff] %v2827
        %3012 = vst [vmem:[%s150 + $0x9c] sm:$0xff] %v2828
        %3013 = vst [vmem:[%s150 + $0xa4] sm:$0xf] %v2829
        %3014 = vst [vmem:[%s150 + $0xa8] sm:$0xff] %v2830
        %3015 = vst [vmem:[%s150 + $0xb0] sm:$0xff] %v2831
        %3016 = vst [vmem:[%s150 + $0xb8] sm:$0xff] %v2832
        %3017 = vst [vmem:[%s150 + $0xc0] sm:$0xf] %v2833
        %3018 = vst [vmem:[%s150 + $0xc4] sm:$0xff] %v2834
        %3019 = vst [vmem:[%s150 + $0xcc] sm:$0xff] %v2835
        %3020 = vst [vmem:[%s150 + $0xd4] sm:$0xff] %v2836
        %3021 = vst [vmem:[%s150 + $0xdc] sm:$0xf] %v2837
        %3022 = vst [vmem:[%s150 + $0xe0] sm:$0xff] %v2838
        %3023 = vst [vmem:[%s150 + $0xe8] sm:$0xff] %v2839
        %3024 = vst [vmem:[%s150 + $0xf0] sm:$0xff] %v2840
        %3025 = vst [vmem:[%s150 + $0xf8] sm:$0xf] %v2841
        %3026 = vst [vmem:[%s150 + $0xfc] sm:$0xff] %v2842
        %3027 = vst [vmem:[%s150 + $0x104] sm:$0xff] %v2843
        %3028 = vst [vmem:[%s150 + $0x10c] sm:$0xff] %v2844
        %3029 = vst [vmem:[%s150 + $0x114] sm:$0xf] %v2845
        %3030 = vst [vmem:[%s150 + $0x118] sm:$0xff] %v2846
        %3031 = vst [vmem:[%s150 + $0x120] sm:$0xff] %v2847
        %3032 = vst [vmem:[%s150 + $0x128] sm:$0xff] %v2848
        %3033 = vst [vmem:[%s150 + $0x130] sm:$0xf] %v2849
        %3034 = vst [vmem:[%s150 + $0x134] sm:$0xff] %v2850
        %3035 = vst [vmem:[%s150 + $0x13c] sm:$0xff] %v2851
        %3036 = vst [vmem:[%s150 + $0x144] sm:$0xff] %v2852
        %3037 = vst [vmem:[%s150 + $0x14c] sm:$0xf] %v2853
        %3038 = vst [vmem:[%s150 + $0x150] sm:$0xff] %v2854
        %3039 = vst [vmem:[%s150 + $0x158] sm:$0xff] %v2855
        %3040 = vst [vmem:[%s150 + $0x160] sm:$0xff] %v2856
        %3041 = vst [vmem:[%s150 + $0x168] sm:$0xf] %v2857
        %3042 = vst [vmem:[%s150 + $0x16c] sm:$0xff] %v2858
        %3043 = vst [vmem:[%s150 + $0x174] sm:$0xff] %v2859
        %3044 = vst [vmem:[%s150 + $0x17c] sm:$0xff] %v2860
        %3045 = vst [vmem:[%s150 + $0x184] sm:$0xf] %v2861
        %3046 = vst [vmem:[%s150 + $0x188] sm:$0xff] %v2862
        %3047 = vst [vmem:[%s150 + $0x190] sm:$0xff] %v2863
        %3048 = vst [vmem:[%s150 + $0x198] sm:$0xff] %v2864
        %3049 = vst [vmem:[%s150 + $0x1a0] sm:$0xf] %v2865
        %3050 = vst [vmem:[%s150 + $0x1a4] sm:$0xff] %v2866
        %3051 = vst [vmem:[%s150 + $0x1ac] sm:$0xff] %v2867
        %3052 = vst [vmem:[%s150 + $0x1b4] sm:$0xff] %v2868
        %3053 = vst [vmem:[%s150 + $0x1bc] sm:$0xf] %v2869
        %3054 = vst [vmem:[%s150 + $0x1c0] sm:$0xff] %v2870
        %3055 = vst [vmem:[%s150 + $0x1c8] sm:$0xff] %v2871
        %3056 = vst [vmem:[%s150 + $0x1d0] sm:$0xff] %v2872
        %3057 = vst [vmem:[%s150 + $0x1d8] sm:$0xf] %v2873
        %3058 = vst [vmem:[%s150 + $0x1dc] sm:$0xff] %v2874
        %3059 = vst [vmem:[%s150 + $0x1e4] sm:$0xff] %v2875
        %3060 = vst [vmem:[%s150 + $0x1ec] sm:$0xff] %v2876
        %3061 = vst [vmem:[%s150 + $0x1f4] sm:$0xf] %v2877
        %3062 = vst [vmem:[%s150 + $0x1f8] sm:$0xff] %v2878
        %3063 = vst [vmem:[%s150 + $0x200] sm:$0xff] %v2879
        %3064 = vst [vmem:[%s150 + $0x208] sm:$0xff] %v2880
        %3065 = vst [vmem:[%s150 + $0x210] sm:$0xf] %v2881
        %3066 = vst [vmem:[%s150 + $0x214] sm:$0xff] %v2882
        %3067 = vst [vmem:[%s150 + $0x21c] sm:$0xff] %v2883
        %3068 = vst [vmem:[%s150 + $0x224] sm:$0xff] %v2884
        %3069 = vst [vmem:[%s150 + $0x22c] sm:$0xf] %v2885
        %3070 = vst [vmem:[%s150 + $0x230] sm:$0xff] %v2886
        %3071 = vst [vmem:[%s150 + $0x238] sm:$0xff] %v2887
        %3072 = vst [vmem:[%s150 + $0x240] sm:$0xff] %v2888
        %3073 = vst [vmem:[%s150 + $0x248] sm:$0xf] %v2889
        %3074 = vst [vmem:[%s150 + $0x24c] sm:$0xff] %v2890
        %3075 = vst [vmem:[%s150 + $0x254] sm:$0xff] %v2891
        %3076 = vst [vmem:[%s150 + $0x25c] sm:$0xff] %v2892
        %3077 = vst [vmem:[%s150 + $0x264] sm:$0xf] %v2893
        %3078 = vst [vmem:[%s150 + $0x268] sm:$0xff] %v2894
        %3079 = vst [vmem:[%s150 + $0x270] sm:$0xff] %v2895
        %3080 = vst [vmem:[%s150 + $0x278] sm:$0xff] %v2896
        %3081 = vst [vmem:[%s150 + $0x280] sm:$0xf] %v2897
        %3082 = vst [vmem:[%s150 + $0x284] sm:$0xff] %v2898
        %3083 = vst [vmem:[%s150 + $0x28c] sm:$0xff] %v2899
        %3084 = vst [vmem:[%s150 + $0x294] sm:$0xff] %v2900
        %3085 = vst [vmem:[%s150 + $0x29c] sm:$0xf] %v2901
        %3086 = vst [vmem:[%s150 + $0x2a0] sm:$0xff] %v2902
        %3087 = vst [vmem:[%s150 + $0x2a8] sm:$0xff] %v2903
        %3088 = vst [vmem:[%s150 + $0x2b0] sm:$0xff] %v2904
        %3089 = vst [vmem:[%s150 + $0x2b8] sm:$0xf] %v2905
        %3090 = vst [vmem:[%s150 + $0x2bc] sm:$0xff] %v2906
        %3091 = vst [vmem:[%s150 + $0x2c4] sm:$0xff] %v2907
        %3092 = vst [vmem:[%s150 + $0x2cc] sm:$0xff] %v2908
        %3093 = vst [vmem:[%s150 + $0x2d4] sm:$0xf] %v2909
        %3094 = vst [vmem:[%s150 + $0x2d8] sm:$0xff] %v2910
        %3095 = vst [vmem:[%s150 + $0x2e0] sm:$0xff] %v2911
        %3096 = vst [vmem:[%s150 + $0x2e8] sm:$0xff] %v2912
        %3097 = vst [vmem:[%s150 + $0x2f0] sm:$0xf] %v2913
        %3098 = vst [vmem:[%s150 + $0x2f4] sm:$0xff] %v2914
        %3099 = vst [vmem:[%s150 + $0x2fc] sm:$0xff] %v2915
        %3100 = vst [vmem:[%s150 + $0x304] sm:$0xff] %v2916
        %3101 = vst [vmem:[%s150 + $0x30c] sm:$0xf] %v2917
        %3102 = vst [vmem:[%s150 + $0x310] sm:$0xff] %v2918
        %3103 = vst [vmem:[%s150 + $0x318] sm:$0xff] %v2919
        %3104 = vst [vmem:[%s150 + $0x320] sm:$0xff] %v2920
        %3105 = vst [vmem:[%s150 + $0x328] sm:$0xf] %v2921
        %3106 = vst [vmem:[%s150 + $0x32c] sm:$0xff] %v2922
        %3107 = vst [vmem:[%s150 + $0x334] sm:$0xff] %v2923
        %3108 = vst [vmem:[%s150 + $0x33c] sm:$0xff] %v2924
        %3109 = vst [vmem:[%s150 + $0x344] sm:$0xf] %v2925
        %3110 = vst [vmem:[%s150 + $0x348] sm:$0xff] %v2926
        %3111 = vst [vmem:[%s150 + $0x350] sm:$0xff] %v2927
        %3112 = vst [vmem:[%s150 + $0x358] sm:$0xff] %v2928
        %3113 = vst [vmem:[%s150 + $0x360] sm:$0xf] %v2929
        %3114 = vst [vmem:[%s150 + $0x364] sm:$0xff] %v2930
        %3115 = vst [vmem:[%s150 + $0x36c] sm:$0xff] %v2931
        %3116 = vst [vmem:[%s150 + $0x374] sm:$0xff] %v2932
        %3117 = vst [vmem:[%s150 + $0x37c] sm:$0xf] %v2933
        %3118 = vst [vmem:[%s150 + $0x380] sm:$0xff] %v2934
        %3119 = vst [vmem:[%s150 + $0x388] sm:$0xff] %v2935
        %3120 = vst [vmem:[%s150 + $0x390] sm:$0xff] %v2936
        %3121 = vst [vmem:[%s150 + $0x398] sm:$0xf] %v2937
        %3122 = vst [vmem:[%s150 + $0x39c] sm:$0xff] %v2938
        %3123 = vst [vmem:[%s150 + $0x3a4] sm:$0xff] %v2939
        %3124 = vst [vmem:[%s150 + $0x3ac] sm:$0xff] %v2940
        %3125 = vst [vmem:[%s150 + $0x3b4] sm:$0xf] %v2941
        %3126 = vst [vmem:[%s150 + $0x3b8] sm:$0xff] %v2942
        %3127 = vst [vmem:[%s150 + $0x3c0] sm:$0xff] %v2943
        %3128 = vst [vmem:[%s150 + $0x3c8] sm:$0xff] %v2944
        %3129 = vst [vmem:[%s150 + $0x3d0] sm:$0xf] %v2945
        %3130 = vst [vmem:[%s150 + $0x3d4] sm:$0xff] %v2946
        %3131 = vst [vmem:[%s150 + $0x3dc] sm:$0xff] %v2947
        %3132 = vst [vmem:[%s150 + $0x3e4] sm:$0xff] %v2948
        %3133 = vst [vmem:[%s150 + $0x3ec] sm:$0xf] %v2949
        %3134 = vst [vmem:[%s150 + $0x3f0] sm:$0xff] %v2950
        %3135 = vst [vmem:[%s150 + $0x3f8] sm:$0xff] %v2951
        %3136 = vst [vmem:[%s150 + $0x400] sm:$0xff] %v2952
        %3137 = vst [vmem:[%s150 + $0x408] sm:$0xf] %v2953
        %3138 = vst [vmem:[%s150 + $0x40c] sm:$0xff] %v2954
        %3139 = vst [vmem:[%s150 + $0x414] sm:$0xff] %v2955
        %3140 = vst [vmem:[%s150 + $0x41c] sm:$0xff] %v2956
        %3141 = vst [vmem:[%s150 + $0x424] sm:$0xf] %v2957
        %3142 = vst [vmem:[%s150 + $0x428] sm:$0xff] %v2958
        %3143 = vst [vmem:[%s150 + $0x430] sm:$0xff] %v2959
        %3144 = vst [vmem:[%s150 + $0x438] sm:$0xff] %v2960
        %3145 = vst [vmem:[%s150 + $0x440] sm:$0xf] %v2961
        %3146 = vst [vmem:[%s150 + $0x444] sm:$0xff] %v2962
        %3147 = vst [vmem:[%s150 + $0x44c] sm:$0xff] %v2963
        %3148 = vst [vmem:[%s150 + $0x454] sm:$0xff] %v2964
        %3149 = vst [vmem:[%s150 + $0x45c] sm:$0xf] %v2965
        %3150 = vst [vmem:[%s150 + $0x460] sm:$0xff] %v2966
        %3151 = vst [vmem:[%s150 + $0x468] sm:$0xff] %v2967
        %3152 = vst [vmem:[%s150 + $0x470] sm:$0xff] %v2968
        %3153 = vst [vmem:[%s150 + $0x478] sm:$0xf] %v2969
        %3154 = vst [vmem:[%s150 + $0x47c] sm:$0xff] %v2970
        %3155 = vst [vmem:[%s150 + $0x484] sm:$0xff] %v2971
        %3156 = vst [vmem:[%s150 + $0x48c] sm:$0xff] %v2972
        %3157 = vst [vmem:[%s150 + $0x494] sm:$0xf] %v2973
        %3158 = vst [vmem:[%s150 + $0x498] sm:$0xff] %v2974
        %3159 = vst [vmem:[%s150 + $0x4a0] sm:$0xff] %v2975
        %3160 = vst [vmem:[%s150 + $0x4a8] sm:$0xff] %v2976
        %3161 = vst [vmem:[%s150 + $0x4b0] sm:$0xf] %v2977
        %3162 = vst [vmem:[%s150 + $0x4b4] sm:$0xff] %v2978
        %3163 = vst [vmem:[%s150 + $0x4bc] sm:$0xff] %v2979
        %3164 = vst [vmem:[%s150 + $0x4c4] sm:$0xff] %v2980
        %3165 = vst [vmem:[%s150 + $0x4cc] sm:$0xf] %v2981
        %3166 = vst [vmem:[%s150 + $0x4d0] sm:$0xff] %v2982
        %3167 = vst [vmem:[%s150 + $0x4d8] sm:$0xff] %v2983
        %3168 = vst [vmem:[%s150 + $0x4e0] sm:$0xff] %v2984
        %3169 = vst [vmem:[%s150 + $0x4e8] sm:$0xf] %v2985
        %3170 = vst [vmem:[%s150 + $0x4ec] sm:$0xff] %v2986
        %3171 = vst [vmem:[%s150 + $0x4f4] sm:$0xff] %v2987
        %3172 = vst [vmem:[%s150 + $0x4fc] sm:$0xff] %v2988
        %3173 = vst [vmem:[%s150 + $0x504] sm:$0xf] %v2989
        %s3174 = sand.u32 %s68, 1
        %s3175 = sand.u32 %s68, 1
        %s3176 = smul.addr %s3175, 1288
        %s3177 = scalar_lea.vmem [#allocation2], %s3176
        // Predicated region
        $region29: #{forward_pallas.3} parent=27 // pred_check
          %p3178 = pneg %p78
        $region30: #{forward_pallas.3} parent=27 // pred_check_branch
          %3180 = sbr.rel (%p3178) target = $region32
        $region31: #{forward_pallas.3} parent=27 // pred_region
          %s3181 = smul.u32 46, %s13
          %s3182 = ssub.s32 91, %s3181
          %p3183 = scmp.lt.s32.totalorder %s3182, 46
          %s3184 = scalar_select %p3183, %s3182, 46
          %s3185 = smul.u32 4, %s3184
          %s3186 = smul.u32 %s3185, 7
          %p3187 = scmp.ne.s32.totalorder 0, %s3186
          %s3188 = smul.addr %s3181, 7
          %s3189 = smul.addr %s3188, 4
          %s3190 = scalar_lea.vmem %s2, %s3189
          // Predicated region
          $region33: #{forward_pallas.3} parent=31 // pred_check
            %p3191 = pneg %p3187
          $region34: #{forward_pallas.3} parent=31 // pred_check_branch
            %3193 = sbr.rel (%p3191) target = $region36
          $region35: #{forward_pallas.3} parent=31 // pred_region
            // Predicated region
            $region37: #{forward_pallas.3} parent=35 // pred_check
              _
            $region38: #{forward_pallas.3} parent=35 // pred_check_branch
              %3195 = sbr.rel (0) target = $region40
            $region39: #{forward_pallas.3} parent=35 // pred_region
              %s3196 = scalar_lea.vmem %s3177, 24 [#allocation2]
              %s3197 = scalar_lea.vmem %s3190, 24
              %s3198 = sdiv.u32.pop %s3184, 11
              %s3199 = srem.u32.pop %s3184, 11
              // While loop
              $region41: #{forward_pallas.3} parent=39 // loop_pre_header
                _
              $region42: #{forward_pallas.3} parent=39 // loop_header
                %s3201 = sphi 0, %s3203
                %p3202 = scmp.ge.s32.totalorder %s3201, %s3198
                %s3206 = sphi 0, %s3277
                %s3207 = sphi %s3177, %s3280
                %s3208 = sphi %s3190, %s3281
              $region43: #{forward_pallas.3} parent=39 // loop_header_branch
                %3205 = sbr.rel (%p3202) target = $region47
              $region44: #{forward_pallas.3} parent=39 // loop_body
                %v3209 = vld [vmem:[%s3207] sm:$0xff]
                %3210 = vst [vmem:[%s3208] sm:$0xff] %v3209
                %v3211 = vld [vmem:[%s3207 + $0x1c] sm:$0xff]
                %3212 = vst [vmem:[%s3208 + $0x1c] sm:$0xff] %v3211
                %v3213 = vld [vmem:[%s3207 + $0x38] sm:$0xff]
                %3214 = vst [vmem:[%s3208 + $0x38] sm:$0xff] %v3213
                %v3215 = vld [vmem:[%s3207 + $0x54] sm:$0xff]
                %3216 = vst [vmem:[%s3208 + $0x54] sm:$0xff] %v3215
                %v3217 = vld [vmem:[%s3207 + $0x70] sm:$0xff]
                %3218 = vst [vmem:[%s3208 + $0x70] sm:$0xff] %v3217
                %v3219 = vld [vmem:[%s3207 + $0x8c] sm:$0xff]
                %3220 = vst [vmem:[%s3208 + $0x8c] sm:$0xff] %v3219
                %v3221 = vld [vmem:[%s3207 + $0xa8] sm:$0xff]
                %3222 = vst [vmem:[%s3208 + $0xa8] sm:$0xff] %v3221
                %v3223 = vld [vmem:[%s3207 + $0xc4] sm:$0xff]
                %3224 = vst [vmem:[%s3208 + $0xc4] sm:$0xff] %v3223
                %v3225 = vld [vmem:[%s3207 + $0xe0] sm:$0xff]
                %3226 = vst [vmem:[%s3208 + $0xe0] sm:$0xff] %v3225
                %v3227 = vld [vmem:[%s3207 + $0xfc] sm:$0xff]
                %3228 = vst [vmem:[%s3208 + $0xfc] sm:$0xff] %v3227
                %v3229 = vld [vmem:[%s3207 + $0x118] sm:$0xff]
                %3230 = vst [vmem:[%s3208 + $0x118] sm:$0xff] %v3229
                %v3231 = vld [vmem:[%s3207 + $0x8] sm:$0xff]
                %3232 = vst [vmem:[%s3208 + $0x8] sm:$0xff] %v3231
                %v3233 = vld [vmem:[%s3207 + $0x24] sm:$0xff]
                %3234 = vst [vmem:[%s3208 + $0x24] sm:$0xff] %v3233
                %v3235 = vld [vmem:[%s3207 + $0x40] sm:$0xff]
                %3236 = vst [vmem:[%s3208 + $0x40] sm:$0xff] %v3235
                %v3237 = vld [vmem:[%s3207 + $0x5c] sm:$0xff]
                %3238 = vst [vmem:[%s3208 + $0x5c] sm:$0xff] %v3237
                %v3239 = vld [vmem:[%s3207 + $0x78] sm:$0xff]
                %3240 = vst [vmem:[%s3208 + $0x78] sm:$0xff] %v3239
                %v3241 = vld [vmem:[%s3207 + $0x94] sm:$0xff]
                %3242 = vst [vmem:[%s3208 + $0x94] sm:$0xff] %v3241
                %v3243 = vld [vmem:[%s3207 + $0xb0] sm:$0xff]
                %3244 = vst [vmem:[%s3208 + $0xb0] sm:$0xff] %v3243
                %v3245 = vld [vmem:[%s3207 + $0xcc] sm:$0xff]
                %3246 = vst [vmem:[%s3208 + $0xcc] sm:$0xff] %v3245
                %v3247 = vld [vmem:[%s3207 + $0xe8] sm:$0xff]
                %3248 = vst [vmem:[%s3208 + $0xe8] sm:$0xff] %v3247
                %v3249 = vld [vmem:[%s3207 + $0x104] sm:$0xff]
                %3250 = vst [vmem:[%s3208 + $0x104] sm:$0xff] %v3249
                %v3251 = vld [vmem:[%s3207 + $0x120] sm:$0xff]
                %3252 = vst [vmem:[%s3208 + $0x120] sm:$0xff] %v3251
                %v3253 = vld [vmem:[%s3207 + $0x10] sm:$0xff]
                %3254 = vst [vmem:[%s3208 + $0x10] sm:$0xff] %v3253
                %v3255 = vld [vmem:[%s3207 + $0x2c] sm:$0xff]
                %3256 = vst [vmem:[%s3208 + $0x2c] sm:$0xff] %v3255
                %v3257 = vld [vmem:[%s3207 + $0x48] sm:$0xff]
                %3258 = vst [vmem:[%s3208 + $0x48] sm:$0xff] %v3257
                %v3259 = vld [vmem:[%s3207 + $0x64] sm:$0xff]
                %3260 = vst [vmem:[%s3208 + $0x64] sm:$0xff] %v3259
                %v3261 = vld [vmem:[%s3207 + $0x80] sm:$0xff]
                %3262 = vst [vmem:[%s3208 + $0x80] sm:$0xff] %v3261
                %v3263 = vld [vmem:[%s3207 + $0x9c] sm:$0xff]
                %3264 = vst [vmem:[%s3208 + $0x9c] sm:$0xff] %v3263
                %v3265 = vld [vmem:[%s3207 + $0xb8] sm:$0xff]
                %3266 = vst [vmem:[%s3208 + $0xb8] sm:$0xff] %v3265
                %v3267 = vld [vmem:[%s3207 + $0xd4] sm:$0xff]
                %3268 = vst [vmem:[%s3208 + $0xd4] sm:$0xff] %v3267
                %v3269 = vld [vmem:[%s3207 + $0xf0] sm:$0xff]
                %3270 = vst [vmem:[%s3208 + $0xf0] sm:$0xff] %v3269
                %v3271 = vld [vmem:[%s3207 + $0x10c] sm:$0xff]
                %3272 = vst [vmem:[%s3208 + $0x10c] sm:$0xff] %v3271
                %v3273 = vld [vmem:[%s3207 + $0x128] sm:$0xff]
                %3274 = vst [vmem:[%s3208 + $0x128] sm:$0xff] %v3273
                %s3275 = sadd.s32 1, %s3206
                %p3276 = scmp.ge.s32.totalorder %s3275, %s3198
                %s3277 = scalar_select %p3276, 0, %s3275
                %s3278 = smul.u32 %s3277, 308
                %s3279 = smul.u32 %s3277, 308
                %s3280 = scalar_lea.vmem %s3177, %s3278 [#allocation2]
                %s3281 = scalar_lea.vmem %s3190, %s3279
              $region45: #{forward_pallas.3} parent=39 // loop_footer
                %s3203 = sadd.s32 %s3201, 1
              $region46: #{forward_pallas.3} parent=39 // loop_footer_branch
                %3200 = sbr.rel target = $region42
              $region47: #{forward_pallas.3} parent=39 // loop_exit
                _
              %s3282 = sdiv.u32.pop %s3184, 11
              %s3283 = srem.u32.pop %s3184, 11
              %s3284 = smul.u32 %s3282, 11
              %s3285 = smul.u32 28, %s3284
              %s3286 = scalar_lea.vmem %s3177, %s3285 [#allocation2]
              %s3287 = smul.u32 28, %s3284
              %s3288 = scalar_lea.vmem %s3190, %s3287
              // While loop
              $region48: #{forward_pallas.3} parent=39 // loop_pre_header
                _
              $region49: #{forward_pallas.3} parent=39 // loop_header
                %s3290 = sphi 0, %s3292
                %p3291 = scmp.ge.s32.totalorder %s3290, %s3283
                %s3295 = sphi 0, %s3306
                %s3296 = sphi %s3286, %s3309
                %s3297 = sphi %s3288, %s3310
              $region50: #{forward_pallas.3} parent=39 // loop_header_branch
                %3294 = sbr.rel (%p3291) target = $region54
              $region51: #{forward_pallas.3} parent=39 // loop_body
                %v3298 = vld [vmem:[%s3296] sm:$0xff]
                %3299 = vst [vmem:[%s3297] sm:$0xff] %v3298
                %v3300 = vld [vmem:[%s3296 + $0x8] sm:$0xff]
                %3301 = vst [vmem:[%s3297 + $0x8] sm:$0xff] %v3300
                %v3302 = vld [vmem:[%s3296 + $0x10] sm:$0xff]
                %3303 = vst [vmem:[%s3297 + $0x10] sm:$0xff] %v3302
                %s3304 = sadd.s32 1, %s3295
                %p3305 = scmp.ge.s32.totalorder %s3304, %s3283
                %s3306 = scalar_select %p3305, 0, %s3304
                %s3307 = smul.u32 %s3306, 28
                %s3308 = smul.u32 %s3306, 28
                %s3309 = scalar_lea.vmem %s3286, %s3307 [#allocation2]
                %s3310 = scalar_lea.vmem %s3288, %s3308
              $region52: #{forward_pallas.3} parent=39 // loop_footer
                %s3292 = sadd.s32 %s3290, 1
              $region53: #{forward_pallas.3} parent=39 // loop_footer_branch
                %3289 = sbr.rel target = $region49
              $region54: #{forward_pallas.3} parent=39 // loop_exit
                _
              %s3312 = ssub.s32 16, 1
              %s3313 = sshrl.u32 %s3184, 5
              // While loop
              $region55: #{forward_pallas.3} parent=39 // loop_pre_header
                _
              $region56: #{forward_pallas.3} parent=39 // loop_header
                %s3315 = sphi 0, %s3317
                %p3316 = scmp.ge.s32.totalorder %s3315, %s3313
                %s3320 = sphi 0, %s3389
                %s3321 = sphi %s3196, %s3392
                %s3322 = sphi %s3197, %s3393
              $region57: #{forward_pallas.3} parent=39 // loop_header_branch
                %3319 = sbr.rel (%p3316) target = $region61
              $region58: #{forward_pallas.3} parent=39 // loop_body
                %v3323 = vld [vmem:[%s3321] sm:%s3312]
                %3324 = vst [vmem:[%s3322] sm:%s3312] %v3323
                %v3325 = vld [vmem:[%s3321 + $0x1c] sm:%s3312]
                %3326 = vst [vmem:[%s3322 + $0x1c] sm:%s3312] %v3325
                %v3327 = vld [vmem:[%s3321 + $0x38] sm:%s3312]
                %3328 = vst [vmem:[%s3322 + $0x38] sm:%s3312] %v3327
                %v3329 = vld [vmem:[%s3321 + $0x54] sm:%s3312]
                %3330 = vst [vmem:[%s3322 + $0x54] sm:%s3312] %v3329
                %v3331 = vld [vmem:[%s3321 + $0x70] sm:%s3312]
                %3332 = vst [vmem:[%s3322 + $0x70] sm:%s3312] %v3331
                %v3333 = vld [vmem:[%s3321 + $0x8c] sm:%s3312]
                %3334 = vst [vmem:[%s3322 + $0x8c] sm:%s3312] %v3333
                %v3335 = vld [vmem:[%s3321 + $0xa8] sm:%s3312]
                %3336 = vst [vmem:[%s3322 + $0xa8] sm:%s3312] %v3335
                %v3337 = vld [vmem:[%s3321 + $0xc4] sm:%s3312]
                %3338 = vst [vmem:[%s3322 + $0xc4] sm:%s3312] %v3337
                %v3339 = vld [vmem:[%s3321 + $0xe0] sm:%s3312]
                %3340 = vst [vmem:[%s3322 + $0xe0] sm:%s3312] %v3339
                %v3341 = vld [vmem:[%s3321 + $0xfc] sm:%s3312]
                %3342 = vst [vmem:[%s3322 + $0xfc] sm:%s3312] %v3341
                %v3343 = vld [vmem:[%s3321 + $0x118] sm:%s3312]
                %3344 = vst [vmem:[%s3322 + $0x118] sm:%s3312] %v3343
                %v3345 = vld [vmem:[%s3321 + $0x134] sm:%s3312]
                %3346 = vst [vmem:[%s3322 + $0x134] sm:%s3312] %v3345
                %v3347 = vld [vmem:[%s3321 + $0x150] sm:%s3312]
                %3348 = vst [vmem:[%s3322 + $0x150] sm:%s3312] %v3347
                %v3349 = vld [vmem:[%s3321 + $0x16c] sm:%s3312]
                %3350 = vst [vmem:[%s3322 + $0x16c] sm:%s3312] %v3349
                %v3351 = vld [vmem:[%s3321 + $0x188] sm:%s3312]
                %3352 = vst [vmem:[%s3322 + $0x188] sm:%s3312] %v3351
                %v3353 = vld [vmem:[%s3321 + $0x1a4] sm:%s3312]
                %3354 = vst [vmem:[%s3322 + $0x1a4] sm:%s3312] %v3353
                %v3355 = vld [vmem:[%s3321 + $0x1c0] sm:%s3312]
                %3356 = vst [vmem:[%s3322 + $0x1c0] sm:%s3312] %v3355
                %v3357 = vld [vmem:[%s3321 + $0x1dc] sm:%s3312]
                %3358 = vst [vmem:[%s3322 + $0x1dc] sm:%s3312] %v3357
                %v3359 = vld [vmem:[%s3321 + $0x1f8] sm:%s3312]
                %3360 = vst [vmem:[%s3322 + $0x1f8] sm:%s3312] %v3359
                %v3361 = vld [vmem:[%s3321 + $0x214] sm:%s3312]
                %3362 = vst [vmem:[%s3322 + $0x214] sm:%s3312] %v3361
                %v3363 = vld [vmem:[%s3321 + $0x230] sm:%s3312]
                %3364 = vst [vmem:[%s3322 + $0x230] sm:%s3312] %v3363
                %v3365 = vld [vmem:[%s3321 + $0x24c] sm:%s3312]
                %3366 = vst [vmem:[%s3322 + $0x24c] sm:%s3312] %v3365
                %v3367 = vld [vmem:[%s3321 + $0x268] sm:%s3312]
                %3368 = vst [vmem:[%s3322 + $0x268] sm:%s3312] %v3367
                %v3369 = vld [vmem:[%s3321 + $0x284] sm:%s3312]
                %3370 = vst [vmem:[%s3322 + $0x284] sm:%s3312] %v3369
                %v3371 = vld [vmem:[%s3321 + $0x2a0] sm:%s3312]
                %3372 = vst [vmem:[%s3322 + $0x2a0] sm:%s3312] %v3371
                %v3373 = vld [vmem:[%s3321 + $0x2bc] sm:%s3312]
                %3374 = vst [vmem:[%s3322 + $0x2bc] sm:%s3312] %v3373
                %v3375 = vld [vmem:[%s3321 + $0x2d8] sm:%s3312]
                %3376 = vst [vmem:[%s3322 + $0x2d8] sm:%s3312] %v3375
                %v3377 = vld [vmem:[%s3321 + $0x2f4] sm:%s3312]
                %3378 = vst [vmem:[%s3322 + $0x2f4] sm:%s3312] %v3377
                %v3379 = vld [vmem:[%s3321 + $0x310] sm:%s3312]
                %3380 = vst [vmem:[%s3322 + $0x310] sm:%s3312] %v3379
                %v3381 = vld [vmem:[%s3321 + $0x32c] sm:%s3312]
                %3382 = vst [vmem:[%s3322 + $0x32c] sm:%s3312] %v3381
                %v3383 = vld [vmem:[%s3321 + $0x348] sm:%s3312]
                %3384 = vst [vmem:[%s3322 + $0x348] sm:%s3312] %v3383
                %v3385 = vld [vmem:[%s3321 + $0x364] sm:%s3312]
                %3386 = vst [vmem:[%s3322 + $0x364] sm:%s3312] %v3385
                %s3387 = sadd.s32 1, %s3320
                %p3388 = scmp.ge.s32.totalorder %s3387, %s3313
                %s3389 = scalar_select %p3388, 0, %s3387
                %s3390 = smul.u32 %s3389, 896
                %s3391 = smul.u32 %s3389, 896
                %s3392 = scalar_lea.vmem %s3196, %s3390 [#allocation2]
                %s3393 = scalar_lea.vmem %s3197, %s3391
              $region59: #{forward_pallas.3} parent=39 // loop_footer
                %s3317 = sadd.s32 %s3315, 1
              $region60: #{forward_pallas.3} parent=39 // loop_footer_branch
                %3314 = sbr.rel target = $region56
              $region61: #{forward_pallas.3} parent=39 // loop_exit
                _
              %s3394 = sshrl.u32 %s3184, 5
              %s3395 = sand.u32 %s3184, 31
              %s3396 = smul.u32 %s3394, 32
              %s3397 = smul.u32 28, %s3396
              %s3398 = scalar_lea.vmem %s3196, %s3397 [#allocation2]
              %s3399 = smul.u32 28, %s3396
              %s3400 = scalar_lea.vmem %s3197, %s3399
              // While loop
              $region62: #{forward_pallas.3} parent=39 // loop_pre_header
                _
              $region63: #{forward_pallas.3} parent=39 // loop_header
                %s3402 = sphi 0, %s3404
                %p3403 = scmp.ge.s32.totalorder %s3402, %s3395
                %s3407 = sphi 0, %s3414
                %s3408 = sphi %s3398, %s3417
                %s3409 = sphi %s3400, %s3418
              $region64: #{forward_pallas.3} parent=39 // loop_header_branch
                %3406 = sbr.rel (%p3403) target = $region68
              $region65: #{forward_pallas.3} parent=39 // loop_body
                %v3410 = vld [vmem:[%s3408] sm:%s3312]
                %3411 = vst [vmem:[%s3409] sm:%s3312] %v3410
                %s3412 = sadd.s32 1, %s3407
                %p3413 = scmp.ge.s32.totalorder %s3412, %s3395
                %s3414 = scalar_select %p3413, 0, %s3412
                %s3415 = smul.u32 %s3414, 28
                %s3416 = smul.u32 %s3414, 28
                %s3417 = scalar_lea.vmem %s3398, %s3415 [#allocation2]
                %s3418 = scalar_lea.vmem %s3400, %s3416
              $region66: #{forward_pallas.3} parent=39 // loop_footer
                %s3404 = sadd.s32 %s3402, 1
              $region67: #{forward_pallas.3} parent=39 // loop_footer_branch
                %3401 = sbr.rel target = $region63
              $region68: #{forward_pallas.3} parent=39 // loop_exit
                _
            $region40: #{forward_pallas.3} parent=35 // pred_fallthru
              _
          $region36: #{forward_pallas.3} parent=31 // pred_fallthru
            _
          %3419 = vnop
        $region32: #{forward_pallas.3} parent=27 // pred_fallthru
          _
      $region28: #{forward_pallas.3} parent=5 // pred_fallthru
        _
      %p3420 = scmp.le.s32.totalorder 2, %s8
      // Predicated region
      $region69: #{forward_pallas.3} parent=5 // pred_check
        %p3421 = pneg %p3420
      $region70: #{forward_pallas.3} parent=5 // pred_check_branch
        %3423 = sbr.rel (%p3421) target = $region72
      $region71: #{forward_pallas.3} parent=5 // pred_region
        %s3424 = ssub.s32 %s8, 2
        // Predicated region
        $region73: #{forward_pallas.3} parent=71 // pred_check
          %p3425 = pneg %p84
        $region74: #{forward_pallas.3} parent=71 // pred_check_branch
          %3427 = sbr.rel (%p3425) target = $region76
        $region75: #{forward_pallas.3} parent=71 // pred_region
          %s3428 = sand.u32 %s69, 1
          %s3429 = sand.u32 %s69, 1
          %s3430 = smul.addr %s3429, 1288
          %s3431 = scalar_lea.vmem [#allocation2], %s3430
        $region76: #{forward_pallas.3} parent=71 // pred_fallthru
          _
      $region72: #{forward_pallas.3} parent=5 // pred_fallthru
        _
    $region6: #{forward_pallas.3} parent=1 // loop_footer
      %s12 = sadd.s32 1, %s8
    $region7: #{forward_pallas.3} parent=1 // loop_footer_branch
      %7 = sbr.rel target = $region3
    $region8: #{forward_pallas.3} parent=1 // loop_exit
      _

</llo_original>
